<compile_context>
chip_gen: v7x
topology: tpu7x:2x2x1
jax: 0.10.0
libtpu: 0.0.40
codegen_flags: <defaults>
</compile_context>

<pallas_src>
import functools

import jax
import jax.numpy as jnp
from jax import lax
from jax.experimental import pallas as pl
from jax.experimental.pallas import tpu as pltpu

LN_EPS = 1e-5


def _gelu_tanh(x):
    # TODO(synk): PyTorch F.gelu defaults to the exact erf GELU; using the tanh approximation
    # (max abs error ~3e-4) since erf is not guaranteed to lower in Mosaic.
    c = 0.7978845608028654  # sqrt(2/pi)
    return 0.5 * x * (1.0 + jnp.tanh(c * (x + 0.044715 * x * x * x)))


# ----------------------------------------------------------------------------
# Kernel 1: fused LayerNorm (over channels) + pointwise (1x1) conv, tiled over tokens.
# ----------------------------------------------------------------------------
def _ln_pw_kernel(x_ref, lnw_ref, lnb_ref, w_ref, b_ref, o_ref, *, with_bias):
    x = x_ref[...].astype(jnp.float32)                                  # (TM, C)
    mu = jnp.mean(x, axis=-1, keepdims=True)
    var = jnp.mean(jnp.square(x - mu), axis=-1, keepdims=True)          # biased (torch unbiased=False)
    inv = lax.rsqrt(var + LN_EPS)
    if with_bias:
        y = (x - mu) * inv * lnw_ref[...] + lnb_ref[...]
    else:
        y = x * inv * lnw_ref[...]
    o = jnp.dot(y, w_ref[...], preferred_element_type=jnp.float32) + b_ref[...]
    o_ref[...] = o.astype(o_ref.dtype)


def ln_pointwise(x, ln_w, ln_b, w, b, *, with_bias=True, tm=256):
    M, C = x.shape
    Cout = w.shape[1]
    tm = min(tm, M)
    kern = functools.partial(_ln_pw_kernel, with_bias=with_bias)
    return pl.pallas_call(
        kern,
        out_shape=jax.ShapeDtypeStruct((M, Cout), x.dtype),
        grid=(pl.cdiv(M, tm),),
        in_specs=[
            pl.BlockSpec((tm, C), lambda i: (i, 0)),
            pl.BlockSpec((1, C), lambda i: (0, 0)),
            pl.BlockSpec((1, C), lambda i: (0, 0)),
            pl.BlockSpec((C, Cout), lambda i: (0, 0)),
            pl.BlockSpec((1, Cout), lambda i: (0, 0)),
        ],
        out_specs=pl.BlockSpec((tm, Cout), lambda i: (i, 0)),
        compiler_params=pltpu.CompilerParams(dimension_semantics=("parallel",)),
    )(x, ln_w.reshape(1, C), ln_b.reshape(1, C), w, b.reshape(1, Cout))


# ----------------------------------------------------------------------------
# Kernel 2: 3x3 depthwise conv, channels-last (channels on lanes), grid over batch.
# ----------------------------------------------------------------------------
def _dwconv3x3_kernel(xp_ref, w_ref, b_ref, o_ref):
    _, H, W, C = o_ref.shape
    xp = xp_ref[...]                                                    # (1, H+2, W+2, C)
    wk = w_ref[...]                                                     # (9, C)
    acc = jnp.zeros((H, W, C), jnp.float32)
    for ki in range(3):
        for kj in range(3):
            idx = ki * 3 + kj
            acc = acc + xp[0, ki:ki + H, kj:kj + W, :].astype(jnp.float32) * wk[idx:idx + 1, :]
    o_ref[...] = (acc + b_ref[...])[None].astype(o_ref.dtype)


def dwconv3x3(x, w9, b):
    # TODO(synk): for large H*W, tile the spatial axis (with a +2-row halo) instead of one batch/step.
    B, H, W, C = x.shape
    xp = jnp.pad(x, ((0, 0), (1, 1), (1, 1), (0, 0)))
    return pl.pallas_call(
        _dwconv3x3_kernel,
        out_shape=jax.ShapeDtypeStruct((B, H, W, C), x.dtype),
        grid=(B,),
        in_specs=[
            pl.BlockSpec((1, H + 2, W + 2, C), lambda i: (i, 0, 0, 0)),
            pl.BlockSpec((9, C), lambda i: (0, 0)),
            pl.BlockSpec((1, C), lambda i: (0, 0)),
        ],
        out_specs=pl.BlockSpec((1, H, W, C), lambda i: (i, 0, 0, 0)),
        compiler_params=pltpu.CompilerParams(dimension_semantics=("parallel",)),
    )(xp, w9, b.reshape(1, C))


# ----------------------------------------------------------------------------
# Kernel 3: channel attention per (batch, head); HW on the lane axis.
# ----------------------------------------------------------------------------
def _chan_attn_kernel(temp_ref, q_ref, k_ref, v_ref, o_ref):
    h = pl.program_id(1)
    t = temp_ref[h]
    q = q_ref[0, 0].astype(jnp.float32)                                 # (d, HW)
    k = k_ref[0, 0].astype(jnp.float32)
    v = v_ref[0, 0].astype(jnp.float32)
    qn = q / jnp.maximum(jnp.sqrt(jnp.sum(q * q, axis=-1, keepdims=True)), 1e-12)
    kn = k / jnp.maximum(jnp.sqrt(jnp.sum(k * k, axis=-1, keepdims=True)), 1e-12)
    attn = lax.dot_general(qn, kn, (((1,), (1,)), ((), ())),
                           preferred_element_type=jnp.float32) * t      # (d, d)
    attn = attn - jnp.max(attn, axis=-1, keepdims=True)
    e = jnp.exp(attn)
    p = e / jnp.sum(e, axis=-1, keepdims=True)
    o = jnp.dot(p, v, preferred_element_type=jnp.float32)               # (d, HW)
    o_ref[...] = o[None, None, :, :].astype(o_ref.dtype)


def channel_attention(q, k, v, temperature):
    B, nh, d, L = q.shape
    blk = pl.BlockSpec((1, 1, d, L), lambda b, h: (b, h, 0, 0))
    return pl.pallas_call(
        _chan_attn_kernel,
        out_shape=jax.ShapeDtypeStruct((B, nh, d, L), q.dtype),
        grid=(B, nh),
        in_specs=[
            pl.BlockSpec(memory_space=pltpu.MemorySpace.SMEM),          # temperature (nh,)
            blk, blk, blk,
        ],
        out_specs=blk,
        compiler_params=pltpu.CompilerParams(dimension_semantics=("parallel", "parallel")),
    )(temperature.astype(jnp.float32), q, k, v)


# ----------------------------------------------------------------------------
# Kernel 4a: pointwise (1x1) conv + bias + residual, tiled over tokens.
# ----------------------------------------------------------------------------
def _pw_res_kernel(x_ref, w_ref, b_ref, r_ref, o_ref):
    y = jnp.dot(x_ref[...], w_ref[...], preferred_element_type=jnp.float32)
    o_ref[...] = (y + b_ref[...] + r_ref[...]).astype(o_ref.dtype)


def pointwise_residual(x, w, b, res, *, tm=256):
    M, C = x.shape
    Cout = w.shape[1]
    tm = min(tm, M)
    return pl.pallas_call(
        _pw_res_kernel,
        out_shape=jax.ShapeDtypeStruct((M, Cout), x.dtype),
        grid=(pl.cdiv(M, tm),),
        in_specs=[
            pl.BlockSpec((tm, C), lambda i: (i, 0)),
            pl.BlockSpec((C, Cout), lambda i: (0, 0)),
            pl.BlockSpec((1, Cout), lambda i: (0, 0)),
            pl.BlockSpec((tm, Cout), lambda i: (i, 0)),
        ],
        out_specs=pl.BlockSpec((tm, Cout), lambda i: (i, 0)),
        compiler_params=pltpu.CompilerParams(dimension_semantics=("parallel",)),
    )(x, w, b.reshape(1, Cout), res)


# ----------------------------------------------------------------------------
# Kernel 4b: gated-GELU + pointwise conv + bias + residual (FFN tail), tiled over tokens.
# ----------------------------------------------------------------------------
def _gated_pw_res_kernel(x_ref, w_ref, b_ref, r_ref, o_ref, *, hidden):
    x = x_ref[...].astype(jnp.float32)                                  # (TM, 2*hidden)
    g = _gelu_tanh(x[:, :hidden]) * x[:, hidden:]
    y = jnp.dot(g, w_ref[...], preferred_element_type=jnp.float32)
    o_ref[...] = (y + b_ref[...] + r_ref[...]).astype(o_ref.dtype)


def gated_pointwise_residual(x, w, b, res, *, hidden, tm=256):
    M, C2 = x.shape
    Cout = w.shape[1]
    tm = min(tm, M)
    kern = functools.partial(_gated_pw_res_kernel, hidden=hidden)
    return pl.pallas_call(
        kern,
        out_shape=jax.ShapeDtypeStruct((M, Cout), x.dtype),
        grid=(pl.cdiv(M, tm),),
        in_specs=[
            pl.BlockSpec((tm, C2), lambda i: (i, 0)),
            pl.BlockSpec((hidden, Cout), lambda i: (0, 0)),
            pl.BlockSpec((1, Cout), lambda i: (0, 0)),
            pl.BlockSpec((tm, Cout), lambda i: (i, 0)),
        ],
        out_specs=pl.BlockSpec((tm, Cout), lambda i: (i, 0)),
        compiler_params=pltpu.CompilerParams(dimension_semantics=("parallel",)),
    )(x, w, b.reshape(1, Cout), res)


# ----------------------------------------------------------------------------
# Full TransformerBlock forward (NCHW in / NCHW out; channels-last internally).
# ----------------------------------------------------------------------------
def transformer_block_forward(x, p, *, num_heads, tm=256):
    B, C, H, W = x.shape
    HW = H * W
    d = C // num_heads
    hidden = p["fo_w"].shape[0]

    x_tok = x.transpose(0, 2, 3, 1).reshape(B * HW, C)                  # (M, C) channels-last

    # ---- x = x + project_out(attn(dwconv(qkv(norm1(x))))) ----
    qkv_tok = ln_pointwise(x_tok, p["ln1_w"], p["ln1_b"], p["qkv_w"], p["qkv_b"], tm=tm)
    qkv_dw = dwconv3x3(qkv_tok.reshape(B, H, W, 3 * C), p["qkv_dw_w"], p["qkv_dw_b"])
    q, k, v = jnp.split(qkv_dw.reshape(B, HW, 3 * C), 3, axis=-1)

    def to_heads(t):                                                    # (B, HW, C) -> (B, heads, d, HW)
        return t.reshape(B, HW, num_heads, d).transpose(0, 2, 3, 1)

    attn_out = channel_attention(to_heads(q), to_heads(k), to_heads(v), p["temperature"])
    attn_tok = attn_out.transpose(0, 3, 1, 2).reshape(B * HW, C)
    x_tok = pointwise_residual(attn_tok, p["po_w"], p["po_b"], x_tok, tm=tm)

    # ---- x = x + project_out(gelu(x1) * x2), (x1,x2) = dwconv(project_in(norm2(x))) ----
    h_tok = ln_pointwise(x_tok, p["ln2_w"], p["ln2_b"], p["pi_w"], p["pi_b"], tm=tm)
    h_dw = dwconv3x3(h_tok.reshape(B, H, W, 2 * hidden), p["ffn_dw_w"], p["ffn_dw_b"])
    x_tok = gated_pointwise_residual(h_dw.reshape(B * HW, 2 * hidden),
                                     p["fo_w"], p["fo_b"], x_tok, hidden=hidden, tm=tm)

    return x_tok.reshape(B, H, W, C).transpose(0, 3, 1, 2)


# ----------------------------------------------------------------------------
# Pure-JAX reference (mirrors the PyTorch module, tanh-GELU as noted above).
# ----------------------------------------------------------------------------
def ref_forward(x, p, num_heads):
    B, C, H, W = x.shape
    HW = H * W

    def ln(x4, w, b):
        t = x4.transpose(0, 2, 3, 1).reshape(B, HW, C)
        mu = t.mean(-1, keepdims=True)
        var = ((t - mu) ** 2).mean(-1, keepdims=True)
        t = (t - mu) / jnp.sqrt(var + LN_EPS) * w + b
        return t.reshape(B, H, W, C).transpose(0, 3, 1, 2)

    def conv1x1(x4, w, b):                                              # w: (Cin, Cout)
        return jnp.einsum("bchw,co->bohw", x4, w) + b.reshape(1, -1, 1, 1)

    def dwconv(x4, w9, b):                                              # w9: (9, Cg)
        Cg = x4.shape[1]
        wf = w9.reshape(3, 3, Cg).transpose(2, 0, 1)[:, None, :, :]
        y = lax.conv_general_dilated(x4, wf, (1, 1), "SAME",
                                     dimension_numbers=("NCHW", "OIHW", "NCHW"),
                                     feature_group_count=Cg)
        return y + b.reshape(1, -1, 1, 1)

    # attention branch
    xn = ln(x, p["ln1_w"], p["ln1_b"])
    qkv = dwconv(conv1x1(xn, p["qkv_w"], p["qkv_b"]), p["qkv_dw_w"], p["qkv_dw_b"])
    q, k, v = jnp.split(qkv, 3, axis=1)
    d = C // num_heads
    q = q.reshape(B, num_heads, d, HW)
    k = k.reshape(B, num_heads, d, HW)
    v = v.reshape(B, num_heads, d, HW)
    q = q / jnp.maximum(jnp.linalg.norm(q, axis=-1, keepdims=True), 1e-12)
    k = k / jnp.maximum(jnp.linalg.norm(k, axis=-1, keepdims=True), 1e-12)
    attn = jnp.einsum("bhcn,bhdn->bhcd", q, k) * p["temperature"].reshape(1, num_heads, 1, 1)
    attn = jax.nn.softmax(attn, axis=-1)
    out = jnp.einsum("bhcd,bhdn->bhcn", attn, v).reshape(B, C, H, W)
    x = x + conv1x1(out, p["po_w"], p["po_b"])

    # FFN branch
    xn = ln(x, p["ln2_w"], p["ln2_b"])
    h2 = dwconv(conv1x1(xn, p["pi_w"], p["pi_b"]), p["ffn_dw_w"], p["ffn_dw_b"])
    x1, x2 = jnp.split(h2, 2, axis=1)
    x = x + conv1x1(_gelu_tanh(x1) * x2, p["fo_w"], p["fo_b"])
    return x


if __name__ == "__main__":
    key = jax.random.PRNGKey(0)
    ks = jax.random.split(key, 12)

    # TransformerBlock(dim=32, num_heads=4, ffn_expansion_factor=2, bias=False, LayerNorm_type='WithBias')
    B, C, H, W = 2, 32, 16, 16
    num_heads = 4
    hidden = int(C * 2.0)

    def rnd(k, shape, scale):
        return (scale * jax.random.normal(k, shape, jnp.float32)).astype(jnp.float32)

    x = jax.random.normal(ks[0], (B, C, H, W), jnp.float32)

    params = dict(
        ln1_w=1.0 + rnd(ks[1], (C,), 0.1),
        ln1_b=rnd(ks[2], (C,), 0.1),
        qkv_w=rnd(ks[3], (C, 3 * C), C ** -0.5),
        qkv_b=jnp.zeros((3 * C,), jnp.float32),          # bias=False
        qkv_dw_w=rnd(ks[4], (9, 3 * C), 1.0 / 3.0),
        qkv_dw_b=jnp.zeros((3 * C,), jnp.float32),
        temperature=1.0 + rnd(ks[5], (num_heads,), 0.1),
        po_w=rnd(ks[6], (C, C), C ** -0.5),
        po_b=jnp.zeros((C,), jnp.float32),
        ln2_w=1.0 + rnd(ks[7], (C,), 0.1),
        ln2_b=rnd(ks[8], (C,), 0.1),
        pi_w=rnd(ks[9], (C, 2 * hidden), C ** -0.5),
        pi_b=jnp.zeros((2 * hidden,), jnp.float32),
        ffn_dw_w=rnd(ks[10], (9, 2 * hidden), 1.0 / 3.0),
        ffn_dw_b=jnp.zeros((2 * hidden,), jnp.float32),
        fo_w=rnd(ks[11], (hidden, C), hidden ** -0.5),
        fo_b=jnp.zeros((C,), jnp.float32),
    )

    fwd = jax.jit(functools.partial(transformer_block_forward, num_heads=num_heads))
    out = jax.block_until_ready(fwd(x, params))

    ref = ref_forward(x, params, num_heads)
    assert out.shape == (B, C, H, W)
    max_err = float(jnp.max(jnp.abs(out - ref)))
    assert jnp.allclose(out, ref, atol=1e-3, rtol=1e-3), f"mismatch vs reference, max_err={max_err}"
    print("KERNEL_OK")
</pallas_src>

<mosaic_0001>
module attributes {stable_mosaic.version = 11 : i64} {
  func.func @_dwconv3x3_kernel(%arg0: i32, %arg1: memref<1x18x18x96xf32, #tpu.memory_space<vmem>>, %arg2: memref<9x96xf32, #tpu.memory_space<vmem>>, %arg3: memref<1x96xf32, #tpu.memory_space<vmem>>, %arg4: memref<1x16x16x96xf32, #tpu.memory_space<vmem>>) attributes {dimension_semantics = [#tpu.dimension_semantics<parallel>], iteration_bounds = array<i64: 2>, scalar_prefetch = 0 : i64, scratch_operands = 0 : i64, tpu.core_type = #tpu.core_type<tc>, window_params = [{transform_indices = @transform_0, window_bounds = array<i64: 1, 18, 18, 96>}, {pipeline_mode = #tpu.pipeline_mode<synchronous>, transform_indices = @transform_1, window_bounds = array<i64: 9, 96>}, {pipeline_mode = #tpu.pipeline_mode<synchronous>, transform_indices = @transform_2, window_bounds = array<i64: 1, 96>}, {transform_indices = @transform_3, window_bounds = array<i64: 1, 16, 16, 96>}]} {
    %c0 = arith.constant 0 : index
    %c0_0 = arith.constant 0 : index
    %c0_1 = arith.constant 0 : index
    %c0_2 = arith.constant 0 : index
    %0 = vector.load %arg1[%c0, %c0_0, %c0_1, %c0_2] : memref<1x18x18x96xf32, #tpu.memory_space<vmem>>, vector<1x18x18x96xf32>
    %c0_3 = arith.constant 0 : index
    %c0_4 = arith.constant 0 : index
    %1 = vector.load %arg2[%c0_3, %c0_4] : memref<9x96xf32, #tpu.memory_space<vmem>>, vector<9x96xf32>
    %cst = arith.constant 0.000000e+00 : f32
    %2 = vector.broadcast %cst : f32 to vector<16x16x96xf32>
    %3 = vector.extract_strided_slice %0 {offsets = [0, 0, 0, 0], sizes = [1, 16, 16, 96], strides = [1, 1, 1, 1]} : vector<1x18x18x96xf32> to vector<1x16x16x96xf32>
    %4 = vector.shape_cast %3 : vector<1x16x16x96xf32> to vector<16x16x96xf32>
    %5 = vector.extract_strided_slice %1 {offsets = [0, 0], sizes = [1, 96], strides = [1, 1]} : vector<9x96xf32> to vector<1x96xf32>
    %6 = vector.shape_cast %5 : vector<1x96xf32> to vector<1x1x96xf32>
    %7 = vector.broadcast %6 : vector<1x1x96xf32> to vector<16x16x96xf32>
    %8 = arith.mulf %4, %7 : vector<16x16x96xf32>
    %9 = arith.addf %2, %8 : vector<16x16x96xf32>
    %10 = vector.extract_strided_slice %0 {offsets = [0, 0, 1, 0], sizes = [1, 16, 16, 96], strides = [1, 1, 1, 1]} : vector<1x18x18x96xf32> to vector<1x16x16x96xf32>
    %11 = vector.shape_cast %10 : vector<1x16x16x96xf32> to vector<16x16x96xf32>
    %12 = vector.extract_strided_slice %1 {offsets = [1, 0], sizes = [1, 96], strides = [1, 1]} : vector<9x96xf32> to vector<1x96xf32>
    %13 = vector.shape_cast %12 : vector<1x96xf32> to vector<1x1x96xf32>
    %14 = vector.broadcast %13 : vector<1x1x96xf32> to vector<16x16x96xf32>
    %15 = arith.mulf %11, %14 : vector<16x16x96xf32>
    %16 = arith.addf %9, %15 : vector<16x16x96xf32>
    %17 = vector.extract_strided_slice %0 {offsets = [0, 0, 2, 0], sizes = [1, 16, 16, 96], strides = [1, 1, 1, 1]} : vector<1x18x18x96xf32> to vector<1x16x16x96xf32>
    %18 = vector.shape_cast %17 : vector<1x16x16x96xf32> to vector<16x16x96xf32>
    %19 = vector.extract_strided_slice %1 {offsets = [2, 0], sizes = [1, 96], strides = [1, 1]} : vector<9x96xf32> to vector<1x96xf32>
    %20 = vector.shape_cast %19 : vector<1x96xf32> to vector<1x1x96xf32>
    %21 = vector.broadcast %20 : vector<1x1x96xf32> to vector<16x16x96xf32>
    %22 = arith.mulf %18, %21 : vector<16x16x96xf32>
    %23 = arith.addf %16, %22 : vector<16x16x96xf32>
    %24 = vector.extract_strided_slice %0 {offsets = [0, 1, 0, 0], sizes = [1, 16, 16, 96], strides = [1, 1, 1, 1]} : vector<1x18x18x96xf32> to vector<1x16x16x96xf32>
    %25 = vector.shape_cast %24 : vector<1x16x16x96xf32> to vector<16x16x96xf32>
    %26 = vector.extract_strided_slice %1 {offsets = [3, 0], sizes = [1, 96], strides = [1, 1]} : vector<9x96xf32> to vector<1x96xf32>
    %27 = vector.shape_cast %26 : vector<1x96xf32> to vector<1x1x96xf32>
    %28 = vector.broadcast %27 : vector<1x1x96xf32> to vector<16x16x96xf32>
    %29 = arith.mulf %25, %28 : vector<16x16x96xf32>
    %30 = arith.addf %23, %29 : vector<16x16x96xf32>
    %31 = vector.extract_strided_slice %0 {offsets = [0, 1, 1, 0], sizes = [1, 16, 16, 96], strides = [1, 1, 1, 1]} : vector<1x18x18x96xf32> to vector<1x16x16x96xf32>
    %32 = vector.shape_cast %31 : vector<1x16x16x96xf32> to vector<16x16x96xf32>
    %33 = vector.extract_strided_slice %1 {offsets = [4, 0], sizes = [1, 96], strides = [1, 1]} : vector<9x96xf32> to vector<1x96xf32>
    %34 = vector.shape_cast %33 : vector<1x96xf32> to vector<1x1x96xf32>
    %35 = vector.broadcast %34 : vector<1x1x96xf32> to vector<16x16x96xf32>
    %36 = arith.mulf %32, %35 : vector<16x16x96xf32>
    %37 = arith.addf %30, %36 : vector<16x16x96xf32>
    %38 = vector.extract_strided_slice %0 {offsets = [0, 1, 2, 0], sizes = [1, 16, 16, 96], strides = [1, 1, 1, 1]} : vector<1x18x18x96xf32> to vector<1x16x16x96xf32>
    %39 = vector.shape_cast %38 : vector<1x16x16x96xf32> to vector<16x16x96xf32>
    %40 = vector.extract_strided_slice %1 {offsets = [5, 0], sizes = [1, 96], strides = [1, 1]} : vector<9x96xf32> to vector<1x96xf32>
    %41 = vector.shape_cast %40 : vector<1x96xf32> to vector<1x1x96xf32>
    %42 = vector.broadcast %41 : vector<1x1x96xf32> to vector<16x16x96xf32>
    %43 = arith.mulf %39, %42 : vector<16x16x96xf32>
    %44 = arith.addf %37, %43 : vector<16x16x96xf32>
    %45 = vector.extract_strided_slice %0 {offsets = [0, 2, 0, 0], sizes = [1, 16, 16, 96], strides = [1, 1, 1, 1]} : vector<1x18x18x96xf32> to vector<1x16x16x96xf32>
    %46 = vector.shape_cast %45 : vector<1x16x16x96xf32> to vector<16x16x96xf32>
    %47 = vector.extract_strided_slice %1 {offsets = [6, 0], sizes = [1, 96], strides = [1, 1]} : vector<9x96xf32> to vector<1x96xf32>
    %48 = vector.shape_cast %47 : vector<1x96xf32> to vector<1x1x96xf32>
    %49 = vector.broadcast %48 : vector<1x1x96xf32> to vector<16x16x96xf32>
    %50 = arith.mulf %46, %49 : vector<16x16x96xf32>
    %51 = arith.addf %44, %50 : vector<16x16x96xf32>
    %52 = vector.extract_strided_slice %0 {offsets = [0, 2, 1, 0], sizes = [1, 16, 16, 96], strides = [1, 1, 1, 1]} : vector<1x18x18x96xf32> to vector<1x16x16x96xf32>
    %53 = vector.shape_cast %52 : vector<1x16x16x96xf32> to vector<16x16x96xf32>
    %54 = vector.extract_strided_slice %1 {offsets = [7, 0], sizes = [1, 96], strides = [1, 1]} : vector<9x96xf32> to vector<1x96xf32>
    %55 = vector.shape_cast %54 : vector<1x96xf32> to vector<1x1x96xf32>
    %56 = vector.broadcast %55 : vector<1x1x96xf32> to vector<16x16x96xf32>
    %57 = arith.mulf %53, %56 : vector<16x16x96xf32>
    %58 = arith.addf %51, %57 : vector<16x16x96xf32>
    %59 = vector.extract_strided_slice %0 {offsets = [0, 2, 2, 0], sizes = [1, 16, 16, 96], strides = [1, 1, 1, 1]} : vector<1x18x18x96xf32> to vector<1x16x16x96xf32>
    %60 = vector.shape_cast %59 : vector<1x16x16x96xf32> to vector<16x16x96xf32>
    %61 = vector.extract_strided_slice %1 {offsets = [8, 0], sizes = [1, 96], strides = [1, 1]} : vector<9x96xf32> to vector<1x96xf32>
    %62 = vector.shape_cast %61 : vector<1x96xf32> to vector<1x1x96xf32>
    %63 = vector.broadcast %62 : vector<1x1x96xf32> to vector<16x16x96xf32>
    %64 = arith.mulf %60, %63 : vector<16x16x96xf32>
    %65 = arith.addf %58, %64 : vector<16x16x96xf32>
    %c0_5 = arith.constant 0 : index
    %c0_6 = arith.constant 0 : index
    %66 = vector.load %arg3[%c0_5, %c0_6] : memref<1x96xf32, #tpu.memory_space<vmem>>, vector<1x96xf32>
    %67 = vector.shape_cast %66 : vector<1x96xf32> to vector<1x1x96xf32>
    %68 = vector.broadcast %67 : vector<1x1x96xf32> to vector<16x16x96xf32>
    %69 = arith.addf %65, %68 : vector<16x16x96xf32>
    %70 = vector.shape_cast %69 : vector<16x16x96xf32> to vector<1x16x16x96xf32>
    %c0_7 = arith.constant 0 : index
    %c0_8 = arith.constant 0 : index
    %c0_9 = arith.constant 0 : index
    %c0_10 = arith.constant 0 : index
    %71 = vector.load %arg4[%c0_7, %c0_8, %c0_9, %c0_10] : memref<1x16x16x96xf32, #tpu.memory_space<vmem>>, vector<1x16x16x96xf32>
    tpu.vector_store %arg4[%c0_7, %c0_8, %c0_9, %c0_10], %70 {strides = array<i32>} : memref<1x16x16x96xf32, #tpu.memory_space<vmem>>, vector<1x16x16x96xf32>,
    return
  }
  func.func @transform_0(%arg0: i32) -> (i32, i32, i32, i32) {
    %c0_i32 = arith.constant 0 : i32
    %c0_i32_0 = arith.constant 0 : i32
    %c0_i32_1 = arith.constant 0 : i32
    %c0_i32_2 = arith.constant 0 : i32
    return %arg0, %c0_i32, %c0_i32_0, %c0_i32_1 : i32, i32, i32, i32
  }
  func.func @transform_1(%arg0: i32) -> (i32, i32) {
    %c0_i32 = arith.constant 0 : i32
    %c0_i32_0 = arith.constant 0 : i32
    %c0_i32_1 = arith.constant 0 : i32
    return %c0_i32, %c0_i32_0 : i32, i32
  }
  func.func @transform_2(%arg0: i32) -> (i32, i32) {
    %c0_i32 = arith.constant 0 : i32
    %c0_i32_0 = arith.constant 0 : i32
    %c0_i32_1 = arith.constant 0 : i32
    return %c0_i32, %c0_i32_0 : i32, i32
  }
  func.func @transform_3(%arg0: i32) -> (i32, i32, i32, i32) {
    %c0_i32 = arith.constant 0 : i32
    %c0_i32_0 = arith.constant 0 : i32
    %c0_i32_1 = arith.constant 0 : i32
    %c0_i32_2 = arith.constant 0 : i32
    return %arg0, %c0_i32, %c0_i32_0, %c0_i32_1 : i32, i32, i32, i32
  }
}

module attributes {stable_mosaic.version = 11 : i64} {
  func.func @_ln_pw_kernel(%arg0: i32, %arg1: memref<256x32xf32, #tpu.memory_space<vmem>>, %arg2: memref<1x32xf32, #tpu.memory_space<vmem>>, %arg3: memref<1x32xf32, #tpu.memory_space<vmem>>, %arg4: memref<32x96xf32, #tpu.memory_space<vmem>>, %arg5: memref<1x96xf32, #tpu.memory_space<vmem>>, %arg6: memref<256x96xf32, #tpu.memory_space<vmem>>) attributes {dimension_semantics = [#tpu.dimension_semantics<parallel>], iteration_bounds = array<i64: 2>, scalar_prefetch = 0 : i64, scratch_operands = 0 : i64, tpu.core_type = #tpu.core_type<tc>, window_params = [{transform_indices = @transform_0, window_bounds = array<i64: 256, 32>}, {pipeline_mode = #tpu.pipeline_mode<synchronous>, transform_indices = @transform_1, window_bounds = array<i64: 1, 32>}, {pipeline_mode = #tpu.pipeline_mode<synchronous>, transform_indices = @transform_2, window_bounds = array<i64: 1, 32>}, {pipeline_mode = #tpu.pipeline_mode<synchronous>, transform_indices = @transform_3, window_bounds = array<i64: 32, 96>}, {pipeline_mode = #tpu.pipeline_mode<synchronous>, transform_indices = @transform_4, window_bounds = array<i64: 1, 96>}, {transform_indices = @transform_5, window_bounds = array<i64: 256, 96>}]} {
    %c0 = arith.constant 0 : index
    %c0_0 = arith.constant 0 : index
    %0 = vector.load %arg1[%c0, %c0_0] : memref<256x32xf32, #tpu.memory_space<vmem>>, vector<256x32xf32>
    %cst = arith.constant dense<0.000000e+00> : vector<256xf32>
    %1 = vector.multi_reduction <add>, %0, %cst [1] : vector<256x32xf32> to vector<256xf32>
    %2 = vector.shape_cast %1 : vector<256xf32> to vector<256x1xf32>
    %cst_1 = arith.constant 3.200000e+01 : f32
    %3 = vector.broadcast %cst_1 : f32 to vector<256x1xf32>
    %4 = arith.divf %2, %3 : vector<256x1xf32>
    %5 = vector.broadcast %4 : vector<256x1xf32> to vector<256x32xf32>
    %6 = arith.subf %0, %5 : vector<256x32xf32>
    %7 = arith.mulf %6, %6 : vector<256x32xf32>
    %cst_2 = arith.constant dense<0.000000e+00> : vector<256xf32>
    %8 = vector.multi_reduction <add>, %7, %cst_2 [1] : vector<256x32xf32> to vector<256xf32>
    %9 = vector.shape_cast %8 : vector<256xf32> to vector<256x1xf32>
    %cst_3 = arith.constant 3.200000e+01 : f32
    %10 = vector.broadcast %cst_3 : f32 to vector<256x1xf32>
    %11 = arith.divf %9, %10 : vector<256x1xf32>
    %cst_4 = arith.constant 9.99999974E-6 : f32
    %12 = vector.broadcast %cst_4 : f32 to vector<256x1xf32>
    %13 = arith.addf %11, %12 : vector<256x1xf32>
    %14 = math.rsqrt %13 : vector<256x1xf32>
    %15 = vector.broadcast %4 : vector<256x1xf32> to vector<256x32xf32>
    %16 = arith.subf %0, %15 : vector<256x32xf32>
    %17 = vector.broadcast %14 : vector<256x1xf32> to vector<256x32xf32>
    %18 = arith.mulf %16, %17 : vector<256x32xf32>
    %c0_5 = arith.constant 0 : index
    %c0_6 = arith.constant 0 : index
    %19 = vector.load %arg2[%c0_5, %c0_6] : memref<1x32xf32, #tpu.memory_space<vmem>>, vector<1x32xf32>
    %20 = vector.broadcast %19 : vector<1x32xf32> to vector<256x32xf32>
    %21 = arith.mulf %18, %20 : vector<256x32xf32>
    %c0_7 = arith.constant 0 : index
    %c0_8 = arith.constant 0 : index
    %22 = vector.load %arg3[%c0_7, %c0_8] : memref<1x32xf32, #tpu.memory_space<vmem>>, vector<1x32xf32>
    %23 = vector.broadcast %22 : vector<1x32xf32> to vector<256x32xf32>
    %24 = arith.addf %21, %23 : vector<256x32xf32>
    %c0_9 = arith.constant 0 : index
    %c0_10 = arith.constant 0 : index
    %25 = vector.load %arg4[%c0_9, %c0_10] : memref<32x96xf32, #tpu.memory_space<vmem>>, vector<32x96xf32>
    %cst_11 = arith.constant dense<0.000000e+00> : vector<256x96xf32>
    %26 = tpu.matmul %24, %25, %cst_11 {dimension_numbers = #tpu.dot_dimension_numbers<[1], [0], [0], [1], [0, 0, 1, 1], [], []>} : vector<256x32xf32>, vector<32x96xf32>, vector<256x96xf32> -> vector<256x96xf32>
    %c0_12 = arith.constant 0 : index
    %c0_13 = arith.constant 0 : index
    %27 = vector.load %arg5[%c0_12, %c0_13] : memref<1x96xf32, #tpu.memory_space<vmem>>, vector<1x96xf32>
    %28 = vector.broadcast %27 : vector<1x96xf32> to vector<256x96xf32>
    %29 = arith.addf %26, %28 : vector<256x96xf32>
    %c0_14 = arith.constant 0 : index
    %c0_15 = arith.constant 0 : index
    %30 = vector.load %arg6[%c0_14, %c0_15] : memref<256x96xf32, #tpu.memory_space<vmem>>, vector<256x96xf32>
    tpu.vector_store %arg6[%c0_14, %c0_15], %29 {strides = array<i32>} : memref<256x96xf32, #tpu.memory_space<vmem>>, vector<256x96xf32>,
    return
  }
  func.func @transform_0(%arg0: i32) -> (i32, i32) {
    %c0_i32 = arith.constant 0 : i32
    %c0_i32_0 = arith.constant 0 : i32
    return %arg0, %c0_i32 : i32, i32
  }
  func.func @transform_1(%arg0: i32) -> (i32, i32) {
    %c0_i32 = arith.constant 0 : i32
    %c0_i32_0 = arith.constant 0 : i32
    %c0_i32_1 = arith.constant 0 : i32
    return %c0_i32, %c0_i32_0 : i32, i32
  }
  func.func @transform_2(%arg0: i32) -> (i32, i32) {
    %c0_i32 = arith.constant 0 : i32
    %c0_i32_0 = arith.constant 0 : i32
    %c0_i32_1 = arith.constant 0 : i32
    return %c0_i32, %c0_i32_0 : i32, i32
  }
  func.func @transform_3(%arg0: i32) -> (i32, i32) {
    %c0_i32 = arith.constant 0 : i32
    %c0_i32_0 = arith.constant 0 : i32
    %c0_i32_1 = arith.constant 0 : i32
    return %c0_i32, %c0_i32_0 : i32, i32
  }
  func.func @transform_4(%arg0: i32) -> (i32, i32) {
    %c0_i32 = arith.constant 0 : i32
    %c0_i32_0 = arith.constant 0 : i32
    %c0_i32_1 = arith.constant 0 : i32
    return %c0_i32, %c0_i32_0 : i32, i32
  }
  func.func @transform_5(%arg0: i32) -> (i32, i32) {
    %c0_i32 = arith.constant 0 : i32
    %c0_i32_0 = arith.constant 0 : i32
    return %arg0, %c0_i32 : i32, i32
  }
}

module attributes {stable_mosaic.version = 11 : i64} {
  func.func @_chan_attn_kernel(%arg0: i32, %arg1: i32, %arg2: memref<4xf32, #tpu.memory_space<smem>>, %arg3: memref<1x1x8x256xf32, #tpu.memory_space<vmem>>, %arg4: memref<1x1x8x256xf32, #tpu.memory_space<vmem>>, %arg5: memref<1x1x8x256xf32, #tpu.memory_space<vmem>>, %arg6: memref<1x1x8x256xf32, #tpu.memory_space<vmem>>) attributes {dimension_semantics = [#tpu.dimension_semantics<parallel>, #tpu.dimension_semantics<parallel>], iteration_bounds = array<i64: 2, 4>, scalar_prefetch = 0 : i64, scratch_operands = 0 : i64, tpu.core_type = #tpu.core_type<tc>, window_params = [{transform_indices = @transform_0, window_bounds = array<i64: 4>}, {transform_indices = @transform_1, window_bounds = array<i64: 1, 1, 8, 256>}, {transform_indices = @transform_2, window_bounds = array<i64: 1, 1, 8, 256>}, {transform_indices = @transform_3, window_bounds = array<i64: 1, 1, 8, 256>}, {transform_indices = @transform_4, window_bounds = array<i64: 1, 1, 8, 256>}]} {
    %0 = arith.index_cast %arg1 : i32 to index
    %1 = memref.load %arg2[%0] : memref<4xf32, #tpu.memory_space<smem>>
    %c0 = arith.constant 0 : index
    %c0_0 = arith.constant 0 : index
    %c0_1 = arith.constant 0 : index
    %c0_2 = arith.constant 0 : index
    %2 = vector.load %arg3[%c0, %c0_0, %c0_1, %c0_2] : memref<1x1x8x256xf32, #tpu.memory_space<vmem>>, vector<1x1x8x256xf32>
    %3 = vector.shape_cast %2 : vector<1x1x8x256xf32> to vector<8x256xf32>
    %c0_3 = arith.constant 0 : index
    %c0_4 = arith.constant 0 : index
    %c0_5 = arith.constant 0 : index
    %c0_6 = arith.constant 0 : index
    %4 = vector.load %arg4[%c0_3, %c0_4, %c0_5, %c0_6] : memref<1x1x8x256xf32, #tpu.memory_space<vmem>>, vector<1x1x8x256xf32>
    %5 = vector.shape_cast %4 : vector<1x1x8x256xf32> to vector<8x256xf32>
    %c0_7 = arith.constant 0 : index
    %c0_8 = arith.constant 0 : index
    %c0_9 = arith.constant 0 : index
    %c0_10 = arith.constant 0 : index
    %6 = vector.load %arg5[%c0_7, %c0_8, %c0_9, %c0_10] : memref<1x1x8x256xf32, #tpu.memory_space<vmem>>, vector<1x1x8x256xf32>
    %7 = vector.shape_cast %6 : vector<1x1x8x256xf32> to vector<8x256xf32>
    %8 = arith.mulf %3, %3 : vector<8x256xf32>
    %cst = arith.constant dense<0.000000e+00> : vector<8xf32>
    %9 = vector.multi_reduction <add>, %8, %cst [1] : vector<8x256xf32> to vector<8xf32>
    %10 = vector.shape_cast %9 : vector<8xf32> to vector<8x1xf32>
    %11 = math.sqrt %10 : vector<8x1xf32>
    %cst_11 = arith.constant 9.99999996E-13 : f32
    %12 = vector.broadcast %cst_11 : f32 to vector<8x1xf32>
    %13 = arith.maximumf %11, %12 : vector<8x1xf32>
    %14 = vector.broadcast %13 : vector<8x1xf32> to vector<8x256xf32>
    %15 = arith.divf %3, %14 : vector<8x256xf32>
    %16 = arith.mulf %5, %5 : vector<8x256xf32>
    %cst_12 = arith.constant dense<0.000000e+00> : vector<8xf32>
    %17 = vector.multi_reduction <add>, %16, %cst_12 [1] : vector<8x256xf32> to vector<8xf32>
    %18 = vector.shape_cast %17 : vector<8xf32> to vector<8x1xf32>
    %19 = math.sqrt %18 : vector<8x1xf32>
    %cst_13 = arith.constant 9.99999996E-13 : f32
    %20 = vector.broadcast %cst_13 : f32 to vector<8x1xf32>
    %21 = arith.maximumf %19, %20 : vector<8x1xf32>
    %22 = vector.broadcast %21 : vector<8x1xf32> to vector<8x256xf32>
    %23 = arith.divf %5, %22 : vector<8x256xf32>
    %cst_14 = arith.constant dense<0.000000e+00> : vector<8x8xf32>
    %24 = tpu.matmul %15, %23, %cst_14 {dimension_numbers = #tpu.dot_dimension_numbers<[1], [1], [0], [0], [0, 0, 1, 0], [], []>} : vector<8x256xf32>, vector<8x256xf32>, vector<8x8xf32> -> vector<8x8xf32>
    %25 = vector.broadcast %1 : f32 to vector<8x8xf32>
    %26 = arith.mulf %24, %25 : vector<8x8xf32>
    %cst_15 = arith.constant dense<0xFF800000> : vector<8xf32>
    %27 = vector.multi_reduction <maximumf>, %26, %cst_15 [1] : vector<8x8xf32> to vector<8xf32>
    %28 = vector.shape_cast %27 : vector<8xf32> to vector<8x1xf32>
    %29 = vector.broadcast %28 : vector<8x1xf32> to vector<8x8xf32>
    %30 = arith.subf %26, %29 : vector<8x8xf32>
    %31 = math.exp %30 : vector<8x8xf32>
    %cst_16 = arith.constant dense<0.000000e+00> : vector<8xf32>
    %32 = vector.multi_reduction <add>, %31, %cst_16 [1] : vector<8x8xf32> to vector<8xf32>
    %33 = vector.shape_cast %32 : vector<8xf32> to vector<8x1xf32>
    %34 = vector.broadcast %33 : vector<8x1xf32> to vector<8x8xf32>
    %35 = arith.divf %31, %34 : vector<8x8xf32>
    %cst_17 = arith.constant dense<0.000000e+00> : vector<8x256xf32>
    %36 = tpu.matmul %35, %7, %cst_17 {dimension_numbers = #tpu.dot_dimension_numbers<[1], [0], [0], [1], [0, 0, 1, 1], [], []>} : vector<8x8xf32>, vector<8x256xf32>, vector<8x256xf32> -> vector<8x256xf32>
    %37 = vector.shape_cast %36 : vector<8x256xf32> to vector<1x1x8x256xf32>
    %c0_18 = arith.constant 0 : index
    %c0_19 = arith.constant 0 : index
    %c0_20 = arith.constant 0 : index
    %c0_21 = arith.constant 0 : index
    %38 = vector.load %arg6[%c0_18, %c0_19, %c0_20, %c0_21] : memref<1x1x8x256xf32, #tpu.memory_space<vmem>>, vector<1x1x8x256xf32>
    tpu.vector_store %arg6[%c0_18, %c0_19, %c0_20, %c0_21], %37 {strides = array<i32>} : memref<1x1x8x256xf32, #tpu.memory_space<vmem>>, vector<1x1x8x256xf32>,
    return
  }
  func.func @transform_0(%arg0: i32, %arg1: i32) -> i32 {
    %c0_i32 = arith.constant 0 : i32
    %c0_i32_0 = arith.constant 0 : i32
    return %c0_i32 : i32
  }
  func.func @transform_1(%arg0: i32, %arg1: i32) -> (i32, i32, i32, i32) {
    %c0_i32 = arith.constant 0 : i32
    %c0_i32_0 = arith.constant 0 : i32
    %c0_i32_1 = arith.constant 0 : i32
    return %arg0, %arg1, %c0_i32, %c0_i32_0 : i32, i32, i32, i32
  }
  func.func @transform_2(%arg0: i32, %arg1: i32) -> (i32, i32, i32, i32) {
    %c0_i32 = arith.constant 0 : i32
    %c0_i32_0 = arith.constant 0 : i32
    %c0_i32_1 = arith.constant 0 : i32
    return %arg0, %arg1, %c0_i32, %c0_i32_0 : i32, i32, i32, i32
  }
  func.func @transform_3(%arg0: i32, %arg1: i32) -> (i32, i32, i32, i32) {
    %c0_i32 = arith.constant 0 : i32
    %c0_i32_0 = arith.constant 0 : i32
    %c0_i32_1 = arith.constant 0 : i32
    return %arg0, %arg1, %c0_i32, %c0_i32_0 : i32, i32, i32, i32
  }
  func.func @transform_4(%arg0: i32, %arg1: i32) -> (i32, i32, i32, i32) {
    %c0_i32 = arith.constant 0 : i32
    %c0_i32_0 = arith.constant 0 : i32
    %c0_i32_1 = arith.constant 0 : i32
    return %arg0, %arg1, %c0_i32, %c0_i32_0 : i32, i32, i32, i32
  }
}

module attributes {stable_mosaic.version = 11 : i64} {
  func.func @_pw_res_kernel(%arg0: i32, %arg1: memref<256x32xf32, #tpu.memory_space<vmem>>, %arg2: memref<32x32xf32, #tpu.memory_space<vmem>>, %arg3: memref<1x32xf32, #tpu.memory_space<vmem>>, %arg4: memref<256x32xf32, #tpu.memory_space<vmem>>, %arg5: memref<256x32xf32, #tpu.memory_space<vmem>>) attributes {dimension_semantics = [#tpu.dimension_semantics<parallel>], iteration_bounds = array<i64: 2>, scalar_prefetch = 0 : i64, scratch_operands = 0 : i64, tpu.core_type = #tpu.core_type<tc>, window_params = [{transform_indices = @transform_0, window_bounds = array<i64: 256, 32>}, {pipeline_mode = #tpu.pipeline_mode<synchronous>, transform_indices = @transform_1, window_bounds = array<i64: 32, 32>}, {pipeline_mode = #tpu.pipeline_mode<synchronous>, transform_indices = @transform_2, window_bounds = array<i64: 1, 32>}, {transform_indices = @transform_3, window_bounds = array<i64: 256, 32>}, {transform_indices = @transform_4, window_bounds = array<i64: 256, 32>}]} {
    %c0 = arith.constant 0 : index
    %c0_0 = arith.constant 0 : index
    %0 = vector.load %arg1[%c0, %c0_0] : memref<256x32xf32, #tpu.memory_space<vmem>>, vector<256x32xf32>
    %c0_1 = arith.constant 0 : index
    %c0_2 = arith.constant 0 : index
    %1 = vector.load %arg2[%c0_1, %c0_2] : memref<32x32xf32, #tpu.memory_space<vmem>>, vector<32x32xf32>
    %cst = arith.constant dense<0.000000e+00> : vector<256x32xf32>
    %2 = tpu.matmul %0, %1, %cst {dimension_numbers = #tpu.dot_dimension_numbers<[1], [0], [0], [1], [0, 0, 1, 1], [], []>} : vector<256x32xf32>, vector<32x32xf32>, vector<256x32xf32> -> vector<256x32xf32>
    %c0_3 = arith.constant 0 : index
    %c0_4 = arith.constant 0 : index
    %3 = vector.load %arg3[%c0_3, %c0_4] : memref<1x32xf32, #tpu.memory_space<vmem>>, vector<1x32xf32>
    %4 = vector.broadcast %3 : vector<1x32xf32> to vector<256x32xf32>
    %5 = arith.addf %2, %4 : vector<256x32xf32>
    %c0_5 = arith.constant 0 : index
    %c0_6 = arith.constant 0 : index
    %6 = vector.load %arg4[%c0_5, %c0_6] : memref<256x32xf32, #tpu.memory_space<vmem>>, vector<256x32xf32>
    %7 = arith.addf %5, %6 : vector<256x32xf32>
    %c0_7 = arith.constant 0 : index
    %c0_8 = arith.constant 0 : index
    %8 = vector.load %arg5[%c0_7, %c0_8] : memref<256x32xf32, #tpu.memory_space<vmem>>, vector<256x32xf32>
    tpu.vector_store %arg5[%c0_7, %c0_8], %7 {strides = array<i32>} : memref<256x32xf32, #tpu.memory_space<vmem>>, vector<256x32xf32>,
    return
  }
  func.func @transform_0(%arg0: i32) -> (i32, i32) {
    %c0_i32 = arith.constant 0 : i32
    %c0_i32_0 = arith.constant 0 : i32
    return %arg0, %c0_i32 : i32, i32
  }
  func.func @transform_1(%arg0: i32) -> (i32, i32) {
    %c0_i32 = arith.constant 0 : i32
    %c0_i32_0 = arith.constant 0 : i32
    %c0_i32_1 = arith.constant 0 : i32
    return %c0_i32, %c0_i32_0 : i32, i32
  }
  func.func @transform_2(%arg0: i32) -> (i32, i32) {
    %c0_i32 = arith.constant 0 : i32
    %c0_i32_0 = arith.constant 0 : i32
    %c0_i32_1 = arith.constant 0 : i32
    return %c0_i32, %c0_i32_0 : i32, i32
  }
  func.func @transform_3(%arg0: i32) -> (i32, i32) {
    %c0_i32 = arith.constant 0 : i32
    %c0_i32_0 = arith.constant 0 : i32
    return %arg0, %c0_i32 : i32, i32
  }
  func.func @transform_4(%arg0: i32) -> (i32, i32) {
    %c0_i32 = arith.constant 0 : i32
    %c0_i32_0 = arith.constant 0 : i32
    return %arg0, %c0_i32 : i32, i32
  }
}

module attributes {stable_mosaic.version = 11 : i64} {
  func.func @_ln_pw_kernel(%arg0: i32, %arg1: memref<256x32xf32, #tpu.memory_space<vmem>>, %arg2: memref<1x32xf32, #tpu.memory_space<vmem>>, %arg3: memref<1x32xf32, #tpu.memory_space<vmem>>, %arg4: memref<32x128xf32, #tpu.memory_space<vmem>>, %arg5: memref<1x128xf32, #tpu.memory_space<vmem>>, %arg6: memref<256x128xf32, #tpu.memory_space<vmem>>) attributes {dimension_semantics = [#tpu.dimension_semantics<parallel>], iteration_bounds = array<i64: 2>, scalar_prefetch = 0 : i64, scratch_operands = 0 : i64, tpu.core_type = #tpu.core_type<tc>, window_params = [{transform_indices = @transform_0, window_bounds = array<i64: 256, 32>}, {pipeline_mode = #tpu.pipeline_mode<synchronous>, transform_indices = @transform_1, window_bounds = array<i64: 1, 32>}, {pipeline_mode = #tpu.pipeline_mode<synchronous>, transform_indices = @transform_2, window_bounds = array<i64: 1, 32>}, {pipeline_mode = #tpu.pipeline_mode<synchronous>, transform_indices = @transform_3, window_bounds = array<i64: 32, 128>}, {pipeline_mode = #tpu.pipeline_mode<synchronous>, transform_indices = @transform_4, window_bounds = array<i64: 1, 128>}, {transform_indices = @transform_5, window_bounds = array<i64: 256, 128>}]} {
    %c0 = arith.constant 0 : index
    %c0_0 = arith.constant 0 : index
    %0 = vector.load %arg1[%c0, %c0_0] : memref<256x32xf32, #tpu.memory_space<vmem>>, vector<256x32xf32>
    %cst = arith.constant dense<0.000000e+00> : vector<256xf32>
    %1 = vector.multi_reduction <add>, %0, %cst [1] : vector<256x32xf32> to vector<256xf32>
    %2 = vector.shape_cast %1 : vector<256xf32> to vector<256x1xf32>
    %cst_1 = arith.constant 3.200000e+01 : f32
    %3 = vector.broadcast %cst_1 : f32 to vector<256x1xf32>
    %4 = arith.divf %2, %3 : vector<256x1xf32>
    %5 = vector.broadcast %4 : vector<256x1xf32> to vector<256x32xf32>
    %6 = arith.subf %0, %5 : vector<256x32xf32>
    %7 = arith.mulf %6, %6 : vector<256x32xf32>
    %cst_2 = arith.constant dense<0.000000e+00> : vector<256xf32>
    %8 = vector.multi_reduction <add>, %7, %cst_2 [1] : vector<256x32xf32> to vector<256xf32>
    %9 = vector.shape_cast %8 : vector<256xf32> to vector<256x1xf32>
    %cst_3 = arith.constant 3.200000e+01 : f32
    %10 = vector.broadcast %cst_3 : f32 to vector<256x1xf32>
    %11 = arith.divf %9, %10 : vector<256x1xf32>
    %cst_4 = arith.constant 9.99999974E-6 : f32
    %12 = vector.broadcast %cst_4 : f32 to vector<256x1xf32>
    %13 = arith.addf %11, %12 : vector<256x1xf32>
    %14 = math.rsqrt %13 : vector<256x1xf32>
    %15 = vector.broadcast %4 : vector<256x1xf32> to vector<256x32xf32>
    %16 = arith.subf %0, %15 : vector<256x32xf32>
    %17 = vector.broadcast %14 : vector<256x1xf32> to vector<256x32xf32>
    %18 = arith.mulf %16, %17 : vector<256x32xf32>
    %c0_5 = arith.constant 0 : index
    %c0_6 = arith.constant 0 : index
    %19 = vector.load %arg2[%c0_5, %c0_6] : memref<1x32xf32, #tpu.memory_space<vmem>>, vector<1x32xf32>
    %20 = vector.broadcast %19 : vector<1x32xf32> to vector<256x32xf32>
    %21 = arith.mulf %18, %20 : vector<256x32xf32>
    %c0_7 = arith.constant 0 : index
    %c0_8 = arith.constant 0 : index
    %22 = vector.load %arg3[%c0_7, %c0_8] : memref<1x32xf32, #tpu.memory_space<vmem>>, vector<1x32xf32>
    %23 = vector.broadcast %22 : vector<1x32xf32> to vector<256x32xf32>
    %24 = arith.addf %21, %23 : vector<256x32xf32>
    %c0_9 = arith.constant 0 : index
    %c0_10 = arith.constant 0 : index
    %25 = vector.load %arg4[%c0_9, %c0_10] : memref<32x128xf32, #tpu.memory_space<vmem>>, vector<32x128xf32>
    %cst_11 = arith.constant dense<0.000000e+00> : vector<256x128xf32>
    %26 = tpu.matmul %24, %25, %cst_11 {dimension_numbers = #tpu.dot_dimension_numbers<[1], [0], [0], [1], [0, 0, 1, 1], [], []>} : vector<256x32xf32>, vector<32x128xf32>, vector<256x128xf32> -> vector<256x128xf32>
    %c0_12 = arith.constant 0 : index
    %c0_13 = arith.constant 0 : index
    %27 = vector.load %arg5[%c0_12, %c0_13] : memref<1x128xf32, #tpu.memory_space<vmem>>, vector<1x128xf32>
    %28 = vector.broadcast %27 : vector<1x128xf32> to vector<256x128xf32>
    %29 = arith.addf %26, %28 : vector<256x128xf32>
    %c0_14 = arith.constant 0 : index
    %c0_15 = arith.constant 0 : index
    %30 = vector.load %arg6[%c0_14, %c0_15] : memref<256x128xf32, #tpu.memory_space<vmem>>, vector<256x128xf32>
    tpu.vector_store %arg6[%c0_14, %c0_15], %29 {strides = array<i32>} : memref<256x128xf32, #tpu.memory_space<vmem>>, vector<256x128xf32>,
    return
  }
  func.func @transform_0(%arg0: i32) -> (i32, i32) {
    %c0_i32 = arith.constant 0 : i32
    %c0_i32_0 = arith.constant 0 : i32
    return %arg0, %c0_i32 : i32, i32
  }
  func.func @transform_1(%arg0: i32) -> (i32, i32) {
    %c0_i32 = arith.constant 0 : i32
    %c0_i32_0 = arith.constant 0 : i32
    %c0_i32_1 = arith.constant 0 : i32
    return %c0_i32, %c0_i32_0 : i32, i32
  }
  func.func @transform_2(%arg0: i32) -> (i32, i32) {
    %c0_i32 = arith.constant 0 : i32
    %c0_i32_0 = arith.constant 0 : i32
    %c0_i32_1 = arith.constant 0 : i32
    return %c0_i32, %c0_i32_0 : i32, i32
  }
  func.func @transform_3(%arg0: i32) -> (i32, i32) {
    %c0_i32 = arith.constant 0 : i32
    %c0_i32_0 = arith.constant 0 : i32
    %c0_i32_1 = arith.constant 0 : i32
    return %c0_i32, %c0_i32_0 : i32, i32
  }
  func.func @transform_4(%arg0: i32) -> (i32, i32) {
    %c0_i32 = arith.constant 0 : i32
    %c0_i32_0 = arith.constant 0 : i32
    %c0_i32_1 = arith.constant 0 : i32
    return %c0_i32, %c0_i32_0 : i32, i32
  }
  func.func @transform_5(%arg0: i32) -> (i32, i32) {
    %c0_i32 = arith.constant 0 : i32
    %c0_i32_0 = arith.constant 0 : i32
    return %arg0, %c0_i32 : i32, i32
  }
}

module attributes {stable_mosaic.version = 11 : i64} {
  func.func @_dwconv3x3_kernel(%arg0: i32, %arg1: memref<1x18x18x128xf32, #tpu.memory_space<vmem>>, %arg2: memref<9x128xf32, #tpu.memory_space<vmem>>, %arg3: memref<1x128xf32, #tpu.memory_space<vmem>>, %arg4: memref<1x16x16x128xf32, #tpu.memory_space<vmem>>) attributes {dimension_semantics = [#tpu.dimension_semantics<parallel>], iteration_bounds = array<i64: 2>, scalar_prefetch = 0 : i64, scratch_operands = 0 : i64, tpu.core_type = #tpu.core_type<tc>, window_params = [{transform_indices = @transform_0, window_bounds = array<i64: 1, 18, 18, 128>}, {pipeline_mode = #tpu.pipeline_mode<synchronous>, transform_indices = @transform_1, window_bounds = array<i64: 9, 128>}, {pipeline_mode = #tpu.pipeline_mode<synchronous>, transform_indices = @transform_2, window_bounds = array<i64: 1, 128>}, {transform_indices = @transform_3, window_bounds = array<i64: 1, 16, 16, 128>}]} {
    %c0 = arith.constant 0 : index
    %c0_0 = arith.constant 0 : index
    %c0_1 = arith.constant 0 : index
    %c0_2 = arith.constant 0 : index
    %0 = vector.load %arg1[%c0, %c0_0, %c0_1, %c0_2] : memref<1x18x18x128xf32, #tpu.memory_space<vmem>>, vector<1x18x18x128xf32>
    %c0_3 = arith.constant 0 : index
    %c0_4 = arith.constant 0 : index
    %1 = vector.load %arg2[%c0_3, %c0_4] : memref<9x128xf32, #tpu.memory_space<vmem>>, vector<9x128xf32>
    %cst = arith.constant 0.000000e+00 : f32
    %2 = vector.broadcast %cst : f32 to vector<16x16x128xf32>
    %3 = vector.extract_strided_slice %0 {offsets = [0, 0, 0, 0], sizes = [1, 16, 16, 128], strides = [1, 1, 1, 1]} : vector<1x18x18x128xf32> to vector<1x16x16x128xf32>
    %4 = vector.shape_cast %3 : vector<1x16x16x128xf32> to vector<16x16x128xf32>
    %5 = vector.extract_strided_slice %1 {offsets = [0, 0], sizes = [1, 128], strides = [1, 1]} : vector<9x128xf32> to vector<1x128xf32>
    %6 = vector.shape_cast %5 : vector<1x128xf32> to vector<1x1x128xf32>
    %7 = vector.broadcast %6 : vector<1x1x128xf32> to vector<16x16x128xf32>
    %8 = arith.mulf %4, %7 : vector<16x16x128xf32>
    %9 = arith.addf %2, %8 : vector<16x16x128xf32>
    %10 = vector.extract_strided_slice %0 {offsets = [0, 0, 1, 0], sizes = [1, 16, 16, 128], strides = [1, 1, 1, 1]} : vector<1x18x18x128xf32> to vector<1x16x16x128xf32>
    %11 = vector.shape_cast %10 : vector<1x16x16x128xf32> to vector<16x16x128xf32>
    %12 = vector.extract_strided_slice %1 {offsets = [1, 0], sizes = [1, 128], strides = [1, 1]} : vector<9x128xf32> to vector<1x128xf32>
    %13 = vector.shape_cast %12 : vector<1x128xf32> to vector<1x1x128xf32>
    %14 = vector.broadcast %13 : vector<1x1x128xf32> to vector<16x16x128xf32>
    %15 = arith.mulf %11, %14 : vector<16x16x128xf32>
    %16 = arith.addf %9, %15 : vector<16x16x128xf32>
    %17 = vector.extract_strided_slice %0 {offsets = [0, 0, 2, 0], sizes = [1, 16, 16, 128], strides = [1, 1, 1, 1]} : vector<1x18x18x128xf32> to vector<1x16x16x128xf32>
    %18 = vector.shape_cast %17 : vector<1x16x16x128xf32> to vector<16x16x128xf32>
    %19 = vector.extract_strided_slice %1 {offsets = [2, 0], sizes = [1, 128], strides = [1, 1]} : vector<9x128xf32> to vector<1x128xf32>
    %20 = vector.shape_cast %19 : vector<1x128xf32> to vector<1x1x128xf32>
    %21 = vector.broadcast %20 : vector<1x1x128xf32> to vector<16x16x128xf32>
    %22 = arith.mulf %18, %21 : vector<16x16x128xf32>
    %23 = arith.addf %16, %22 : vector<16x16x128xf32>
    %24 = vector.extract_strided_slice %0 {offsets = [0, 1, 0, 0], sizes = [1, 16, 16, 128], strides = [1, 1, 1, 1]} : vector<1x18x18x128xf32> to vector<1x16x16x128xf32>
    %25 = vector.shape_cast %24 : vector<1x16x16x128xf32> to vector<16x16x128xf32>
    %26 = vector.extract_strided_slice %1 {offsets = [3, 0], sizes = [1, 128], strides = [1, 1]} : vector<9x128xf32> to vector<1x128xf32>
    %27 = vector.shape_cast %26 : vector<1x128xf32> to vector<1x1x128xf32>
    %28 = vector.broadcast %27 : vector<1x1x128xf32> to vector<16x16x128xf32>
    %29 = arith.mulf %25, %28 : vector<16x16x128xf32>
    %30 = arith.addf %23, %29 : vector<16x16x128xf32>
    %31 = vector.extract_strided_slice %0 {offsets = [0, 1, 1, 0], sizes = [1, 16, 16, 128], strides = [1, 1, 1, 1]} : vector<1x18x18x128xf32> to vector<1x16x16x128xf32>
    %32 = vector.shape_cast %31 : vector<1x16x16x128xf32> to vector<16x16x128xf32>
    %33 = vector.extract_strided_slice %1 {offsets = [4, 0], sizes = [1, 128], strides = [1, 1]} : vector<9x128xf32> to vector<1x128xf32>
    %34 = vector.shape_cast %33 : vector<1x128xf32> to vector<1x1x128xf32>
    %35 = vector.broadcast %34 : vector<1x1x128xf32> to vector<16x16x128xf32>
    %36 = arith.mulf %32, %35 : vector<16x16x128xf32>
    %37 = arith.addf %30, %36 : vector<16x16x128xf32>
    %38 = vector.extract_strided_slice %0 {offsets = [0, 1, 2, 0], sizes = [1, 16, 16, 128], strides = [1, 1, 1, 1]} : vector<1x18x18x128xf32> to vector<1x16x16x128xf32>
    %39 = vector.shape_cast %38 : vector<1x16x16x128xf32> to vector<16x16x128xf32>
    %40 = vector.extract_strided_slice %1 {offsets = [5, 0], sizes = [1, 128], strides = [1, 1]} : vector<9x128xf32> to vector<1x128xf32>
    %41 = vector.shape_cast %40 : vector<1x128xf32> to vector<1x1x128xf32>
    %42 = vector.broadcast %41 : vector<1x1x128xf32> to vector<16x16x128xf32>
    %43 = arith.mulf %39, %42 : vector<16x16x128xf32>
    %44 = arith.addf %37, %43 : vector<16x16x128xf32>
    %45 = vector.extract_strided_slice %0 {offsets = [0, 2, 0, 0], sizes = [1, 16, 16, 128], strides = [1, 1, 1, 1]} : vector<1x18x18x128xf32> to vector<1x16x16x128xf32>
    %46 = vector.shape_cast %45 : vector<1x16x16x128xf32> to vector<16x16x128xf32>
    %47 = vector.extract_strided_slice %1 {offsets = [6, 0], sizes = [1, 128], strides = [1, 1]} : vector<9x128xf32> to vector<1x128xf32>
    %48 = vector.shape_cast %47 : vector<1x128xf32> to vector<1x1x128xf32>
    %49 = vector.broadcast %48 : vector<1x1x128xf32> to vector<16x16x128xf32>
    %50 = arith.mulf %46, %49 : vector<16x16x128xf32>
    %51 = arith.addf %44, %50 : vector<16x16x128xf32>
    %52 = vector.extract_strided_slice %0 {offsets = [0, 2, 1, 0], sizes = [1, 16, 16, 128], strides = [1, 1, 1, 1]} : vector<1x18x18x128xf32> to vector<1x16x16x128xf32>
    %53 = vector.shape_cast %52 : vector<1x16x16x128xf32> to vector<16x16x128xf32>
    %54 = vector.extract_strided_slice %1 {offsets = [7, 0], sizes = [1, 128], strides = [1, 1]} : vector<9x128xf32> to vector<1x128xf32>
    %55 = vector.shape_cast %54 : vector<1x128xf32> to vector<1x1x128xf32>
    %56 = vector.broadcast %55 : vector<1x1x128xf32> to vector<16x16x128xf32>
    %57 = arith.mulf %53, %56 : vector<16x16x128xf32>
    %58 = arith.addf %51, %57 : vector<16x16x128xf32>
    %59 = vector.extract_strided_slice %0 {offsets = [0, 2, 2, 0], sizes = [1, 16, 16, 128], strides = [1, 1, 1, 1]} : vector<1x18x18x128xf32> to vector<1x16x16x128xf32>
    %60 = vector.shape_cast %59 : vector<1x16x16x128xf32> to vector<16x16x128xf32>
    %61 = vector.extract_strided_slice %1 {offsets = [8, 0], sizes = [1, 128], strides = [1, 1]} : vector<9x128xf32> to vector<1x128xf32>
    %62 = vector.shape_cast %61 : vector<1x128xf32> to vector<1x1x128xf32>
    %63 = vector.broadcast %62 : vector<1x1x128xf32> to vector<16x16x128xf32>
    %64 = arith.mulf %60, %63 : vector<16x16x128xf32>
    %65 = arith.addf %58, %64 : vector<16x16x128xf32>
    %c0_5 = arith.constant 0 : index
    %c0_6 = arith.constant 0 : index
    %66 = vector.load %arg3[%c0_5, %c0_6] : memref<1x128xf32, #tpu.memory_space<vmem>>, vector<1x128xf32>
    %67 = vector.shape_cast %66 : vector<1x128xf32> to vector<1x1x128xf32>
    %68 = vector.broadcast %67 : vector<1x1x128xf32> to vector<16x16x128xf32>
    %69 = arith.addf %65, %68 : vector<16x16x128xf32>
    %70 = vector.shape_cast %69 : vector<16x16x128xf32> to vector<1x16x16x128xf32>
    %c0_7 = arith.constant 0 : index
    %c0_8 = arith.constant 0 : index
    %c0_9 = arith.constant 0 : index
    %c0_10 = arith.constant 0 : index
    %71 = vector.load %arg4[%c0_7, %c0_8, %c0_9, %c0_10] : memref<1x16x16x128xf32, #tpu.memory_space<vmem>>, vector<1x16x16x128xf32>
    tpu.vector_store %arg4[%c0_7, %c0_8, %c0_9, %c0_10], %70 {strides = array<i32>} : memref<1x16x16x128xf32, #tpu.memory_space<vmem>>, vector<1x16x16x128xf32>,
    return
  }
  func.func @transform_0(%arg0: i32) -> (i32, i32, i32, i32) {
    %c0_i32 = arith.constant 0 : i32
    %c0_i32_0 = arith.constant 0 : i32
    %c0_i32_1 = arith.constant 0 : i32
    %c0_i32_2 = arith.constant 0 : i32
    return %arg0, %c0_i32, %c0_i32_0, %c0_i32_1 : i32, i32, i32, i32
  }
  func.func @transform_1(%arg0: i32) -> (i32, i32) {
    %c0_i32 = arith.constant 0 : i32
    %c0_i32_0 = arith.constant 0 : i32
    %c0_i32_1 = arith.constant 0 : i32
    return %c0_i32, %c0_i32_0 : i32, i32
  }
  func.func @transform_2(%arg0: i32) -> (i32, i32) {
    %c0_i32 = arith.constant 0 : i32
    %c0_i32_0 = arith.constant 0 : i32
    %c0_i32_1 = arith.constant 0 : i32
    return %c0_i32, %c0_i32_0 : i32, i32
  }
  func.func @transform_3(%arg0: i32) -> (i32, i32, i32, i32) {
    %c0_i32 = arith.constant 0 : i32
    %c0_i32_0 = arith.constant 0 : i32
    %c0_i32_1 = arith.constant 0 : i32
    %c0_i32_2 = arith.constant 0 : i32
    return %arg0, %c0_i32, %c0_i32_0, %c0_i32_1 : i32, i32, i32, i32
  }
}

module attributes {stable_mosaic.version = 11 : i64} {
  func.func @_gated_pw_res_kernel(%arg0: i32, %arg1: memref<256x128xf32, #tpu.memory_space<vmem>>, %arg2: memref<64x32xf32, #tpu.memory_space<vmem>>, %arg3: memref<1x32xf32, #tpu.memory_space<vmem>>, %arg4: memref<256x32xf32, #tpu.memory_space<vmem>>, %arg5: memref<256x32xf32, #tpu.memory_space<vmem>>) attributes {dimension_semantics = [#tpu.dimension_semantics<parallel>], iteration_bounds = array<i64: 2>, scalar_prefetch = 0 : i64, scratch_operands = 0 : i64, tpu.core_type = #tpu.core_type<tc>, window_params = [{transform_indices = @transform_0, window_bounds = array<i64: 256, 128>}, {pipeline_mode = #tpu.pipeline_mode<synchronous>, transform_indices = @transform_1, window_bounds = array<i64: 64, 32>}, {pipeline_mode = #tpu.pipeline_mode<synchronous>, transform_indices = @transform_2, window_bounds = array<i64: 1, 32>}, {transform_indices = @transform_3, window_bounds = array<i64: 256, 32>}, {transform_indices = @transform_4, window_bounds = array<i64: 256, 32>}]} {
    %c0 = arith.constant 0 : index
    %c0_0 = arith.constant 0 : index
    %0 = vector.load %arg1[%c0, %c0_0] : memref<256x128xf32, #tpu.memory_space<vmem>>, vector<256x128xf32>
    %1 = vector.extract_strided_slice %0 {offsets = [0, 0], sizes = [256, 64], strides = [1, 1]} : vector<256x128xf32> to vector<256x64xf32>
    %cst = arith.constant 5.000000e-01 : f32
    %2 = vector.broadcast %cst : f32 to vector<256x64xf32>
    %3 = arith.mulf %2, %1 : vector<256x64xf32>
    %cst_1 = arith.constant 4.471500e-02 : f32
    %4 = vector.broadcast %cst_1 : f32 to vector<256x64xf32>
    %5 = arith.mulf %4, %1 : vector<256x64xf32>
    %6 = arith.mulf %5, %1 : vector<256x64xf32>
    %7 = arith.mulf %6, %1 : vector<256x64xf32>
    %8 = arith.addf %1, %7 : vector<256x64xf32>
    %cst_2 = arith.constant 0.797884583 : f32
    %9 = vector.broadcast %cst_2 : f32 to vector<256x64xf32>
    %10 = arith.mulf %9, %8 : vector<256x64xf32>
    %11 = math.tanh %10 : vector<256x64xf32>
    %cst_3 = arith.constant 1.000000e+00 : f32
    %12 = vector.broadcast %cst_3 : f32 to vector<256x64xf32>
    %13 = arith.addf %12, %11 : vector<256x64xf32>
    %14 = arith.mulf %3, %13 : vector<256x64xf32>
    %15 = vector.extract_strided_slice %0 {offsets = [0, 64], sizes = [256, 64], strides = [1, 1]} : vector<256x128xf32> to vector<256x64xf32>
    %16 = arith.mulf %14, %15 : vector<256x64xf32>
    %c0_4 = arith.constant 0 : index
    %c0_5 = arith.constant 0 : index
    %17 = vector.load %arg2[%c0_4, %c0_5] : memref<64x32xf32, #tpu.memory_space<vmem>>, vector<64x32xf32>
    %cst_6 = arith.constant dense<0.000000e+00> : vector<256x32xf32>
    %18 = tpu.matmul %16, %17, %cst_6 {dimension_numbers = #tpu.dot_dimension_numbers<[1], [0], [0], [1], [0, 0, 1, 1], [], []>} : vector<256x64xf32>, vector<64x32xf32>, vector<256x32xf32> -> vector<256x32xf32>
    %c0_7 = arith.constant 0 : index
    %c0_8 = arith.constant 0 : index
    %19 = vector.load %arg3[%c0_7, %c0_8] : memref<1x32xf32, #tpu.memory_space<vmem>>, vector<1x32xf32>
    %20 = vector.broadcast %19 : vector<1x32xf32> to vector<256x32xf32>
    %21 = arith.addf %18, %20 : vector<256x32xf32>
    %c0_9 = arith.constant 0 : index
    %c0_10 = arith.constant 0 : index
    %22 = vector.load %arg4[%c0_9, %c0_10] : memref<256x32xf32, #tpu.memory_space<vmem>>, vector<256x32xf32>
    %23 = arith.addf %21, %22 : vector<256x32xf32>
    %c0_11 = arith.constant 0 : index
    %c0_12 = arith.constant 0 : index
    %24 = vector.load %arg5[%c0_11, %c0_12] : memref<256x32xf32, #tpu.memory_space<vmem>>, vector<256x32xf32>
    tpu.vector_store %arg5[%c0_11, %c0_12], %23 {strides = array<i32>} : memref<256x32xf32, #tpu.memory_space<vmem>>, vector<256x32xf32>,
    return
  }
  func.func @transform_0(%arg0: i32) -> (i32, i32) {
    %c0_i32 = arith.constant 0 : i32
    %c0_i32_0 = arith.constant 0 : i32
    return %arg0, %c0_i32 : i32, i32
  }
  func.func @transform_1(%arg0: i32) -> (i32, i32) {
    %c0_i32 = arith.constant 0 : i32
    %c0_i32_0 = arith.constant 0 : i32
    %c0_i32_1 = arith.constant 0 : i32
    return %c0_i32, %c0_i32_0 : i32, i32
  }
  func.func @transform_2(%arg0: i32) -> (i32, i32) {
    %c0_i32 = arith.constant 0 : i32
    %c0_i32_0 = arith.constant 0 : i32
    %c0_i32_1 = arith.constant 0 : i32
    return %c0_i32, %c0_i32_0 : i32, i32
  }
  func.func @transform_3(%arg0: i32) -> (i32, i32) {
    %c0_i32 = arith.constant 0 : i32
    %c0_i32_0 = arith.constant 0 : i32
    return %arg0, %c0_i32 : i32, i32
  }
  func.func @transform_4(%arg0: i32) -> (i32, i32) {
    %c0_i32 = arith.constant 0 : i32
    %c0_i32_0 = arith.constant 0 : i32
    return %arg0, %c0_i32 : i32, i32
  }
}

</mosaic_0001>

<llo_original>
// kernel: transformer_block_forward.7
$region0: #{transformer_block_forward.7}
  #allocation0 [shape = 'u32[]', space=smem, size = 0x4, offset = 0x4, fixed_abs, tag = 'smem constant byte address 0x4 - core index']
  #allocation1 [shape = 'u32[144,128]{1,0:T(1,128)}', space=vmem, size = 0x12000, scoped, tag = 'internal scratch']
  %s0 = inlined_call_operand.hbm [shape: f32[512,32], index: 0, kind: input, shape index: {}]
  %s1 = inlined_call_operand.vmem [shape: f32[1,32], index: 1, kind: input, shape index: {}]
  %s2 = inlined_call_operand.vmem [shape: f32[1,32], index: 2, kind: input, shape index: {}]
  %s3 = inlined_call_operand.vmem [shape: f32[32,96], index: 3, kind: input, shape index: {}]
  %s4 = inlined_call_operand.vmem [shape: f32[1,96], index: 4, kind: input, shape index: {}]
  %s5 = inlined_call_operand.vmem [shape: f32[512,96], index: 5, kind: output, shape index: {}]
  %s6 = sld [smem:[#allocation0]]
  $region57: #{transformer_block_forward.7} parent=0
    _
  %s8 = ssub.s32 1, %s6
  %s9 = scalar_select 0, %s8, %s6
  $region1: #{transformer_block_forward.7} parent=0
    #allocation2 [shape = 'u8[262144]{0}', space=vmem, size = 0x40000, scoped, tag = 'input window, operand 0']
    #allocation3 [shape = 's32[2]{0}', space=sflag, size = 0x8, scoped, tag = 'scoped memory for transformer_block_forward.7']
    %10 = vsyncpa [#allocation3], 0
    %s11 = scalar_lea.sflag [#allocation3], 1
    %12 = vsyncpa %s11, 0
    loop: start=0, step=1, limit=4
    $region2: #{transformer_block_forward.7} parent=1 // loop_pre_header
      _
    $region3: #{transformer_block_forward.7} parent=1 // loop_header
      %s14 = sphi 0, %s18
      %p15 = scmp.ge.s32.totalorder %s14, 4
      %s24 = sphi 0, %s26
      %s27 = sphi 0, %s24
      %s28 = sphi 0, %s27
      %s44 = sphi 0, %s28
      %s48 = sphi 0, %s48
      %s50 = sphi 0, %s48
      %s51 = sphi 0, %s50
      %s65 = sphi 0, %s51
      %s69 = sphi 0, %s69
      %s71 = sphi 0, %s69
      %s72 = sphi 0, %s71
      %s86 = sphi 0, %s72
      %s90 = sphi 0, %s90
      %s92 = sphi 0, %s90
      %s93 = sphi 0, %s92
      %s107 = sphi 0, %s93
      %s111 = sphi 0, %s111
      %s113 = sphi 0, %s111
      %s114 = sphi 0, %s113
      %s128 = sphi 0, %s114
      %s134 = sphi 0, %s136
      %s137 = sphi 0, %s134
      %s138 = sphi 0, %s137
      %s154 = sphi 0, %s138
    $region4: #{transformer_block_forward.7} parent=1 // loop_header_branch
      %17 = sbr.rel (%p15) target = $region8
    $region5: #{transformer_block_forward.7} parent=1 // loop_body
      %s19 = ssub.s32 %s14, 1
      %s20 = ssub.s32 %s14, 2
      %s21 = sadd.s32 %s14, 1
      %s22 = ssub.s32 %s14, %s21
      %p23 = scmp.eq.s32.totalorder %s22, 0
      %s25 = sadd.s32 %s24, 1
      %s26 = scalar_select %p23, %s24, %s25
      %p29 = pneg %p23
      %p30 = scmp.eq.s32.totalorder %s14, 1
      %p31 = por %p29, %p30
      %p32 = scmp.ne.s32.totalorder %s24, %s27
      %p33 = scmp.eq.s32.totalorder %s14, 0
      %p34 = por %p32, %p33
      %p35 = scmp.ne.s32.totalorder %s24, %s27
      %p36 = scmp.eq.s32.totalorder %s19, 1
      %p37 = por %p35, %p36
      %p38 = scmp.ne.s32.totalorder %s27, %s28
      %p39 = scmp.eq.s32.totalorder %s19, 0
      %p40 = por %p38, %p39
      %p41 = scmp.ne.s32.totalorder %s27, %s28
      %p42 = scmp.eq.s32.totalorder %s20, 1
      %p43 = por %p41, %p42
      %p45 = scmp.ne.s32.totalorder %s28, %s44
      %p46 = scmp.eq.s32.totalorder %s20, 0
      %p47 = por %p45, %p46
      %s49 = sadd.s32 %s48, 1
      %p52 = scmp.eq.s32.totalorder %s14, 1
      %p53 = scmp.ne.s32.totalorder %s48, %s50
      %p54 = scmp.eq.s32.totalorder %s14, 0
      %p55 = por %p53, %p54
      %p56 = scmp.ne.s32.totalorder %s48, %s50
      %p57 = scmp.eq.s32.totalorder %s19, 1
      %p58 = por %p56, %p57
      %p59 = scmp.ne.s32.totalorder %s50, %s51
      %p60 = scmp.eq.s32.totalorder %s19, 0
      %p61 = por %p59, %p60
      %p62 = scmp.ne.s32.totalorder %s50, %s51
      %p63 = scmp.eq.s32.totalorder %s20, 1
      %p64 = por %p62, %p63
      %p66 = scmp.ne.s32.totalorder %s51, %s65
      %p67 = scmp.eq.s32.totalorder %s20, 0
      %p68 = por %p66, %p67
      %s70 = sadd.s32 %s69, 1
      %p73 = scmp.eq.s32.totalorder %s14, 1
      %p74 = scmp.ne.s32.totalorder %s69, %s71
      %p75 = scmp.eq.s32.totalorder %s14, 0
      %p76 = por %p74, %p75
      %p77 = scmp.ne.s32.totalorder %s69, %s71
      %p78 = scmp.eq.s32.totalorder %s19, 1
      %p79 = por %p77, %p78
      %p80 = scmp.ne.s32.totalorder %s71, %s72
      %p81 = scmp.eq.s32.totalorder %s19, 0
      %p82 = por %p80, %p81
      %p83 = scmp.ne.s32.totalorder %s71, %s72
      %p84 = scmp.eq.s32.totalorder %s20, 1
      %p85 = por %p83, %p84
      %p87 = scmp.ne.s32.totalorder %s72, %s86
      %p88 = scmp.eq.s32.totalorder %s20, 0
      %p89 = por %p87, %p88
      %s91 = sadd.s32 %s90, 1
      %p94 = scmp.eq.s32.totalorder %s14, 1
      %p95 = scmp.ne.s32.totalorder %s90, %s92
      %p96 = scmp.eq.s32.totalorder %s14, 0
      %p97 = por %p95, %p96
      %p98 = scmp.ne.s32.totalorder %s90, %s92
      %p99 = scmp.eq.s32.totalorder %s19, 1
      %p100 = por %p98, %p99
      %p101 = scmp.ne.s32.totalorder %s92, %s93
      %p102 = scmp.eq.s32.totalorder %s19, 0
      %p103 = por %p101, %p102
      %p104 = scmp.ne.s32.totalorder %s92, %s93
      %p105 = scmp.eq.s32.totalorder %s20, 1
      %p106 = por %p104, %p105
      %p108 = scmp.ne.s32.totalorder %s93, %s107
      %p109 = scmp.eq.s32.totalorder %s20, 0
      %p110 = por %p108, %p109
      %s112 = sadd.s32 %s111, 1
      %p115 = scmp.eq.s32.totalorder %s14, 1
      %p116 = scmp.ne.s32.totalorder %s111, %s113
      %p117 = scmp.eq.s32.totalorder %s14, 0
      %p118 = por %p116, %p117
      %p119 = scmp.ne.s32.totalorder %s111, %s113
      %p120 = scmp.eq.s32.totalorder %s19, 1
      %p121 = por %p119, %p120
      %p122 = scmp.ne.s32.totalorder %s113, %s114
      %p123 = scmp.eq.s32.totalorder %s19, 0
      %p124 = por %p122, %p123
      %p125 = scmp.ne.s32.totalorder %s113, %s114
      %p126 = scmp.eq.s32.totalorder %s20, 1
      %p127 = por %p125, %p126
      %p129 = scmp.ne.s32.totalorder %s114, %s128
      %p130 = scmp.eq.s32.totalorder %s20, 0
      %p131 = por %p129, %p130
      %s132 = ssub.s32 %s14, %s21
      %p133 = scmp.eq.s32.totalorder %s132, 0
      %s135 = sadd.s32 %s134, 1
      %s136 = scalar_select %p133, %s134, %s135
      %p139 = pneg %p133
      %p140 = scmp.eq.s32.totalorder %s14, 1
      %p141 = por %p139, %p140
      %p142 = scmp.ne.s32.totalorder %s134, %s137
      %p143 = scmp.eq.s32.totalorder %s14, 0
      %p144 = por %p142, %p143
      %p145 = scmp.ne.s32.totalorder %s134, %s137
      %p146 = scmp.eq.s32.totalorder %s19, 1
      %p147 = por %p145, %p146
      %p148 = scmp.ne.s32.totalorder %s137, %s138
      %p149 = scmp.eq.s32.totalorder %s19, 0
      %p150 = por %p148, %p149
      %p151 = scmp.ne.s32.totalorder %s137, %s138
      %p152 = scmp.eq.s32.totalorder %s20, 1
      %p153 = por %p151, %p152
      %p155 = scmp.ne.s32.totalorder %s138, %s154
      %p156 = scmp.eq.s32.totalorder %s20, 0
      %p157 = por %p155, %p156
      %p158 = scmp.le.s32.totalorder 1, %s14
      %p159 = scmp.lt.s32.totalorder %s14, 3
      %p160 = pnand %p158, %p159
      %p161 = pneg %p160
      // Predicated region
      $region9: #{transformer_block_forward.7} parent=5 // pred_check
        _
      $region10: #{transformer_block_forward.7} parent=5 // pred_check_branch
        %163 = sbr.rel (%p160) target = $region12
      $region11: #{transformer_block_forward.7} parent=5 // pred_region
        %s164 = ssub.s32 %s14, 1
        // Predicated region
        $region13: #{transformer_block_forward.7} parent=11 // pred_check
          %p165 = pneg %p61
        $region14: #{transformer_block_forward.7} parent=11 // pred_check_branch
          %167 = sbr.rel (%p165) target = $region16
        $region15: #{transformer_block_forward.7} parent=11 // pred_region
          _
        $region16: #{transformer_block_forward.7} parent=11 // pred_fallthru
          _
        // Predicated region
        $region17: #{transformer_block_forward.7} parent=11 // pred_check
          %p168 = pneg %p82
        $region18: #{transformer_block_forward.7} parent=11 // pred_check_branch
          %170 = sbr.rel (%p168) target = $region20
        $region19: #{transformer_block_forward.7} parent=11 // pred_region
          _
        $region20: #{transformer_block_forward.7} parent=11 // pred_fallthru
          _
        // Predicated region
        $region21: #{transformer_block_forward.7} parent=11 // pred_check
          %p171 = pneg %p103
        $region22: #{transformer_block_forward.7} parent=11 // pred_check_branch
          %173 = sbr.rel (%p171) target = $region24
        $region23: #{transformer_block_forward.7} parent=11 // pred_region
          _
        $region24: #{transformer_block_forward.7} parent=11 // pred_fallthru
          _
        // Predicated region
        $region25: #{transformer_block_forward.7} parent=11 // pred_check
          %p174 = pneg %p124
        $region26: #{transformer_block_forward.7} parent=11 // pred_check_branch
          %176 = sbr.rel (%p174) target = $region28
        $region27: #{transformer_block_forward.7} parent=11 // pred_region
          _
        $region28: #{transformer_block_forward.7} parent=11 // pred_fallthru
          _
      $region12: #{transformer_block_forward.7} parent=5 // pred_fallthru
        _
      %p177 = scmp.lt.s32.totalorder %s14, 2
      // Predicated region
      $region29: #{transformer_block_forward.7} parent=5 // pred_check
        %p178 = pneg %p177
      $region30: #{transformer_block_forward.7} parent=5 // pred_check_branch
        %180 = sbr.rel (%p178) target = $region32
      $region31: #{transformer_block_forward.7} parent=5 // pred_region
        // Predicated region
        $region33: #{transformer_block_forward.7} parent=31 // pred_check
          %p181 = pneg %p34
        $region34: #{transformer_block_forward.7} parent=31 // pred_check_branch
          %183 = sbr.rel (%p181) target = $region36
        $region35: #{transformer_block_forward.7} parent=31 // pred_region
          %s184 = sand.u32 %s24, 1
          %s185 = scalar_lea.sflag [#allocation3], %s184
          %s186 = sand.u32 %s24, 1
          %s187 = smul.addr %s186, 256
          %s188 = scalar_lea.vmem [#allocation2], %s187
          %s189 = smul.u32 32, %s14
          %s191 = ssub.s32 4096, 4096
          %192 = vsyncadd %s185, %s191
          %s193 = smul.addr %s189, 128
          %s194 = scalar_lea.hbm %s0, %s193
          %s195 = sshll.u32 %s188, 4
          %s196 = int_to_ptr.vmem [resolvable:$true] %s195
          %201 = dma.hbm_to_vmem [thread:$0]  %s194, 4096, %s196, %s185, 128, 128, 8
        $region36: #{transformer_block_forward.7} parent=31 // pred_fallthru
          _
      $region32: #{transformer_block_forward.7} parent=5 // pred_fallthru
        _
      %p202 = scmp.le.s32.totalorder 1, %s14
      %p203 = scmp.lt.s32.totalorder %s14, 3
      %p204 = pnand %p202, %p203
      %p205 = pneg %p204
      // Predicated region
      $region37: #{transformer_block_forward.7} parent=5 // pred_check
        _
      $region38: #{transformer_block_forward.7} parent=5 // pred_check_branch
        %207 = sbr.rel (%p204) target = $region40
      $region39: #{transformer_block_forward.7} parent=5 // pred_region
        %s208 = ssub.s32 %s14, 1
        %s209 = sand.u32 %s27, 1
        %s210 = scalar_lea.sflag [#allocation3], %s209
        %s211 = sand.u32 %s27, 1
        %s212 = smul.addr %s211, 256
        %s213 = scalar_lea.vmem [#allocation2], %s212
        // Predicated region
        $region41: #{transformer_block_forward.7} parent=39 // pred_check
          %p214 = pneg %p40
        $region42: #{transformer_block_forward.7} parent=39 // pred_check_branch
          %216 = sbr.rel (%p214) target = $region44
        $region43: #{transformer_block_forward.7} parent=39 // pred_region
          %217 = dma.done %s210, 4096
        $region44: #{transformer_block_forward.7} parent=39 // pred_fallthru
          _
        %s218 = sand.u32 %s27, 1
        %s219 = scalar_lea.sflag [#allocation3], %s218
        %s220 = sand.u32 %s27, 1
        %s221 = smul.addr %s220, 256
        %s222 = scalar_lea.vmem [#allocation2], %s221
        %p223 = pneg %p40
        %p224 = pneg %p37
        %p225 = pneg %p61
        %p226 = pneg %p58
        %p227 = pneg %p82
        %p228 = pneg %p79
        %p229 = pneg %p103
        %p230 = pneg %p100
        %p231 = pneg %p124
        %p232 = pneg %p121
        %p233 = pneg %p150
        %p234 = pneg %p147
        %s235 = smul.u32 32, %s19
        %p236 = scmp.lt.s32.totalorder %s235, 63
        %s237 = scalar_select %p236, %s235, 63
        %s238 = smul.addr %s237, 8
        %s239 = scalar_lea.vmem %s5, %s238
        %s240 = smul.u32 32, %s19
        %s241 = smul.u32 32, %s19
        %p242 = scmp.lt.s32.totalorder %s241, 63
        %s243 = scalar_select %p242, %s241, 63
        %s244 = smul.addr %s243, 8
        %s245 = scalar_lea.vmem %s5, %s244
        %s246 = smul.u32 32, %s19
        %v247 = vld [vmem:[%s213] sm:$0xff]
        %v248 = vld [vmem:[%s213 + $0x8] sm:$0xff]
        %v249 = vld [vmem:[%s213 + $0x10] sm:$0xff]
        %v250 = vld [vmem:[%s213 + $0x18] sm:$0xff]
        %v251 = vld [vmem:[%s213 + $0x20] sm:$0xff]
        %v252 = vld [vmem:[%s213 + $0x28] sm:$0xff]
        %v253 = vld [vmem:[%s213 + $0x30] sm:$0xff]
        %v254 = vld [vmem:[%s213 + $0x38] sm:$0xff]
        %v255 = vld [vmem:[%s213 + $0x40] sm:$0xff]
        %v256 = vld [vmem:[%s213 + $0x48] sm:$0xff]
        %v257 = vld [vmem:[%s213 + $0x50] sm:$0xff]
        %v258 = vld [vmem:[%s213 + $0x58] sm:$0xff]
        %v259 = vld [vmem:[%s213 + $0x60] sm:$0xff]
        %v260 = vld [vmem:[%s213 + $0x68] sm:$0xff]
        %v261 = vld [vmem:[%s213 + $0x70] sm:$0xff]
        %v262 = vld [vmem:[%s213 + $0x78] sm:$0xff]
        %v263 = vld [vmem:[%s213 + $0x80] sm:$0xff]
        %v264 = vld [vmem:[%s213 + $0x88] sm:$0xff]
        %v265 = vld [vmem:[%s213 + $0x90] sm:$0xff]
        %v266 = vld [vmem:[%s213 + $0x98] sm:$0xff]
        %v267 = vld [vmem:[%s213 + $0xa0] sm:$0xff]
        %v268 = vld [vmem:[%s213 + $0xa8] sm:$0xff]
        %v269 = vld [vmem:[%s213 + $0xb0] sm:$0xff]
        %v270 = vld [vmem:[%s213 + $0xb8] sm:$0xff]
        %v271 = vld [vmem:[%s213 + $0xc0] sm:$0xff]
        %v272 = vld [vmem:[%s213 + $0xc8] sm:$0xff]
        %v273 = vld [vmem:[%s213 + $0xd0] sm:$0xff]
        %v274 = vld [vmem:[%s213 + $0xd8] sm:$0xff]
        %v275 = vld [vmem:[%s213 + $0xe0] sm:$0xff]
        %v276 = vld [vmem:[%s213 + $0xe8] sm:$0xff]
        %v277 = vld [vmem:[%s213 + $0xf0] sm:$0xff]
        %v278 = vld [vmem:[%s213 + $0xf8] sm:$0xff]
        %vm279 = vcmask 261120
        %v280 = vsel %vm279, %v247, 0.0
        %281 = vadd.xlane.f32.xlu0 %v280
        %v282 = vpop.xlane.xlu0 %281
        %v283 = vsel %vm279, %v248, 0.0
        %284 = vadd.xlane.f32.xlu0 %v283
        %v285 = vpop.xlane.xlu0 %284
        %v286 = vsel %vm279, %v249, 0.0
        %287 = vadd.xlane.f32.xlu0 %v286
        %v288 = vpop.xlane.xlu0 %287
        %v289 = vsel %vm279, %v250, 0.0
        %290 = vadd.xlane.f32.xlu0 %v289
        %v291 = vpop.xlane.xlu0 %290
        %v292 = vsel %vm279, %v251, 0.0
        %293 = vadd.xlane.f32.xlu0 %v292
        %v294 = vpop.xlane.xlu0 %293
        %v295 = vsel %vm279, %v252, 0.0
        %296 = vadd.xlane.f32.xlu0 %v295
        %v297 = vpop.xlane.xlu0 %296
        %v298 = vsel %vm279, %v253, 0.0
        %299 = vadd.xlane.f32.xlu0 %v298
        %v300 = vpop.xlane.xlu0 %299
        %v301 = vsel %vm279, %v254, 0.0
        %302 = vadd.xlane.f32.xlu0 %v301
        %v303 = vpop.xlane.xlu0 %302
        %v304 = vsel %vm279, %v255, 0.0
        %305 = vadd.xlane.f32.xlu0 %v304
        %v306 = vpop.xlane.xlu0 %305
        %v307 = vsel %vm279, %v256, 0.0
        %308 = vadd.xlane.f32.xlu0 %v307
        %v309 = vpop.xlane.xlu0 %308
        %v310 = vsel %vm279, %v257, 0.0
        %311 = vadd.xlane.f32.xlu0 %v310
        %v312 = vpop.xlane.xlu0 %311
        %v313 = vsel %vm279, %v258, 0.0
        %314 = vadd.xlane.f32.xlu0 %v313
        %v315 = vpop.xlane.xlu0 %314
        %v316 = vsel %vm279, %v259, 0.0
        %317 = vadd.xlane.f32.xlu0 %v316
        %v318 = vpop.xlane.xlu0 %317
        %v319 = vsel %vm279, %v260, 0.0
        %320 = vadd.xlane.f32.xlu0 %v319
        %v321 = vpop.xlane.xlu0 %320
        %v322 = vsel %vm279, %v261, 0.0
        %323 = vadd.xlane.f32.xlu0 %v322
        %v324 = vpop.xlane.xlu0 %323
        %v325 = vsel %vm279, %v262, 0.0
        %326 = vadd.xlane.f32.xlu0 %v325
        %v327 = vpop.xlane.xlu0 %326
        %v328 = vsel %vm279, %v263, 0.0
        %329 = vadd.xlane.f32.xlu0 %v328
        %v330 = vpop.xlane.xlu0 %329
        %v331 = vsel %vm279, %v264, 0.0
        %332 = vadd.xlane.f32.xlu0 %v331
        %v333 = vpop.xlane.xlu0 %332
        %v334 = vsel %vm279, %v265, 0.0
        %335 = vadd.xlane.f32.xlu0 %v334
        %v336 = vpop.xlane.xlu0 %335
        %v337 = vsel %vm279, %v266, 0.0
        %338 = vadd.xlane.f32.xlu0 %v337
        %v339 = vpop.xlane.xlu0 %338
        %v340 = vsel %vm279, %v267, 0.0
        %341 = vadd.xlane.f32.xlu0 %v340
        %v342 = vpop.xlane.xlu0 %341
        %v343 = vsel %vm279, %v268, 0.0
        %344 = vadd.xlane.f32.xlu0 %v343
        %v345 = vpop.xlane.xlu0 %344
        %v346 = vsel %vm279, %v269, 0.0
        %347 = vadd.xlane.f32.xlu0 %v346
        %v348 = vpop.xlane.xlu0 %347
        %v349 = vsel %vm279, %v270, 0.0
        %350 = vadd.xlane.f32.xlu0 %v349
        %v351 = vpop.xlane.xlu0 %350
        %v352 = vsel %vm279, %v271, 0.0
        %353 = vadd.xlane.f32.xlu0 %v352
        %v354 = vpop.xlane.xlu0 %353
        %v355 = vsel %vm279, %v272, 0.0
        %356 = vadd.xlane.f32.xlu0 %v355
        %v357 = vpop.xlane.xlu0 %356
        %v358 = vsel %vm279, %v273, 0.0
        %359 = vadd.xlane.f32.xlu0 %v358
        %v360 = vpop.xlane.xlu0 %359
        %v361 = vsel %vm279, %v274, 0.0
        %362 = vadd.xlane.f32.xlu0 %v361
        %v363 = vpop.xlane.xlu0 %362
        %v364 = vsel %vm279, %v275, 0.0
        %365 = vadd.xlane.f32.xlu0 %v364
        %v366 = vpop.xlane.xlu0 %365
        %v367 = vsel %vm279, %v276, 0.0
        %368 = vadd.xlane.f32.xlu0 %v367
        %v369 = vpop.xlane.xlu0 %368
        %v370 = vsel %vm279, %v277, 0.0
        %371 = vadd.xlane.f32.xlu0 %v370
        %v372 = vpop.xlane.xlu0 %371
        %v373 = vsel %vm279, %v278, 0.0
        %374 = vadd.xlane.f32.xlu0 %v373
        %v375 = vpop.xlane.xlu0 %374
        %v376 = vrcp.pop 32.0
        %v377 = vmul.f32 %v282, %v376
        %v378 = vmul.f32 %v285, %v376
        %v379 = vmul.f32 %v288, %v376
        %v380 = vmul.f32 %v291, %v376
        %v381 = vmul.f32 %v294, %v376
        %v382 = vmul.f32 %v297, %v376
        %v383 = vmul.f32 %v300, %v376
        %v384 = vmul.f32 %v303, %v376
        %v385 = vmul.f32 %v306, %v376
        %v386 = vmul.f32 %v309, %v376
        %v387 = vmul.f32 %v312, %v376
        %v388 = vmul.f32 %v315, %v376
        %v389 = vmul.f32 %v318, %v376
        %v390 = vmul.f32 %v321, %v376
        %v391 = vmul.f32 %v324, %v376
        %v392 = vmul.f32 %v327, %v376
        %v393 = vmul.f32 %v330, %v376
        %v394 = vmul.f32 %v333, %v376
        %v395 = vmul.f32 %v336, %v376
        %v396 = vmul.f32 %v339, %v376
        %v397 = vmul.f32 %v342, %v376
        %v398 = vmul.f32 %v345, %v376
        %v399 = vmul.f32 %v348, %v376
        %v400 = vmul.f32 %v351, %v376
        %v401 = vmul.f32 %v354, %v376
        %v402 = vmul.f32 %v357, %v376
        %v403 = vmul.f32 %v360, %v376
        %v404 = vmul.f32 %v363, %v376
        %v405 = vmul.f32 %v366, %v376
        %v406 = vmul.f32 %v369, %v376
        %v407 = vmul.f32 %v372, %v376
        %v408 = vmul.f32 %v375, %v376
        %v409 = vsub.f32 %v247, %v377
        %v410 = vsub.f32 %v248, %v378
        %v411 = vsub.f32 %v249, %v379
        %v412 = vsub.f32 %v250, %v380
        %v413 = vsub.f32 %v251, %v381
        %v414 = vsub.f32 %v252, %v382
        %v415 = vsub.f32 %v253, %v383
        %v416 = vsub.f32 %v254, %v384
        %v417 = vsub.f32 %v255, %v385
        %v418 = vsub.f32 %v256, %v386
        %v419 = vsub.f32 %v257, %v387
        %v420 = vsub.f32 %v258, %v388
        %v421 = vsub.f32 %v259, %v389
        %v422 = vsub.f32 %v260, %v390
        %v423 = vsub.f32 %v261, %v391
        %v424 = vsub.f32 %v262, %v392
        %v425 = vsub.f32 %v263, %v393
        %v426 = vsub.f32 %v264, %v394
        %v427 = vsub.f32 %v265, %v395
        %v428 = vsub.f32 %v266, %v396
        %v429 = vsub.f32 %v267, %v397
        %v430 = vsub.f32 %v268, %v398
        %v431 = vsub.f32 %v269, %v399
        %v432 = vsub.f32 %v270, %v400
        %v433 = vsub.f32 %v271, %v401
        %v434 = vsub.f32 %v272, %v402
        %v435 = vsub.f32 %v273, %v403
        %v436 = vsub.f32 %v274, %v404
        %v437 = vsub.f32 %v275, %v405
        %v438 = vsub.f32 %v276, %v406
        %v439 = vsub.f32 %v277, %v407
        %v440 = vsub.f32 %v278, %v408
        %v441 = vmul.f32 %v409, %v409
        %v442 = vmul.f32 %v410, %v410
        %v443 = vmul.f32 %v411, %v411
        %v444 = vmul.f32 %v412, %v412
        %v445 = vmul.f32 %v413, %v413
        %v446 = vmul.f32 %v414, %v414
        %v447 = vmul.f32 %v415, %v415
        %v448 = vmul.f32 %v416, %v416
        %v449 = vmul.f32 %v417, %v417
        %v450 = vmul.f32 %v418, %v418
        %v451 = vmul.f32 %v419, %v419
        %v452 = vmul.f32 %v420, %v420
        %v453 = vmul.f32 %v421, %v421
        %v454 = vmul.f32 %v422, %v422
        %v455 = vmul.f32 %v423, %v423
        %v456 = vmul.f32 %v424, %v424
        %v457 = vmul.f32 %v425, %v425
        %v458 = vmul.f32 %v426, %v426
        %v459 = vmul.f32 %v427, %v427
        %v460 = vmul.f32 %v428, %v428
        %v461 = vmul.f32 %v429, %v429
        %v462 = vmul.f32 %v430, %v430
        %v463 = vmul.f32 %v431, %v431
        %v464 = vmul.f32 %v432, %v432
        %v465 = vmul.f32 %v433, %v433
        %v466 = vmul.f32 %v434, %v434
        %v467 = vmul.f32 %v435, %v435
        %v468 = vmul.f32 %v436, %v436
        %v469 = vmul.f32 %v437, %v437
        %v470 = vmul.f32 %v438, %v438
        %v471 = vmul.f32 %v439, %v439
        %v472 = vmul.f32 %v440, %v440
        %v473 = vsel %vm279, %v441, 0.0
        %474 = vadd.xlane.f32.xlu0 %v473
        %v475 = vpop.xlane.xlu0 %474
        %v476 = vsel %vm279, %v442, 0.0
        %477 = vadd.xlane.f32.xlu0 %v476
        %v478 = vpop.xlane.xlu0 %477
        %v479 = vsel %vm279, %v443, 0.0
        %480 = vadd.xlane.f32.xlu0 %v479
        %v481 = vpop.xlane.xlu0 %480
        %v482 = vsel %vm279, %v444, 0.0
        %483 = vadd.xlane.f32.xlu0 %v482
        %v484 = vpop.xlane.xlu0 %483
        %v485 = vsel %vm279, %v445, 0.0
        %486 = vadd.xlane.f32.xlu0 %v485
        %v487 = vpop.xlane.xlu0 %486
        %v488 = vsel %vm279, %v446, 0.0
        %489 = vadd.xlane.f32.xlu0 %v488
        %v490 = vpop.xlane.xlu0 %489
        %v491 = vsel %vm279, %v447, 0.0
        %492 = vadd.xlane.f32.xlu0 %v491
        %v493 = vpop.xlane.xlu0 %492
        %v494 = vsel %vm279, %v448, 0.0
        %495 = vadd.xlane.f32.xlu0 %v494
        %v496 = vpop.xlane.xlu0 %495
        %v497 = vsel %vm279, %v449, 0.0
        %498 = vadd.xlane.f32.xlu0 %v497
        %v499 = vpop.xlane.xlu0 %498
        %v500 = vsel %vm279, %v450, 0.0
        %501 = vadd.xlane.f32.xlu0 %v500
        %v502 = vpop.xlane.xlu0 %501
        %v503 = vsel %vm279, %v451, 0.0
        %504 = vadd.xlane.f32.xlu0 %v503
        %v505 = vpop.xlane.xlu0 %504
        %v506 = vsel %vm279, %v452, 0.0
        %507 = vadd.xlane.f32.xlu0 %v506
        %v508 = vpop.xlane.xlu0 %507
        %v509 = vsel %vm279, %v453, 0.0
        %510 = vadd.xlane.f32.xlu0 %v509
        %v511 = vpop.xlane.xlu0 %510
        %v512 = vsel %vm279, %v454, 0.0
        %513 = vadd.xlane.f32.xlu0 %v512
        %v514 = vpop.xlane.xlu0 %513
        %v515 = vsel %vm279, %v455, 0.0
        %516 = vadd.xlane.f32.xlu0 %v515
        %v517 = vpop.xlane.xlu0 %516
        %v518 = vsel %vm279, %v456, 0.0
        %519 = vadd.xlane.f32.xlu0 %v518
        %v520 = vpop.xlane.xlu0 %519
        %v521 = vsel %vm279, %v457, 0.0
        %522 = vadd.xlane.f32.xlu0 %v521
        %v523 = vpop.xlane.xlu0 %522
        %v524 = vsel %vm279, %v458, 0.0
        %525 = vadd.xlane.f32.xlu0 %v524
        %v526 = vpop.xlane.xlu0 %525
        %v527 = vsel %vm279, %v459, 0.0
        %528 = vadd.xlane.f32.xlu0 %v527
        %v529 = vpop.xlane.xlu0 %528
        %v530 = vsel %vm279, %v460, 0.0
        %531 = vadd.xlane.f32.xlu0 %v530
        %v532 = vpop.xlane.xlu0 %531
        %v533 = vsel %vm279, %v461, 0.0
        %534 = vadd.xlane.f32.xlu0 %v533
        %v535 = vpop.xlane.xlu0 %534
        %v536 = vsel %vm279, %v462, 0.0
        %537 = vadd.xlane.f32.xlu0 %v536
        %v538 = vpop.xlane.xlu0 %537
        %v539 = vsel %vm279, %v463, 0.0
        %540 = vadd.xlane.f32.xlu0 %v539
        %v541 = vpop.xlane.xlu0 %540
        %v542 = vsel %vm279, %v464, 0.0
        %543 = vadd.xlane.f32.xlu0 %v542
        %v544 = vpop.xlane.xlu0 %543
        %v545 = vsel %vm279, %v465, 0.0
        %546 = vadd.xlane.f32.xlu0 %v545
        %v547 = vpop.xlane.xlu0 %546
        %v548 = vsel %vm279, %v466, 0.0
        %549 = vadd.xlane.f32.xlu0 %v548
        %v550 = vpop.xlane.xlu0 %549
        %v551 = vsel %vm279, %v467, 0.0
        %552 = vadd.xlane.f32.xlu0 %v551
        %v553 = vpop.xlane.xlu0 %552
        %v554 = vsel %vm279, %v468, 0.0
        %555 = vadd.xlane.f32.xlu0 %v554
        %v556 = vpop.xlane.xlu0 %555
        %v557 = vsel %vm279, %v469, 0.0
        %558 = vadd.xlane.f32.xlu0 %v557
        %v559 = vpop.xlane.xlu0 %558
        %v560 = vsel %vm279, %v470, 0.0
        %561 = vadd.xlane.f32.xlu0 %v560
        %v562 = vpop.xlane.xlu0 %561
        %v563 = vsel %vm279, %v471, 0.0
        %564 = vadd.xlane.f32.xlu0 %v563
        %v565 = vpop.xlane.xlu0 %564
        %v566 = vsel %vm279, %v472, 0.0
        %567 = vadd.xlane.f32.xlu0 %v566
        %v568 = vpop.xlane.xlu0 %567
        %v569 = vmul.f32 %v475, %v376
        %v570 = vmul.f32 %v478, %v376
        %v571 = vmul.f32 %v481, %v376
        %v572 = vmul.f32 %v484, %v376
        %v573 = vmul.f32 %v487, %v376
        %v574 = vmul.f32 %v490, %v376
        %v575 = vmul.f32 %v493, %v376
        %v576 = vmul.f32 %v496, %v376
        %v577 = vmul.f32 %v499, %v376
        %v578 = vmul.f32 %v502, %v376
        %v579 = vmul.f32 %v505, %v376
        %v580 = vmul.f32 %v508, %v376
        %v581 = vmul.f32 %v511, %v376
        %v582 = vmul.f32 %v514, %v376
        %v583 = vmul.f32 %v517, %v376
        %v584 = vmul.f32 %v520, %v376
        %v585 = vmul.f32 %v523, %v376
        %v586 = vmul.f32 %v526, %v376
        %v587 = vmul.f32 %v529, %v376
        %v588 = vmul.f32 %v532, %v376
        %v589 = vmul.f32 %v535, %v376
        %v590 = vmul.f32 %v538, %v376
        %v591 = vmul.f32 %v541, %v376
        %v592 = vmul.f32 %v544, %v376
        %v593 = vmul.f32 %v547, %v376
        %v594 = vmul.f32 %v550, %v376
        %v595 = vmul.f32 %v553, %v376
        %v596 = vmul.f32 %v556, %v376
        %v597 = vmul.f32 %v559, %v376
        %v598 = vmul.f32 %v562, %v376
        %v599 = vmul.f32 %v565, %v376
        %v600 = vmul.f32 %v568, %v376
        %v601 = vadd.f32 %v569, 1e-05
        %v602 = vadd.f32 %v570, 1e-05
        %v603 = vadd.f32 %v571, 1e-05
        %v604 = vadd.f32 %v572, 1e-05
        %v605 = vadd.f32 %v573, 1e-05
        %v606 = vadd.f32 %v574, 1e-05
        %v607 = vadd.f32 %v575, 1e-05
        %v608 = vadd.f32 %v576, 1e-05
        %v609 = vadd.f32 %v577, 1e-05
        %v610 = vadd.f32 %v578, 1e-05
        %v611 = vadd.f32 %v579, 1e-05
        %v612 = vadd.f32 %v580, 1e-05
        %v613 = vadd.f32 %v581, 1e-05
        %v614 = vadd.f32 %v582, 1e-05
        %v615 = vadd.f32 %v583, 1e-05
        %v616 = vadd.f32 %v584, 1e-05
        %v617 = vadd.f32 %v585, 1e-05
        %v618 = vadd.f32 %v586, 1e-05
        %v619 = vadd.f32 %v587, 1e-05
        %v620 = vadd.f32 %v588, 1e-05
        %v621 = vadd.f32 %v589, 1e-05
        %v622 = vadd.f32 %v590, 1e-05
        %v623 = vadd.f32 %v591, 1e-05
        %v624 = vadd.f32 %v592, 1e-05
        %v625 = vadd.f32 %v593, 1e-05
        %v626 = vadd.f32 %v594, 1e-05
        %v627 = vadd.f32 %v595, 1e-05
        %v628 = vadd.f32 %v596, 1e-05
        %v629 = vadd.f32 %v597, 1e-05
        %v630 = vadd.f32 %v598, 1e-05
        %v631 = vadd.f32 %v599, 1e-05
        %v632 = vadd.f32 %v600, 1e-05
        %v633 = vrsqrt.pop %v601
        %v634 = vrsqrt.pop %v602
        %v635 = vrsqrt.pop %v603
        %v636 = vrsqrt.pop %v604
        %v637 = vrsqrt.pop %v605
        %v638 = vrsqrt.pop %v606
        %v639 = vrsqrt.pop %v607
        %v640 = vrsqrt.pop %v608
        %v641 = vrsqrt.pop %v609
        %v642 = vrsqrt.pop %v610
        %v643 = vrsqrt.pop %v611
        %v644 = vrsqrt.pop %v612
        %v645 = vrsqrt.pop %v613
        %v646 = vrsqrt.pop %v614
        %v647 = vrsqrt.pop %v615
        %v648 = vrsqrt.pop %v616
        %v649 = vrsqrt.pop %v617
        %v650 = vrsqrt.pop %v618
        %v651 = vrsqrt.pop %v619
        %v652 = vrsqrt.pop %v620
        %v653 = vrsqrt.pop %v621
        %v654 = vrsqrt.pop %v622
        %v655 = vrsqrt.pop %v623
        %v656 = vrsqrt.pop %v624
        %v657 = vrsqrt.pop %v625
        %v658 = vrsqrt.pop %v626
        %v659 = vrsqrt.pop %v627
        %v660 = vrsqrt.pop %v628
        %v661 = vrsqrt.pop %v629
        %v662 = vrsqrt.pop %v630
        %v663 = vrsqrt.pop %v631
        %v664 = vrsqrt.pop %v632
        %v665 = vmul.f32 %v409, %v633
        %v666 = vmul.f32 %v410, %v634
        %v667 = vmul.f32 %v411, %v635
        %v668 = vmul.f32 %v412, %v636
        %v669 = vmul.f32 %v413, %v637
        %v670 = vmul.f32 %v414, %v638
        %v671 = vmul.f32 %v415, %v639
        %v672 = vmul.f32 %v416, %v640
        %v673 = vmul.f32 %v417, %v641
        %v674 = vmul.f32 %v418, %v642
        %v675 = vmul.f32 %v419, %v643
        %v676 = vmul.f32 %v420, %v644
        %v677 = vmul.f32 %v421, %v645
        %v678 = vmul.f32 %v422, %v646
        %v679 = vmul.f32 %v423, %v647
        %v680 = vmul.f32 %v424, %v648
        %v681 = vmul.f32 %v425, %v649
        %v682 = vmul.f32 %v426, %v650
        %v683 = vmul.f32 %v427, %v651
        %v684 = vmul.f32 %v428, %v652
        %v685 = vmul.f32 %v429, %v653
        %v686 = vmul.f32 %v430, %v654
        %v687 = vmul.f32 %v431, %v655
        %v688 = vmul.f32 %v432, %v656
        %v689 = vmul.f32 %v433, %v657
        %v690 = vmul.f32 %v434, %v658
        %v691 = vmul.f32 %v435, %v659
        %v692 = vmul.f32 %v436, %v660
        %v693 = vmul.f32 %v437, %v661
        %v694 = vmul.f32 %v438, %v662
        %v695 = vmul.f32 %v439, %v663
        %v696 = vmul.f32 %v440, %v664
        %v697 = vld [vmem:[%s1] sm:$0x1]
        %v699 = vlaneseq
        %v700 = vshrl.u32 %v699, 7
        %v701 = vsub.s32 0, %v700
        %v702 = vrot.slane %v697, %v701
        %v704 = vmul.f32 %v665, %v702
        %v705 = vmul.f32 %v666, %v702
        %v706 = vmul.f32 %v667, %v702
        %v707 = vmul.f32 %v668, %v702
        %v708 = vmul.f32 %v669, %v702
        %v709 = vmul.f32 %v670, %v702
        %v710 = vmul.f32 %v671, %v702
        %v711 = vmul.f32 %v672, %v702
        %v712 = vmul.f32 %v673, %v702
        %v713 = vmul.f32 %v674, %v702
        %v714 = vmul.f32 %v675, %v702
        %v715 = vmul.f32 %v676, %v702
        %v716 = vmul.f32 %v677, %v702
        %v717 = vmul.f32 %v678, %v702
        %v718 = vmul.f32 %v679, %v702
        %v719 = vmul.f32 %v680, %v702
        %v720 = vmul.f32 %v681, %v702
        %v721 = vmul.f32 %v682, %v702
        %v722 = vmul.f32 %v683, %v702
        %v723 = vmul.f32 %v684, %v702
        %v724 = vmul.f32 %v685, %v702
        %v725 = vmul.f32 %v686, %v702
        %v726 = vmul.f32 %v687, %v702
        %v727 = vmul.f32 %v688, %v702
        %v728 = vmul.f32 %v689, %v702
        %v729 = vmul.f32 %v690, %v702
        %v730 = vmul.f32 %v691, %v702
        %v731 = vmul.f32 %v692, %v702
        %v732 = vmul.f32 %v693, %v702
        %v733 = vmul.f32 %v694, %v702
        %v734 = vmul.f32 %v695, %v702
        %v735 = vmul.f32 %v696, %v702
        %v736 = vld [vmem:[%s2] sm:$0x1]
        %v738 = vlaneseq
        %v739 = vshrl.u32 %v738, 7
        %v740 = vsub.s32 0, %v739
        %v741 = vrot.slane %v736, %v740
        %v743 = vadd.f32 %v704, %v741
        %v744 = vadd.f32 %v705, %v741
        %v745 = vadd.f32 %v706, %v741
        %v746 = vadd.f32 %v707, %v741
        %v747 = vadd.f32 %v708, %v741
        %v748 = vadd.f32 %v709, %v741
        %v749 = vadd.f32 %v710, %v741
        %v750 = vadd.f32 %v711, %v741
        %v751 = vadd.f32 %v712, %v741
        %v752 = vadd.f32 %v713, %v741
        %v753 = vadd.f32 %v714, %v741
        %v754 = vadd.f32 %v715, %v741
        %v755 = vadd.f32 %v716, %v741
        %v756 = vadd.f32 %v717, %v741
        %v757 = vadd.f32 %v718, %v741
        %v758 = vadd.f32 %v719, %v741
        %v759 = vadd.f32 %v720, %v741
        %v760 = vadd.f32 %v721, %v741
        %v761 = vadd.f32 %v722, %v741
        %v762 = vadd.f32 %v723, %v741
        %v763 = vadd.f32 %v724, %v741
        %v764 = vadd.f32 %v725, %v741
        %v765 = vadd.f32 %v726, %v741
        %v766 = vadd.f32 %v727, %v741
        %v767 = vadd.f32 %v728, %v741
        %v768 = vadd.f32 %v729, %v741
        %v769 = vadd.f32 %v730, %v741
        %v770 = vadd.f32 %v731, %v741
        %v771 = vadd.f32 %v732, %v741
        %v772 = vadd.f32 %v733, %v741
        %v773 = vadd.f32 %v734, %v741
        %v774 = vadd.f32 %v735, %v741
        %v775 = vld [vmem:[%s3] sm:$0xff]
        %v776 = vld [vmem:[%s3 + $0x8] sm:$0xff]
        %v777 = vld [vmem:[%s3 + $0x10] sm:$0xff]
        %v778 = vld [vmem:[%s3 + $0x18] sm:$0xff]
        %v779 = vld [vmem:[%s4] sm:$0x1]
        %v781 = vlaneseq
        %v782 = vshrl.u32 %v781, 7
        %v783 = vsub.s32 0, %v782
        %v784 = vrot.slane %v779, %v783
        %v787 = vsel %vm279, %v743, 0
        %v790 = vsel %vm279, %v744, 0
        %v793 = vsel %vm279, %v745, 0
        %v796 = vsel %vm279, %v746, 0
        %v799 = vsel %vm279, %v747, 0
        %v802 = vsel %vm279, %v748, 0
        %v805 = vsel %vm279, %v749, 0
        %v808 = vsel %vm279, %v750, 0
        %v811 = vsel %vm279, %v751, 0
        %v814 = vsel %vm279, %v752, 0
        %v817 = vsel %vm279, %v753, 0
        %v820 = vsel %vm279, %v754, 0
        %v823 = vsel %vm279, %v755, 0
        %v826 = vsel %vm279, %v756, 0
        %v829 = vsel %vm279, %v757, 0
        %v832 = vsel %vm279, %v758, 0
        %v835 = vsel %vm279, %v759, 0
        %v838 = vsel %vm279, %v760, 0
        %v841 = vsel %vm279, %v761, 0
        %v844 = vsel %vm279, %v762, 0
        %v847 = vsel %vm279, %v763, 0
        %v850 = vsel %vm279, %v764, 0
        %v853 = vsel %vm279, %v765, 0
        %v856 = vsel %vm279, %v766, 0
        %v859 = vsel %vm279, %v767, 0
        %v862 = vsel %vm279, %v768, 0
        %v865 = vsel %vm279, %v769, 0
        %v868 = vsel %vm279, %v770, 0
        %v871 = vsel %vm279, %v771, 0
        %v874 = vsel %vm279, %v772, 0
        %v877 = vsel %vm279, %v773, 0
        %v880 = vsel %vm279, %v774, 0
        %882 = vmatprep.subr.mxu0 0.0
        %883 = vmatpush1.msra.mxu0 %v775
        %884 = vmatprep.subr.mxu0 0.0
        %885 = vmatpush1.msra.mxu0 %v776
        %886 = vmatprep.subr.mxu0 0.0
        %887 = vmatpush1.msra.mxu0 %v777
        %888 = vmatprep.subr.mxu0 0.0
        %889 = vmatpush1.msra.mxu0 %v778
        %890 = vmatprep.subr.mxu0 0.0
        %891 = vmatpush1.msra.mxu0 0.0
        %892 = vmatprep.subr.mxu0 0.0
        %893 = vmatpush1.msra.mxu0 0.0
        %894 = vmatprep.subr.mxu0 0.0
        %895 = vmatpush1.msra.mxu0 0.0
        %896 = vmatprep.subr.mxu0 0.0
        %897 = vmatpush1.msra.mxu0 0.0
        %898 = vmatprep.subr.mxu0 0.0
        %899 = vmatpush1.msra.mxu0 0.0
        %900 = vmatprep.subr.mxu0 0.0
        %901 = vmatpush1.msra.mxu0 0.0
        %902 = vmatprep.subr.mxu0 0.0
        %903 = vmatpush1.msra.mxu0 0.0
        %904 = vmatprep.subr.mxu0 0.0
        %905 = vmatpush1.msra.mxu0 0.0
        %906 = vmatprep.subr.mxu0 0.0
        %907 = vmatpush1.msra.mxu0 0.0
        %908 = vmatprep.subr.mxu0 0.0
        %909 = vmatpush1.msra.mxu0 0.0
        %910 = vmatprep.subr.mxu0 0.0
        %911 = vmatpush1.msra.mxu0 0.0
        %912 = vmatprep.subr.mxu0 0.0
        %913 = vmatpush1.msra.mxu0 0.0
        %914 = vmatprep.subr.mxu0 0.0
        %915 = vmatpush1.msra.mxu0 0.0
        %916 = vmatprep.subr.mxu0 0.0
        %917 = vmatpush1.msra.mxu0 0.0
        %918 = vmatprep.subr.mxu0 0.0
        %919 = vmatpush1.msra.mxu0 0.0
        %920 = vmatprep.subr.mxu0 0.0
        %921 = vmatpush1.msra.mxu0 0.0
        %922 = vmatprep.subr.mxu0 0.0
        %923 = vmatpush1.msra.mxu0 0.0
        %924 = vmatprep.subr.mxu0 0.0
        %925 = vmatpush1.msra.mxu0 0.0
        %926 = vmatprep.subr.mxu0 0.0
        %927 = vmatpush1.msra.mxu0 0.0
        %928 = vmatprep.subr.mxu0 0.0
        %929 = vmatpush1.msra.mxu0 0.0
        %930 = vmatprep.subr.mxu0 0.0
        %931 = vmatpush1.msra.mxu0 0.0
        %932 = vmatprep.subr.mxu0 0.0
        %933 = vmatpush1.msra.mxu0 0.0
        %934 = vmatprep.subr.mxu0 0.0
        %935 = vmatpush1.msra.mxu0 0.0
        %936 = vmatprep.subr.mxu0 0.0
        %937 = vmatpush1.msra.mxu0 0.0
        %938 = vmatprep.subr.mxu0 0.0
        %939 = vmatpush1.msra.mxu0 0.0
        %940 = vmatprep.subr.mxu0 0.0
        %941 = vmatpush1.msra.mxu0 0.0
        %942 = vmatprep.subr.mxu0 0.0
        %943 = vmatpush1.msra.mxu0 0.0
        %944 = vmatprep.subr.mxu0 0.0
        %945 = vmatpush1.msra.mxu0 0.0
        %946 = vmatprep.mubr.f32.mxu0 0.0
        %947 = vmatmul.mubr.f32.gmra.mrb[0].mxu0 %v787
        %v948 = vpop.f32.mrb[0].mxu0
        %v949 = vadd.f32 %v784, %v948
        %v950 = vpop.f32.mrb[0].mxu0
        %951 = vmatprep.mubr.f32.mxu0 0.0
        %952 = vmatmul.mubr.f32.gmra.mrb[0].mxu0 %v790
        %v953 = vpop.f32.mrb[0].mxu0
        %v954 = vadd.f32 %v784, %v953
        %v955 = vpop.f32.mrb[0].mxu0
        %956 = vmatprep.mubr.f32.mxu0 0.0
        %957 = vmatmul.mubr.f32.gmra.mrb[0].mxu0 %v793
        %v958 = vpop.f32.mrb[0].mxu0
        %v959 = vadd.f32 %v784, %v958
        %v960 = vpop.f32.mrb[0].mxu0
        %961 = vmatprep.mubr.f32.mxu0 0.0
        %962 = vmatmul.mubr.f32.gmra.mrb[0].mxu0 %v796
        %v963 = vpop.f32.mrb[0].mxu0
        %v964 = vadd.f32 %v784, %v963
        %v965 = vpop.f32.mrb[0].mxu0
        %966 = vmatprep.mubr.f32.mxu0 0.0
        %967 = vmatmul.mubr.f32.gmra.mrb[0].mxu0 %v799
        %v968 = vpop.f32.mrb[0].mxu0
        %v969 = vadd.f32 %v784, %v968
        %v970 = vpop.f32.mrb[0].mxu0
        %971 = vmatprep.mubr.f32.mxu0 0.0
        %972 = vmatmul.mubr.f32.gmra.mrb[0].mxu0 %v802
        %v973 = vpop.f32.mrb[0].mxu0
        %v974 = vadd.f32 %v784, %v973
        %v975 = vpop.f32.mrb[0].mxu0
        %976 = vmatprep.mubr.f32.mxu0 0.0
        %977 = vmatmul.mubr.f32.gmra.mrb[0].mxu0 %v805
        %v978 = vpop.f32.mrb[0].mxu0
        %v979 = vadd.f32 %v784, %v978
        %v980 = vpop.f32.mrb[0].mxu0
        %981 = vmatprep.mubr.f32.mxu0 0.0
        %982 = vmatmul.mubr.f32.gmra.mrb[0].mxu0 %v808
        %v983 = vpop.f32.mrb[0].mxu0
        %v984 = vadd.f32 %v784, %v983
        %v985 = vpop.f32.mrb[0].mxu0
        %986 = vmatprep.mubr.f32.mxu0 0.0
        %987 = vmatmul.mubr.f32.gmra.mrb[0].mxu0 %v811
        %v988 = vpop.f32.mrb[0].mxu0
        %v989 = vadd.f32 %v784, %v988
        %v990 = vpop.f32.mrb[0].mxu0
        %991 = vmatprep.mubr.f32.mxu0 0.0
        %992 = vmatmul.mubr.f32.gmra.mrb[0].mxu0 %v814
        %v993 = vpop.f32.mrb[0].mxu0
        %v994 = vadd.f32 %v784, %v993
        %v995 = vpop.f32.mrb[0].mxu0
        %996 = vmatprep.mubr.f32.mxu0 0.0
        %997 = vmatmul.mubr.f32.gmra.mrb[0].mxu0 %v817
        %v998 = vpop.f32.mrb[0].mxu0
        %v999 = vadd.f32 %v784, %v998
        %v1000 = vpop.f32.mrb[0].mxu0
        %1001 = vmatprep.mubr.f32.mxu0 0.0
        %1002 = vmatmul.mubr.f32.gmra.mrb[0].mxu0 %v820
        %v1003 = vpop.f32.mrb[0].mxu0
        %v1004 = vadd.f32 %v784, %v1003
        %v1005 = vpop.f32.mrb[0].mxu0
        %1006 = vmatprep.mubr.f32.mxu0 0.0
        %1007 = vmatmul.mubr.f32.gmra.mrb[0].mxu0 %v823
        %v1008 = vpop.f32.mrb[0].mxu0
        %v1009 = vadd.f32 %v784, %v1008
        %v1010 = vpop.f32.mrb[0].mxu0
        %1011 = vmatprep.mubr.f32.mxu0 0.0
        %1012 = vmatmul.mubr.f32.gmra.mrb[0].mxu0 %v826
        %v1013 = vpop.f32.mrb[0].mxu0
        %v1014 = vadd.f32 %v784, %v1013
        %v1015 = vpop.f32.mrb[0].mxu0
        %1016 = vmatprep.mubr.f32.mxu0 0.0
        %1017 = vmatmul.mubr.f32.gmra.mrb[0].mxu0 %v829
        %v1018 = vpop.f32.mrb[0].mxu0
        %v1019 = vadd.f32 %v784, %v1018
        %v1020 = vpop.f32.mrb[0].mxu0
        %1021 = vmatprep.mubr.f32.mxu0 0.0
        %1022 = vmatmul.mubr.f32.gmra.mrb[0].mxu0 %v832
        %v1023 = vpop.f32.mrb[0].mxu0
        %v1024 = vadd.f32 %v784, %v1023
        %v1025 = vpop.f32.mrb[0].mxu0
        %1026 = vmatprep.mubr.f32.mxu0 0.0
        %1027 = vmatmul.mubr.f32.gmra.mrb[0].mxu0 %v835
        %v1028 = vpop.f32.mrb[0].mxu0
        %v1029 = vadd.f32 %v784, %v1028
        %v1030 = vpop.f32.mrb[0].mxu0
        %1031 = vmatprep.mubr.f32.mxu0 0.0
        %1032 = vmatmul.mubr.f32.gmra.mrb[0].mxu0 %v838
        %v1033 = vpop.f32.mrb[0].mxu0
        %v1034 = vadd.f32 %v784, %v1033
        %v1035 = vpop.f32.mrb[0].mxu0
        %1036 = vmatprep.mubr.f32.mxu0 0.0
        %1037 = vmatmul.mubr.f32.gmra.mrb[0].mxu0 %v841
        %v1038 = vpop.f32.mrb[0].mxu0
        %v1039 = vadd.f32 %v784, %v1038
        %v1040 = vpop.f32.mrb[0].mxu0
        %1041 = vmatprep.mubr.f32.mxu0 0.0
        %1042 = vmatmul.mubr.f32.gmra.mrb[0].mxu0 %v844
        %v1043 = vpop.f32.mrb[0].mxu0
        %v1044 = vadd.f32 %v784, %v1043
        %v1045 = vpop.f32.mrb[0].mxu0
        %1046 = vmatprep.mubr.f32.mxu0 0.0
        %1047 = vmatmul.mubr.f32.gmra.mrb[0].mxu0 %v847
        %v1048 = vpop.f32.mrb[0].mxu0
        %v1049 = vadd.f32 %v784, %v1048
        %v1050 = vpop.f32.mrb[0].mxu0
        %1051 = vmatprep.mubr.f32.mxu0 0.0
        %1052 = vmatmul.mubr.f32.gmra.mrb[0].mxu0 %v850
        %v1053 = vpop.f32.mrb[0].mxu0
        %v1054 = vadd.f32 %v784, %v1053
        %v1055 = vpop.f32.mrb[0].mxu0
        %1056 = vmatprep.mubr.f32.mxu0 0.0
        %1057 = vmatmul.mubr.f32.gmra.mrb[0].mxu0 %v853
        %v1058 = vpop.f32.mrb[0].mxu0
        %v1059 = vadd.f32 %v784, %v1058
        %v1060 = vpop.f32.mrb[0].mxu0
        %1061 = vmatprep.mubr.f32.mxu0 0.0
        %1062 = vmatmul.mubr.f32.gmra.mrb[0].mxu0 %v856
        %v1063 = vpop.f32.mrb[0].mxu0
        %v1064 = vadd.f32 %v784, %v1063
        %v1065 = vpop.f32.mrb[0].mxu0
        %1066 = vmatprep.mubr.f32.mxu0 0.0
        %1067 = vmatmul.mubr.f32.gmra.mrb[0].mxu0 %v859
        %v1068 = vpop.f32.mrb[0].mxu0
        %v1069 = vadd.f32 %v784, %v1068
        %v1070 = vpop.f32.mrb[0].mxu0
        %1071 = vmatprep.mubr.f32.mxu0 0.0
        %1072 = vmatmul.mubr.f32.gmra.mrb[0].mxu0 %v862
        %v1073 = vpop.f32.mrb[0].mxu0
        %v1074 = vadd.f32 %v784, %v1073
        %v1075 = vpop.f32.mrb[0].mxu0
        %1076 = vmatprep.mubr.f32.mxu0 0.0
        %1077 = vmatmul.mubr.f32.gmra.mrb[0].mxu0 %v865
        %v1078 = vpop.f32.mrb[0].mxu0
        %v1079 = vadd.f32 %v784, %v1078
        %v1080 = vpop.f32.mrb[0].mxu0
        %1081 = vmatprep.mubr.f32.mxu0 0.0
        %1082 = vmatmul.mubr.f32.gmra.mrb[0].mxu0 %v868
        %v1083 = vpop.f32.mrb[0].mxu0
        %v1084 = vadd.f32 %v784, %v1083
        %v1085 = vpop.f32.mrb[0].mxu0
        %1086 = vmatprep.mubr.f32.mxu0 0.0
        %1087 = vmatmul.mubr.f32.gmra.mrb[0].mxu0 %v871
        %v1088 = vpop.f32.mrb[0].mxu0
        %v1089 = vadd.f32 %v784, %v1088
        %v1090 = vpop.f32.mrb[0].mxu0
        %1091 = vmatprep.mubr.f32.mxu0 0.0
        %1092 = vmatmul.mubr.f32.gmra.mrb[0].mxu0 %v874
        %v1093 = vpop.f32.mrb[0].mxu0
        %v1094 = vadd.f32 %v784, %v1093
        %v1095 = vpop.f32.mrb[0].mxu0
        %1096 = vmatprep.mubr.f32.mxu0 0.0
        %1097 = vmatmul.mubr.f32.gmra.mrb[0].mxu0 %v877
        %v1098 = vpop.f32.mrb[0].mxu0
        %v1099 = vadd.f32 %v784, %v1098
        %v1100 = vpop.f32.mrb[0].mxu0
        %1101 = vmatprep.mubr.f32.mxu0 0.0
        %1102 = vmatmul.mubr.f32.gmra.mrb[0].mxu0 %v880
        %v1103 = vpop.f32.mrb[0].mxu0
        %v1104 = vadd.f32 %v784, %v1103
        %v1105 = vpop.f32.mrb[0].mxu0
        %1106 = vdwg.mxu0
        %vm1107 = vcmask 785408
        %1108 = vst.msk [vmem:[%s245] sm:$0xff] %vm1107, %v949
        %1109 = vst.msk [vmem:[%s245 + $0x8] sm:$0xff] %vm1107, %v954
        %1110 = vst.msk [vmem:[%s245 + $0x10] sm:$0xff] %vm1107, %v959
        %1111 = vst.msk [vmem:[%s245 + $0x18] sm:$0xff] %vm1107, %v964
        %1112 = vst.msk [vmem:[%s245 + $0x20] sm:$0xff] %vm1107, %v969
        %1113 = vst.msk [vmem:[%s245 + $0x28] sm:$0xff] %vm1107, %v974
        %1114 = vst.msk [vmem:[%s245 + $0x30] sm:$0xff] %vm1107, %v979
        %1115 = vst.msk [vmem:[%s245 + $0x38] sm:$0xff] %vm1107, %v984
        %1116 = vst.msk [vmem:[%s245 + $0x40] sm:$0xff] %vm1107, %v989
        %1117 = vst.msk [vmem:[%s245 + $0x48] sm:$0xff] %vm1107, %v994
        %1118 = vst.msk [vmem:[%s245 + $0x50] sm:$0xff] %vm1107, %v999
        %1119 = vst.msk [vmem:[%s245 + $0x58] sm:$0xff] %vm1107, %v1004
        %1120 = vst.msk [vmem:[%s245 + $0x60] sm:$0xff] %vm1107, %v1009
        %1121 = vst.msk [vmem:[%s245 + $0x68] sm:$0xff] %vm1107, %v1014
        %1122 = vst.msk [vmem:[%s245 + $0x70] sm:$0xff] %vm1107, %v1019
        %1123 = vst.msk [vmem:[%s245 + $0x78] sm:$0xff] %vm1107, %v1024
        %1124 = vst.msk [vmem:[%s245 + $0x80] sm:$0xff] %vm1107, %v1029
        %1125 = vst.msk [vmem:[%s245 + $0x88] sm:$0xff] %vm1107, %v1034
        %1126 = vst.msk [vmem:[%s245 + $0x90] sm:$0xff] %vm1107, %v1039
        %1127 = vst.msk [vmem:[%s245 + $0x98] sm:$0xff] %vm1107, %v1044
        %1128 = vst.msk [vmem:[%s245 + $0xa0] sm:$0xff] %vm1107, %v1049
        %1129 = vst.msk [vmem:[%s245 + $0xa8] sm:$0xff] %vm1107, %v1054
        %1130 = vst.msk [vmem:[%s245 + $0xb0] sm:$0xff] %vm1107, %v1059
        %1131 = vst.msk [vmem:[%s245 + $0xb8] sm:$0xff] %vm1107, %v1064
        %1132 = vst.msk [vmem:[%s245 + $0xc0] sm:$0xff] %vm1107, %v1069
        %1133 = vst.msk [vmem:[%s245 + $0xc8] sm:$0xff] %vm1107, %v1074
        %1134 = vst.msk [vmem:[%s245 + $0xd0] sm:$0xff] %vm1107, %v1079
        %1135 = vst.msk [vmem:[%s245 + $0xd8] sm:$0xff] %vm1107, %v1084
        %1136 = vst.msk [vmem:[%s245 + $0xe0] sm:$0xff] %vm1107, %v1089
        %1137 = vst.msk [vmem:[%s245 + $0xe8] sm:$0xff] %vm1107, %v1094
        %1138 = vst.msk [vmem:[%s245 + $0xf0] sm:$0xff] %vm1107, %v1099
        %1139 = vst.msk [vmem:[%s245 + $0xf8] sm:$0xff] %vm1107, %v1104
        %s1140 = smul.u32 32, %s19
        %p1141 = scmp.lt.s32.totalorder %s1140, 63
        %s1142 = scalar_select %p1141, %s1140, 63
        %s1143 = smul.addr %s1142, 8
        %s1144 = scalar_lea.vmem %s5, %s1143
        // Predicated region
        $region45: #{transformer_block_forward.7} parent=39 // pred_check
          %p1145 = pneg %p147
        $region46: #{transformer_block_forward.7} parent=39 // pred_check_branch
          %1147 = sbr.rel (%p1145) target = $region48
        $region47: #{transformer_block_forward.7} parent=39 // pred_region
          %s1148 = smul.u32 32, %s19
        $region48: #{transformer_block_forward.7} parent=39 // pred_fallthru
          _
      $region40: #{transformer_block_forward.7} parent=5 // pred_fallthru
        _
      %p1149 = scmp.le.s32.totalorder 2, %s14
      // Predicated region
      $region49: #{transformer_block_forward.7} parent=5 // pred_check
        %p1150 = pneg %p1149
      $region50: #{transformer_block_forward.7} parent=5 // pred_check_branch
        %1152 = sbr.rel (%p1150) target = $region52
      $region51: #{transformer_block_forward.7} parent=5 // pred_region
        %s1153 = ssub.s32 %s14, 2
        // Predicated region
        $region53: #{transformer_block_forward.7} parent=51 // pred_check
          %p1154 = pneg %p153
        $region54: #{transformer_block_forward.7} parent=51 // pred_check_branch
          %1156 = sbr.rel (%p1154) target = $region56
        $region55: #{transformer_block_forward.7} parent=51 // pred_region
          %s1157 = smul.u32 32, %s20
          %p1158 = scmp.lt.s32.totalorder %s1157, 63
          %s1159 = scalar_select %p1158, %s1157, 63
          %s1160 = smul.addr %s1159, 8
          %s1161 = scalar_lea.vmem %s5, %s1160
        $region56: #{transformer_block_forward.7} parent=51 // pred_fallthru
          _
      $region52: #{transformer_block_forward.7} parent=5 // pred_fallthru
        _
    $region6: #{transformer_block_forward.7} parent=1 // loop_footer
      %s18 = sadd.s32 1, %s14
    $region7: #{transformer_block_forward.7} parent=1 // loop_footer_branch
      %13 = sbr.rel target = $region3
    $region8: #{transformer_block_forward.7} parent=1 // loop_exit
      _
    %1162 = vsyncpa [#allocation3], 1
    %s1163 = scalar_lea.sflag [#allocation3], 1
    %1164 = vsyncpa %s1163, 1

// kernel: transformer_block_forward.8
$region0: #{transformer_block_forward.8}
  #allocation0 [shape = 'u32[]', space=smem, size = 0x4, offset = 0x4, fixed_abs, tag = 'smem constant byte address 0x4 - core index']
  #allocation1 [shape = 'u32[144,128]{1,0:T(1,128)}', space=vmem, size = 0x12000, scoped, tag = 'internal scratch']
  %s0 = inlined_call_operand.vmem [shape: f32[2,18,18,96], index: 0, kind: input, shape index: {}]
  %s1 = inlined_call_operand.vmem [shape: f32[9,96], index: 1, kind: input, shape index: {}]
  %s2 = inlined_call_operand.vmem [shape: f32[1,96], index: 2, kind: input, shape index: {}]
  %s3 = inlined_call_operand.vmem [shape: f32[2,16,16,96], index: 3, kind: output, shape index: {}]
  %s4 = sld [smem:[#allocation0]]
  $region45: #{transformer_block_forward.8} parent=0
    _
  %s6 = ssub.s32 1, %s4
  %s7 = scalar_select 0, %s6, %s4
  loop: start=0, step=1, limit=4
  $region2: #{transformer_block_forward.8} parent=0 // loop_pre_header
    _
  $region3: #{transformer_block_forward.8} parent=0 // loop_header
    %s9 = sphi 0, %s13
    %p10 = scmp.ge.s32.totalorder %s9, 4
    %s19 = sphi 0, %s21
    %s22 = sphi 0, %s19
    %s23 = sphi 0, %s22
    %s39 = sphi 0, %s23
    %s43 = sphi 0, %s43
    %s45 = sphi 0, %s43
    %s46 = sphi 0, %s45
    %s60 = sphi 0, %s46
    %s64 = sphi 0, %s64
    %s66 = sphi 0, %s64
    %s67 = sphi 0, %s66
    %s81 = sphi 0, %s67
    %s87 = sphi 0, %s89
    %s90 = sphi 0, %s87
    %s91 = sphi 0, %s90
    %s107 = sphi 0, %s91
  $region4: #{transformer_block_forward.8} parent=0 // loop_header_branch
    %12 = sbr.rel (%p10) target = $region8
  $region5: #{transformer_block_forward.8} parent=0 // loop_body
    %s14 = ssub.s32 %s9, 1
    %s15 = ssub.s32 %s9, 2
    %s16 = sadd.s32 %s9, 1
    %s17 = ssub.s32 %s9, %s16
    %p18 = scmp.eq.s32.totalorder %s17, 0
    %s20 = sadd.s32 %s19, 1
    %s21 = scalar_select %p18, %s19, %s20
    %p24 = pneg %p18
    %p25 = scmp.eq.s32.totalorder %s9, 1
    %p26 = por %p24, %p25
    %p27 = scmp.ne.s32.totalorder %s19, %s22
    %p28 = scmp.eq.s32.totalorder %s9, 0
    %p29 = por %p27, %p28
    %p30 = scmp.ne.s32.totalorder %s19, %s22
    %p31 = scmp.eq.s32.totalorder %s14, 1
    %p32 = por %p30, %p31
    %p33 = scmp.ne.s32.totalorder %s22, %s23
    %p34 = scmp.eq.s32.totalorder %s14, 0
    %p35 = por %p33, %p34
    %p36 = scmp.ne.s32.totalorder %s22, %s23
    %p37 = scmp.eq.s32.totalorder %s15, 1
    %p38 = por %p36, %p37
    %p40 = scmp.ne.s32.totalorder %s23, %s39
    %p41 = scmp.eq.s32.totalorder %s15, 0
    %p42 = por %p40, %p41
    %s44 = sadd.s32 %s43, 1
    %p47 = scmp.eq.s32.totalorder %s9, 1
    %p48 = scmp.ne.s32.totalorder %s43, %s45
    %p49 = scmp.eq.s32.totalorder %s9, 0
    %p50 = por %p48, %p49
    %p51 = scmp.ne.s32.totalorder %s43, %s45
    %p52 = scmp.eq.s32.totalorder %s14, 1
    %p53 = por %p51, %p52
    %p54 = scmp.ne.s32.totalorder %s45, %s46
    %p55 = scmp.eq.s32.totalorder %s14, 0
    %p56 = por %p54, %p55
    %p57 = scmp.ne.s32.totalorder %s45, %s46
    %p58 = scmp.eq.s32.totalorder %s15, 1
    %p59 = por %p57, %p58
    %p61 = scmp.ne.s32.totalorder %s46, %s60
    %p62 = scmp.eq.s32.totalorder %s15, 0
    %p63 = por %p61, %p62
    %s65 = sadd.s32 %s64, 1
    %p68 = scmp.eq.s32.totalorder %s9, 1
    %p69 = scmp.ne.s32.totalorder %s64, %s66
    %p70 = scmp.eq.s32.totalorder %s9, 0
    %p71 = por %p69, %p70
    %p72 = scmp.ne.s32.totalorder %s64, %s66
    %p73 = scmp.eq.s32.totalorder %s14, 1
    %p74 = por %p72, %p73
    %p75 = scmp.ne.s32.totalorder %s66, %s67
    %p76 = scmp.eq.s32.totalorder %s14, 0
    %p77 = por %p75, %p76
    %p78 = scmp.ne.s32.totalorder %s66, %s67
    %p79 = scmp.eq.s32.totalorder %s15, 1
    %p80 = por %p78, %p79
    %p82 = scmp.ne.s32.totalorder %s67, %s81
    %p83 = scmp.eq.s32.totalorder %s15, 0
    %p84 = por %p82, %p83
    %s85 = ssub.s32 %s9, %s16
    %p86 = scmp.eq.s32.totalorder %s85, 0
    %s88 = sadd.s32 %s87, 1
    %s89 = scalar_select %p86, %s87, %s88
    %p92 = pneg %p86
    %p93 = scmp.eq.s32.totalorder %s9, 1
    %p94 = por %p92, %p93
    %p95 = scmp.ne.s32.totalorder %s87, %s90
    %p96 = scmp.eq.s32.totalorder %s9, 0
    %p97 = por %p95, %p96
    %p98 = scmp.ne.s32.totalorder %s87, %s90
    %p99 = scmp.eq.s32.totalorder %s14, 1
    %p100 = por %p98, %p99
    %p101 = scmp.ne.s32.totalorder %s90, %s91
    %p102 = scmp.eq.s32.totalorder %s14, 0
    %p103 = por %p101, %p102
    %p104 = scmp.ne.s32.totalorder %s90, %s91
    %p105 = scmp.eq.s32.totalorder %s15, 1
    %p106 = por %p104, %p105
    %p108 = scmp.ne.s32.totalorder %s91, %s107
    %p109 = scmp.eq.s32.totalorder %s15, 0
    %p110 = por %p108, %p109
    %p111 = scmp.le.s32.totalorder 1, %s9
    %p112 = scmp.lt.s32.totalorder %s9, 3
    %p113 = pnand %p111, %p112
    %p114 = pneg %p113
    // Predicated region
    $region9: #{transformer_block_forward.8} parent=5 // pred_check
      _
    $region10: #{transformer_block_forward.8} parent=5 // pred_check_branch
      %116 = sbr.rel (%p113) target = $region12
    $region11: #{transformer_block_forward.8} parent=5 // pred_region
      %s117 = ssub.s32 %s9, 1
      // Predicated region
      $region13: #{transformer_block_forward.8} parent=11 // pred_check
        %p118 = pneg %p56
      $region14: #{transformer_block_forward.8} parent=11 // pred_check_branch
        %120 = sbr.rel (%p118) target = $region16
      $region15: #{transformer_block_forward.8} parent=11 // pred_region
        _
      $region16: #{transformer_block_forward.8} parent=11 // pred_fallthru
        _
      // Predicated region
      $region17: #{transformer_block_forward.8} parent=11 // pred_check
        %p121 = pneg %p77
      $region18: #{transformer_block_forward.8} parent=11 // pred_check_branch
        %123 = sbr.rel (%p121) target = $region20
      $region19: #{transformer_block_forward.8} parent=11 // pred_region
        _
      $region20: #{transformer_block_forward.8} parent=11 // pred_fallthru
        _
    $region12: #{transformer_block_forward.8} parent=5 // pred_fallthru
      _
    %p124 = scmp.lt.s32.totalorder %s9, 2
    // Predicated region
    $region21: #{transformer_block_forward.8} parent=5 // pred_check
      %p125 = pneg %p124
    $region22: #{transformer_block_forward.8} parent=5 // pred_check_branch
      %127 = sbr.rel (%p125) target = $region24
    $region23: #{transformer_block_forward.8} parent=5 // pred_region
      // Predicated region
      $region25: #{transformer_block_forward.8} parent=23 // pred_check
        %p128 = pneg %p29
      $region26: #{transformer_block_forward.8} parent=23 // pred_check_branch
        %130 = sbr.rel (%p128) target = $region28
      $region27: #{transformer_block_forward.8} parent=23 // pred_region
        %p131 = scmp.lt.s32.totalorder %s9, 1
        %s132 = scalar_select %p131, %s9, 1
        %s133 = smul.addr %s132, 54
        %s134 = smul.addr %s133, 8
        %s135 = scalar_lea.vmem %s0, %s134
      $region28: #{transformer_block_forward.8} parent=23 // pred_fallthru
        _
    $region24: #{transformer_block_forward.8} parent=5 // pred_fallthru
      _
    %p136 = scmp.le.s32.totalorder 1, %s9
    %p137 = scmp.lt.s32.totalorder %s9, 3
    %p138 = pnand %p136, %p137
    %p139 = pneg %p138
    // Predicated region
    $region29: #{transformer_block_forward.8} parent=5 // pred_check
      _
    $region30: #{transformer_block_forward.8} parent=5 // pred_check_branch
      %141 = sbr.rel (%p138) target = $region32
    $region31: #{transformer_block_forward.8} parent=5 // pred_region
      %s142 = ssub.s32 %s9, 1
      %p143 = scmp.lt.s32.totalorder %s14, 1
      %s144 = scalar_select %p143, %s14, 1
      %s145 = smul.addr %s144, 54
      %s146 = smul.addr %s145, 8
      %s147 = scalar_lea.vmem %s0, %s146
      %p148 = pneg %p35
      %p149 = pneg %p32
      %p150 = pneg %p56
      %p151 = pneg %p53
      %p152 = pneg %p77
      %p153 = pneg %p74
      %p154 = pneg %p103
      %p155 = pneg %p100
      %p156 = scmp.lt.s32.totalorder %s14, 1
      %s157 = scalar_select %p156, %s14, 1
      %s158 = smul.addr %s157, 32
      %s159 = smul.addr %s158, 8
      %s160 = scalar_lea.vmem %s3, %s159
      %p161 = scmp.lt.s32.totalorder %s14, 1
      %s162 = scalar_select %p161, %s14, 1
      %s163 = smul.addr %s162, 54
      %s164 = smul.addr %s163, 8
      %s165 = scalar_lea.vmem %s0, %s164
      %p166 = scmp.lt.s32.totalorder %s14, 1
      %s167 = scalar_select %p166, %s14, 1
      %s168 = smul.addr %s167, 32
      %s169 = smul.addr %s168, 8
      %s170 = scalar_lea.vmem %s3, %s169
      %v171 = vld [vmem:[%s165] sm:$0xff]
      %v172 = vld [vmem:[%s165 + $0x8] sm:$0xff]
      %v173 = vld [vmem:[%s165 + $0x10] sm:$0x3]
      %v174 = vld [vmem:[%s165 + $0x18] sm:$0xff]
      %v175 = vld [vmem:[%s165 + $0x20] sm:$0xff]
      %v176 = vld [vmem:[%s165 + $0x28] sm:$0x3]
      %v177 = vld [vmem:[%s165 + $0x30] sm:$0xff]
      %v178 = vld [vmem:[%s165 + $0x38] sm:$0xff]
      %v179 = vld [vmem:[%s165 + $0x40] sm:$0x3]
      %v180 = vld [vmem:[%s165 + $0x48] sm:$0xff]
      %v181 = vld [vmem:[%s165 + $0x50] sm:$0xff]
      %v182 = vld [vmem:[%s165 + $0x58] sm:$0x3]
      %v183 = vld [vmem:[%s165 + $0x60] sm:$0xff]
      %v184 = vld [vmem:[%s165 + $0x68] sm:$0xff]
      %v185 = vld [vmem:[%s165 + $0x70] sm:$0x3]
      %v186 = vld [vmem:[%s165 + $0x78] sm:$0xff]
      %v187 = vld [vmem:[%s165 + $0x80] sm:$0xff]
      %v188 = vld [vmem:[%s165 + $0x88] sm:$0x3]
      %v189 = vld [vmem:[%s165 + $0x90] sm:$0xff]
      %v190 = vld [vmem:[%s165 + $0x98] sm:$0xff]
      %v191 = vld [vmem:[%s165 + $0xa0] sm:$0x3]
      %v192 = vld [vmem:[%s165 + $0xa8] sm:$0xff]
      %v193 = vld [vmem:[%s165 + $0xb0] sm:$0xff]
      %v194 = vld [vmem:[%s165 + $0xb8] sm:$0x3]
      %v195 = vld [vmem:[%s165 + $0xc0] sm:$0xff]
      %v196 = vld [vmem:[%s165 + $0xc8] sm:$0xff]
      %v197 = vld [vmem:[%s165 + $0xd0] sm:$0x3]
      %v198 = vld [vmem:[%s165 + $0xd8] sm:$0xff]
      %v199 = vld [vmem:[%s165 + $0xe0] sm:$0xff]
      %v200 = vld [vmem:[%s165 + $0xe8] sm:$0x3]
      %v201 = vld [vmem:[%s165 + $0xf0] sm:$0xff]
      %v202 = vld [vmem:[%s165 + $0xf8] sm:$0xff]
      %v203 = vld [vmem:[%s165 + $0x100] sm:$0x3]
      %v204 = vld [vmem:[%s165 + $0x108] sm:$0xff]
      %v205 = vld [vmem:[%s165 + $0x110] sm:$0xff]
      %v206 = vld [vmem:[%s165 + $0x118] sm:$0x3]
      %v207 = vld [vmem:[%s165 + $0x120] sm:$0xff]
      %v208 = vld [vmem:[%s165 + $0x128] sm:$0xff]
      %v209 = vld [vmem:[%s165 + $0x130] sm:$0x3]
      %v210 = vld [vmem:[%s165 + $0x138] sm:$0xff]
      %v211 = vld [vmem:[%s165 + $0x140] sm:$0xff]
      %v212 = vld [vmem:[%s165 + $0x148] sm:$0x3]
      %v213 = vld [vmem:[%s165 + $0x150] sm:$0xff]
      %v214 = vld [vmem:[%s165 + $0x158] sm:$0xff]
      %v215 = vld [vmem:[%s165 + $0x160] sm:$0x3]
      %v216 = vld [vmem:[%s165 + $0x168] sm:$0xff]
      %v217 = vld [vmem:[%s165 + $0x170] sm:$0xff]
      %v218 = vld [vmem:[%s165 + $0x178] sm:$0x3]
      %v219 = vld [vmem:[%s165 + $0x180] sm:$0xff]
      %v220 = vld [vmem:[%s165 + $0x188] sm:$0xff]
      %v221 = vld [vmem:[%s165 + $0x190] sm:$0x3]
      %v222 = vld [vmem:[%s165 + $0x198] sm:$0xff]
      %v223 = vld [vmem:[%s165 + $0x1a0] sm:$0xff]
      %v224 = vld [vmem:[%s165 + $0x1a8] sm:$0x3]
      %v225 = vld [vmem:[%s1] sm:$0xff]
      %v226 = vld [vmem:[%s1 + $0x8] sm:$0x1]
      %v227 = vlaneseq
      %v228 = vshrl.u32 %v227, 7
      %v229 = vsub.s32 0, %v228
      %v230 = vrot.slane %v225, %v229
      %v231 = vmul.f32 %v171, %v230
      %v232 = vmul.f32 %v172, %v230
      %v233 = vmul.f32 %v174, %v230
      %v234 = vmul.f32 %v175, %v230
      %v235 = vmul.f32 %v177, %v230
      %v236 = vmul.f32 %v178, %v230
      %v237 = vmul.f32 %v180, %v230
      %v238 = vmul.f32 %v181, %v230
      %v239 = vmul.f32 %v183, %v230
      %v240 = vmul.f32 %v184, %v230
      %v241 = vmul.f32 %v186, %v230
      %v242 = vmul.f32 %v187, %v230
      %v243 = vmul.f32 %v189, %v230
      %v244 = vmul.f32 %v190, %v230
      %v245 = vmul.f32 %v192, %v230
      %v246 = vmul.f32 %v193, %v230
      %v247 = vmul.f32 %v195, %v230
      %v248 = vmul.f32 %v196, %v230
      %v249 = vmul.f32 %v198, %v230
      %v250 = vmul.f32 %v199, %v230
      %v251 = vmul.f32 %v201, %v230
      %v252 = vmul.f32 %v202, %v230
      %v253 = vmul.f32 %v204, %v230
      %v254 = vmul.f32 %v205, %v230
      %v255 = vmul.f32 %v207, %v230
      %v256 = vmul.f32 %v208, %v230
      %v257 = vmul.f32 %v210, %v230
      %v258 = vmul.f32 %v211, %v230
      %v259 = vmul.f32 %v213, %v230
      %v260 = vmul.f32 %v214, %v230
      %v261 = vmul.f32 %v216, %v230
      %v262 = vmul.f32 %v217, %v230
      %v263 = vadd.f32 %v231, 0.0
      %v264 = vadd.f32 %v232, 0.0
      %v265 = vadd.f32 %v233, 0.0
      %v266 = vadd.f32 %v234, 0.0
      %v267 = vadd.f32 %v235, 0.0
      %v268 = vadd.f32 %v236, 0.0
      %v269 = vadd.f32 %v237, 0.0
      %v270 = vadd.f32 %v238, 0.0
      %v271 = vadd.f32 %v239, 0.0
      %v272 = vadd.f32 %v240, 0.0
      %v273 = vadd.f32 %v241, 0.0
      %v274 = vadd.f32 %v242, 0.0
      %v275 = vadd.f32 %v243, 0.0
      %v276 = vadd.f32 %v244, 0.0
      %v277 = vadd.f32 %v245, 0.0
      %v278 = vadd.f32 %v246, 0.0
      %v279 = vadd.f32 %v247, 0.0
      %v280 = vadd.f32 %v248, 0.0
      %v281 = vadd.f32 %v249, 0.0
      %v282 = vadd.f32 %v250, 0.0
      %v283 = vadd.f32 %v251, 0.0
      %v284 = vadd.f32 %v252, 0.0
      %v285 = vadd.f32 %v253, 0.0
      %v286 = vadd.f32 %v254, 0.0
      %v287 = vadd.f32 %v255, 0.0
      %v288 = vadd.f32 %v256, 0.0
      %v289 = vadd.f32 %v257, 0.0
      %v290 = vadd.f32 %v258, 0.0
      %v291 = vadd.f32 %v259, 0.0
      %v292 = vadd.f32 %v260, 0.0
      %v293 = vadd.f32 %v261, 0.0
      %v294 = vadd.f32 %v262, 0.0
      %v295 = vlaneseq
      %v296 = vshrl.u32 %v295, 7
      %v297 = vsub.s32 1, %v296
      %v298 = vrot.slane %v225, %v297
      %v299 = vmul.f32 %v171, %v298
      %v300 = vmul.f32 %v172, %v298
      %v301 = vmul.f32 %v173, %v298
      %v302 = vmul.f32 %v174, %v298
      %v303 = vmul.f32 %v175, %v298
      %v304 = vmul.f32 %v176, %v298
      %v305 = vmul.f32 %v177, %v298
      %v306 = vmul.f32 %v178, %v298
      %v307 = vmul.f32 %v179, %v298
      %v308 = vmul.f32 %v180, %v298
      %v309 = vmul.f32 %v181, %v298
      %v310 = vmul.f32 %v182, %v298
      %v311 = vmul.f32 %v183, %v298
      %v312 = vmul.f32 %v184, %v298
      %v313 = vmul.f32 %v185, %v298
      %v314 = vmul.f32 %v186, %v298
      %v315 = vmul.f32 %v187, %v298
      %v316 = vmul.f32 %v188, %v298
      %v317 = vmul.f32 %v189, %v298
      %v318 = vmul.f32 %v190, %v298
      %v319 = vmul.f32 %v191, %v298
      %v320 = vmul.f32 %v192, %v298
      %v321 = vmul.f32 %v193, %v298
      %v322 = vmul.f32 %v194, %v298
      %v323 = vmul.f32 %v195, %v298
      %v324 = vmul.f32 %v196, %v298
      %v325 = vmul.f32 %v197, %v298
      %v326 = vmul.f32 %v198, %v298
      %v327 = vmul.f32 %v199, %v298
      %v328 = vmul.f32 %v200, %v298
      %v329 = vmul.f32 %v201, %v298
      %v330 = vmul.f32 %v202, %v298
      %v331 = vmul.f32 %v203, %v298
      %v332 = vmul.f32 %v204, %v298
      %v333 = vmul.f32 %v205, %v298
      %v334 = vmul.f32 %v206, %v298
      %v335 = vmul.f32 %v207, %v298
      %v336 = vmul.f32 %v208, %v298
      %v337 = vmul.f32 %v209, %v298
      %v338 = vmul.f32 %v210, %v298
      %v339 = vmul.f32 %v211, %v298
      %v340 = vmul.f32 %v212, %v298
      %v341 = vmul.f32 %v213, %v298
      %v342 = vmul.f32 %v214, %v298
      %v343 = vmul.f32 %v215, %v298
      %v344 = vmul.f32 %v216, %v298
      %v345 = vmul.f32 %v217, %v298
      %v346 = vmul.f32 %v218, %v298
      %vm395 = vcmask 1046528
      %v396 = vrot.slane %v299, 1
      %v397 = vrot.slane %v300, 1
      %v398 = vsel %vm395, %v396, %v397
      %v399 = vrot.slane %v301, 1
      %v400 = vsel %vm395, %v397, %v399
      %v401 = vrot.slane %v302, 1
      %v402 = vrot.slane %v303, 1
      %v403 = vsel %vm395, %v401, %v402
      %v404 = vrot.slane %v304, 1
      %v405 = vsel %vm395, %v402, %v404
      %v406 = vrot.slane %v305, 1
      %v407 = vrot.slane %v306, 1
      %v408 = vsel %vm395, %v406, %v407
      %v409 = vrot.slane %v307, 1
      %v410 = vsel %vm395, %v407, %v409
      %v411 = vrot.slane %v308, 1
      %v412 = vrot.slane %v309, 1
      %v413 = vsel %vm395, %v411, %v412
      %v414 = vrot.slane %v310, 1
      %v415 = vsel %vm395, %v412, %v414
      %v416 = vrot.slane %v311, 1
      %v417 = vrot.slane %v312, 1
      %v418 = vsel %vm395, %v416, %v417
      %v419 = vrot.slane %v313, 1
      %v420 = vsel %vm395, %v417, %v419
      %v421 = vrot.slane %v314, 1
      %v422 = vrot.slane %v315, 1
      %v423 = vsel %vm395, %v421, %v422
      %v424 = vrot.slane %v316, 1
      %v425 = vsel %vm395, %v422, %v424
      %v426 = vrot.slane %v317, 1
      %v427 = vrot.slane %v318, 1
      %v428 = vsel %vm395, %v426, %v427
      %v429 = vrot.slane %v319, 1
      %v430 = vsel %vm395, %v427, %v429
      %v431 = vrot.slane %v320, 1
      %v432 = vrot.slane %v321, 1
      %v433 = vsel %vm395, %v431, %v432
      %v434 = vrot.slane %v322, 1
      %v435 = vsel %vm395, %v432, %v434
      %v436 = vrot.slane %v323, 1
      %v437 = vrot.slane %v324, 1
      %v438 = vsel %vm395, %v436, %v437
      %v439 = vrot.slane %v325, 1
      %v440 = vsel %vm395, %v437, %v439
      %v441 = vrot.slane %v326, 1
      %v442 = vrot.slane %v327, 1
      %v443 = vsel %vm395, %v441, %v442
      %v444 = vrot.slane %v328, 1
      %v445 = vsel %vm395, %v442, %v444
      %v446 = vrot.slane %v329, 1
      %v447 = vrot.slane %v330, 1
      %v448 = vsel %vm395, %v446, %v447
      %v449 = vrot.slane %v331, 1
      %v450 = vsel %vm395, %v447, %v449
      %v451 = vrot.slane %v332, 1
      %v452 = vrot.slane %v333, 1
      %v453 = vsel %vm395, %v451, %v452
      %v454 = vrot.slane %v334, 1
      %v455 = vsel %vm395, %v452, %v454
      %v456 = vrot.slane %v335, 1
      %v457 = vrot.slane %v336, 1
      %v458 = vsel %vm395, %v456, %v457
      %v459 = vrot.slane %v337, 1
      %v460 = vsel %vm395, %v457, %v459
      %v461 = vrot.slane %v338, 1
      %v462 = vrot.slane %v339, 1
      %v463 = vsel %vm395, %v461, %v462
      %v464 = vrot.slane %v340, 1
      %v465 = vsel %vm395, %v462, %v464
      %v466 = vrot.slane %v341, 1
      %v467 = vrot.slane %v342, 1
      %v468 = vsel %vm395, %v466, %v467
      %v469 = vrot.slane %v343, 1
      %v470 = vsel %vm395, %v467, %v469
      %v471 = vrot.slane %v344, 1
      %v472 = vrot.slane %v345, 1
      %v473 = vsel %vm395, %v471, %v472
      %v474 = vrot.slane %v346, 1
      %v475 = vsel %vm395, %v472, %v474
      %v508 = vadd.f32 %v263, %v398
      %v509 = vadd.f32 %v264, %v400
      %v510 = vadd.f32 %v265, %v403
      %v511 = vadd.f32 %v266, %v405
      %v512 = vadd.f32 %v267, %v408
      %v513 = vadd.f32 %v268, %v410
      %v514 = vadd.f32 %v269, %v413
      %v515 = vadd.f32 %v270, %v415
      %v516 = vadd.f32 %v271, %v418
      %v517 = vadd.f32 %v272, %v420
      %v518 = vadd.f32 %v273, %v423
      %v519 = vadd.f32 %v274, %v425
      %v520 = vadd.f32 %v275, %v428
      %v521 = vadd.f32 %v276, %v430
      %v522 = vadd.f32 %v277, %v433
      %v523 = vadd.f32 %v278, %v435
      %v524 = vadd.f32 %v279, %v438
      %v525 = vadd.f32 %v280, %v440
      %v526 = vadd.f32 %v281, %v443
      %v527 = vadd.f32 %v282, %v445
      %v528 = vadd.f32 %v283, %v448
      %v529 = vadd.f32 %v284, %v450
      %v530 = vadd.f32 %v285, %v453
      %v531 = vadd.f32 %v286, %v455
      %v532 = vadd.f32 %v287, %v458
      %v533 = vadd.f32 %v288, %v460
      %v534 = vadd.f32 %v289, %v463
      %v535 = vadd.f32 %v290, %v465
      %v536 = vadd.f32 %v291, %v468
      %v537 = vadd.f32 %v292, %v470
      %v538 = vadd.f32 %v293, %v473
      %v539 = vadd.f32 %v294, %v475
      %v540 = vlaneseq
      %v541 = vshrl.u32 %v540, 7
      %v542 = vsub.s32 2, %v541
      %v543 = vrot.slane %v225, %v542
      %v544 = vmul.f32 %v171, %v543
      %v545 = vmul.f32 %v172, %v543
      %v546 = vmul.f32 %v173, %v543
      %v547 = vmul.f32 %v174, %v543
      %v548 = vmul.f32 %v175, %v543
      %v549 = vmul.f32 %v176, %v543
      %v550 = vmul.f32 %v177, %v543
      %v551 = vmul.f32 %v178, %v543
      %v552 = vmul.f32 %v179, %v543
      %v553 = vmul.f32 %v180, %v543
      %v554 = vmul.f32 %v181, %v543
      %v555 = vmul.f32 %v182, %v543
      %v556 = vmul.f32 %v183, %v543
      %v557 = vmul.f32 %v184, %v543
      %v558 = vmul.f32 %v185, %v543
      %v559 = vmul.f32 %v186, %v543
      %v560 = vmul.f32 %v187, %v543
      %v561 = vmul.f32 %v188, %v543
      %v562 = vmul.f32 %v189, %v543
      %v563 = vmul.f32 %v190, %v543
      %v564 = vmul.f32 %v191, %v543
      %v565 = vmul.f32 %v192, %v543
      %v566 = vmul.f32 %v193, %v543
      %v567 = vmul.f32 %v194, %v543
      %v568 = vmul.f32 %v195, %v543
      %v569 = vmul.f32 %v196, %v543
      %v570 = vmul.f32 %v197, %v543
      %v571 = vmul.f32 %v198, %v543
      %v572 = vmul.f32 %v199, %v543
      %v573 = vmul.f32 %v200, %v543
      %v574 = vmul.f32 %v201, %v543
      %v575 = vmul.f32 %v202, %v543
      %v576 = vmul.f32 %v203, %v543
      %v577 = vmul.f32 %v204, %v543
      %v578 = vmul.f32 %v205, %v543
      %v579 = vmul.f32 %v206, %v543
      %v580 = vmul.f32 %v207, %v543
      %v581 = vmul.f32 %v208, %v543
      %v582 = vmul.f32 %v209, %v543
      %v583 = vmul.f32 %v210, %v543
      %v584 = vmul.f32 %v211, %v543
      %v585 = vmul.f32 %v212, %v543
      %v586 = vmul.f32 %v213, %v543
      %v587 = vmul.f32 %v214, %v543
      %v588 = vmul.f32 %v215, %v543
      %v589 = vmul.f32 %v216, %v543
      %v590 = vmul.f32 %v217, %v543
      %v591 = vmul.f32 %v218, %v543
      %vm640 = vcmask 1045504
      %v641 = vrot.slane %v544, 2
      %v642 = vrot.slane %v545, 2
      %v643 = vsel %vm640, %v641, %v642
      %v644 = vrot.slane %v546, 2
      %v645 = vsel %vm640, %v642, %v644
      %v646 = vrot.slane %v547, 2
      %v647 = vrot.slane %v548, 2
      %v648 = vsel %vm640, %v646, %v647
      %v649 = vrot.slane %v549, 2
      %v650 = vsel %vm640, %v647, %v649
      %v651 = vrot.slane %v550, 2
      %v652 = vrot.slane %v551, 2
      %v653 = vsel %vm640, %v651, %v652
      %v654 = vrot.slane %v552, 2
      %v655 = vsel %vm640, %v652, %v654
      %v656 = vrot.slane %v553, 2
      %v657 = vrot.slane %v554, 2
      %v658 = vsel %vm640, %v656, %v657
      %v659 = vrot.slane %v555, 2
      %v660 = vsel %vm640, %v657, %v659
      %v661 = vrot.slane %v556, 2
      %v662 = vrot.slane %v557, 2
      %v663 = vsel %vm640, %v661, %v662
      %v664 = vrot.slane %v558, 2
      %v665 = vsel %vm640, %v662, %v664
      %v666 = vrot.slane %v559, 2
      %v667 = vrot.slane %v560, 2
      %v668 = vsel %vm640, %v666, %v667
      %v669 = vrot.slane %v561, 2
      %v670 = vsel %vm640, %v667, %v669
      %v671 = vrot.slane %v562, 2
      %v672 = vrot.slane %v563, 2
      %v673 = vsel %vm640, %v671, %v672
      %v674 = vrot.slane %v564, 2
      %v675 = vsel %vm640, %v672, %v674
      %v676 = vrot.slane %v565, 2
      %v677 = vrot.slane %v566, 2
      %v678 = vsel %vm640, %v676, %v677
      %v679 = vrot.slane %v567, 2
      %v680 = vsel %vm640, %v677, %v679
      %v681 = vrot.slane %v568, 2
      %v682 = vrot.slane %v569, 2
      %v683 = vsel %vm640, %v681, %v682
      %v684 = vrot.slane %v570, 2
      %v685 = vsel %vm640, %v682, %v684
      %v686 = vrot.slane %v571, 2
      %v687 = vrot.slane %v572, 2
      %v688 = vsel %vm640, %v686, %v687
      %v689 = vrot.slane %v573, 2
      %v690 = vsel %vm640, %v687, %v689
      %v691 = vrot.slane %v574, 2
      %v692 = vrot.slane %v575, 2
      %v693 = vsel %vm640, %v691, %v692
      %v694 = vrot.slane %v576, 2
      %v695 = vsel %vm640, %v692, %v694
      %v696 = vrot.slane %v577, 2
      %v697 = vrot.slane %v578, 2
      %v698 = vsel %vm640, %v696, %v697
      %v699 = vrot.slane %v579, 2
      %v700 = vsel %vm640, %v697, %v699
      %v701 = vrot.slane %v580, 2
      %v702 = vrot.slane %v581, 2
      %v703 = vsel %vm640, %v701, %v702
      %v704 = vrot.slane %v582, 2
      %v705 = vsel %vm640, %v702, %v704
      %v706 = vrot.slane %v583, 2
      %v707 = vrot.slane %v584, 2
      %v708 = vsel %vm640, %v706, %v707
      %v709 = vrot.slane %v585, 2
      %v710 = vsel %vm640, %v707, %v709
      %v711 = vrot.slane %v586, 2
      %v712 = vrot.slane %v587, 2
      %v713 = vsel %vm640, %v711, %v712
      %v714 = vrot.slane %v588, 2
      %v715 = vsel %vm640, %v712, %v714
      %v716 = vrot.slane %v589, 2
      %v717 = vrot.slane %v590, 2
      %v718 = vsel %vm640, %v716, %v717
      %v719 = vrot.slane %v591, 2
      %v720 = vsel %vm640, %v717, %v719
      %v753 = vadd.f32 %v508, %v643
      %v754 = vadd.f32 %v509, %v645
      %v755 = vadd.f32 %v510, %v648
      %v756 = vadd.f32 %v511, %v650
      %v757 = vadd.f32 %v512, %v653
      %v758 = vadd.f32 %v513, %v655
      %v759 = vadd.f32 %v514, %v658
      %v760 = vadd.f32 %v515, %v660
      %v761 = vadd.f32 %v516, %v663
      %v762 = vadd.f32 %v517, %v665
      %v763 = vadd.f32 %v518, %v668
      %v764 = vadd.f32 %v519, %v670
      %v765 = vadd.f32 %v520, %v673
      %v766 = vadd.f32 %v521, %v675
      %v767 = vadd.f32 %v522, %v678
      %v768 = vadd.f32 %v523, %v680
      %v769 = vadd.f32 %v524, %v683
      %v770 = vadd.f32 %v525, %v685
      %v771 = vadd.f32 %v526, %v688
      %v772 = vadd.f32 %v527, %v690
      %v773 = vadd.f32 %v528, %v693
      %v774 = vadd.f32 %v529, %v695
      %v775 = vadd.f32 %v530, %v698
      %v776 = vadd.f32 %v531, %v700
      %v777 = vadd.f32 %v532, %v703
      %v778 = vadd.f32 %v533, %v705
      %v779 = vadd.f32 %v534, %v708
      %v780 = vadd.f32 %v535, %v710
      %v781 = vadd.f32 %v536, %v713
      %v782 = vadd.f32 %v537, %v715
      %v783 = vadd.f32 %v538, %v718
      %v784 = vadd.f32 %v539, %v720
      %v785 = vlaneseq
      %v786 = vshrl.u32 %v785, 7
      %v787 = vsub.s32 3, %v786
      %v788 = vrot.slane %v225, %v787
      %v789 = vmul.f32 %v174, %v788
      %v790 = vmul.f32 %v175, %v788
      %v791 = vmul.f32 %v177, %v788
      %v792 = vmul.f32 %v178, %v788
      %v793 = vmul.f32 %v180, %v788
      %v794 = vmul.f32 %v181, %v788
      %v795 = vmul.f32 %v183, %v788
      %v796 = vmul.f32 %v184, %v788
      %v797 = vmul.f32 %v186, %v788
      %v798 = vmul.f32 %v187, %v788
      %v799 = vmul.f32 %v189, %v788
      %v800 = vmul.f32 %v190, %v788
      %v801 = vmul.f32 %v192, %v788
      %v802 = vmul.f32 %v193, %v788
      %v803 = vmul.f32 %v195, %v788
      %v804 = vmul.f32 %v196, %v788
      %v805 = vmul.f32 %v198, %v788
      %v806 = vmul.f32 %v199, %v788
      %v807 = vmul.f32 %v201, %v788
      %v808 = vmul.f32 %v202, %v788
      %v809 = vmul.f32 %v204, %v788
      %v810 = vmul.f32 %v205, %v788
      %v811 = vmul.f32 %v207, %v788
      %v812 = vmul.f32 %v208, %v788
      %v813 = vmul.f32 %v210, %v788
      %v814 = vmul.f32 %v211, %v788
      %v815 = vmul.f32 %v213, %v788
      %v816 = vmul.f32 %v214, %v788
      %v817 = vmul.f32 %v216, %v788
      %v818 = vmul.f32 %v217, %v788
      %v819 = vmul.f32 %v219, %v788
      %v820 = vmul.f32 %v220, %v788
      %v821 = vadd.f32 %v753, %v789
      %v822 = vadd.f32 %v754, %v790
      %v823 = vadd.f32 %v755, %v791
      %v824 = vadd.f32 %v756, %v792
      %v825 = vadd.f32 %v757, %v793
      %v826 = vadd.f32 %v758, %v794
      %v827 = vadd.f32 %v759, %v795
      %v828 = vadd.f32 %v760, %v796
      %v829 = vadd.f32 %v761, %v797
      %v830 = vadd.f32 %v762, %v798
      %v831 = vadd.f32 %v763, %v799
      %v832 = vadd.f32 %v764, %v800
      %v833 = vadd.f32 %v765, %v801
      %v834 = vadd.f32 %v766, %v802
      %v835 = vadd.f32 %v767, %v803
      %v836 = vadd.f32 %v768, %v804
      %v837 = vadd.f32 %v769, %v805
      %v838 = vadd.f32 %v770, %v806
      %v839 = vadd.f32 %v771, %v807
      %v840 = vadd.f32 %v772, %v808
      %v841 = vadd.f32 %v773, %v809
      %v842 = vadd.f32 %v774, %v810
      %v843 = vadd.f32 %v775, %v811
      %v844 = vadd.f32 %v776, %v812
      %v845 = vadd.f32 %v777, %v813
      %v846 = vadd.f32 %v778, %v814
      %v847 = vadd.f32 %v779, %v815
      %v848 = vadd.f32 %v780, %v816
      %v849 = vadd.f32 %v781, %v817
      %v850 = vadd.f32 %v782, %v818
      %v851 = vadd.f32 %v783, %v819
      %v852 = vadd.f32 %v784, %v820
      %v853 = vlaneseq
      %v854 = vshrl.u32 %v853, 7
      %v855 = vsub.s32 4, %v854
      %v856 = vrot.slane %v225, %v855
      %v857 = vmul.f32 %v174, %v856
      %v858 = vmul.f32 %v175, %v856
      %v859 = vmul.f32 %v176, %v856
      %v860 = vmul.f32 %v177, %v856
      %v861 = vmul.f32 %v178, %v856
      %v862 = vmul.f32 %v179, %v856
      %v863 = vmul.f32 %v180, %v856
      %v864 = vmul.f32 %v181, %v856
      %v865 = vmul.f32 %v182, %v856
      %v866 = vmul.f32 %v183, %v856
      %v867 = vmul.f32 %v184, %v856
      %v868 = vmul.f32 %v185, %v856
      %v869 = vmul.f32 %v186, %v856
      %v870 = vmul.f32 %v187, %v856
      %v871 = vmul.f32 %v188, %v856
      %v872 = vmul.f32 %v189, %v856
      %v873 = vmul.f32 %v190, %v856
      %v874 = vmul.f32 %v191, %v856
      %v875 = vmul.f32 %v192, %v856
      %v876 = vmul.f32 %v193, %v856
      %v877 = vmul.f32 %v194, %v856
      %v878 = vmul.f32 %v195, %v856
      %v879 = vmul.f32 %v196, %v856
      %v880 = vmul.f32 %v197, %v856
      %v881 = vmul.f32 %v198, %v856
      %v882 = vmul.f32 %v199, %v856
      %v883 = vmul.f32 %v200, %v856
      %v884 = vmul.f32 %v201, %v856
      %v885 = vmul.f32 %v202, %v856
      %v886 = vmul.f32 %v203, %v856
      %v887 = vmul.f32 %v204, %v856
      %v888 = vmul.f32 %v205, %v856
      %v889 = vmul.f32 %v206, %v856
      %v890 = vmul.f32 %v207, %v856
      %v891 = vmul.f32 %v208, %v856
      %v892 = vmul.f32 %v209, %v856
      %v893 = vmul.f32 %v210, %v856
      %v894 = vmul.f32 %v211, %v856
      %v895 = vmul.f32 %v212, %v856
      %v896 = vmul.f32 %v213, %v856
      %v897 = vmul.f32 %v214, %v856
      %v898 = vmul.f32 %v215, %v856
      %v899 = vmul.f32 %v216, %v856
      %v900 = vmul.f32 %v217, %v856
      %v901 = vmul.f32 %v218, %v856
      %v902 = vmul.f32 %v219, %v856
      %v903 = vmul.f32 %v220, %v856
      %v904 = vmul.f32 %v221, %v856
      %v953 = vrot.slane %v857, 1
      %v954 = vrot.slane %v858, 1
      %v955 = vsel %vm395, %v953, %v954
      %v956 = vrot.slane %v859, 1
      %v957 = vsel %vm395, %v954, %v956
      %v958 = vrot.slane %v860, 1
      %v959 = vrot.slane %v861, 1
      %v960 = vsel %vm395, %v958, %v959
      %v961 = vrot.slane %v862, 1
      %v962 = vsel %vm395, %v959, %v961
      %v963 = vrot.slane %v863, 1
      %v964 = vrot.slane %v864, 1
      %v965 = vsel %vm395, %v963, %v964
      %v966 = vrot.slane %v865, 1
      %v967 = vsel %vm395, %v964, %v966
      %v968 = vrot.slane %v866, 1
      %v969 = vrot.slane %v867, 1
      %v970 = vsel %vm395, %v968, %v969
      %v971 = vrot.slane %v868, 1
      %v972 = vsel %vm395, %v969, %v971
      %v973 = vrot.slane %v869, 1
      %v974 = vrot.slane %v870, 1
      %v975 = vsel %vm395, %v973, %v974
      %v976 = vrot.slane %v871, 1
      %v977 = vsel %vm395, %v974, %v976
      %v978 = vrot.slane %v872, 1
      %v979 = vrot.slane %v873, 1
      %v980 = vsel %vm395, %v978, %v979
      %v981 = vrot.slane %v874, 1
      %v982 = vsel %vm395, %v979, %v981
      %v983 = vrot.slane %v875, 1
      %v984 = vrot.slane %v876, 1
      %v985 = vsel %vm395, %v983, %v984
      %v986 = vrot.slane %v877, 1
      %v987 = vsel %vm395, %v984, %v986
      %v988 = vrot.slane %v878, 1
      %v989 = vrot.slane %v879, 1
      %v990 = vsel %vm395, %v988, %v989
      %v991 = vrot.slane %v880, 1
      %v992 = vsel %vm395, %v989, %v991
      %v993 = vrot.slane %v881, 1
      %v994 = vrot.slane %v882, 1
      %v995 = vsel %vm395, %v993, %v994
      %v996 = vrot.slane %v883, 1
      %v997 = vsel %vm395, %v994, %v996
      %v998 = vrot.slane %v884, 1
      %v999 = vrot.slane %v885, 1
      %v1000 = vsel %vm395, %v998, %v999
      %v1001 = vrot.slane %v886, 1
      %v1002 = vsel %vm395, %v999, %v1001
      %v1003 = vrot.slane %v887, 1
      %v1004 = vrot.slane %v888, 1
      %v1005 = vsel %vm395, %v1003, %v1004
      %v1006 = vrot.slane %v889, 1
      %v1007 = vsel %vm395, %v1004, %v1006
      %v1008 = vrot.slane %v890, 1
      %v1009 = vrot.slane %v891, 1
      %v1010 = vsel %vm395, %v1008, %v1009
      %v1011 = vrot.slane %v892, 1
      %v1012 = vsel %vm395, %v1009, %v1011
      %v1013 = vrot.slane %v893, 1
      %v1014 = vrot.slane %v894, 1
      %v1015 = vsel %vm395, %v1013, %v1014
      %v1016 = vrot.slane %v895, 1
      %v1017 = vsel %vm395, %v1014, %v1016
      %v1018 = vrot.slane %v896, 1
      %v1019 = vrot.slane %v897, 1
      %v1020 = vsel %vm395, %v1018, %v1019
      %v1021 = vrot.slane %v898, 1
      %v1022 = vsel %vm395, %v1019, %v1021
      %v1023 = vrot.slane %v899, 1
      %v1024 = vrot.slane %v900, 1
      %v1025 = vsel %vm395, %v1023, %v1024
      %v1026 = vrot.slane %v901, 1
      %v1027 = vsel %vm395, %v1024, %v1026
      %v1028 = vrot.slane %v902, 1
      %v1029 = vrot.slane %v903, 1
      %v1030 = vsel %vm395, %v1028, %v1029
      %v1031 = vrot.slane %v904, 1
      %v1032 = vsel %vm395, %v1029, %v1031
      %v1065 = vadd.f32 %v821, %v955
      %v1066 = vadd.f32 %v822, %v957
      %v1067 = vadd.f32 %v823, %v960
      %v1068 = vadd.f32 %v824, %v962
      %v1069 = vadd.f32 %v825, %v965
      %v1070 = vadd.f32 %v826, %v967
      %v1071 = vadd.f32 %v827, %v970
      %v1072 = vadd.f32 %v828, %v972
      %v1073 = vadd.f32 %v829, %v975
      %v1074 = vadd.f32 %v830, %v977
      %v1075 = vadd.f32 %v831, %v980
      %v1076 = vadd.f32 %v832, %v982
      %v1077 = vadd.f32 %v833, %v985
      %v1078 = vadd.f32 %v834, %v987
      %v1079 = vadd.f32 %v835, %v990
      %v1080 = vadd.f32 %v836, %v992
      %v1081 = vadd.f32 %v837, %v995
      %v1082 = vadd.f32 %v838, %v997
      %v1083 = vadd.f32 %v839, %v1000
      %v1084 = vadd.f32 %v840, %v1002
      %v1085 = vadd.f32 %v841, %v1005
      %v1086 = vadd.f32 %v842, %v1007
      %v1087 = vadd.f32 %v843, %v1010
      %v1088 = vadd.f32 %v844, %v1012
      %v1089 = vadd.f32 %v845, %v1015
      %v1090 = vadd.f32 %v846, %v1017
      %v1091 = vadd.f32 %v847, %v1020
      %v1092 = vadd.f32 %v848, %v1022
      %v1093 = vadd.f32 %v849, %v1025
      %v1094 = vadd.f32 %v850, %v1027
      %v1095 = vadd.f32 %v851, %v1030
      %v1096 = vadd.f32 %v852, %v1032
      %v1097 = vlaneseq
      %v1098 = vshrl.u32 %v1097, 7
      %v1099 = vsub.s32 5, %v1098
      %v1100 = vrot.slane %v225, %v1099
      %v1101 = vmul.f32 %v174, %v1100
      %v1102 = vmul.f32 %v175, %v1100
      %v1103 = vmul.f32 %v176, %v1100
      %v1104 = vmul.f32 %v177, %v1100
      %v1105 = vmul.f32 %v178, %v1100
      %v1106 = vmul.f32 %v179, %v1100
      %v1107 = vmul.f32 %v180, %v1100
      %v1108 = vmul.f32 %v181, %v1100
      %v1109 = vmul.f32 %v182, %v1100
      %v1110 = vmul.f32 %v183, %v1100
      %v1111 = vmul.f32 %v184, %v1100
      %v1112 = vmul.f32 %v185, %v1100
      %v1113 = vmul.f32 %v186, %v1100
      %v1114 = vmul.f32 %v187, %v1100
      %v1115 = vmul.f32 %v188, %v1100
      %v1116 = vmul.f32 %v189, %v1100
      %v1117 = vmul.f32 %v190, %v1100
      %v1118 = vmul.f32 %v191, %v1100
      %v1119 = vmul.f32 %v192, %v1100
      %v1120 = vmul.f32 %v193, %v1100
      %v1121 = vmul.f32 %v194, %v1100
      %v1122 = vmul.f32 %v195, %v1100
      %v1123 = vmul.f32 %v196, %v1100
      %v1124 = vmul.f32 %v197, %v1100
      %v1125 = vmul.f32 %v198, %v1100
      %v1126 = vmul.f32 %v199, %v1100
      %v1127 = vmul.f32 %v200, %v1100
      %v1128 = vmul.f32 %v201, %v1100
      %v1129 = vmul.f32 %v202, %v1100
      %v1130 = vmul.f32 %v203, %v1100
      %v1131 = vmul.f32 %v204, %v1100
      %v1132 = vmul.f32 %v205, %v1100
      %v1133 = vmul.f32 %v206, %v1100
      %v1134 = vmul.f32 %v207, %v1100
      %v1135 = vmul.f32 %v208, %v1100
      %v1136 = vmul.f32 %v209, %v1100
      %v1137 = vmul.f32 %v210, %v1100
      %v1138 = vmul.f32 %v211, %v1100
      %v1139 = vmul.f32 %v212, %v1100
      %v1140 = vmul.f32 %v213, %v1100
      %v1141 = vmul.f32 %v214, %v1100
      %v1142 = vmul.f32 %v215, %v1100
      %v1143 = vmul.f32 %v216, %v1100
      %v1144 = vmul.f32 %v217, %v1100
      %v1145 = vmul.f32 %v218, %v1100
      %v1146 = vmul.f32 %v219, %v1100
      %v1147 = vmul.f32 %v220, %v1100
      %v1148 = vmul.f32 %v221, %v1100
      %v1197 = vrot.slane %v1101, 2
      %v1198 = vrot.slane %v1102, 2
      %v1199 = vsel %vm640, %v1197, %v1198
      %v1200 = vrot.slane %v1103, 2
      %v1201 = vsel %vm640, %v1198, %v1200
      %v1202 = vrot.slane %v1104, 2
      %v1203 = vrot.slane %v1105, 2
      %v1204 = vsel %vm640, %v1202, %v1203
      %v1205 = vrot.slane %v1106, 2
      %v1206 = vsel %vm640, %v1203, %v1205
      %v1207 = vrot.slane %v1107, 2
      %v1208 = vrot.slane %v1108, 2
      %v1209 = vsel %vm640, %v1207, %v1208
      %v1210 = vrot.slane %v1109, 2
      %v1211 = vsel %vm640, %v1208, %v1210
      %v1212 = vrot.slane %v1110, 2
      %v1213 = vrot.slane %v1111, 2
      %v1214 = vsel %vm640, %v1212, %v1213
      %v1215 = vrot.slane %v1112, 2
      %v1216 = vsel %vm640, %v1213, %v1215
      %v1217 = vrot.slane %v1113, 2
      %v1218 = vrot.slane %v1114, 2
      %v1219 = vsel %vm640, %v1217, %v1218
      %v1220 = vrot.slane %v1115, 2
      %v1221 = vsel %vm640, %v1218, %v1220
      %v1222 = vrot.slane %v1116, 2
      %v1223 = vrot.slane %v1117, 2
      %v1224 = vsel %vm640, %v1222, %v1223
      %v1225 = vrot.slane %v1118, 2
      %v1226 = vsel %vm640, %v1223, %v1225
      %v1227 = vrot.slane %v1119, 2
      %v1228 = vrot.slane %v1120, 2
      %v1229 = vsel %vm640, %v1227, %v1228
      %v1230 = vrot.slane %v1121, 2
      %v1231 = vsel %vm640, %v1228, %v1230
      %v1232 = vrot.slane %v1122, 2
      %v1233 = vrot.slane %v1123, 2
      %v1234 = vsel %vm640, %v1232, %v1233
      %v1235 = vrot.slane %v1124, 2
      %v1236 = vsel %vm640, %v1233, %v1235
      %v1237 = vrot.slane %v1125, 2
      %v1238 = vrot.slane %v1126, 2
      %v1239 = vsel %vm640, %v1237, %v1238
      %v1240 = vrot.slane %v1127, 2
      %v1241 = vsel %vm640, %v1238, %v1240
      %v1242 = vrot.slane %v1128, 2
      %v1243 = vrot.slane %v1129, 2
      %v1244 = vsel %vm640, %v1242, %v1243
      %v1245 = vrot.slane %v1130, 2
      %v1246 = vsel %vm640, %v1243, %v1245
      %v1247 = vrot.slane %v1131, 2
      %v1248 = vrot.slane %v1132, 2
      %v1249 = vsel %vm640, %v1247, %v1248
      %v1250 = vrot.slane %v1133, 2
      %v1251 = vsel %vm640, %v1248, %v1250
      %v1252 = vrot.slane %v1134, 2
      %v1253 = vrot.slane %v1135, 2
      %v1254 = vsel %vm640, %v1252, %v1253
      %v1255 = vrot.slane %v1136, 2
      %v1256 = vsel %vm640, %v1253, %v1255
      %v1257 = vrot.slane %v1137, 2
      %v1258 = vrot.slane %v1138, 2
      %v1259 = vsel %vm640, %v1257, %v1258
      %v1260 = vrot.slane %v1139, 2
      %v1261 = vsel %vm640, %v1258, %v1260
      %v1262 = vrot.slane %v1140, 2
      %v1263 = vrot.slane %v1141, 2
      %v1264 = vsel %vm640, %v1262, %v1263
      %v1265 = vrot.slane %v1142, 2
      %v1266 = vsel %vm640, %v1263, %v1265
      %v1267 = vrot.slane %v1143, 2
      %v1268 = vrot.slane %v1144, 2
      %v1269 = vsel %vm640, %v1267, %v1268
      %v1270 = vrot.slane %v1145, 2
      %v1271 = vsel %vm640, %v1268, %v1270
      %v1272 = vrot.slane %v1146, 2
      %v1273 = vrot.slane %v1147, 2
      %v1274 = vsel %vm640, %v1272, %v1273
      %v1275 = vrot.slane %v1148, 2
      %v1276 = vsel %vm640, %v1273, %v1275
      %v1309 = vadd.f32 %v1065, %v1199
      %v1310 = vadd.f32 %v1066, %v1201
      %v1311 = vadd.f32 %v1067, %v1204
      %v1312 = vadd.f32 %v1068, %v1206
      %v1313 = vadd.f32 %v1069, %v1209
      %v1314 = vadd.f32 %v1070, %v1211
      %v1315 = vadd.f32 %v1071, %v1214
      %v1316 = vadd.f32 %v1072, %v1216
      %v1317 = vadd.f32 %v1073, %v1219
      %v1318 = vadd.f32 %v1074, %v1221
      %v1319 = vadd.f32 %v1075, %v1224
      %v1320 = vadd.f32 %v1076, %v1226
      %v1321 = vadd.f32 %v1077, %v1229
      %v1322 = vadd.f32 %v1078, %v1231
      %v1323 = vadd.f32 %v1079, %v1234
      %v1324 = vadd.f32 %v1080, %v1236
      %v1325 = vadd.f32 %v1081, %v1239
      %v1326 = vadd.f32 %v1082, %v1241
      %v1327 = vadd.f32 %v1083, %v1244
      %v1328 = vadd.f32 %v1084, %v1246
      %v1329 = vadd.f32 %v1085, %v1249
      %v1330 = vadd.f32 %v1086, %v1251
      %v1331 = vadd.f32 %v1087, %v1254
      %v1332 = vadd.f32 %v1088, %v1256
      %v1333 = vadd.f32 %v1089, %v1259
      %v1334 = vadd.f32 %v1090, %v1261
      %v1335 = vadd.f32 %v1091, %v1264
      %v1336 = vadd.f32 %v1092, %v1266
      %v1337 = vadd.f32 %v1093, %v1269
      %v1338 = vadd.f32 %v1094, %v1271
      %v1339 = vadd.f32 %v1095, %v1274
      %v1340 = vadd.f32 %v1096, %v1276
      %v1341 = vlaneseq
      %v1342 = vshrl.u32 %v1341, 7
      %v1343 = vsub.s32 6, %v1342
      %v1344 = vrot.slane %v225, %v1343
      %v1345 = vmul.f32 %v177, %v1344
      %v1346 = vmul.f32 %v178, %v1344
      %v1347 = vmul.f32 %v180, %v1344
      %v1348 = vmul.f32 %v181, %v1344
      %v1349 = vmul.f32 %v183, %v1344
      %v1350 = vmul.f32 %v184, %v1344
      %v1351 = vmul.f32 %v186, %v1344
      %v1352 = vmul.f32 %v187, %v1344
      %v1353 = vmul.f32 %v189, %v1344
      %v1354 = vmul.f32 %v190, %v1344
      %v1355 = vmul.f32 %v192, %v1344
      %v1356 = vmul.f32 %v193, %v1344
      %v1357 = vmul.f32 %v195, %v1344
      %v1358 = vmul.f32 %v196, %v1344
      %v1359 = vmul.f32 %v198, %v1344
      %v1360 = vmul.f32 %v199, %v1344
      %v1361 = vmul.f32 %v201, %v1344
      %v1362 = vmul.f32 %v202, %v1344
      %v1363 = vmul.f32 %v204, %v1344
      %v1364 = vmul.f32 %v205, %v1344
      %v1365 = vmul.f32 %v207, %v1344
      %v1366 = vmul.f32 %v208, %v1344
      %v1367 = vmul.f32 %v210, %v1344
      %v1368 = vmul.f32 %v211, %v1344
      %v1369 = vmul.f32 %v213, %v1344
      %v1370 = vmul.f32 %v214, %v1344
      %v1371 = vmul.f32 %v216, %v1344
      %v1372 = vmul.f32 %v217, %v1344
      %v1373 = vmul.f32 %v219, %v1344
      %v1374 = vmul.f32 %v220, %v1344
      %v1375 = vmul.f32 %v222, %v1344
      %v1376 = vmul.f32 %v223, %v1344
      %v1377 = vadd.f32 %v1309, %v1345
      %v1378 = vadd.f32 %v1310, %v1346
      %v1379 = vadd.f32 %v1311, %v1347
      %v1380 = vadd.f32 %v1312, %v1348
      %v1381 = vadd.f32 %v1313, %v1349
      %v1382 = vadd.f32 %v1314, %v1350
      %v1383 = vadd.f32 %v1315, %v1351
      %v1384 = vadd.f32 %v1316, %v1352
      %v1385 = vadd.f32 %v1317, %v1353
      %v1386 = vadd.f32 %v1318, %v1354
      %v1387 = vadd.f32 %v1319, %v1355
      %v1388 = vadd.f32 %v1320, %v1356
      %v1389 = vadd.f32 %v1321, %v1357
      %v1390 = vadd.f32 %v1322, %v1358
      %v1391 = vadd.f32 %v1323, %v1359
      %v1392 = vadd.f32 %v1324, %v1360
      %v1393 = vadd.f32 %v1325, %v1361
      %v1394 = vadd.f32 %v1326, %v1362
      %v1395 = vadd.f32 %v1327, %v1363
      %v1396 = vadd.f32 %v1328, %v1364
      %v1397 = vadd.f32 %v1329, %v1365
      %v1398 = vadd.f32 %v1330, %v1366
      %v1399 = vadd.f32 %v1331, %v1367
      %v1400 = vadd.f32 %v1332, %v1368
      %v1401 = vadd.f32 %v1333, %v1369
      %v1402 = vadd.f32 %v1334, %v1370
      %v1403 = vadd.f32 %v1335, %v1371
      %v1404 = vadd.f32 %v1336, %v1372
      %v1405 = vadd.f32 %v1337, %v1373
      %v1406 = vadd.f32 %v1338, %v1374
      %v1407 = vadd.f32 %v1339, %v1375
      %v1408 = vadd.f32 %v1340, %v1376
      %v1409 = vlaneseq
      %v1410 = vshrl.u32 %v1409, 7
      %v1411 = vsub.s32 7, %v1410
      %v1412 = vrot.slane %v225, %v1411
      %v1413 = vmul.f32 %v177, %v1412
      %v1414 = vmul.f32 %v178, %v1412
      %v1415 = vmul.f32 %v179, %v1412
      %v1416 = vmul.f32 %v180, %v1412
      %v1417 = vmul.f32 %v181, %v1412
      %v1418 = vmul.f32 %v182, %v1412
      %v1419 = vmul.f32 %v183, %v1412
      %v1420 = vmul.f32 %v184, %v1412
      %v1421 = vmul.f32 %v185, %v1412
      %v1422 = vmul.f32 %v186, %v1412
      %v1423 = vmul.f32 %v187, %v1412
      %v1424 = vmul.f32 %v188, %v1412
      %v1425 = vmul.f32 %v189, %v1412
      %v1426 = vmul.f32 %v190, %v1412
      %v1427 = vmul.f32 %v191, %v1412
      %v1428 = vmul.f32 %v192, %v1412
      %v1429 = vmul.f32 %v193, %v1412
      %v1430 = vmul.f32 %v194, %v1412
      %v1431 = vmul.f32 %v195, %v1412
      %v1432 = vmul.f32 %v196, %v1412
      %v1433 = vmul.f32 %v197, %v1412
      %v1434 = vmul.f32 %v198, %v1412
      %v1435 = vmul.f32 %v199, %v1412
      %v1436 = vmul.f32 %v200, %v1412
      %v1437 = vmul.f32 %v201, %v1412
      %v1438 = vmul.f32 %v202, %v1412
      %v1439 = vmul.f32 %v203, %v1412
      %v1440 = vmul.f32 %v204, %v1412
      %v1441 = vmul.f32 %v205, %v1412
      %v1442 = vmul.f32 %v206, %v1412
      %v1443 = vmul.f32 %v207, %v1412
      %v1444 = vmul.f32 %v208, %v1412
      %v1445 = vmul.f32 %v209, %v1412
      %v1446 = vmul.f32 %v210, %v1412
      %v1447 = vmul.f32 %v211, %v1412
      %v1448 = vmul.f32 %v212, %v1412
      %v1449 = vmul.f32 %v213, %v1412
      %v1450 = vmul.f32 %v214, %v1412
      %v1451 = vmul.f32 %v215, %v1412
      %v1452 = vmul.f32 %v216, %v1412
      %v1453 = vmul.f32 %v217, %v1412
      %v1454 = vmul.f32 %v218, %v1412
      %v1455 = vmul.f32 %v219, %v1412
      %v1456 = vmul.f32 %v220, %v1412
      %v1457 = vmul.f32 %v221, %v1412
      %v1458 = vmul.f32 %v222, %v1412
      %v1459 = vmul.f32 %v223, %v1412
      %v1460 = vmul.f32 %v224, %v1412
      %v1509 = vrot.slane %v1413, 1
      %v1510 = vrot.slane %v1414, 1
      %v1511 = vsel %vm395, %v1509, %v1510
      %v1512 = vrot.slane %v1415, 1
      %v1513 = vsel %vm395, %v1510, %v1512
      %v1514 = vrot.slane %v1416, 1
      %v1515 = vrot.slane %v1417, 1
      %v1516 = vsel %vm395, %v1514, %v1515
      %v1517 = vrot.slane %v1418, 1
      %v1518 = vsel %vm395, %v1515, %v1517
      %v1519 = vrot.slane %v1419, 1
      %v1520 = vrot.slane %v1420, 1
      %v1521 = vsel %vm395, %v1519, %v1520
      %v1522 = vrot.slane %v1421, 1
      %v1523 = vsel %vm395, %v1520, %v1522
      %v1524 = vrot.slane %v1422, 1
      %v1525 = vrot.slane %v1423, 1
      %v1526 = vsel %vm395, %v1524, %v1525
      %v1527 = vrot.slane %v1424, 1
      %v1528 = vsel %vm395, %v1525, %v1527
      %v1529 = vrot.slane %v1425, 1
      %v1530 = vrot.slane %v1426, 1
      %v1531 = vsel %vm395, %v1529, %v1530
      %v1532 = vrot.slane %v1427, 1
      %v1533 = vsel %vm395, %v1530, %v1532
      %v1534 = vrot.slane %v1428, 1
      %v1535 = vrot.slane %v1429, 1
      %v1536 = vsel %vm395, %v1534, %v1535
      %v1537 = vrot.slane %v1430, 1
      %v1538 = vsel %vm395, %v1535, %v1537
      %v1539 = vrot.slane %v1431, 1
      %v1540 = vrot.slane %v1432, 1
      %v1541 = vsel %vm395, %v1539, %v1540
      %v1542 = vrot.slane %v1433, 1
      %v1543 = vsel %vm395, %v1540, %v1542
      %v1544 = vrot.slane %v1434, 1
      %v1545 = vrot.slane %v1435, 1
      %v1546 = vsel %vm395, %v1544, %v1545
      %v1547 = vrot.slane %v1436, 1
      %v1548 = vsel %vm395, %v1545, %v1547
      %v1549 = vrot.slane %v1437, 1
      %v1550 = vrot.slane %v1438, 1
      %v1551 = vsel %vm395, %v1549, %v1550
      %v1552 = vrot.slane %v1439, 1
      %v1553 = vsel %vm395, %v1550, %v1552
      %v1554 = vrot.slane %v1440, 1
      %v1555 = vrot.slane %v1441, 1
      %v1556 = vsel %vm395, %v1554, %v1555
      %v1557 = vrot.slane %v1442, 1
      %v1558 = vsel %vm395, %v1555, %v1557
      %v1559 = vrot.slane %v1443, 1
      %v1560 = vrot.slane %v1444, 1
      %v1561 = vsel %vm395, %v1559, %v1560
      %v1562 = vrot.slane %v1445, 1
      %v1563 = vsel %vm395, %v1560, %v1562
      %v1564 = vrot.slane %v1446, 1
      %v1565 = vrot.slane %v1447, 1
      %v1566 = vsel %vm395, %v1564, %v1565
      %v1567 = vrot.slane %v1448, 1
      %v1568 = vsel %vm395, %v1565, %v1567
      %v1569 = vrot.slane %v1449, 1
      %v1570 = vrot.slane %v1450, 1
      %v1571 = vsel %vm395, %v1569, %v1570
      %v1572 = vrot.slane %v1451, 1
      %v1573 = vsel %vm395, %v1570, %v1572
      %v1574 = vrot.slane %v1452, 1
      %v1575 = vrot.slane %v1453, 1
      %v1576 = vsel %vm395, %v1574, %v1575
      %v1577 = vrot.slane %v1454, 1
      %v1578 = vsel %vm395, %v1575, %v1577
      %v1579 = vrot.slane %v1455, 1
      %v1580 = vrot.slane %v1456, 1
      %v1581 = vsel %vm395, %v1579, %v1580
      %v1582 = vrot.slane %v1457, 1
      %v1583 = vsel %vm395, %v1580, %v1582
      %v1584 = vrot.slane %v1458, 1
      %v1585 = vrot.slane %v1459, 1
      %v1586 = vsel %vm395, %v1584, %v1585
      %v1587 = vrot.slane %v1460, 1
      %v1588 = vsel %vm395, %v1585, %v1587
      %v1621 = vadd.f32 %v1377, %v1511
      %v1622 = vadd.f32 %v1378, %v1513
      %v1623 = vadd.f32 %v1379, %v1516
      %v1624 = vadd.f32 %v1380, %v1518
      %v1625 = vadd.f32 %v1381, %v1521
      %v1626 = vadd.f32 %v1382, %v1523
      %v1627 = vadd.f32 %v1383, %v1526
      %v1628 = vadd.f32 %v1384, %v1528
      %v1629 = vadd.f32 %v1385, %v1531
      %v1630 = vadd.f32 %v1386, %v1533
      %v1631 = vadd.f32 %v1387, %v1536
      %v1632 = vadd.f32 %v1388, %v1538
      %v1633 = vadd.f32 %v1389, %v1541
      %v1634 = vadd.f32 %v1390, %v1543
      %v1635 = vadd.f32 %v1391, %v1546
      %v1636 = vadd.f32 %v1392, %v1548
      %v1637 = vadd.f32 %v1393, %v1551
      %v1638 = vadd.f32 %v1394, %v1553
      %v1639 = vadd.f32 %v1395, %v1556
      %v1640 = vadd.f32 %v1396, %v1558
      %v1641 = vadd.f32 %v1397, %v1561
      %v1642 = vadd.f32 %v1398, %v1563
      %v1643 = vadd.f32 %v1399, %v1566
      %v1644 = vadd.f32 %v1400, %v1568
      %v1645 = vadd.f32 %v1401, %v1571
      %v1646 = vadd.f32 %v1402, %v1573
      %v1647 = vadd.f32 %v1403, %v1576
      %v1648 = vadd.f32 %v1404, %v1578
      %v1649 = vadd.f32 %v1405, %v1581
      %v1650 = vadd.f32 %v1406, %v1583
      %v1651 = vadd.f32 %v1407, %v1586
      %v1652 = vadd.f32 %v1408, %v1588
      %v1653 = vlaneseq
      %v1654 = vshrl.u32 %v1653, 7
      %v1655 = vsub.s32 0, %v1654
      %v1656 = vrot.slane %v226, %v1655
      %v1657 = vmul.f32 %v177, %v1656
      %v1658 = vmul.f32 %v178, %v1656
      %v1659 = vmul.f32 %v179, %v1656
      %v1660 = vmul.f32 %v180, %v1656
      %v1661 = vmul.f32 %v181, %v1656
      %v1662 = vmul.f32 %v182, %v1656
      %v1663 = vmul.f32 %v183, %v1656
      %v1664 = vmul.f32 %v184, %v1656
      %v1665 = vmul.f32 %v185, %v1656
      %v1666 = vmul.f32 %v186, %v1656
      %v1667 = vmul.f32 %v187, %v1656
      %v1668 = vmul.f32 %v188, %v1656
      %v1669 = vmul.f32 %v189, %v1656
      %v1670 = vmul.f32 %v190, %v1656
      %v1671 = vmul.f32 %v191, %v1656
      %v1672 = vmul.f32 %v192, %v1656
      %v1673 = vmul.f32 %v193, %v1656
      %v1674 = vmul.f32 %v194, %v1656
      %v1675 = vmul.f32 %v195, %v1656
      %v1676 = vmul.f32 %v196, %v1656
      %v1677 = vmul.f32 %v197, %v1656
      %v1678 = vmul.f32 %v198, %v1656
      %v1679 = vmul.f32 %v199, %v1656
      %v1680 = vmul.f32 %v200, %v1656
      %v1681 = vmul.f32 %v201, %v1656
      %v1682 = vmul.f32 %v202, %v1656
      %v1683 = vmul.f32 %v203, %v1656
      %v1684 = vmul.f32 %v204, %v1656
      %v1685 = vmul.f32 %v205, %v1656
      %v1686 = vmul.f32 %v206, %v1656
      %v1687 = vmul.f32 %v207, %v1656
      %v1688 = vmul.f32 %v208, %v1656
      %v1689 = vmul.f32 %v209, %v1656
      %v1690 = vmul.f32 %v210, %v1656
      %v1691 = vmul.f32 %v211, %v1656
      %v1692 = vmul.f32 %v212, %v1656
      %v1693 = vmul.f32 %v213, %v1656
      %v1694 = vmul.f32 %v214, %v1656
      %v1695 = vmul.f32 %v215, %v1656
      %v1696 = vmul.f32 %v216, %v1656
      %v1697 = vmul.f32 %v217, %v1656
      %v1698 = vmul.f32 %v218, %v1656
      %v1699 = vmul.f32 %v219, %v1656
      %v1700 = vmul.f32 %v220, %v1656
      %v1701 = vmul.f32 %v221, %v1656
      %v1702 = vmul.f32 %v222, %v1656
      %v1703 = vmul.f32 %v223, %v1656
      %v1704 = vmul.f32 %v224, %v1656
      %v1753 = vrot.slane %v1657, 2
      %v1754 = vrot.slane %v1658, 2
      %v1755 = vsel %vm640, %v1753, %v1754
      %v1756 = vrot.slane %v1659, 2
      %v1757 = vsel %vm640, %v1754, %v1756
      %v1758 = vrot.slane %v1660, 2
      %v1759 = vrot.slane %v1661, 2
      %v1760 = vsel %vm640, %v1758, %v1759
      %v1761 = vrot.slane %v1662, 2
      %v1762 = vsel %vm640, %v1759, %v1761
      %v1763 = vrot.slane %v1663, 2
      %v1764 = vrot.slane %v1664, 2
      %v1765 = vsel %vm640, %v1763, %v1764
      %v1766 = vrot.slane %v1665, 2
      %v1767 = vsel %vm640, %v1764, %v1766
      %v1768 = vrot.slane %v1666, 2
      %v1769 = vrot.slane %v1667, 2
      %v1770 = vsel %vm640, %v1768, %v1769
      %v1771 = vrot.slane %v1668, 2
      %v1772 = vsel %vm640, %v1769, %v1771
      %v1773 = vrot.slane %v1669, 2
      %v1774 = vrot.slane %v1670, 2
      %v1775 = vsel %vm640, %v1773, %v1774
      %v1776 = vrot.slane %v1671, 2
      %v1777 = vsel %vm640, %v1774, %v1776
      %v1778 = vrot.slane %v1672, 2
      %v1779 = vrot.slane %v1673, 2
      %v1780 = vsel %vm640, %v1778, %v1779
      %v1781 = vrot.slane %v1674, 2
      %v1782 = vsel %vm640, %v1779, %v1781
      %v1783 = vrot.slane %v1675, 2
      %v1784 = vrot.slane %v1676, 2
      %v1785 = vsel %vm640, %v1783, %v1784
      %v1786 = vrot.slane %v1677, 2
      %v1787 = vsel %vm640, %v1784, %v1786
      %v1788 = vrot.slane %v1678, 2
      %v1789 = vrot.slane %v1679, 2
      %v1790 = vsel %vm640, %v1788, %v1789
      %v1791 = vrot.slane %v1680, 2
      %v1792 = vsel %vm640, %v1789, %v1791
      %v1793 = vrot.slane %v1681, 2
      %v1794 = vrot.slane %v1682, 2
      %v1795 = vsel %vm640, %v1793, %v1794
      %v1796 = vrot.slane %v1683, 2
      %v1797 = vsel %vm640, %v1794, %v1796
      %v1798 = vrot.slane %v1684, 2
      %v1799 = vrot.slane %v1685, 2
      %v1800 = vsel %vm640, %v1798, %v1799
      %v1801 = vrot.slane %v1686, 2
      %v1802 = vsel %vm640, %v1799, %v1801
      %v1803 = vrot.slane %v1687, 2
      %v1804 = vrot.slane %v1688, 2
      %v1805 = vsel %vm640, %v1803, %v1804
      %v1806 = vrot.slane %v1689, 2
      %v1807 = vsel %vm640, %v1804, %v1806
      %v1808 = vrot.slane %v1690, 2
      %v1809 = vrot.slane %v1691, 2
      %v1810 = vsel %vm640, %v1808, %v1809
      %v1811 = vrot.slane %v1692, 2
      %v1812 = vsel %vm640, %v1809, %v1811
      %v1813 = vrot.slane %v1693, 2
      %v1814 = vrot.slane %v1694, 2
      %v1815 = vsel %vm640, %v1813, %v1814
      %v1816 = vrot.slane %v1695, 2
      %v1817 = vsel %vm640, %v1814, %v1816
      %v1818 = vrot.slane %v1696, 2
      %v1819 = vrot.slane %v1697, 2
      %v1820 = vsel %vm640, %v1818, %v1819
      %v1821 = vrot.slane %v1698, 2
      %v1822 = vsel %vm640, %v1819, %v1821
      %v1823 = vrot.slane %v1699, 2
      %v1824 = vrot.slane %v1700, 2
      %v1825 = vsel %vm640, %v1823, %v1824
      %v1826 = vrot.slane %v1701, 2
      %v1827 = vsel %vm640, %v1824, %v1826
      %v1828 = vrot.slane %v1702, 2
      %v1829 = vrot.slane %v1703, 2
      %v1830 = vsel %vm640, %v1828, %v1829
      %v1831 = vrot.slane %v1704, 2
      %v1832 = vsel %vm640, %v1829, %v1831
      %v1865 = vadd.f32 %v1621, %v1755
      %v1866 = vadd.f32 %v1622, %v1757
      %v1867 = vadd.f32 %v1623, %v1760
      %v1868 = vadd.f32 %v1624, %v1762
      %v1869 = vadd.f32 %v1625, %v1765
      %v1870 = vadd.f32 %v1626, %v1767
      %v1871 = vadd.f32 %v1627, %v1770
      %v1872 = vadd.f32 %v1628, %v1772
      %v1873 = vadd.f32 %v1629, %v1775
      %v1874 = vadd.f32 %v1630, %v1777
      %v1875 = vadd.f32 %v1631, %v1780
      %v1876 = vadd.f32 %v1632, %v1782
      %v1877 = vadd.f32 %v1633, %v1785
      %v1878 = vadd.f32 %v1634, %v1787
      %v1879 = vadd.f32 %v1635, %v1790
      %v1880 = vadd.f32 %v1636, %v1792
      %v1881 = vadd.f32 %v1637, %v1795
      %v1882 = vadd.f32 %v1638, %v1797
      %v1883 = vadd.f32 %v1639, %v1800
      %v1884 = vadd.f32 %v1640, %v1802
      %v1885 = vadd.f32 %v1641, %v1805
      %v1886 = vadd.f32 %v1642, %v1807
      %v1887 = vadd.f32 %v1643, %v1810
      %v1888 = vadd.f32 %v1644, %v1812
      %v1889 = vadd.f32 %v1645, %v1815
      %v1890 = vadd.f32 %v1646, %v1817
      %v1891 = vadd.f32 %v1647, %v1820
      %v1892 = vadd.f32 %v1648, %v1822
      %v1893 = vadd.f32 %v1649, %v1825
      %v1894 = vadd.f32 %v1650, %v1827
      %v1895 = vadd.f32 %v1651, %v1830
      %v1896 = vadd.f32 %v1652, %v1832
      %v1897 = vld [vmem:[%s2] sm:$0x1]
      %v1899 = vlaneseq
      %v1900 = vshrl.u32 %v1899, 7
      %v1901 = vsub.s32 0, %v1900
      %v1902 = vrot.slane %v1897, %v1901
      %v1904 = vadd.f32 %v1865, %v1902
      %v1905 = vadd.f32 %v1866, %v1902
      %v1906 = vadd.f32 %v1867, %v1902
      %v1907 = vadd.f32 %v1868, %v1902
      %v1908 = vadd.f32 %v1869, %v1902
      %v1909 = vadd.f32 %v1870, %v1902
      %v1910 = vadd.f32 %v1871, %v1902
      %v1911 = vadd.f32 %v1872, %v1902
      %v1912 = vadd.f32 %v1873, %v1902
      %v1913 = vadd.f32 %v1874, %v1902
      %v1914 = vadd.f32 %v1875, %v1902
      %v1915 = vadd.f32 %v1876, %v1902
      %v1916 = vadd.f32 %v1877, %v1902
      %v1917 = vadd.f32 %v1878, %v1902
      %v1918 = vadd.f32 %v1879, %v1902
      %v1919 = vadd.f32 %v1880, %v1902
      %v1920 = vadd.f32 %v1881, %v1902
      %v1921 = vadd.f32 %v1882, %v1902
      %v1922 = vadd.f32 %v1883, %v1902
      %v1923 = vadd.f32 %v1884, %v1902
      %v1924 = vadd.f32 %v1885, %v1902
      %v1925 = vadd.f32 %v1886, %v1902
      %v1926 = vadd.f32 %v1887, %v1902
      %v1927 = vadd.f32 %v1888, %v1902
      %v1928 = vadd.f32 %v1889, %v1902
      %v1929 = vadd.f32 %v1890, %v1902
      %v1930 = vadd.f32 %v1891, %v1902
      %v1931 = vadd.f32 %v1892, %v1902
      %v1932 = vadd.f32 %v1893, %v1902
      %v1933 = vadd.f32 %v1894, %v1902
      %v1934 = vadd.f32 %v1895, %v1902
      %v1935 = vadd.f32 %v1896, %v1902
      %vm1936 = vcmask 785408
      %1937 = vst.msk [vmem:[%s170] sm:$0xff] %vm1936, %v1904
      %1938 = vst.msk [vmem:[%s170 + $0x8] sm:$0xff] %vm1936, %v1905
      %1939 = vst.msk [vmem:[%s170 + $0x10] sm:$0xff] %vm1936, %v1906
      %1940 = vst.msk [vmem:[%s170 + $0x18] sm:$0xff] %vm1936, %v1907
      %1941 = vst.msk [vmem:[%s170 + $0x20] sm:$0xff] %vm1936, %v1908
      %1942 = vst.msk [vmem:[%s170 + $0x28] sm:$0xff] %vm1936, %v1909
      %1943 = vst.msk [vmem:[%s170 + $0x30] sm:$0xff] %vm1936, %v1910
      %1944 = vst.msk [vmem:[%s170 + $0x38] sm:$0xff] %vm1936, %v1911
      %1945 = vst.msk [vmem:[%s170 + $0x40] sm:$0xff] %vm1936, %v1912
      %1946 = vst.msk [vmem:[%s170 + $0x48] sm:$0xff] %vm1936, %v1913
      %1947 = vst.msk [vmem:[%s170 + $0x50] sm:$0xff] %vm1936, %v1914
      %1948 = vst.msk [vmem:[%s170 + $0x58] sm:$0xff] %vm1936, %v1915
      %1949 = vst.msk [vmem:[%s170 + $0x60] sm:$0xff] %vm1936, %v1916
      %1950 = vst.msk [vmem:[%s170 + $0x68] sm:$0xff] %vm1936, %v1917
      %1951 = vst.msk [vmem:[%s170 + $0x70] sm:$0xff] %vm1936, %v1918
      %1952 = vst.msk [vmem:[%s170 + $0x78] sm:$0xff] %vm1936, %v1919
      %1953 = vst.msk [vmem:[%s170 + $0x80] sm:$0xff] %vm1936, %v1920
      %1954 = vst.msk [vmem:[%s170 + $0x88] sm:$0xff] %vm1936, %v1921
      %1955 = vst.msk [vmem:[%s170 + $0x90] sm:$0xff] %vm1936, %v1922
      %1956 = vst.msk [vmem:[%s170 + $0x98] sm:$0xff] %vm1936, %v1923
      %1957 = vst.msk [vmem:[%s170 + $0xa0] sm:$0xff] %vm1936, %v1924
      %1958 = vst.msk [vmem:[%s170 + $0xa8] sm:$0xff] %vm1936, %v1925
      %1959 = vst.msk [vmem:[%s170 + $0xb0] sm:$0xff] %vm1936, %v1926
      %1960 = vst.msk [vmem:[%s170 + $0xb8] sm:$0xff] %vm1936, %v1927
      %1961 = vst.msk [vmem:[%s170 + $0xc0] sm:$0xff] %vm1936, %v1928
      %1962 = vst.msk [vmem:[%s170 + $0xc8] sm:$0xff] %vm1936, %v1929
      %1963 = vst.msk [vmem:[%s170 + $0xd0] sm:$0xff] %vm1936, %v1930
      %1964 = vst.msk [vmem:[%s170 + $0xd8] sm:$0xff] %vm1936, %v1931
      %1965 = vst.msk [vmem:[%s170 + $0xe0] sm:$0xff] %vm1936, %v1932
      %1966 = vst.msk [vmem:[%s170 + $0xe8] sm:$0xff] %vm1936, %v1933
      %1967 = vst.msk [vmem:[%s170 + $0xf0] sm:$0xff] %vm1936, %v1934
      %1968 = vst.msk [vmem:[%s170 + $0xf8] sm:$0xff] %vm1936, %v1935
      %p1969 = scmp.lt.s32.totalorder %s14, 1
      %s1970 = scalar_select %p1969, %s14, 1
      %s1971 = smul.addr %s1970, 32
      %s1972 = smul.addr %s1971, 8
      %s1973 = scalar_lea.vmem %s3, %s1972
      // Predicated region
      $region33: #{transformer_block_forward.8} parent=31 // pred_check
        %p1974 = pneg %p100
      $region34: #{transformer_block_forward.8} parent=31 // pred_check_branch
        %1976 = sbr.rel (%p1974) target = $region36
      $region35: #{transformer_block_forward.8} parent=31 // pred_region
        _
      $region36: #{transformer_block_forward.8} parent=31 // pred_fallthru
        _
    $region32: #{transformer_block_forward.8} parent=5 // pred_fallthru
      _
    %p1977 = scmp.le.s32.totalorder 2, %s9
    // Predicated region
    $region37: #{transformer_block_forward.8} parent=5 // pred_check
      %p1978 = pneg %p1977
    $region38: #{transformer_block_forward.8} parent=5 // pred_check_branch
      %1980 = sbr.rel (%p1978) target = $region40
    $region39: #{transformer_block_forward.8} parent=5 // pred_region
      %s1981 = ssub.s32 %s9, 2
      // Predicated region
      $region41: #{transformer_block_forward.8} parent=39 // pred_check
        %p1982 = pneg %p106
      $region42: #{transformer_block_forward.8} parent=39 // pred_check_branch
        %1984 = sbr.rel (%p1982) target = $region44
      $region43: #{transformer_block_forward.8} parent=39 // pred_region
        %p1985 = scmp.lt.s32.totalorder %s15, 1
        %s1986 = scalar_select %p1985, %s15, 1
        %s1987 = smul.addr %s1986, 32
        %s1988 = smul.addr %s1987, 8
        %s1989 = scalar_lea.vmem %s3, %s1988
      $region44: #{transformer_block_forward.8} parent=39 // pred_fallthru
        _
    $region40: #{transformer_block_forward.8} parent=5 // pred_fallthru
      _
  $region6: #{transformer_block_forward.8} parent=0 // loop_footer
    %s13 = sadd.s32 1, %s9
  $region7: #{transformer_block_forward.8} parent=0 // loop_footer_branch
    %8 = sbr.rel target = $region3
  $region8: #{transformer_block_forward.8} parent=0 // loop_exit
    _

// kernel: transformer_block_forward.9
$region0: #{transformer_block_forward.9}
  #allocation0 [shape = 'u32[]', space=smem, size = 0x4, offset = 0x4, fixed_abs, tag = 'smem constant byte address 0x4 - core index']
  #allocation1 [shape = 'u32[144,128]{1,0:T(1,128)}', space=vmem, size = 0x12000, scoped, tag = 'internal scratch']
  %s0 = inlined_call_operand.vmem [shape: f32[4], index: 0, kind: input, shape index: {}]
  %s1 = inlined_call_operand.vmem [shape: f32[2,4,8,256], index: 1, kind: input, shape index: {}]
  %s2 = inlined_call_operand.vmem [shape: f32[2,4,8,256], index: 2, kind: input, shape index: {}]
  %s3 = inlined_call_operand.vmem [shape: f32[2,4,8,256], index: 3, kind: input, shape index: {}]
  %s4 = inlined_call_operand.vmem [shape: f32[2,4,8,256], index: 4, kind: output, shape index: {}]
  %s5 = sld [smem:[#allocation0]]
  $region53: #{transformer_block_forward.9} parent=0
    _
  %s7 = ssub.s32 1, %s5
  %s8 = scalar_select 0, %s7, %s5
  $region1: #{transformer_block_forward.9} parent=0
    #allocation2 [shape = 'u8[512]{0}', space=smem, size = 0x200, scoped, tag = 'input window, operand 0, single buffered']
    #allocation3 [shape = 's32[2]{0}', space=sflag, size = 0x8, scoped, tag = 'scoped memory for transformer_block_forward.9']
    %9 = vsyncpa [#allocation3], 0
    loop: start=0, step=1, limit=10
    $region2: #{transformer_block_forward.9} parent=1 // loop_pre_header
      _
    $region3: #{transformer_block_forward.9} parent=1 // loop_header
      %s11 = sphi 0, %s15
      %p12 = scmp.ge.s32.totalorder %s11, 10
      %s18 = sphi 0, %s30
      %s19 = sphi 0, %s26
      %s20 = sphi 0, %s18
      %s21 = sphi 0, %s19
      %s22 = sphi 0, %s20
      %s23 = sphi 0, %s21
      %s31 = sphi 0, %s31
      %s33 = sphi 0, %s31
      %s34 = sphi 0, %s33
      %s48 = sphi 0, %s34
      %s56 = sphi 0, %s58
      %s59 = sphi 0, %s56
      %s60 = sphi 0, %s59
      %s76 = sphi 0, %s60
      %s84 = sphi 0, %s86
      %s87 = sphi 0, %s84
      %s88 = sphi 0, %s87
      %s104 = sphi 0, %s88
      %s112 = sphi 0, %s114
      %s115 = sphi 0, %s112
      %s116 = sphi 0, %s115
      %s132 = sphi 0, %s116
      %s140 = sphi 0, %s142
      %s143 = sphi 0, %s140
      %s144 = sphi 0, %s143
      %s160 = sphi 0, %s144
    $region4: #{transformer_block_forward.9} parent=1 // loop_header_branch
      %14 = sbr.rel (%p12) target = $region8
    $region5: #{transformer_block_forward.9} parent=1 // loop_body
      %s16 = ssub.s32 %s11, 1
      %s17 = ssub.s32 %s11, 2
      %s24 = sadd.s32 1, %s19
      %p25 = scmp.ge.s32.totalorder %s24, 4
      %s26 = scalar_select %p25, 0, %s24
      %s27 = sadd.s32 1, %s18
      %s28 = scalar_select %p25, %s27, %s18
      %p29 = scmp.ge.s32.totalorder %s28, 2
      %s30 = scalar_select %p29, 0, %s28
      %s32 = sadd.s32 %s31, 1
      %p35 = scmp.eq.s32.totalorder %s11, 7
      %p36 = scmp.ne.s32.totalorder %s31, %s33
      %p37 = scmp.eq.s32.totalorder %s11, 0
      %p38 = por %p36, %p37
      %p39 = scmp.ne.s32.totalorder %s31, %s33
      %p40 = scmp.eq.s32.totalorder %s16, 7
      %p41 = por %p39, %p40
      %p42 = scmp.ne.s32.totalorder %s33, %s34
      %p43 = scmp.eq.s32.totalorder %s16, 0
      %p44 = por %p42, %p43
      %p45 = scmp.ne.s32.totalorder %s33, %s34
      %p46 = scmp.eq.s32.totalorder %s17, 7
      %p47 = por %p45, %p46
      %p49 = scmp.ne.s32.totalorder %s34, %s48
      %p50 = scmp.eq.s32.totalorder %s17, 0
      %p51 = por %p49, %p50
      %s52 = ssub.s32 %s18, %s30
      %s53 = ssub.s32 %s19, %s26
      %s54 = sor.u32 %s52, %s53
      %p55 = scmp.eq.s32.totalorder %s54, 0
      %s57 = sadd.s32 %s56, 1
      %s58 = scalar_select %p55, %s56, %s57
      %p61 = pneg %p55
      %p62 = scmp.eq.s32.totalorder %s11, 7
      %p63 = por %p61, %p62
      %p64 = scmp.ne.s32.totalorder %s56, %s59
      %p65 = scmp.eq.s32.totalorder %s11, 0
      %p66 = por %p64, %p65
      %p67 = scmp.ne.s32.totalorder %s56, %s59
      %p68 = scmp.eq.s32.totalorder %s16, 7
      %p69 = por %p67, %p68
      %p70 = scmp.ne.s32.totalorder %s59, %s60
      %p71 = scmp.eq.s32.totalorder %s16, 0
      %p72 = por %p70, %p71
      %p73 = scmp.ne.s32.totalorder %s59, %s60
      %p74 = scmp.eq.s32.totalorder %s17, 7
      %p75 = por %p73, %p74
      %p77 = scmp.ne.s32.totalorder %s60, %s76
      %p78 = scmp.eq.s32.totalorder %s17, 0
      %p79 = por %p77, %p78
      %s80 = ssub.s32 %s18, %s30
      %s81 = ssub.s32 %s19, %s26
      %s82 = sor.u32 %s80, %s81
      %p83 = scmp.eq.s32.totalorder %s82, 0
      %s85 = sadd.s32 %s84, 1
      %s86 = scalar_select %p83, %s84, %s85
      %p89 = pneg %p83
      %p90 = scmp.eq.s32.totalorder %s11, 7
      %p91 = por %p89, %p90
      %p92 = scmp.ne.s32.totalorder %s84, %s87
      %p93 = scmp.eq.s32.totalorder %s11, 0
      %p94 = por %p92, %p93
      %p95 = scmp.ne.s32.totalorder %s84, %s87
      %p96 = scmp.eq.s32.totalorder %s16, 7
      %p97 = por %p95, %p96
      %p98 = scmp.ne.s32.totalorder %s87, %s88
      %p99 = scmp.eq.s32.totalorder %s16, 0
      %p100 = por %p98, %p99
      %p101 = scmp.ne.s32.totalorder %s87, %s88
      %p102 = scmp.eq.s32.totalorder %s17, 7
      %p103 = por %p101, %p102
      %p105 = scmp.ne.s32.totalorder %s88, %s104
      %p106 = scmp.eq.s32.totalorder %s17, 0
      %p107 = por %p105, %p106
      %s108 = ssub.s32 %s18, %s30
      %s109 = ssub.s32 %s19, %s26
      %s110 = sor.u32 %s108, %s109
      %p111 = scmp.eq.s32.totalorder %s110, 0
      %s113 = sadd.s32 %s112, 1
      %s114 = scalar_select %p111, %s112, %s113
      %p117 = pneg %p111
      %p118 = scmp.eq.s32.totalorder %s11, 7
      %p119 = por %p117, %p118
      %p120 = scmp.ne.s32.totalorder %s112, %s115
      %p121 = scmp.eq.s32.totalorder %s11, 0
      %p122 = por %p120, %p121
      %p123 = scmp.ne.s32.totalorder %s112, %s115
      %p124 = scmp.eq.s32.totalorder %s16, 7
      %p125 = por %p123, %p124
      %p126 = scmp.ne.s32.totalorder %s115, %s116
      %p127 = scmp.eq.s32.totalorder %s16, 0
      %p128 = por %p126, %p127
      %p129 = scmp.ne.s32.totalorder %s115, %s116
      %p130 = scmp.eq.s32.totalorder %s17, 7
      %p131 = por %p129, %p130
      %p133 = scmp.ne.s32.totalorder %s116, %s132
      %p134 = scmp.eq.s32.totalorder %s17, 0
      %p135 = por %p133, %p134
      %s136 = ssub.s32 %s18, %s30
      %s137 = ssub.s32 %s19, %s26
      %s138 = sor.u32 %s136, %s137
      %p139 = scmp.eq.s32.totalorder %s138, 0
      %s141 = sadd.s32 %s140, 1
      %s142 = scalar_select %p139, %s140, %s141
      %p145 = pneg %p139
      %p146 = scmp.eq.s32.totalorder %s11, 7
      %p147 = por %p145, %p146
      %p148 = scmp.ne.s32.totalorder %s140, %s143
      %p149 = scmp.eq.s32.totalorder %s11, 0
      %p150 = por %p148, %p149
      %p151 = scmp.ne.s32.totalorder %s140, %s143
      %p152 = scmp.eq.s32.totalorder %s16, 7
      %p153 = por %p151, %p152
      %p154 = scmp.ne.s32.totalorder %s143, %s144
      %p155 = scmp.eq.s32.totalorder %s16, 0
      %p156 = por %p154, %p155
      %p157 = scmp.ne.s32.totalorder %s143, %s144
      %p158 = scmp.eq.s32.totalorder %s17, 7
      %p159 = por %p157, %p158
      %p161 = scmp.ne.s32.totalorder %s144, %s160
      %p162 = scmp.eq.s32.totalorder %s17, 0
      %p163 = por %p161, %p162
      %p164 = scmp.le.s32.totalorder 1, %s11
      %p165 = scmp.lt.s32.totalorder %s11, 9
      %p166 = pnand %p164, %p165
      %p167 = pneg %p166
      // Predicated region
      $region9: #{transformer_block_forward.9} parent=5 // pred_check
        _
      $region10: #{transformer_block_forward.9} parent=5 // pred_check_branch
        %169 = sbr.rel (%p166) target = $region12
      $region11: #{transformer_block_forward.9} parent=5 // pred_region
        %s170 = ssub.s32 %s11, 1
        // Predicated region
        $region13: #{transformer_block_forward.9} parent=11 // pred_check
          %p171 = pneg %p44
        $region14: #{transformer_block_forward.9} parent=11 // pred_check_branch
          %173 = sbr.rel (%p171) target = $region16
        $region15: #{transformer_block_forward.9} parent=11 // pred_region
          %s175 = ssub.s32 16, 16
          %176 = vsyncadd [#allocation3], %s175
          %s178 = sshll.u32 %s0, 4
          %s179 = int_to_ptr.vmem [resolvable:$true] %s178
          %181 = dma.vmem_to_smem %s179, 16, [#allocation2], [#allocation3]
        $region16: #{transformer_block_forward.9} parent=11 // pred_fallthru
          _
      $region12: #{transformer_block_forward.9} parent=5 // pred_fallthru
        _
      %p182 = scmp.lt.s32.totalorder %s11, 8
      // Predicated region
      $region17: #{transformer_block_forward.9} parent=5 // pred_check
        %p183 = pneg %p182
      $region18: #{transformer_block_forward.9} parent=5 // pred_check_branch
        %185 = sbr.rel (%p183) target = $region20
      $region19: #{transformer_block_forward.9} parent=5 // pred_region
        // Predicated region
        $region21: #{transformer_block_forward.9} parent=19 // pred_check
          %p186 = pneg %p66
        $region22: #{transformer_block_forward.9} parent=19 // pred_check_branch
          %188 = sbr.rel (%p186) target = $region24
        $region23: #{transformer_block_forward.9} parent=19 // pred_region
          %p189 = scmp.lt.s32.totalorder %s18, 1
          %s190 = scalar_select %p189, %s18, 1
          %p191 = scmp.lt.s32.totalorder %s19, 3
          %s192 = scalar_select %p191, %s19, 3
          %s193 = smul.addr %s192, 2
          %s194 = smul.addr %s190, 8
          %s195 = sadd.s32 %s193, %s194
          %s196 = smul.addr %s195, 8
          %s197 = scalar_lea.vmem %s1, %s196
        $region24: #{transformer_block_forward.9} parent=19 // pred_fallthru
          _
        // Predicated region
        $region25: #{transformer_block_forward.9} parent=19 // pred_check
          %p198 = pneg %p94
        $region26: #{transformer_block_forward.9} parent=19 // pred_check_branch
          %200 = sbr.rel (%p198) target = $region28
        $region27: #{transformer_block_forward.9} parent=19 // pred_region
          %p201 = scmp.lt.s32.totalorder %s18, 1
          %s202 = scalar_select %p201, %s18, 1
          %p203 = scmp.lt.s32.totalorder %s19, 3
          %s204 = scalar_select %p203, %s19, 3
          %s205 = smul.addr %s204, 2
          %s206 = smul.addr %s202, 8
          %s207 = sadd.s32 %s205, %s206
          %s208 = smul.addr %s207, 8
          %s209 = scalar_lea.vmem %s2, %s208
        $region28: #{transformer_block_forward.9} parent=19 // pred_fallthru
          _
        // Predicated region
        $region29: #{transformer_block_forward.9} parent=19 // pred_check
          %p210 = pneg %p122
        $region30: #{transformer_block_forward.9} parent=19 // pred_check_branch
          %212 = sbr.rel (%p210) target = $region32
        $region31: #{transformer_block_forward.9} parent=19 // pred_region
          %p213 = scmp.lt.s32.totalorder %s18, 1
          %s214 = scalar_select %p213, %s18, 1
          %p215 = scmp.lt.s32.totalorder %s19, 3
          %s216 = scalar_select %p215, %s19, 3
          %s217 = smul.addr %s216, 2
          %s218 = smul.addr %s214, 8
          %s219 = sadd.s32 %s217, %s218
          %s220 = smul.addr %s219, 8
          %s221 = scalar_lea.vmem %s3, %s220
        $region32: #{transformer_block_forward.9} parent=19 // pred_fallthru
          _
      $region20: #{transformer_block_forward.9} parent=5 // pred_fallthru
        _
      %p222 = scmp.le.s32.totalorder 1, %s11
      %p223 = scmp.lt.s32.totalorder %s11, 9
      %p224 = pnand %p222, %p223
      %p225 = pneg %p224
      // Predicated region
      $region33: #{transformer_block_forward.9} parent=5 // pred_check
        _
      $region34: #{transformer_block_forward.9} parent=5 // pred_check_branch
        %227 = sbr.rel (%p224) target = $region36
      $region35: #{transformer_block_forward.9} parent=5 // pred_region
        %s228 = ssub.s32 %s11, 1
        // Predicated region
        $region37: #{transformer_block_forward.9} parent=35 // pred_check
          %p229 = pneg %p44
        $region38: #{transformer_block_forward.9} parent=35 // pred_check_branch
          %231 = sbr.rel (%p229) target = $region40
        $region39: #{transformer_block_forward.9} parent=35 // pred_region
          %232 = dma.done [#allocation3], 16
        $region40: #{transformer_block_forward.9} parent=35 // pred_fallthru
          _
        %233 = sfence
        %p234 = pneg %p44
        %p235 = pneg %p41
        %p236 = scmp.lt.s32.totalorder %s20, 1
        %s237 = scalar_select %p236, %s20, 1
        %p238 = scmp.lt.s32.totalorder %s21, 3
        %s239 = scalar_select %p238, %s21, 3
        %s240 = smul.addr %s239, 2
        %s241 = smul.addr %s237, 8
        %s242 = sadd.s32 %s240, %s241
        %s243 = smul.addr %s242, 8
        %s244 = scalar_lea.vmem %s1, %s243
        %p245 = pneg %p72
        %p246 = pneg %p69
        %p247 = scmp.lt.s32.totalorder %s20, 1
        %s248 = scalar_select %p247, %s20, 1
        %p249 = scmp.lt.s32.totalorder %s21, 3
        %s250 = scalar_select %p249, %s21, 3
        %s251 = smul.addr %s250, 2
        %s252 = smul.addr %s248, 8
        %s253 = sadd.s32 %s251, %s252
        %s254 = smul.addr %s253, 8
        %s255 = scalar_lea.vmem %s2, %s254
        %p256 = pneg %p100
        %p257 = pneg %p97
        %p258 = scmp.lt.s32.totalorder %s20, 1
        %s259 = scalar_select %p258, %s20, 1
        %p260 = scmp.lt.s32.totalorder %s21, 3
        %s261 = scalar_select %p260, %s21, 3
        %s262 = smul.addr %s261, 2
        %s263 = smul.addr %s259, 8
        %s264 = sadd.s32 %s262, %s263
        %s265 = smul.addr %s264, 8
        %s266 = scalar_lea.vmem %s3, %s265
        %p267 = pneg %p128
        %p268 = pneg %p125
        %p269 = pneg %p156
        %p270 = pneg %p153
        %p271 = scmp.lt.s32.totalorder %s20, 1
        %s272 = scalar_select %p271, %s20, 1
        %p273 = scmp.lt.s32.totalorder %s21, 3
        %s274 = scalar_select %p273, %s21, 3
        %s275 = smul.addr %s274, 2
        %s276 = smul.addr %s272, 8
        %s277 = sadd.s32 %s275, %s276
        %s278 = smul.addr %s277, 8
        %s279 = scalar_lea.vmem %s4, %s278
        %p280 = scmp.lt.s32.totalorder %s20, 1
        %s281 = scalar_select %p280, %s20, 1
        %p282 = scmp.lt.s32.totalorder %s21, 3
        %s283 = scalar_select %p282, %s21, 3
        %s284 = smul.addr %s283, 2
        %s285 = smul.addr %s281, 8
        %s286 = sadd.s32 %s284, %s285
        %s287 = smul.addr %s286, 8
        %s288 = scalar_lea.vmem %s1, %s287
        %p289 = scmp.lt.s32.totalorder %s20, 1
        %s290 = scalar_select %p289, %s20, 1
        %p291 = scmp.lt.s32.totalorder %s21, 3
        %s292 = scalar_select %p291, %s21, 3
        %s293 = smul.addr %s292, 2
        %s294 = smul.addr %s290, 8
        %s295 = sadd.s32 %s293, %s294
        %s296 = smul.addr %s295, 8
        %s297 = scalar_lea.vmem %s2, %s296
        %p298 = scmp.lt.s32.totalorder %s20, 1
        %s299 = scalar_select %p298, %s20, 1
        %p300 = scmp.lt.s32.totalorder %s21, 3
        %s301 = scalar_select %p300, %s21, 3
        %s302 = smul.addr %s301, 2
        %s303 = smul.addr %s299, 8
        %s304 = sadd.s32 %s302, %s303
        %s305 = smul.addr %s304, 8
        %s306 = scalar_lea.vmem %s3, %s305
        %p307 = scmp.lt.s32.totalorder %s20, 1
        %s308 = scalar_select %p307, %s20, 1
        %p309 = scmp.lt.s32.totalorder %s21, 3
        %s310 = scalar_select %p309, %s21, 3
        %s311 = smul.addr %s310, 2
        %s312 = smul.addr %s308, 8
        %s313 = sadd.s32 %s311, %s312
        %s314 = smul.addr %s313, 8
        %s315 = scalar_lea.vmem %s4, %s314
        %s316 = sld [smem:[#allocation2 + %s21]]
        %v317 = vld [vmem:[%s288] sm:$0xff]
        %v318 = vld [vmem:[%s288 + $0x8] sm:$0xff]
        %v319 = vld [vmem:[%s297] sm:$0xff]
        %v320 = vld [vmem:[%s297 + $0x8] sm:$0xff]
        %v321 = vld [vmem:[%s306] sm:$0xff]
        %v322 = vld [vmem:[%s306 + $0x8] sm:$0xff]
        %v323 = vmul.f32 %v317, %v317
        %v324 = vmul.f32 %v318, %v318
        %v325 = vadd.f32 %v323, %v324
        %326 = vadd.xlane.f32.xlu0 %v325
        %v327 = vpop.xlane.xlu0 %326
        %v328 = vrsqrt.pop %v327
        %v329 = vmul.f32 %v327, %v328
        %vm330 = vcmp.eq.f32.partialorder %v327, inf
        %v331 = vsel %vm330, %v327, %v329
        %vm332 = vcmp.eq.f32.partialorder %v327, 0.0
        %v333 = vand.u32 %v327, 2147483648
        %v334 = vsel %vm332, %v333, %v331
        %v335 = vmax.f32 %v334, 1e-12
        %v336 = vrcp.pop %v335
        %v337 = vmul.f32 %v317, %v336
        %v338 = vmul.f32 %v318, %v336
        %v339 = vmul.f32 %v319, %v319
        %v340 = vmul.f32 %v320, %v320
        %v341 = vadd.f32 %v339, %v340
        %342 = vadd.xlane.f32.xlu0 %v341
        %v343 = vpop.xlane.xlu0 %342
        %v344 = vrsqrt.pop %v343
        %v345 = vmul.f32 %v343, %v344
        %vm346 = vcmp.eq.f32.partialorder %v343, inf
        %v347 = vsel %vm346, %v343, %v345
        %vm348 = vcmp.eq.f32.partialorder %v343, 0.0
        %v349 = vand.u32 %v343, 2147483648
        %v350 = vsel %vm348, %v349, %v347
        %v351 = vmax.f32 %v350, 1e-12
        %v352 = vrcp.pop %v351
        %v353 = vmul.f32 %v319, %v352
        %v354 = vmul.f32 %v320, %v352
        %355 = vmatprep.subr.mxu0 %v354
        %356 = vmatpush1.xpose.msra.mxu0 %v353
        %357 = vmatprep.subr.mxu0 0.0
        %358 = vmatpush1.xpose.msra.mxu0 0.0
        %359 = vmatprep.subr.mxu0 0.0
        %360 = vmatpush1.xpose.msra.mxu0 0.0
        %361 = vmatprep.subr.mxu0 0.0
        %362 = vmatpush1.xpose.msra.mxu0 0.0
        %363 = vmatprep.subr.mxu0 0.0
        %364 = vmatpush1.xpose.msra.mxu0 0.0
        %365 = vmatprep.subr.mxu0 0.0
        %366 = vmatpush1.xpose.msra.mxu0 0.0
        %367 = vmatprep.subr.mxu0 0.0
        %368 = vmatpush1.xpose.msra.mxu0 0.0
        %369 = vmatprep.subr.mxu0 0.0
        %370 = vmatpush1.xpose.msra.mxu0 0.0
        %371 = vmatprep.subr.mxu0 0.0
        %372 = vmatpush1.xpose.msra.mxu0 0.0
        %373 = vmatprep.subr.mxu0 0.0
        %374 = vmatpush1.xpose.msra.mxu0 0.0
        %375 = vmatprep.subr.mxu0 0.0
        %376 = vmatpush1.xpose.msra.mxu0 0.0
        %377 = vmatprep.subr.mxu0 0.0
        %378 = vmatpush1.xpose.msra.mxu0 0.0
        %379 = vmatprep.subr.mxu0 0.0
        %380 = vmatpush1.xpose.msra.mxu0 0.0
        %381 = vmatprep.subr.mxu0 0.0
        %382 = vmatpush1.xpose.msra.mxu0 0.0
        %383 = vmatprep.subr.mxu0 0.0
        %384 = vmatpush1.xpose.msra.mxu0 0.0
        %385 = vmatprep.subr.mxu0 0.0
        %386 = vmatpush1.xpose.msra.mxu0 0.0
        %387 = vmatprep.subr.mxu0 0.0
        %388 = vmatpush1.xpose.msra.mxu0 0.0
        %389 = vmatprep.subr.mxu0 0.0
        %390 = vmatpush1.xpose.msra.mxu0 0.0
        %391 = vmatprep.subr.mxu0 0.0
        %392 = vmatpush1.xpose.msra.mxu0 0.0
        %393 = vmatprep.subr.mxu0 0.0
        %394 = vmatpush1.xpose.msra.mxu0 0.0
        %395 = vmatprep.subr.mxu0 0.0
        %396 = vmatpush1.xpose.msra.mxu0 0.0
        %397 = vmatprep.subr.mxu0 0.0
        %398 = vmatpush1.xpose.msra.mxu0 0.0
        %399 = vmatprep.subr.mxu0 0.0
        %400 = vmatpush1.xpose.msra.mxu0 0.0
        %401 = vmatprep.subr.mxu0 0.0
        %402 = vmatpush1.xpose.msra.mxu0 0.0
        %403 = vmatprep.subr.mxu0 0.0
        %404 = vmatpush1.xpose.msra.mxu0 0.0
        %405 = vmatprep.subr.mxu0 0.0
        %406 = vmatpush1.xpose.msra.mxu0 0.0
        %407 = vmatprep.subr.mxu0 0.0
        %408 = vmatpush1.xpose.msra.mxu0 0.0
        %409 = vmatprep.subr.mxu0 0.0
        %410 = vmatpush1.xpose.msra.mxu0 0.0
        %411 = vmatprep.subr.mxu0 0.0
        %412 = vmatpush1.xpose.msra.mxu0 0.0
        %413 = vmatprep.subr.mxu0 0.0
        %414 = vmatpush1.xpose.msra.mxu0 0.0
        %415 = vmatprep.subr.mxu0 0.0
        %416 = vmatpush1.xpose.msra.mxu0 0.0
        %417 = vmatprep.subr.mxu0 0.0
        %418 = vmatpush1.xpose.msra.mxu0 0.0
        %419 = vmatprep.mubr.f32.mxu0 %v338
        %420 = vmatmul.mubr.f32.gmra.mrb[0].mxu0 %v337
        %v421 = vpop.f32.mrb[0].mxu0
        %v422 = vadd.f32 0.0, %v421
        %v423 = vpop.f32.mrb[0].mxu0
        %424 = vdwg.mxu0
        %v425 = vstv %s316
        %v426 = vmul.f32 %v422, %v425
        %vm427 = vcmask 64512
        %v428 = vsel %vm427, %v426, -inf
        %429 = vmax.xlane.f32.xlu0 %v428
        %v430 = vpop.xlane.xlu0 %429
        %v431 = vsub.f32 %v426, %v430
        %v432 = vmul.f32 %v431, 1.442695
        %v433 = vpow.pop %v432
        %v434 = vsel %vm427, %v433, 0.0
        %435 = vadd.xlane.f32.xlu0 %v434
        %v436 = vpop.xlane.xlu0 %435
        %v437 = vrcp.pop %v436
        %v438 = vmul.f32 %v433, %v437
        %v440 = vsel %vm427, %v438, 0
        %442 = vmatprep.subr.mxu0 %v322
        %443 = vmatpush1.msra.mxu0 %v321
        %444 = vmatprep.subr.mxu0 0.0
        %445 = vmatpush1.msra.mxu0 0.0
        %446 = vmatprep.subr.mxu0 0.0
        %447 = vmatpush1.msra.mxu0 0.0
        %448 = vmatprep.subr.mxu0 0.0
        %449 = vmatpush1.msra.mxu0 0.0
        %450 = vmatprep.subr.mxu0 0.0
        %451 = vmatpush1.msra.mxu0 0.0
        %452 = vmatprep.subr.mxu0 0.0
        %453 = vmatpush1.msra.mxu0 0.0
        %454 = vmatprep.subr.mxu0 0.0
        %455 = vmatpush1.msra.mxu0 0.0
        %456 = vmatprep.subr.mxu0 0.0
        %457 = vmatpush1.msra.mxu0 0.0
        %458 = vmatprep.subr.mxu0 0.0
        %459 = vmatpush1.msra.mxu0 0.0
        %460 = vmatprep.subr.mxu0 0.0
        %461 = vmatpush1.msra.mxu0 0.0
        %462 = vmatprep.subr.mxu0 0.0
        %463 = vmatpush1.msra.mxu0 0.0
        %464 = vmatprep.subr.mxu0 0.0
        %465 = vmatpush1.msra.mxu0 0.0
        %466 = vmatprep.subr.mxu0 0.0
        %467 = vmatpush1.msra.mxu0 0.0
        %468 = vmatprep.subr.mxu0 0.0
        %469 = vmatpush1.msra.mxu0 0.0
        %470 = vmatprep.subr.mxu0 0.0
        %471 = vmatpush1.msra.mxu0 0.0
        %472 = vmatprep.subr.mxu0 0.0
        %473 = vmatpush1.msra.mxu0 0.0
        %474 = vmatprep.subr.mxu0 0.0
        %475 = vmatpush1.msra.mxu0 0.0
        %476 = vmatprep.subr.mxu0 0.0
        %477 = vmatpush1.msra.mxu0 0.0
        %478 = vmatprep.subr.mxu0 0.0
        %479 = vmatpush1.msra.mxu0 0.0
        %480 = vmatprep.subr.mxu0 0.0
        %481 = vmatpush1.msra.mxu0 0.0
        %482 = vmatprep.subr.mxu0 0.0
        %483 = vmatpush1.msra.mxu0 0.0
        %484 = vmatprep.subr.mxu0 0.0
        %485 = vmatpush1.msra.mxu0 0.0
        %486 = vmatprep.subr.mxu0 0.0
        %487 = vmatpush1.msra.mxu0 0.0
        %488 = vmatprep.subr.mxu0 0.0
        %489 = vmatpush1.msra.mxu0 0.0
        %490 = vmatprep.subr.mxu0 0.0
        %491 = vmatpush1.msra.mxu0 0.0
        %492 = vmatprep.subr.mxu0 0.0
        %493 = vmatpush1.msra.mxu0 0.0
        %494 = vmatprep.subr.mxu0 0.0
        %495 = vmatpush1.msra.mxu0 0.0
        %496 = vmatprep.subr.mxu0 0.0
        %497 = vmatpush1.msra.mxu0 0.0
        %498 = vmatprep.subr.mxu0 0.0
        %499 = vmatpush1.msra.mxu0 0.0
        %500 = vmatprep.subr.mxu0 0.0
        %501 = vmatpush1.msra.mxu0 0.0
        %502 = vmatprep.subr.mxu0 0.0
        %503 = vmatpush1.msra.mxu0 0.0
        %504 = vmatprep.subr.mxu0 0.0
        %505 = vmatpush1.msra.mxu0 0.0
        %506 = vmatprep.mubr.f32.mxu0 0.0
        %507 = vmatmul.mubr.f32.gmra.mrb[0].mxu0 %v440
        %v508 = vpop.f32.mrb[0].mxu0
        %v509 = vadd.f32 0.0, %v508
        %v510 = vpop.f32.mrb[0].mxu0
        %v511 = vadd.f32 0.0, %v510
        %512 = vdwg.mxu0
        %513 = vst [vmem:[%s315] sm:$0xff] %v509
        %514 = vst [vmem:[%s315 + $0x8] sm:$0xff] %v511
        %p515 = scmp.lt.s32.totalorder %s20, 1
        %s516 = scalar_select %p515, %s20, 1
        %p517 = scmp.lt.s32.totalorder %s21, 3
        %s518 = scalar_select %p517, %s21, 3
        %s519 = smul.addr %s518, 2
        %s520 = smul.addr %s516, 8
        %s521 = sadd.s32 %s519, %s520
        %s522 = smul.addr %s521, 8
        %s523 = scalar_lea.vmem %s4, %s522
        // Predicated region
        $region41: #{transformer_block_forward.9} parent=35 // pred_check
          %p524 = pneg %p153
        $region42: #{transformer_block_forward.9} parent=35 // pred_check_branch
          %526 = sbr.rel (%p524) target = $region44
        $region43: #{transformer_block_forward.9} parent=35 // pred_region
          _
        $region44: #{transformer_block_forward.9} parent=35 // pred_fallthru
          _
      $region36: #{transformer_block_forward.9} parent=5 // pred_fallthru
        _
      %p527 = scmp.le.s32.totalorder 2, %s11
      // Predicated region
      $region45: #{transformer_block_forward.9} parent=5 // pred_check
        %p528 = pneg %p527
      $region46: #{transformer_block_forward.9} parent=5 // pred_check_branch
        %530 = sbr.rel (%p528) target = $region48
      $region47: #{transformer_block_forward.9} parent=5 // pred_region
        %s531 = ssub.s32 %s11, 2
        // Predicated region
        $region49: #{transformer_block_forward.9} parent=47 // pred_check
          %p532 = pneg %p159
        $region50: #{transformer_block_forward.9} parent=47 // pred_check_branch
          %534 = sbr.rel (%p532) target = $region52
        $region51: #{transformer_block_forward.9} parent=47 // pred_region
          %p535 = scmp.lt.s32.totalorder %s22, 1
          %s536 = scalar_select %p535, %s22, 1
          %p537 = scmp.lt.s32.totalorder %s23, 3
          %s538 = scalar_select %p537, %s23, 3
          %s539 = smul.addr %s538, 2
          %s540 = smul.addr %s536, 8
          %s541 = sadd.s32 %s539, %s540
          %s542 = smul.addr %s541, 8
          %s543 = scalar_lea.vmem %s4, %s542
        $region52: #{transformer_block_forward.9} parent=47 // pred_fallthru
          _
      $region48: #{transformer_block_forward.9} parent=5 // pred_fallthru
        _
    $region6: #{transformer_block_forward.9} parent=1 // loop_footer
      %s15 = sadd.s32 1, %s11
    $region7: #{transformer_block_forward.9} parent=1 // loop_footer_branch
      %10 = sbr.rel target = $region3
    $region8: #{transformer_block_forward.9} parent=1 // loop_exit
      _
    %544 = vsyncpa [#allocation3], 1
    %s545 = scalar_lea.sflag [#allocation3], 1
    %546 = vsyncpa %s545, 1

// kernel: transformer_block_forward.10
$region0: #{transformer_block_forward.10}
  #allocation0 [shape = 'u32[]', space=smem, size = 0x4, offset = 0x4, fixed_abs, tag = 'smem constant byte address 0x4 - core index']
  #allocation1 [shape = 'u32[144,128]{1,0:T(1,128)}', space=vmem, size = 0x12000, scoped, tag = 'internal scratch']
  %s0 = inlined_call_operand.vmem [shape: f32[512,32], index: 0, kind: input, shape index: {}]
  %s1 = inlined_call_operand.vmem [shape: f32[32,32], index: 1, kind: input, shape index: {}]
  %s2 = inlined_call_operand.vmem [shape: f32[1,32], index: 2, kind: input, shape index: {}]
  %s3 = inlined_call_operand.vmem [shape: f32[512,32], index: 3, kind: input, shape index: {}]
  %s4 = inlined_call_operand.vmem [shape: f32[512,32], index: 4, kind: output, shape index: {}]
  %s5 = sld [smem:[#allocation0]]
  $region49: #{transformer_block_forward.10} parent=0
    _
  %s7 = ssub.s32 1, %s5
  %s8 = scalar_select 0, %s7, %s5
  loop: start=0, step=1, limit=4
  $region2: #{transformer_block_forward.10} parent=0 // loop_pre_header
    _
  $region3: #{transformer_block_forward.10} parent=0 // loop_header
    %s10 = sphi 0, %s14
    %p11 = scmp.ge.s32.totalorder %s10, 4
    %s20 = sphi 0, %s22
    %s23 = sphi 0, %s20
    %s24 = sphi 0, %s23
    %s40 = sphi 0, %s24
    %s44 = sphi 0, %s44
    %s46 = sphi 0, %s44
    %s47 = sphi 0, %s46
    %s61 = sphi 0, %s47
    %s65 = sphi 0, %s65
    %s67 = sphi 0, %s65
    %s68 = sphi 0, %s67
    %s82 = sphi 0, %s68
    %s88 = sphi 0, %s90
    %s91 = sphi 0, %s88
    %s92 = sphi 0, %s91
    %s108 = sphi 0, %s92
    %s114 = sphi 0, %s116
    %s117 = sphi 0, %s114
    %s118 = sphi 0, %s117
    %s134 = sphi 0, %s118
  $region4: #{transformer_block_forward.10} parent=0 // loop_header_branch
    %13 = sbr.rel (%p11) target = $region8
  $region5: #{transformer_block_forward.10} parent=0 // loop_body
    %s15 = ssub.s32 %s10, 1
    %s16 = ssub.s32 %s10, 2
    %s17 = sadd.s32 %s10, 1
    %s18 = ssub.s32 %s10, %s17
    %p19 = scmp.eq.s32.totalorder %s18, 0
    %s21 = sadd.s32 %s20, 1
    %s22 = scalar_select %p19, %s20, %s21
    %p25 = pneg %p19
    %p26 = scmp.eq.s32.totalorder %s10, 1
    %p27 = por %p25, %p26
    %p28 = scmp.ne.s32.totalorder %s20, %s23
    %p29 = scmp.eq.s32.totalorder %s10, 0
    %p30 = por %p28, %p29
    %p31 = scmp.ne.s32.totalorder %s20, %s23
    %p32 = scmp.eq.s32.totalorder %s15, 1
    %p33 = por %p31, %p32
    %p34 = scmp.ne.s32.totalorder %s23, %s24
    %p35 = scmp.eq.s32.totalorder %s15, 0
    %p36 = por %p34, %p35
    %p37 = scmp.ne.s32.totalorder %s23, %s24
    %p38 = scmp.eq.s32.totalorder %s16, 1
    %p39 = por %p37, %p38
    %p41 = scmp.ne.s32.totalorder %s24, %s40
    %p42 = scmp.eq.s32.totalorder %s16, 0
    %p43 = por %p41, %p42
    %s45 = sadd.s32 %s44, 1
    %p48 = scmp.eq.s32.totalorder %s10, 1
    %p49 = scmp.ne.s32.totalorder %s44, %s46
    %p50 = scmp.eq.s32.totalorder %s10, 0
    %p51 = por %p49, %p50
    %p52 = scmp.ne.s32.totalorder %s44, %s46
    %p53 = scmp.eq.s32.totalorder %s15, 1
    %p54 = por %p52, %p53
    %p55 = scmp.ne.s32.totalorder %s46, %s47
    %p56 = scmp.eq.s32.totalorder %s15, 0
    %p57 = por %p55, %p56
    %p58 = scmp.ne.s32.totalorder %s46, %s47
    %p59 = scmp.eq.s32.totalorder %s16, 1
    %p60 = por %p58, %p59
    %p62 = scmp.ne.s32.totalorder %s47, %s61
    %p63 = scmp.eq.s32.totalorder %s16, 0
    %p64 = por %p62, %p63
    %s66 = sadd.s32 %s65, 1
    %p69 = scmp.eq.s32.totalorder %s10, 1
    %p70 = scmp.ne.s32.totalorder %s65, %s67
    %p71 = scmp.eq.s32.totalorder %s10, 0
    %p72 = por %p70, %p71
    %p73 = scmp.ne.s32.totalorder %s65, %s67
    %p74 = scmp.eq.s32.totalorder %s15, 1
    %p75 = por %p73, %p74
    %p76 = scmp.ne.s32.totalorder %s67, %s68
    %p77 = scmp.eq.s32.totalorder %s15, 0
    %p78 = por %p76, %p77
    %p79 = scmp.ne.s32.totalorder %s67, %s68
    %p80 = scmp.eq.s32.totalorder %s16, 1
    %p81 = por %p79, %p80
    %p83 = scmp.ne.s32.totalorder %s68, %s82
    %p84 = scmp.eq.s32.totalorder %s16, 0
    %p85 = por %p83, %p84
    %s86 = ssub.s32 %s10, %s17
    %p87 = scmp.eq.s32.totalorder %s86, 0
    %s89 = sadd.s32 %s88, 1
    %s90 = scalar_select %p87, %s88, %s89
    %p93 = pneg %p87
    %p94 = scmp.eq.s32.totalorder %s10, 1
    %p95 = por %p93, %p94
    %p96 = scmp.ne.s32.totalorder %s88, %s91
    %p97 = scmp.eq.s32.totalorder %s10, 0
    %p98 = por %p96, %p97
    %p99 = scmp.ne.s32.totalorder %s88, %s91
    %p100 = scmp.eq.s32.totalorder %s15, 1
    %p101 = por %p99, %p100
    %p102 = scmp.ne.s32.totalorder %s91, %s92
    %p103 = scmp.eq.s32.totalorder %s15, 0
    %p104 = por %p102, %p103
    %p105 = scmp.ne.s32.totalorder %s91, %s92
    %p106 = scmp.eq.s32.totalorder %s16, 1
    %p107 = por %p105, %p106
    %p109 = scmp.ne.s32.totalorder %s92, %s108
    %p110 = scmp.eq.s32.totalorder %s16, 0
    %p111 = por %p109, %p110
    %s112 = ssub.s32 %s10, %s17
    %p113 = scmp.eq.s32.totalorder %s112, 0
    %s115 = sadd.s32 %s114, 1
    %s116 = scalar_select %p113, %s114, %s115
    %p119 = pneg %p113
    %p120 = scmp.eq.s32.totalorder %s10, 1
    %p121 = por %p119, %p120
    %p122 = scmp.ne.s32.totalorder %s114, %s117
    %p123 = scmp.eq.s32.totalorder %s10, 0
    %p124 = por %p122, %p123
    %p125 = scmp.ne.s32.totalorder %s114, %s117
    %p126 = scmp.eq.s32.totalorder %s15, 1
    %p127 = por %p125, %p126
    %p128 = scmp.ne.s32.totalorder %s117, %s118
    %p129 = scmp.eq.s32.totalorder %s15, 0
    %p130 = por %p128, %p129
    %p131 = scmp.ne.s32.totalorder %s117, %s118
    %p132 = scmp.eq.s32.totalorder %s16, 1
    %p133 = por %p131, %p132
    %p135 = scmp.ne.s32.totalorder %s118, %s134
    %p136 = scmp.eq.s32.totalorder %s16, 0
    %p137 = por %p135, %p136
    %p138 = scmp.le.s32.totalorder 1, %s10
    %p139 = scmp.lt.s32.totalorder %s10, 3
    %p140 = pnand %p138, %p139
    %p141 = pneg %p140
    // Predicated region
    $region9: #{transformer_block_forward.10} parent=5 // pred_check
      _
    $region10: #{transformer_block_forward.10} parent=5 // pred_check_branch
      %143 = sbr.rel (%p140) target = $region12
    $region11: #{transformer_block_forward.10} parent=5 // pred_region
      %s144 = ssub.s32 %s10, 1
      // Predicated region
      $region13: #{transformer_block_forward.10} parent=11 // pred_check
        %p145 = pneg %p57
      $region14: #{transformer_block_forward.10} parent=11 // pred_check_branch
        %147 = sbr.rel (%p145) target = $region16
      $region15: #{transformer_block_forward.10} parent=11 // pred_region
        _
      $region16: #{transformer_block_forward.10} parent=11 // pred_fallthru
        _
      // Predicated region
      $region17: #{transformer_block_forward.10} parent=11 // pred_check
        %p148 = pneg %p78
      $region18: #{transformer_block_forward.10} parent=11 // pred_check_branch
        %150 = sbr.rel (%p148) target = $region20
      $region19: #{transformer_block_forward.10} parent=11 // pred_region
        _
      $region20: #{transformer_block_forward.10} parent=11 // pred_fallthru
        _
    $region12: #{transformer_block_forward.10} parent=5 // pred_fallthru
      _
    %p151 = scmp.lt.s32.totalorder %s10, 2
    // Predicated region
    $region21: #{transformer_block_forward.10} parent=5 // pred_check
      %p152 = pneg %p151
    $region22: #{transformer_block_forward.10} parent=5 // pred_check_branch
      %154 = sbr.rel (%p152) target = $region24
    $region23: #{transformer_block_forward.10} parent=5 // pred_region
      // Predicated region
      $region25: #{transformer_block_forward.10} parent=23 // pred_check
        %p155 = pneg %p30
      $region26: #{transformer_block_forward.10} parent=23 // pred_check_branch
        %157 = sbr.rel (%p155) target = $region28
      $region27: #{transformer_block_forward.10} parent=23 // pred_region
        %s158 = smul.u32 32, %s10
        %p159 = scmp.lt.s32.totalorder %s158, 63
        %s160 = scalar_select %p159, %s158, 63
        %s161 = smul.addr %s160, 8
        %s162 = scalar_lea.vmem %s0, %s161
        %s163 = smul.u32 32, %s10
      $region28: #{transformer_block_forward.10} parent=23 // pred_fallthru
        _
      // Predicated region
      $region29: #{transformer_block_forward.10} parent=23 // pred_check
        %p164 = pneg %p98
      $region30: #{transformer_block_forward.10} parent=23 // pred_check_branch
        %166 = sbr.rel (%p164) target = $region32
      $region31: #{transformer_block_forward.10} parent=23 // pred_region
        %s167 = smul.u32 32, %s10
        %p168 = scmp.lt.s32.totalorder %s167, 63
        %s169 = scalar_select %p168, %s167, 63
        %s170 = smul.addr %s169, 8
        %s171 = scalar_lea.vmem %s3, %s170
        %s172 = smul.u32 32, %s10
      $region32: #{transformer_block_forward.10} parent=23 // pred_fallthru
        _
    $region24: #{transformer_block_forward.10} parent=5 // pred_fallthru
      _
    %p173 = scmp.le.s32.totalorder 1, %s10
    %p174 = scmp.lt.s32.totalorder %s10, 3
    %p175 = pnand %p173, %p174
    %p176 = pneg %p175
    // Predicated region
    $region33: #{transformer_block_forward.10} parent=5 // pred_check
      _
    $region34: #{transformer_block_forward.10} parent=5 // pred_check_branch
      %178 = sbr.rel (%p175) target = $region36
    $region35: #{transformer_block_forward.10} parent=5 // pred_region
      %s179 = ssub.s32 %s10, 1
      %s180 = smul.u32 32, %s15
      %p181 = scmp.lt.s32.totalorder %s180, 63
      %s182 = scalar_select %p181, %s180, 63
      %s183 = smul.addr %s182, 8
      %s184 = scalar_lea.vmem %s0, %s183
      %p185 = pneg %p36
      %p186 = pneg %p33
      %p187 = pneg %p57
      %p188 = pneg %p54
      %p189 = pneg %p78
      %p190 = pneg %p75
      %s191 = smul.u32 32, %s15
      %p192 = scmp.lt.s32.totalorder %s191, 63
      %s193 = scalar_select %p192, %s191, 63
      %s194 = smul.addr %s193, 8
      %s195 = scalar_lea.vmem %s3, %s194
      %p196 = pneg %p104
      %p197 = pneg %p101
      %p198 = pneg %p130
      %p199 = pneg %p127
      %s200 = smul.u32 32, %s15
      %p201 = scmp.lt.s32.totalorder %s200, 63
      %s202 = scalar_select %p201, %s200, 63
      %s203 = smul.addr %s202, 8
      %s204 = scalar_lea.vmem %s4, %s203
      %s205 = smul.u32 32, %s15
      %p206 = scmp.lt.s32.totalorder %s205, 63
      %s207 = scalar_select %p206, %s205, 63
      %s208 = smul.addr %s207, 8
      %s209 = scalar_lea.vmem %s0, %s208
      %s210 = smul.u32 32, %s15
      %s211 = smul.u32 32, %s15
      %p212 = scmp.lt.s32.totalorder %s211, 63
      %s213 = scalar_select %p212, %s211, 63
      %s214 = smul.addr %s213, 8
      %s215 = scalar_lea.vmem %s3, %s214
      %s216 = smul.u32 32, %s15
      %s217 = smul.u32 32, %s15
      %p218 = scmp.lt.s32.totalorder %s217, 63
      %s219 = scalar_select %p218, %s217, 63
      %s220 = smul.addr %s219, 8
      %s221 = scalar_lea.vmem %s4, %s220
      %s222 = smul.u32 32, %s15
      %v223 = vld [vmem:[%s209] sm:$0xff]
      %v224 = vld [vmem:[%s209 + $0x8] sm:$0xff]
      %v225 = vld [vmem:[%s209 + $0x10] sm:$0xff]
      %v226 = vld [vmem:[%s209 + $0x18] sm:$0xff]
      %v227 = vld [vmem:[%s209 + $0x20] sm:$0xff]
      %v228 = vld [vmem:[%s209 + $0x28] sm:$0xff]
      %v229 = vld [vmem:[%s209 + $0x30] sm:$0xff]
      %v230 = vld [vmem:[%s209 + $0x38] sm:$0xff]
      %v231 = vld [vmem:[%s209 + $0x40] sm:$0xff]
      %v232 = vld [vmem:[%s209 + $0x48] sm:$0xff]
      %v233 = vld [vmem:[%s209 + $0x50] sm:$0xff]
      %v234 = vld [vmem:[%s209 + $0x58] sm:$0xff]
      %v235 = vld [vmem:[%s209 + $0x60] sm:$0xff]
      %v236 = vld [vmem:[%s209 + $0x68] sm:$0xff]
      %v237 = vld [vmem:[%s209 + $0x70] sm:$0xff]
      %v238 = vld [vmem:[%s209 + $0x78] sm:$0xff]
      %v239 = vld [vmem:[%s209 + $0x80] sm:$0xff]
      %v240 = vld [vmem:[%s209 + $0x88] sm:$0xff]
      %v241 = vld [vmem:[%s209 + $0x90] sm:$0xff]
      %v242 = vld [vmem:[%s209 + $0x98] sm:$0xff]
      %v243 = vld [vmem:[%s209 + $0xa0] sm:$0xff]
      %v244 = vld [vmem:[%s209 + $0xa8] sm:$0xff]
      %v245 = vld [vmem:[%s209 + $0xb0] sm:$0xff]
      %v246 = vld [vmem:[%s209 + $0xb8] sm:$0xff]
      %v247 = vld [vmem:[%s209 + $0xc0] sm:$0xff]
      %v248 = vld [vmem:[%s209 + $0xc8] sm:$0xff]
      %v249 = vld [vmem:[%s209 + $0xd0] sm:$0xff]
      %v250 = vld [vmem:[%s209 + $0xd8] sm:$0xff]
      %v251 = vld [vmem:[%s209 + $0xe0] sm:$0xff]
      %v252 = vld [vmem:[%s209 + $0xe8] sm:$0xff]
      %v253 = vld [vmem:[%s209 + $0xf0] sm:$0xff]
      %v254 = vld [vmem:[%s209 + $0xf8] sm:$0xff]
      %v255 = vld [vmem:[%s1] sm:$0xff]
      %v256 = vld [vmem:[%s1 + $0x8] sm:$0xff]
      %v257 = vld [vmem:[%s1 + $0x10] sm:$0xff]
      %v258 = vld [vmem:[%s1 + $0x18] sm:$0xff]
      %v259 = vld [vmem:[%s2] sm:$0x1]
      %v261 = vlaneseq
      %v262 = vshrl.u32 %v261, 7
      %v263 = vsub.s32 0, %v262
      %v264 = vrot.slane %v259, %v263
      %vm266 = vcmask 261120
      %v268 = vsel %vm266, %v223, 0
      %v271 = vsel %vm266, %v224, 0
      %v274 = vsel %vm266, %v225, 0
      %v277 = vsel %vm266, %v226, 0
      %v280 = vsel %vm266, %v227, 0
      %v283 = vsel %vm266, %v228, 0
      %v286 = vsel %vm266, %v229, 0
      %v289 = vsel %vm266, %v230, 0
      %v292 = vsel %vm266, %v231, 0
      %v295 = vsel %vm266, %v232, 0
      %v298 = vsel %vm266, %v233, 0
      %v301 = vsel %vm266, %v234, 0
      %v304 = vsel %vm266, %v235, 0
      %v307 = vsel %vm266, %v236, 0
      %v310 = vsel %vm266, %v237, 0
      %v313 = vsel %vm266, %v238, 0
      %v316 = vsel %vm266, %v239, 0
      %v319 = vsel %vm266, %v240, 0
      %v322 = vsel %vm266, %v241, 0
      %v325 = vsel %vm266, %v242, 0
      %v328 = vsel %vm266, %v243, 0
      %v331 = vsel %vm266, %v244, 0
      %v334 = vsel %vm266, %v245, 0
      %v337 = vsel %vm266, %v246, 0
      %v340 = vsel %vm266, %v247, 0
      %v343 = vsel %vm266, %v248, 0
      %v346 = vsel %vm266, %v249, 0
      %v349 = vsel %vm266, %v250, 0
      %v352 = vsel %vm266, %v251, 0
      %v355 = vsel %vm266, %v252, 0
      %v358 = vsel %vm266, %v253, 0
      %v361 = vsel %vm266, %v254, 0
      %363 = vmatprep.subr.mxu0 0.0
      %364 = vmatpush1.msra.mxu0 %v255
      %365 = vmatprep.subr.mxu0 0.0
      %366 = vmatpush1.msra.mxu0 %v256
      %367 = vmatprep.subr.mxu0 0.0
      %368 = vmatpush1.msra.mxu0 %v257
      %369 = vmatprep.subr.mxu0 0.0
      %370 = vmatpush1.msra.mxu0 %v258
      %371 = vmatprep.subr.mxu0 0.0
      %372 = vmatpush1.msra.mxu0 0.0
      %373 = vmatprep.subr.mxu0 0.0
      %374 = vmatpush1.msra.mxu0 0.0
      %375 = vmatprep.subr.mxu0 0.0
      %376 = vmatpush1.msra.mxu0 0.0
      %377 = vmatprep.subr.mxu0 0.0
      %378 = vmatpush1.msra.mxu0 0.0
      %379 = vmatprep.subr.mxu0 0.0
      %380 = vmatpush1.msra.mxu0 0.0
      %381 = vmatprep.subr.mxu0 0.0
      %382 = vmatpush1.msra.mxu0 0.0
      %383 = vmatprep.subr.mxu0 0.0
      %384 = vmatpush1.msra.mxu0 0.0
      %385 = vmatprep.subr.mxu0 0.0
      %386 = vmatpush1.msra.mxu0 0.0
      %387 = vmatprep.subr.mxu0 0.0
      %388 = vmatpush1.msra.mxu0 0.0
      %389 = vmatprep.subr.mxu0 0.0
      %390 = vmatpush1.msra.mxu0 0.0
      %391 = vmatprep.subr.mxu0 0.0
      %392 = vmatpush1.msra.mxu0 0.0
      %393 = vmatprep.subr.mxu0 0.0
      %394 = vmatpush1.msra.mxu0 0.0
      %395 = vmatprep.subr.mxu0 0.0
      %396 = vmatpush1.msra.mxu0 0.0
      %397 = vmatprep.subr.mxu0 0.0
      %398 = vmatpush1.msra.mxu0 0.0
      %399 = vmatprep.subr.mxu0 0.0
      %400 = vmatpush1.msra.mxu0 0.0
      %401 = vmatprep.subr.mxu0 0.0
      %402 = vmatpush1.msra.mxu0 0.0
      %403 = vmatprep.subr.mxu0 0.0
      %404 = vmatpush1.msra.mxu0 0.0
      %405 = vmatprep.subr.mxu0 0.0
      %406 = vmatpush1.msra.mxu0 0.0
      %407 = vmatprep.subr.mxu0 0.0
      %408 = vmatpush1.msra.mxu0 0.0
      %409 = vmatprep.subr.mxu0 0.0
      %410 = vmatpush1.msra.mxu0 0.0
      %411 = vmatprep.subr.mxu0 0.0
      %412 = vmatpush1.msra.mxu0 0.0
      %413 = vmatprep.subr.mxu0 0.0
      %414 = vmatpush1.msra.mxu0 0.0
      %415 = vmatprep.subr.mxu0 0.0
      %416 = vmatpush1.msra.mxu0 0.0
      %417 = vmatprep.subr.mxu0 0.0
      %418 = vmatpush1.msra.mxu0 0.0
      %419 = vmatprep.subr.mxu0 0.0
      %420 = vmatpush1.msra.mxu0 0.0
      %421 = vmatprep.subr.mxu0 0.0
      %422 = vmatpush1.msra.mxu0 0.0
      %423 = vmatprep.subr.mxu0 0.0
      %424 = vmatpush1.msra.mxu0 0.0
      %425 = vmatprep.subr.mxu0 0.0
      %426 = vmatpush1.msra.mxu0 0.0
      %427 = vmatprep.mubr.f32.mxu0 0.0
      %428 = vmatmul.mubr.f32.gmra.mrb[0].mxu0 %v268
      %v429 = vpop.f32.mrb[0].mxu0
      %v430 = vadd.f32 %v264, %v429
      %v431 = vpop.f32.mrb[0].mxu0
      %432 = vmatprep.mubr.f32.mxu0 0.0
      %433 = vmatmul.mubr.f32.gmra.mrb[0].mxu0 %v271
      %v434 = vpop.f32.mrb[0].mxu0
      %v435 = vadd.f32 %v264, %v434
      %v436 = vpop.f32.mrb[0].mxu0
      %437 = vmatprep.mubr.f32.mxu0 0.0
      %438 = vmatmul.mubr.f32.gmra.mrb[0].mxu0 %v274
      %v439 = vpop.f32.mrb[0].mxu0
      %v440 = vadd.f32 %v264, %v439
      %v441 = vpop.f32.mrb[0].mxu0
      %442 = vmatprep.mubr.f32.mxu0 0.0
      %443 = vmatmul.mubr.f32.gmra.mrb[0].mxu0 %v277
      %v444 = vpop.f32.mrb[0].mxu0
      %v445 = vadd.f32 %v264, %v444
      %v446 = vpop.f32.mrb[0].mxu0
      %447 = vmatprep.mubr.f32.mxu0 0.0
      %448 = vmatmul.mubr.f32.gmra.mrb[0].mxu0 %v280
      %v449 = vpop.f32.mrb[0].mxu0
      %v450 = vadd.f32 %v264, %v449
      %v451 = vpop.f32.mrb[0].mxu0
      %452 = vmatprep.mubr.f32.mxu0 0.0
      %453 = vmatmul.mubr.f32.gmra.mrb[0].mxu0 %v283
      %v454 = vpop.f32.mrb[0].mxu0
      %v455 = vadd.f32 %v264, %v454
      %v456 = vpop.f32.mrb[0].mxu0
      %457 = vmatprep.mubr.f32.mxu0 0.0
      %458 = vmatmul.mubr.f32.gmra.mrb[0].mxu0 %v286
      %v459 = vpop.f32.mrb[0].mxu0
      %v460 = vadd.f32 %v264, %v459
      %v461 = vpop.f32.mrb[0].mxu0
      %462 = vmatprep.mubr.f32.mxu0 0.0
      %463 = vmatmul.mubr.f32.gmra.mrb[0].mxu0 %v289
      %v464 = vpop.f32.mrb[0].mxu0
      %v465 = vadd.f32 %v264, %v464
      %v466 = vpop.f32.mrb[0].mxu0
      %467 = vmatprep.mubr.f32.mxu0 0.0
      %468 = vmatmul.mubr.f32.gmra.mrb[0].mxu0 %v292
      %v469 = vpop.f32.mrb[0].mxu0
      %v470 = vadd.f32 %v264, %v469
      %v471 = vpop.f32.mrb[0].mxu0
      %472 = vmatprep.mubr.f32.mxu0 0.0
      %473 = vmatmul.mubr.f32.gmra.mrb[0].mxu0 %v295
      %v474 = vpop.f32.mrb[0].mxu0
      %v475 = vadd.f32 %v264, %v474
      %v476 = vpop.f32.mrb[0].mxu0
      %477 = vmatprep.mubr.f32.mxu0 0.0
      %478 = vmatmul.mubr.f32.gmra.mrb[0].mxu0 %v298
      %v479 = vpop.f32.mrb[0].mxu0
      %v480 = vadd.f32 %v264, %v479
      %v481 = vpop.f32.mrb[0].mxu0
      %482 = vmatprep.mubr.f32.mxu0 0.0
      %483 = vmatmul.mubr.f32.gmra.mrb[0].mxu0 %v301
      %v484 = vpop.f32.mrb[0].mxu0
      %v485 = vadd.f32 %v264, %v484
      %v486 = vpop.f32.mrb[0].mxu0
      %487 = vmatprep.mubr.f32.mxu0 0.0
      %488 = vmatmul.mubr.f32.gmra.mrb[0].mxu0 %v304
      %v489 = vpop.f32.mrb[0].mxu0
      %v490 = vadd.f32 %v264, %v489
      %v491 = vpop.f32.mrb[0].mxu0
      %492 = vmatprep.mubr.f32.mxu0 0.0
      %493 = vmatmul.mubr.f32.gmra.mrb[0].mxu0 %v307
      %v494 = vpop.f32.mrb[0].mxu0
      %v495 = vadd.f32 %v264, %v494
      %v496 = vpop.f32.mrb[0].mxu0
      %497 = vmatprep.mubr.f32.mxu0 0.0
      %498 = vmatmul.mubr.f32.gmra.mrb[0].mxu0 %v310
      %v499 = vpop.f32.mrb[0].mxu0
      %v500 = vadd.f32 %v264, %v499
      %v501 = vpop.f32.mrb[0].mxu0
      %502 = vmatprep.mubr.f32.mxu0 0.0
      %503 = vmatmul.mubr.f32.gmra.mrb[0].mxu0 %v313
      %v504 = vpop.f32.mrb[0].mxu0
      %v505 = vadd.f32 %v264, %v504
      %v506 = vpop.f32.mrb[0].mxu0
      %507 = vmatprep.mubr.f32.mxu0 0.0
      %508 = vmatmul.mubr.f32.gmra.mrb[0].mxu0 %v316
      %v509 = vpop.f32.mrb[0].mxu0
      %v510 = vadd.f32 %v264, %v509
      %v511 = vpop.f32.mrb[0].mxu0
      %512 = vmatprep.mubr.f32.mxu0 0.0
      %513 = vmatmul.mubr.f32.gmra.mrb[0].mxu0 %v319
      %v514 = vpop.f32.mrb[0].mxu0
      %v515 = vadd.f32 %v264, %v514
      %v516 = vpop.f32.mrb[0].mxu0
      %517 = vmatprep.mubr.f32.mxu0 0.0
      %518 = vmatmul.mubr.f32.gmra.mrb[0].mxu0 %v322
      %v519 = vpop.f32.mrb[0].mxu0
      %v520 = vadd.f32 %v264, %v519
      %v521 = vpop.f32.mrb[0].mxu0
      %522 = vmatprep.mubr.f32.mxu0 0.0
      %523 = vmatmul.mubr.f32.gmra.mrb[0].mxu0 %v325
      %v524 = vpop.f32.mrb[0].mxu0
      %v525 = vadd.f32 %v264, %v524
      %v526 = vpop.f32.mrb[0].mxu0
      %527 = vmatprep.mubr.f32.mxu0 0.0
      %528 = vmatmul.mubr.f32.gmra.mrb[0].mxu0 %v328
      %v529 = vpop.f32.mrb[0].mxu0
      %v530 = vadd.f32 %v264, %v529
      %v531 = vpop.f32.mrb[0].mxu0
      %532 = vmatprep.mubr.f32.mxu0 0.0
      %533 = vmatmul.mubr.f32.gmra.mrb[0].mxu0 %v331
      %v534 = vpop.f32.mrb[0].mxu0
      %v535 = vadd.f32 %v264, %v534
      %v536 = vpop.f32.mrb[0].mxu0
      %537 = vmatprep.mubr.f32.mxu0 0.0
      %538 = vmatmul.mubr.f32.gmra.mrb[0].mxu0 %v334
      %v539 = vpop.f32.mrb[0].mxu0
      %v540 = vadd.f32 %v264, %v539
      %v541 = vpop.f32.mrb[0].mxu0
      %542 = vmatprep.mubr.f32.mxu0 0.0
      %543 = vmatmul.mubr.f32.gmra.mrb[0].mxu0 %v337
      %v544 = vpop.f32.mrb[0].mxu0
      %v545 = vadd.f32 %v264, %v544
      %v546 = vpop.f32.mrb[0].mxu0
      %547 = vmatprep.mubr.f32.mxu0 0.0
      %548 = vmatmul.mubr.f32.gmra.mrb[0].mxu0 %v340
      %v549 = vpop.f32.mrb[0].mxu0
      %v550 = vadd.f32 %v264, %v549
      %v551 = vpop.f32.mrb[0].mxu0
      %552 = vmatprep.mubr.f32.mxu0 0.0
      %553 = vmatmul.mubr.f32.gmra.mrb[0].mxu0 %v343
      %v554 = vpop.f32.mrb[0].mxu0
      %v555 = vadd.f32 %v264, %v554
      %v556 = vpop.f32.mrb[0].mxu0
      %557 = vmatprep.mubr.f32.mxu0 0.0
      %558 = vmatmul.mubr.f32.gmra.mrb[0].mxu0 %v346
      %v559 = vpop.f32.mrb[0].mxu0
      %v560 = vadd.f32 %v264, %v559
      %v561 = vpop.f32.mrb[0].mxu0
      %562 = vmatprep.mubr.f32.mxu0 0.0
      %563 = vmatmul.mubr.f32.gmra.mrb[0].mxu0 %v349
      %v564 = vpop.f32.mrb[0].mxu0
      %v565 = vadd.f32 %v264, %v564
      %v566 = vpop.f32.mrb[0].mxu0
      %567 = vmatprep.mubr.f32.mxu0 0.0
      %568 = vmatmul.mubr.f32.gmra.mrb[0].mxu0 %v352
      %v569 = vpop.f32.mrb[0].mxu0
      %v570 = vadd.f32 %v264, %v569
      %v571 = vpop.f32.mrb[0].mxu0
      %572 = vmatprep.mubr.f32.mxu0 0.0
      %573 = vmatmul.mubr.f32.gmra.mrb[0].mxu0 %v355
      %v574 = vpop.f32.mrb[0].mxu0
      %v575 = vadd.f32 %v264, %v574
      %v576 = vpop.f32.mrb[0].mxu0
      %577 = vmatprep.mubr.f32.mxu0 0.0
      %578 = vmatmul.mubr.f32.gmra.mrb[0].mxu0 %v358
      %v579 = vpop.f32.mrb[0].mxu0
      %v580 = vadd.f32 %v264, %v579
      %v581 = vpop.f32.mrb[0].mxu0
      %582 = vmatprep.mubr.f32.mxu0 0.0
      %583 = vmatmul.mubr.f32.gmra.mrb[0].mxu0 %v361
      %v584 = vpop.f32.mrb[0].mxu0
      %v585 = vadd.f32 %v264, %v584
      %v586 = vpop.f32.mrb[0].mxu0
      %587 = vdwg.mxu0
      %v588 = vld [vmem:[%s215] sm:$0xff]
      %v589 = vld [vmem:[%s215 + $0x8] sm:$0xff]
      %v590 = vld [vmem:[%s215 + $0x10] sm:$0xff]
      %v591 = vld [vmem:[%s215 + $0x18] sm:$0xff]
      %v592 = vld [vmem:[%s215 + $0x20] sm:$0xff]
      %v593 = vld [vmem:[%s215 + $0x28] sm:$0xff]
      %v594 = vld [vmem:[%s215 + $0x30] sm:$0xff]
      %v595 = vld [vmem:[%s215 + $0x38] sm:$0xff]
      %v596 = vld [vmem:[%s215 + $0x40] sm:$0xff]
      %v597 = vld [vmem:[%s215 + $0x48] sm:$0xff]
      %v598 = vld [vmem:[%s215 + $0x50] sm:$0xff]
      %v599 = vld [vmem:[%s215 + $0x58] sm:$0xff]
      %v600 = vld [vmem:[%s215 + $0x60] sm:$0xff]
      %v601 = vld [vmem:[%s215 + $0x68] sm:$0xff]
      %v602 = vld [vmem:[%s215 + $0x70] sm:$0xff]
      %v603 = vld [vmem:[%s215 + $0x78] sm:$0xff]
      %v604 = vld [vmem:[%s215 + $0x80] sm:$0xff]
      %v605 = vld [vmem:[%s215 + $0x88] sm:$0xff]
      %v606 = vld [vmem:[%s215 + $0x90] sm:$0xff]
      %v607 = vld [vmem:[%s215 + $0x98] sm:$0xff]
      %v608 = vld [vmem:[%s215 + $0xa0] sm:$0xff]
      %v609 = vld [vmem:[%s215 + $0xa8] sm:$0xff]
      %v610 = vld [vmem:[%s215 + $0xb0] sm:$0xff]
      %v611 = vld [vmem:[%s215 + $0xb8] sm:$0xff]
      %v612 = vld [vmem:[%s215 + $0xc0] sm:$0xff]
      %v613 = vld [vmem:[%s215 + $0xc8] sm:$0xff]
      %v614 = vld [vmem:[%s215 + $0xd0] sm:$0xff]
      %v615 = vld [vmem:[%s215 + $0xd8] sm:$0xff]
      %v616 = vld [vmem:[%s215 + $0xe0] sm:$0xff]
      %v617 = vld [vmem:[%s215 + $0xe8] sm:$0xff]
      %v618 = vld [vmem:[%s215 + $0xf0] sm:$0xff]
      %v619 = vld [vmem:[%s215 + $0xf8] sm:$0xff]
      %v620 = vadd.f32 %v430, %v588
      %v621 = vadd.f32 %v435, %v589
      %v622 = vadd.f32 %v440, %v590
      %v623 = vadd.f32 %v445, %v591
      %v624 = vadd.f32 %v450, %v592
      %v625 = vadd.f32 %v455, %v593
      %v626 = vadd.f32 %v460, %v594
      %v627 = vadd.f32 %v465, %v595
      %v628 = vadd.f32 %v470, %v596
      %v629 = vadd.f32 %v475, %v597
      %v630 = vadd.f32 %v480, %v598
      %v631 = vadd.f32 %v485, %v599
      %v632 = vadd.f32 %v490, %v600
      %v633 = vadd.f32 %v495, %v601
      %v634 = vadd.f32 %v500, %v602
      %v635 = vadd.f32 %v505, %v603
      %v636 = vadd.f32 %v510, %v604
      %v637 = vadd.f32 %v515, %v605
      %v638 = vadd.f32 %v520, %v606
      %v639 = vadd.f32 %v525, %v607
      %v640 = vadd.f32 %v530, %v608
      %v641 = vadd.f32 %v535, %v609
      %v642 = vadd.f32 %v540, %v610
      %v643 = vadd.f32 %v545, %v611
      %v644 = vadd.f32 %v550, %v612
      %v645 = vadd.f32 %v555, %v613
      %v646 = vadd.f32 %v560, %v614
      %v647 = vadd.f32 %v565, %v615
      %v648 = vadd.f32 %v570, %v616
      %v649 = vadd.f32 %v575, %v617
      %v650 = vadd.f32 %v580, %v618
      %v651 = vadd.f32 %v585, %v619
      %652 = vst.msk [vmem:[%s221] sm:$0xff] %vm266, %v620
      %653 = vst.msk [vmem:[%s221 + $0x8] sm:$0xff] %vm266, %v621
      %654 = vst.msk [vmem:[%s221 + $0x10] sm:$0xff] %vm266, %v622
      %655 = vst.msk [vmem:[%s221 + $0x18] sm:$0xff] %vm266, %v623
      %656 = vst.msk [vmem:[%s221 + $0x20] sm:$0xff] %vm266, %v624
      %657 = vst.msk [vmem:[%s221 + $0x28] sm:$0xff] %vm266, %v625
      %658 = vst.msk [vmem:[%s221 + $0x30] sm:$0xff] %vm266, %v626
      %659 = vst.msk [vmem:[%s221 + $0x38] sm:$0xff] %vm266, %v627
      %660 = vst.msk [vmem:[%s221 + $0x40] sm:$0xff] %vm266, %v628
      %661 = vst.msk [vmem:[%s221 + $0x48] sm:$0xff] %vm266, %v629
      %662 = vst.msk [vmem:[%s221 + $0x50] sm:$0xff] %vm266, %v630
      %663 = vst.msk [vmem:[%s221 + $0x58] sm:$0xff] %vm266, %v631
      %664 = vst.msk [vmem:[%s221 + $0x60] sm:$0xff] %vm266, %v632
      %665 = vst.msk [vmem:[%s221 + $0x68] sm:$0xff] %vm266, %v633
      %666 = vst.msk [vmem:[%s221 + $0x70] sm:$0xff] %vm266, %v634
      %667 = vst.msk [vmem:[%s221 + $0x78] sm:$0xff] %vm266, %v635
      %668 = vst.msk [vmem:[%s221 + $0x80] sm:$0xff] %vm266, %v636
      %669 = vst.msk [vmem:[%s221 + $0x88] sm:$0xff] %vm266, %v637
      %670 = vst.msk [vmem:[%s221 + $0x90] sm:$0xff] %vm266, %v638
      %671 = vst.msk [vmem:[%s221 + $0x98] sm:$0xff] %vm266, %v639
      %672 = vst.msk [vmem:[%s221 + $0xa0] sm:$0xff] %vm266, %v640
      %673 = vst.msk [vmem:[%s221 + $0xa8] sm:$0xff] %vm266, %v641
      %674 = vst.msk [vmem:[%s221 + $0xb0] sm:$0xff] %vm266, %v642
      %675 = vst.msk [vmem:[%s221 + $0xb8] sm:$0xff] %vm266, %v643
      %676 = vst.msk [vmem:[%s221 + $0xc0] sm:$0xff] %vm266, %v644
      %677 = vst.msk [vmem:[%s221 + $0xc8] sm:$0xff] %vm266, %v645
      %678 = vst.msk [vmem:[%s221 + $0xd0] sm:$0xff] %vm266, %v646
      %679 = vst.msk [vmem:[%s221 + $0xd8] sm:$0xff] %vm266, %v647
      %680 = vst.msk [vmem:[%s221 + $0xe0] sm:$0xff] %vm266, %v648
      %681 = vst.msk [vmem:[%s221 + $0xe8] sm:$0xff] %vm266, %v649
      %682 = vst.msk [vmem:[%s221 + $0xf0] sm:$0xff] %vm266, %v650
      %683 = vst.msk [vmem:[%s221 + $0xf8] sm:$0xff] %vm266, %v651
      %s684 = smul.u32 32, %s15
      %p685 = scmp.lt.s32.totalorder %s684, 63
      %s686 = scalar_select %p685, %s684, 63
      %s687 = smul.addr %s686, 8
      %s688 = scalar_lea.vmem %s4, %s687
      // Predicated region
      $region37: #{transformer_block_forward.10} parent=35 // pred_check
        %p689 = pneg %p127
      $region38: #{transformer_block_forward.10} parent=35 // pred_check_branch
        %691 = sbr.rel (%p689) target = $region40
      $region39: #{transformer_block_forward.10} parent=35 // pred_region
        %s692 = smul.u32 32, %s15
      $region40: #{transformer_block_forward.10} parent=35 // pred_fallthru
        _
    $region36: #{transformer_block_forward.10} parent=5 // pred_fallthru
      _
    %p693 = scmp.le.s32.totalorder 2, %s10
    // Predicated region
    $region41: #{transformer_block_forward.10} parent=5 // pred_check
      %p694 = pneg %p693
    $region42: #{transformer_block_forward.10} parent=5 // pred_check_branch
      %696 = sbr.rel (%p694) target = $region44
    $region43: #{transformer_block_forward.10} parent=5 // pred_region
      %s697 = ssub.s32 %s10, 2
      // Predicated region
      $region45: #{transformer_block_forward.10} parent=43 // pred_check
        %p698 = pneg %p133
      $region46: #{transformer_block_forward.10} parent=43 // pred_check_branch
        %700 = sbr.rel (%p698) target = $region48
      $region47: #{transformer_block_forward.10} parent=43 // pred_region
        %s701 = smul.u32 32, %s16
        %p702 = scmp.lt.s32.totalorder %s701, 63
        %s703 = scalar_select %p702, %s701, 63
        %s704 = smul.addr %s703, 8
        %s705 = scalar_lea.vmem %s4, %s704
      $region48: #{transformer_block_forward.10} parent=43 // pred_fallthru
        _
    $region44: #{transformer_block_forward.10} parent=5 // pred_fallthru
      _
  $region6: #{transformer_block_forward.10} parent=0 // loop_footer
    %s14 = sadd.s32 1, %s10
  $region7: #{transformer_block_forward.10} parent=0 // loop_footer_branch
    %9 = sbr.rel target = $region3
  $region8: #{transformer_block_forward.10} parent=0 // loop_exit
    _

// kernel: transformer_block_forward.11
$region0: #{transformer_block_forward.11}
  #allocation0 [shape = 'u32[]', space=smem, size = 0x4, offset = 0x4, fixed_abs, tag = 'smem constant byte address 0x4 - core index']
  #allocation1 [shape = 'u32[144,128]{1,0:T(1,128)}', space=vmem, size = 0x12000, scoped, tag = 'internal scratch']
  %s0 = inlined_call_operand.vmem [shape: f32[512,32], index: 0, kind: input, shape index: {}]
  %s1 = inlined_call_operand.vmem [shape: f32[1,32], index: 1, kind: input, shape index: {}]
  %s2 = inlined_call_operand.vmem [shape: f32[1,32], index: 2, kind: input, shape index: {}]
  %s3 = inlined_call_operand.vmem [shape: f32[32,128], index: 3, kind: input, shape index: {}]
  %s4 = inlined_call_operand.vmem [shape: f32[1,128], index: 4, kind: input, shape index: {}]
  %s5 = inlined_call_operand.vmem [shape: f32[512,128], index: 5, kind: output, shape index: {}]
  %s6 = sld [smem:[#allocation0]]
  $region53: #{transformer_block_forward.11} parent=0
    _
  %s8 = ssub.s32 1, %s6
  %s9 = scalar_select 0, %s8, %s6
  loop: start=0, step=1, limit=4
  $region2: #{transformer_block_forward.11} parent=0 // loop_pre_header
    _
  $region3: #{transformer_block_forward.11} parent=0 // loop_header
    %s11 = sphi 0, %s15
    %p12 = scmp.ge.s32.totalorder %s11, 4
    %s21 = sphi 0, %s23
    %s24 = sphi 0, %s21
    %s25 = sphi 0, %s24
    %s41 = sphi 0, %s25
    %s45 = sphi 0, %s45
    %s47 = sphi 0, %s45
    %s48 = sphi 0, %s47
    %s62 = sphi 0, %s48
    %s66 = sphi 0, %s66
    %s68 = sphi 0, %s66
    %s69 = sphi 0, %s68
    %s83 = sphi 0, %s69
    %s87 = sphi 0, %s87
    %s89 = sphi 0, %s87
    %s90 = sphi 0, %s89
    %s104 = sphi 0, %s90
    %s108 = sphi 0, %s108
    %s110 = sphi 0, %s108
    %s111 = sphi 0, %s110
    %s125 = sphi 0, %s111
    %s131 = sphi 0, %s133
    %s134 = sphi 0, %s131
    %s135 = sphi 0, %s134
    %s151 = sphi 0, %s135
  $region4: #{transformer_block_forward.11} parent=0 // loop_header_branch
    %14 = sbr.rel (%p12) target = $region8
  $region5: #{transformer_block_forward.11} parent=0 // loop_body
    %s16 = ssub.s32 %s11, 1
    %s17 = ssub.s32 %s11, 2
    %s18 = sadd.s32 %s11, 1
    %s19 = ssub.s32 %s11, %s18
    %p20 = scmp.eq.s32.totalorder %s19, 0
    %s22 = sadd.s32 %s21, 1
    %s23 = scalar_select %p20, %s21, %s22
    %p26 = pneg %p20
    %p27 = scmp.eq.s32.totalorder %s11, 1
    %p28 = por %p26, %p27
    %p29 = scmp.ne.s32.totalorder %s21, %s24
    %p30 = scmp.eq.s32.totalorder %s11, 0
    %p31 = por %p29, %p30
    %p32 = scmp.ne.s32.totalorder %s21, %s24
    %p33 = scmp.eq.s32.totalorder %s16, 1
    %p34 = por %p32, %p33
    %p35 = scmp.ne.s32.totalorder %s24, %s25
    %p36 = scmp.eq.s32.totalorder %s16, 0
    %p37 = por %p35, %p36
    %p38 = scmp.ne.s32.totalorder %s24, %s25
    %p39 = scmp.eq.s32.totalorder %s17, 1
    %p40 = por %p38, %p39
    %p42 = scmp.ne.s32.totalorder %s25, %s41
    %p43 = scmp.eq.s32.totalorder %s17, 0
    %p44 = por %p42, %p43
    %s46 = sadd.s32 %s45, 1
    %p49 = scmp.eq.s32.totalorder %s11, 1
    %p50 = scmp.ne.s32.totalorder %s45, %s47
    %p51 = scmp.eq.s32.totalorder %s11, 0
    %p52 = por %p50, %p51
    %p53 = scmp.ne.s32.totalorder %s45, %s47
    %p54 = scmp.eq.s32.totalorder %s16, 1
    %p55 = por %p53, %p54
    %p56 = scmp.ne.s32.totalorder %s47, %s48
    %p57 = scmp.eq.s32.totalorder %s16, 0
    %p58 = por %p56, %p57
    %p59 = scmp.ne.s32.totalorder %s47, %s48
    %p60 = scmp.eq.s32.totalorder %s17, 1
    %p61 = por %p59, %p60
    %p63 = scmp.ne.s32.totalorder %s48, %s62
    %p64 = scmp.eq.s32.totalorder %s17, 0
    %p65 = por %p63, %p64
    %s67 = sadd.s32 %s66, 1
    %p70 = scmp.eq.s32.totalorder %s11, 1
    %p71 = scmp.ne.s32.totalorder %s66, %s68
    %p72 = scmp.eq.s32.totalorder %s11, 0
    %p73 = por %p71, %p72
    %p74 = scmp.ne.s32.totalorder %s66, %s68
    %p75 = scmp.eq.s32.totalorder %s16, 1
    %p76 = por %p74, %p75
    %p77 = scmp.ne.s32.totalorder %s68, %s69
    %p78 = scmp.eq.s32.totalorder %s16, 0
    %p79 = por %p77, %p78
    %p80 = scmp.ne.s32.totalorder %s68, %s69
    %p81 = scmp.eq.s32.totalorder %s17, 1
    %p82 = por %p80, %p81
    %p84 = scmp.ne.s32.totalorder %s69, %s83
    %p85 = scmp.eq.s32.totalorder %s17, 0
    %p86 = por %p84, %p85
    %s88 = sadd.s32 %s87, 1
    %p91 = scmp.eq.s32.totalorder %s11, 1
    %p92 = scmp.ne.s32.totalorder %s87, %s89
    %p93 = scmp.eq.s32.totalorder %s11, 0
    %p94 = por %p92, %p93
    %p95 = scmp.ne.s32.totalorder %s87, %s89
    %p96 = scmp.eq.s32.totalorder %s16, 1
    %p97 = por %p95, %p96
    %p98 = scmp.ne.s32.totalorder %s89, %s90
    %p99 = scmp.eq.s32.totalorder %s16, 0
    %p100 = por %p98, %p99
    %p101 = scmp.ne.s32.totalorder %s89, %s90
    %p102 = scmp.eq.s32.totalorder %s17, 1
    %p103 = por %p101, %p102
    %p105 = scmp.ne.s32.totalorder %s90, %s104
    %p106 = scmp.eq.s32.totalorder %s17, 0
    %p107 = por %p105, %p106
    %s109 = sadd.s32 %s108, 1
    %p112 = scmp.eq.s32.totalorder %s11, 1
    %p113 = scmp.ne.s32.totalorder %s108, %s110
    %p114 = scmp.eq.s32.totalorder %s11, 0
    %p115 = por %p113, %p114
    %p116 = scmp.ne.s32.totalorder %s108, %s110
    %p117 = scmp.eq.s32.totalorder %s16, 1
    %p118 = por %p116, %p117
    %p119 = scmp.ne.s32.totalorder %s110, %s111
    %p120 = scmp.eq.s32.totalorder %s16, 0
    %p121 = por %p119, %p120
    %p122 = scmp.ne.s32.totalorder %s110, %s111
    %p123 = scmp.eq.s32.totalorder %s17, 1
    %p124 = por %p122, %p123
    %p126 = scmp.ne.s32.totalorder %s111, %s125
    %p127 = scmp.eq.s32.totalorder %s17, 0
    %p128 = por %p126, %p127
    %s129 = ssub.s32 %s11, %s18
    %p130 = scmp.eq.s32.totalorder %s129, 0
    %s132 = sadd.s32 %s131, 1
    %s133 = scalar_select %p130, %s131, %s132
    %p136 = pneg %p130
    %p137 = scmp.eq.s32.totalorder %s11, 1
    %p138 = por %p136, %p137
    %p139 = scmp.ne.s32.totalorder %s131, %s134
    %p140 = scmp.eq.s32.totalorder %s11, 0
    %p141 = por %p139, %p140
    %p142 = scmp.ne.s32.totalorder %s131, %s134
    %p143 = scmp.eq.s32.totalorder %s16, 1
    %p144 = por %p142, %p143
    %p145 = scmp.ne.s32.totalorder %s134, %s135
    %p146 = scmp.eq.s32.totalorder %s16, 0
    %p147 = por %p145, %p146
    %p148 = scmp.ne.s32.totalorder %s134, %s135
    %p149 = scmp.eq.s32.totalorder %s17, 1
    %p150 = por %p148, %p149
    %p152 = scmp.ne.s32.totalorder %s135, %s151
    %p153 = scmp.eq.s32.totalorder %s17, 0
    %p154 = por %p152, %p153
    %p155 = scmp.le.s32.totalorder 1, %s11
    %p156 = scmp.lt.s32.totalorder %s11, 3
    %p157 = pnand %p155, %p156
    %p158 = pneg %p157
    // Predicated region
    $region9: #{transformer_block_forward.11} parent=5 // pred_check
      _
    $region10: #{transformer_block_forward.11} parent=5 // pred_check_branch
      %160 = sbr.rel (%p157) target = $region12
    $region11: #{transformer_block_forward.11} parent=5 // pred_region
      %s161 = ssub.s32 %s11, 1
      // Predicated region
      $region13: #{transformer_block_forward.11} parent=11 // pred_check
        %p162 = pneg %p58
      $region14: #{transformer_block_forward.11} parent=11 // pred_check_branch
        %164 = sbr.rel (%p162) target = $region16
      $region15: #{transformer_block_forward.11} parent=11 // pred_region
        _
      $region16: #{transformer_block_forward.11} parent=11 // pred_fallthru
        _
      // Predicated region
      $region17: #{transformer_block_forward.11} parent=11 // pred_check
        %p165 = pneg %p79
      $region18: #{transformer_block_forward.11} parent=11 // pred_check_branch
        %167 = sbr.rel (%p165) target = $region20
      $region19: #{transformer_block_forward.11} parent=11 // pred_region
        _
      $region20: #{transformer_block_forward.11} parent=11 // pred_fallthru
        _
      // Predicated region
      $region21: #{transformer_block_forward.11} parent=11 // pred_check
        %p168 = pneg %p100
      $region22: #{transformer_block_forward.11} parent=11 // pred_check_branch
        %170 = sbr.rel (%p168) target = $region24
      $region23: #{transformer_block_forward.11} parent=11 // pred_region
        _
      $region24: #{transformer_block_forward.11} parent=11 // pred_fallthru
        _
      // Predicated region
      $region25: #{transformer_block_forward.11} parent=11 // pred_check
        %p171 = pneg %p121
      $region26: #{transformer_block_forward.11} parent=11 // pred_check_branch
        %173 = sbr.rel (%p171) target = $region28
      $region27: #{transformer_block_forward.11} parent=11 // pred_region
        _
      $region28: #{transformer_block_forward.11} parent=11 // pred_fallthru
        _
    $region12: #{transformer_block_forward.11} parent=5 // pred_fallthru
      _
    %p174 = scmp.lt.s32.totalorder %s11, 2
    // Predicated region
    $region29: #{transformer_block_forward.11} parent=5 // pred_check
      %p175 = pneg %p174
    $region30: #{transformer_block_forward.11} parent=5 // pred_check_branch
      %177 = sbr.rel (%p175) target = $region32
    $region31: #{transformer_block_forward.11} parent=5 // pred_region
      // Predicated region
      $region33: #{transformer_block_forward.11} parent=31 // pred_check
        %p178 = pneg %p31
      $region34: #{transformer_block_forward.11} parent=31 // pred_check_branch
        %180 = sbr.rel (%p178) target = $region36
      $region35: #{transformer_block_forward.11} parent=31 // pred_region
        %s181 = smul.u32 32, %s11
        %p182 = scmp.lt.s32.totalorder %s181, 63
        %s183 = scalar_select %p182, %s181, 63
        %s184 = smul.addr %s183, 8
        %s185 = scalar_lea.vmem %s0, %s184
        %s186 = smul.u32 32, %s11
      $region36: #{transformer_block_forward.11} parent=31 // pred_fallthru
        _
    $region32: #{transformer_block_forward.11} parent=5 // pred_fallthru
      _
    %p187 = scmp.le.s32.totalorder 1, %s11
    %p188 = scmp.lt.s32.totalorder %s11, 3
    %p189 = pnand %p187, %p188
    %p190 = pneg %p189
    // Predicated region
    $region37: #{transformer_block_forward.11} parent=5 // pred_check
      _
    $region38: #{transformer_block_forward.11} parent=5 // pred_check_branch
      %192 = sbr.rel (%p189) target = $region40
    $region39: #{transformer_block_forward.11} parent=5 // pred_region
      %s193 = ssub.s32 %s11, 1
      %s194 = smul.u32 32, %s16
      %p195 = scmp.lt.s32.totalorder %s194, 63
      %s196 = scalar_select %p195, %s194, 63
      %s197 = smul.addr %s196, 8
      %s198 = scalar_lea.vmem %s0, %s197
      %p199 = pneg %p37
      %p200 = pneg %p34
      %p201 = pneg %p58
      %p202 = pneg %p55
      %p203 = pneg %p79
      %p204 = pneg %p76
      %p205 = pneg %p100
      %p206 = pneg %p97
      %p207 = pneg %p121
      %p208 = pneg %p118
      %p209 = pneg %p147
      %p210 = pneg %p144
      %s211 = smul.u32 32, %s16
      %p212 = scmp.lt.s32.totalorder %s211, 63
      %s213 = scalar_select %p212, %s211, 63
      %s214 = smul.addr %s213, 8
      %s215 = scalar_lea.vmem %s5, %s214
      %s216 = smul.u32 32, %s16
      %p217 = scmp.lt.s32.totalorder %s216, 63
      %s218 = scalar_select %p217, %s216, 63
      %s219 = smul.addr %s218, 8
      %s220 = scalar_lea.vmem %s0, %s219
      %s221 = smul.u32 32, %s16
      %s222 = smul.u32 32, %s16
      %p223 = scmp.lt.s32.totalorder %s222, 63
      %s224 = scalar_select %p223, %s222, 63
      %s225 = smul.addr %s224, 8
      %s226 = scalar_lea.vmem %s5, %s225
      %s227 = smul.u32 32, %s16
      %v228 = vld [vmem:[%s220] sm:$0xff]
      %v229 = vld [vmem:[%s220 + $0x8] sm:$0xff]
      %v230 = vld [vmem:[%s220 + $0x10] sm:$0xff]
      %v231 = vld [vmem:[%s220 + $0x18] sm:$0xff]
      %v232 = vld [vmem:[%s220 + $0x20] sm:$0xff]
      %v233 = vld [vmem:[%s220 + $0x28] sm:$0xff]
      %v234 = vld [vmem:[%s220 + $0x30] sm:$0xff]
      %v235 = vld [vmem:[%s220 + $0x38] sm:$0xff]
      %v236 = vld [vmem:[%s220 + $0x40] sm:$0xff]
      %v237 = vld [vmem:[%s220 + $0x48] sm:$0xff]
      %v238 = vld [vmem:[%s220 + $0x50] sm:$0xff]
      %v239 = vld [vmem:[%s220 + $0x58] sm:$0xff]
      %v240 = vld [vmem:[%s220 + $0x60] sm:$0xff]
      %v241 = vld [vmem:[%s220 + $0x68] sm:$0xff]
      %v242 = vld [vmem:[%s220 + $0x70] sm:$0xff]
      %v243 = vld [vmem:[%s220 + $0x78] sm:$0xff]
      %v244 = vld [vmem:[%s220 + $0x80] sm:$0xff]
      %v245 = vld [vmem:[%s220 + $0x88] sm:$0xff]
      %v246 = vld [vmem:[%s220 + $0x90] sm:$0xff]
      %v247 = vld [vmem:[%s220 + $0x98] sm:$0xff]
      %v248 = vld [vmem:[%s220 + $0xa0] sm:$0xff]
      %v249 = vld [vmem:[%s220 + $0xa8] sm:$0xff]
      %v250 = vld [vmem:[%s220 + $0xb0] sm:$0xff]
      %v251 = vld [vmem:[%s220 + $0xb8] sm:$0xff]
      %v252 = vld [vmem:[%s220 + $0xc0] sm:$0xff]
      %v253 = vld [vmem:[%s220 + $0xc8] sm:$0xff]
      %v254 = vld [vmem:[%s220 + $0xd0] sm:$0xff]
      %v255 = vld [vmem:[%s220 + $0xd8] sm:$0xff]
      %v256 = vld [vmem:[%s220 + $0xe0] sm:$0xff]
      %v257 = vld [vmem:[%s220 + $0xe8] sm:$0xff]
      %v258 = vld [vmem:[%s220 + $0xf0] sm:$0xff]
      %v259 = vld [vmem:[%s220 + $0xf8] sm:$0xff]
      %vm260 = vcmask 261120
      %v261 = vsel %vm260, %v228, 0.0
      %262 = vadd.xlane.f32.xlu0 %v261
      %v263 = vpop.xlane.xlu0 %262
      %v264 = vsel %vm260, %v229, 0.0
      %265 = vadd.xlane.f32.xlu0 %v264
      %v266 = vpop.xlane.xlu0 %265
      %v267 = vsel %vm260, %v230, 0.0
      %268 = vadd.xlane.f32.xlu0 %v267
      %v269 = vpop.xlane.xlu0 %268
      %v270 = vsel %vm260, %v231, 0.0
      %271 = vadd.xlane.f32.xlu0 %v270
      %v272 = vpop.xlane.xlu0 %271
      %v273 = vsel %vm260, %v232, 0.0
      %274 = vadd.xlane.f32.xlu0 %v273
      %v275 = vpop.xlane.xlu0 %274
      %v276 = vsel %vm260, %v233, 0.0
      %277 = vadd.xlane.f32.xlu0 %v276
      %v278 = vpop.xlane.xlu0 %277
      %v279 = vsel %vm260, %v234, 0.0
      %280 = vadd.xlane.f32.xlu0 %v279
      %v281 = vpop.xlane.xlu0 %280
      %v282 = vsel %vm260, %v235, 0.0
      %283 = vadd.xlane.f32.xlu0 %v282
      %v284 = vpop.xlane.xlu0 %283
      %v285 = vsel %vm260, %v236, 0.0
      %286 = vadd.xlane.f32.xlu0 %v285
      %v287 = vpop.xlane.xlu0 %286
      %v288 = vsel %vm260, %v237, 0.0
      %289 = vadd.xlane.f32.xlu0 %v288
      %v290 = vpop.xlane.xlu0 %289
      %v291 = vsel %vm260, %v238, 0.0
      %292 = vadd.xlane.f32.xlu0 %v291
      %v293 = vpop.xlane.xlu0 %292
      %v294 = vsel %vm260, %v239, 0.0
      %295 = vadd.xlane.f32.xlu0 %v294
      %v296 = vpop.xlane.xlu0 %295
      %v297 = vsel %vm260, %v240, 0.0
      %298 = vadd.xlane.f32.xlu0 %v297
      %v299 = vpop.xlane.xlu0 %298
      %v300 = vsel %vm260, %v241, 0.0
      %301 = vadd.xlane.f32.xlu0 %v300
      %v302 = vpop.xlane.xlu0 %301
      %v303 = vsel %vm260, %v242, 0.0
      %304 = vadd.xlane.f32.xlu0 %v303
      %v305 = vpop.xlane.xlu0 %304
      %v306 = vsel %vm260, %v243, 0.0
      %307 = vadd.xlane.f32.xlu0 %v306
      %v308 = vpop.xlane.xlu0 %307
      %v309 = vsel %vm260, %v244, 0.0
      %310 = vadd.xlane.f32.xlu0 %v309
      %v311 = vpop.xlane.xlu0 %310
      %v312 = vsel %vm260, %v245, 0.0
      %313 = vadd.xlane.f32.xlu0 %v312
      %v314 = vpop.xlane.xlu0 %313
      %v315 = vsel %vm260, %v246, 0.0
      %316 = vadd.xlane.f32.xlu0 %v315
      %v317 = vpop.xlane.xlu0 %316
      %v318 = vsel %vm260, %v247, 0.0
      %319 = vadd.xlane.f32.xlu0 %v318
      %v320 = vpop.xlane.xlu0 %319
      %v321 = vsel %vm260, %v248, 0.0
      %322 = vadd.xlane.f32.xlu0 %v321
      %v323 = vpop.xlane.xlu0 %322
      %v324 = vsel %vm260, %v249, 0.0
      %325 = vadd.xlane.f32.xlu0 %v324
      %v326 = vpop.xlane.xlu0 %325
      %v327 = vsel %vm260, %v250, 0.0
      %328 = vadd.xlane.f32.xlu0 %v327
      %v329 = vpop.xlane.xlu0 %328
      %v330 = vsel %vm260, %v251, 0.0
      %331 = vadd.xlane.f32.xlu0 %v330
      %v332 = vpop.xlane.xlu0 %331
      %v333 = vsel %vm260, %v252, 0.0
      %334 = vadd.xlane.f32.xlu0 %v333
      %v335 = vpop.xlane.xlu0 %334
      %v336 = vsel %vm260, %v253, 0.0
      %337 = vadd.xlane.f32.xlu0 %v336
      %v338 = vpop.xlane.xlu0 %337
      %v339 = vsel %vm260, %v254, 0.0
      %340 = vadd.xlane.f32.xlu0 %v339
      %v341 = vpop.xlane.xlu0 %340
      %v342 = vsel %vm260, %v255, 0.0
      %343 = vadd.xlane.f32.xlu0 %v342
      %v344 = vpop.xlane.xlu0 %343
      %v345 = vsel %vm260, %v256, 0.0
      %346 = vadd.xlane.f32.xlu0 %v345
      %v347 = vpop.xlane.xlu0 %346
      %v348 = vsel %vm260, %v257, 0.0
      %349 = vadd.xlane.f32.xlu0 %v348
      %v350 = vpop.xlane.xlu0 %349
      %v351 = vsel %vm260, %v258, 0.0
      %352 = vadd.xlane.f32.xlu0 %v351
      %v353 = vpop.xlane.xlu0 %352
      %v354 = vsel %vm260, %v259, 0.0
      %355 = vadd.xlane.f32.xlu0 %v354
      %v356 = vpop.xlane.xlu0 %355
      %v357 = vrcp.pop 32.0
      %v358 = vmul.f32 %v263, %v357
      %v359 = vmul.f32 %v266, %v357
      %v360 = vmul.f32 %v269, %v357
      %v361 = vmul.f32 %v272, %v357
      %v362 = vmul.f32 %v275, %v357
      %v363 = vmul.f32 %v278, %v357
      %v364 = vmul.f32 %v281, %v357
      %v365 = vmul.f32 %v284, %v357
      %v366 = vmul.f32 %v287, %v357
      %v367 = vmul.f32 %v290, %v357
      %v368 = vmul.f32 %v293, %v357
      %v369 = vmul.f32 %v296, %v357
      %v370 = vmul.f32 %v299, %v357
      %v371 = vmul.f32 %v302, %v357
      %v372 = vmul.f32 %v305, %v357
      %v373 = vmul.f32 %v308, %v357
      %v374 = vmul.f32 %v311, %v357
      %v375 = vmul.f32 %v314, %v357
      %v376 = vmul.f32 %v317, %v357
      %v377 = vmul.f32 %v320, %v357
      %v378 = vmul.f32 %v323, %v357
      %v379 = vmul.f32 %v326, %v357
      %v380 = vmul.f32 %v329, %v357
      %v381 = vmul.f32 %v332, %v357
      %v382 = vmul.f32 %v335, %v357
      %v383 = vmul.f32 %v338, %v357
      %v384 = vmul.f32 %v341, %v357
      %v385 = vmul.f32 %v344, %v357
      %v386 = vmul.f32 %v347, %v357
      %v387 = vmul.f32 %v350, %v357
      %v388 = vmul.f32 %v353, %v357
      %v389 = vmul.f32 %v356, %v357
      %v390 = vsub.f32 %v228, %v358
      %v391 = vsub.f32 %v229, %v359
      %v392 = vsub.f32 %v230, %v360
      %v393 = vsub.f32 %v231, %v361
      %v394 = vsub.f32 %v232, %v362
      %v395 = vsub.f32 %v233, %v363
      %v396 = vsub.f32 %v234, %v364
      %v397 = vsub.f32 %v235, %v365
      %v398 = vsub.f32 %v236, %v366
      %v399 = vsub.f32 %v237, %v367
      %v400 = vsub.f32 %v238, %v368
      %v401 = vsub.f32 %v239, %v369
      %v402 = vsub.f32 %v240, %v370
      %v403 = vsub.f32 %v241, %v371
      %v404 = vsub.f32 %v242, %v372
      %v405 = vsub.f32 %v243, %v373
      %v406 = vsub.f32 %v244, %v374
      %v407 = vsub.f32 %v245, %v375
      %v408 = vsub.f32 %v246, %v376
      %v409 = vsub.f32 %v247, %v377
      %v410 = vsub.f32 %v248, %v378
      %v411 = vsub.f32 %v249, %v379
      %v412 = vsub.f32 %v250, %v380
      %v413 = vsub.f32 %v251, %v381
      %v414 = vsub.f32 %v252, %v382
      %v415 = vsub.f32 %v253, %v383
      %v416 = vsub.f32 %v254, %v384
      %v417 = vsub.f32 %v255, %v385
      %v418 = vsub.f32 %v256, %v386
      %v419 = vsub.f32 %v257, %v387
      %v420 = vsub.f32 %v258, %v388
      %v421 = vsub.f32 %v259, %v389
      %v422 = vmul.f32 %v390, %v390
      %v423 = vmul.f32 %v391, %v391
      %v424 = vmul.f32 %v392, %v392
      %v425 = vmul.f32 %v393, %v393
      %v426 = vmul.f32 %v394, %v394
      %v427 = vmul.f32 %v395, %v395
      %v428 = vmul.f32 %v396, %v396
      %v429 = vmul.f32 %v397, %v397
      %v430 = vmul.f32 %v398, %v398
      %v431 = vmul.f32 %v399, %v399
      %v432 = vmul.f32 %v400, %v400
      %v433 = vmul.f32 %v401, %v401
      %v434 = vmul.f32 %v402, %v402
      %v435 = vmul.f32 %v403, %v403
      %v436 = vmul.f32 %v404, %v404
      %v437 = vmul.f32 %v405, %v405
      %v438 = vmul.f32 %v406, %v406
      %v439 = vmul.f32 %v407, %v407
      %v440 = vmul.f32 %v408, %v408
      %v441 = vmul.f32 %v409, %v409
      %v442 = vmul.f32 %v410, %v410
      %v443 = vmul.f32 %v411, %v411
      %v444 = vmul.f32 %v412, %v412
      %v445 = vmul.f32 %v413, %v413
      %v446 = vmul.f32 %v414, %v414
      %v447 = vmul.f32 %v415, %v415
      %v448 = vmul.f32 %v416, %v416
      %v449 = vmul.f32 %v417, %v417
      %v450 = vmul.f32 %v418, %v418
      %v451 = vmul.f32 %v419, %v419
      %v452 = vmul.f32 %v420, %v420
      %v453 = vmul.f32 %v421, %v421
      %v454 = vsel %vm260, %v422, 0.0
      %455 = vadd.xlane.f32.xlu0 %v454
      %v456 = vpop.xlane.xlu0 %455
      %v457 = vsel %vm260, %v423, 0.0
      %458 = vadd.xlane.f32.xlu0 %v457
      %v459 = vpop.xlane.xlu0 %458
      %v460 = vsel %vm260, %v424, 0.0
      %461 = vadd.xlane.f32.xlu0 %v460
      %v462 = vpop.xlane.xlu0 %461
      %v463 = vsel %vm260, %v425, 0.0
      %464 = vadd.xlane.f32.xlu0 %v463
      %v465 = vpop.xlane.xlu0 %464
      %v466 = vsel %vm260, %v426, 0.0
      %467 = vadd.xlane.f32.xlu0 %v466
      %v468 = vpop.xlane.xlu0 %467
      %v469 = vsel %vm260, %v427, 0.0
      %470 = vadd.xlane.f32.xlu0 %v469
      %v471 = vpop.xlane.xlu0 %470
      %v472 = vsel %vm260, %v428, 0.0
      %473 = vadd.xlane.f32.xlu0 %v472
      %v474 = vpop.xlane.xlu0 %473
      %v475 = vsel %vm260, %v429, 0.0
      %476 = vadd.xlane.f32.xlu0 %v475
      %v477 = vpop.xlane.xlu0 %476
      %v478 = vsel %vm260, %v430, 0.0
      %479 = vadd.xlane.f32.xlu0 %v478
      %v480 = vpop.xlane.xlu0 %479
      %v481 = vsel %vm260, %v431, 0.0
      %482 = vadd.xlane.f32.xlu0 %v481
      %v483 = vpop.xlane.xlu0 %482
      %v484 = vsel %vm260, %v432, 0.0
      %485 = vadd.xlane.f32.xlu0 %v484
      %v486 = vpop.xlane.xlu0 %485
      %v487 = vsel %vm260, %v433, 0.0
      %488 = vadd.xlane.f32.xlu0 %v487
      %v489 = vpop.xlane.xlu0 %488
      %v490 = vsel %vm260, %v434, 0.0
      %491 = vadd.xlane.f32.xlu0 %v490
      %v492 = vpop.xlane.xlu0 %491
      %v493 = vsel %vm260, %v435, 0.0
      %494 = vadd.xlane.f32.xlu0 %v493
      %v495 = vpop.xlane.xlu0 %494
      %v496 = vsel %vm260, %v436, 0.0
      %497 = vadd.xlane.f32.xlu0 %v496
      %v498 = vpop.xlane.xlu0 %497
      %v499 = vsel %vm260, %v437, 0.0
      %500 = vadd.xlane.f32.xlu0 %v499
      %v501 = vpop.xlane.xlu0 %500
      %v502 = vsel %vm260, %v438, 0.0
      %503 = vadd.xlane.f32.xlu0 %v502
      %v504 = vpop.xlane.xlu0 %503
      %v505 = vsel %vm260, %v439, 0.0
      %506 = vadd.xlane.f32.xlu0 %v505
      %v507 = vpop.xlane.xlu0 %506
      %v508 = vsel %vm260, %v440, 0.0
      %509 = vadd.xlane.f32.xlu0 %v508
      %v510 = vpop.xlane.xlu0 %509
      %v511 = vsel %vm260, %v441, 0.0
      %512 = vadd.xlane.f32.xlu0 %v511
      %v513 = vpop.xlane.xlu0 %512
      %v514 = vsel %vm260, %v442, 0.0
      %515 = vadd.xlane.f32.xlu0 %v514
      %v516 = vpop.xlane.xlu0 %515
      %v517 = vsel %vm260, %v443, 0.0
      %518 = vadd.xlane.f32.xlu0 %v517
      %v519 = vpop.xlane.xlu0 %518
      %v520 = vsel %vm260, %v444, 0.0
      %521 = vadd.xlane.f32.xlu0 %v520
      %v522 = vpop.xlane.xlu0 %521
      %v523 = vsel %vm260, %v445, 0.0
      %524 = vadd.xlane.f32.xlu0 %v523
      %v525 = vpop.xlane.xlu0 %524
      %v526 = vsel %vm260, %v446, 0.0
      %527 = vadd.xlane.f32.xlu0 %v526
      %v528 = vpop.xlane.xlu0 %527
      %v529 = vsel %vm260, %v447, 0.0
      %530 = vadd.xlane.f32.xlu0 %v529
      %v531 = vpop.xlane.xlu0 %530
      %v532 = vsel %vm260, %v448, 0.0
      %533 = vadd.xlane.f32.xlu0 %v532
      %v534 = vpop.xlane.xlu0 %533
      %v535 = vsel %vm260, %v449, 0.0
      %536 = vadd.xlane.f32.xlu0 %v535
      %v537 = vpop.xlane.xlu0 %536
      %v538 = vsel %vm260, %v450, 0.0
      %539 = vadd.xlane.f32.xlu0 %v538
      %v540 = vpop.xlane.xlu0 %539
      %v541 = vsel %vm260, %v451, 0.0
      %542 = vadd.xlane.f32.xlu0 %v541
      %v543 = vpop.xlane.xlu0 %542
      %v544 = vsel %vm260, %v452, 0.0
      %545 = vadd.xlane.f32.xlu0 %v544
      %v546 = vpop.xlane.xlu0 %545
      %v547 = vsel %vm260, %v453, 0.0
      %548 = vadd.xlane.f32.xlu0 %v547
      %v549 = vpop.xlane.xlu0 %548
      %v550 = vmul.f32 %v456, %v357
      %v551 = vmul.f32 %v459, %v357
      %v552 = vmul.f32 %v462, %v357
      %v553 = vmul.f32 %v465, %v357
      %v554 = vmul.f32 %v468, %v357
      %v555 = vmul.f32 %v471, %v357
      %v556 = vmul.f32 %v474, %v357
      %v557 = vmul.f32 %v477, %v357
      %v558 = vmul.f32 %v480, %v357
      %v559 = vmul.f32 %v483, %v357
      %v560 = vmul.f32 %v486, %v357
      %v561 = vmul.f32 %v489, %v357
      %v562 = vmul.f32 %v492, %v357
      %v563 = vmul.f32 %v495, %v357
      %v564 = vmul.f32 %v498, %v357
      %v565 = vmul.f32 %v501, %v357
      %v566 = vmul.f32 %v504, %v357
      %v567 = vmul.f32 %v507, %v357
      %v568 = vmul.f32 %v510, %v357
      %v569 = vmul.f32 %v513, %v357
      %v570 = vmul.f32 %v516, %v357
      %v571 = vmul.f32 %v519, %v357
      %v572 = vmul.f32 %v522, %v357
      %v573 = vmul.f32 %v525, %v357
      %v574 = vmul.f32 %v528, %v357
      %v575 = vmul.f32 %v531, %v357
      %v576 = vmul.f32 %v534, %v357
      %v577 = vmul.f32 %v537, %v357
      %v578 = vmul.f32 %v540, %v357
      %v579 = vmul.f32 %v543, %v357
      %v580 = vmul.f32 %v546, %v357
      %v581 = vmul.f32 %v549, %v357
      %v582 = vadd.f32 %v550, 1e-05
      %v583 = vadd.f32 %v551, 1e-05
      %v584 = vadd.f32 %v552, 1e-05
      %v585 = vadd.f32 %v553, 1e-05
      %v586 = vadd.f32 %v554, 1e-05
      %v587 = vadd.f32 %v555, 1e-05
      %v588 = vadd.f32 %v556, 1e-05
      %v589 = vadd.f32 %v557, 1e-05
      %v590 = vadd.f32 %v558, 1e-05
      %v591 = vadd.f32 %v559, 1e-05
      %v592 = vadd.f32 %v560, 1e-05
      %v593 = vadd.f32 %v561, 1e-05
      %v594 = vadd.f32 %v562, 1e-05
      %v595 = vadd.f32 %v563, 1e-05
      %v596 = vadd.f32 %v564, 1e-05
      %v597 = vadd.f32 %v565, 1e-05
      %v598 = vadd.f32 %v566, 1e-05
      %v599 = vadd.f32 %v567, 1e-05
      %v600 = vadd.f32 %v568, 1e-05
      %v601 = vadd.f32 %v569, 1e-05
      %v602 = vadd.f32 %v570, 1e-05
      %v603 = vadd.f32 %v571, 1e-05
      %v604 = vadd.f32 %v572, 1e-05
      %v605 = vadd.f32 %v573, 1e-05
      %v606 = vadd.f32 %v574, 1e-05
      %v607 = vadd.f32 %v575, 1e-05
      %v608 = vadd.f32 %v576, 1e-05
      %v609 = vadd.f32 %v577, 1e-05
      %v610 = vadd.f32 %v578, 1e-05
      %v611 = vadd.f32 %v579, 1e-05
      %v612 = vadd.f32 %v580, 1e-05
      %v613 = vadd.f32 %v581, 1e-05
      %v614 = vrsqrt.pop %v582
      %v615 = vrsqrt.pop %v583
      %v616 = vrsqrt.pop %v584
      %v617 = vrsqrt.pop %v585
      %v618 = vrsqrt.pop %v586
      %v619 = vrsqrt.pop %v587
      %v620 = vrsqrt.pop %v588
      %v621 = vrsqrt.pop %v589
      %v622 = vrsqrt.pop %v590
      %v623 = vrsqrt.pop %v591
      %v624 = vrsqrt.pop %v592
      %v625 = vrsqrt.pop %v593
      %v626 = vrsqrt.pop %v594
      %v627 = vrsqrt.pop %v595
      %v628 = vrsqrt.pop %v596
      %v629 = vrsqrt.pop %v597
      %v630 = vrsqrt.pop %v598
      %v631 = vrsqrt.pop %v599
      %v632 = vrsqrt.pop %v600
      %v633 = vrsqrt.pop %v601
      %v634 = vrsqrt.pop %v602
      %v635 = vrsqrt.pop %v603
      %v636 = vrsqrt.pop %v604
      %v637 = vrsqrt.pop %v605
      %v638 = vrsqrt.pop %v606
      %v639 = vrsqrt.pop %v607
      %v640 = vrsqrt.pop %v608
      %v641 = vrsqrt.pop %v609
      %v642 = vrsqrt.pop %v610
      %v643 = vrsqrt.pop %v611
      %v644 = vrsqrt.pop %v612
      %v645 = vrsqrt.pop %v613
      %v646 = vmul.f32 %v390, %v614
      %v647 = vmul.f32 %v391, %v615
      %v648 = vmul.f32 %v392, %v616
      %v649 = vmul.f32 %v393, %v617
      %v650 = vmul.f32 %v394, %v618
      %v651 = vmul.f32 %v395, %v619
      %v652 = vmul.f32 %v396, %v620
      %v653 = vmul.f32 %v397, %v621
      %v654 = vmul.f32 %v398, %v622
      %v655 = vmul.f32 %v399, %v623
      %v656 = vmul.f32 %v400, %v624
      %v657 = vmul.f32 %v401, %v625
      %v658 = vmul.f32 %v402, %v626
      %v659 = vmul.f32 %v403, %v627
      %v660 = vmul.f32 %v404, %v628
      %v661 = vmul.f32 %v405, %v629
      %v662 = vmul.f32 %v406, %v630
      %v663 = vmul.f32 %v407, %v631
      %v664 = vmul.f32 %v408, %v632
      %v665 = vmul.f32 %v409, %v633
      %v666 = vmul.f32 %v410, %v634
      %v667 = vmul.f32 %v411, %v635
      %v668 = vmul.f32 %v412, %v636
      %v669 = vmul.f32 %v413, %v637
      %v670 = vmul.f32 %v414, %v638
      %v671 = vmul.f32 %v415, %v639
      %v672 = vmul.f32 %v416, %v640
      %v673 = vmul.f32 %v417, %v641
      %v674 = vmul.f32 %v418, %v642
      %v675 = vmul.f32 %v419, %v643
      %v676 = vmul.f32 %v420, %v644
      %v677 = vmul.f32 %v421, %v645
      %v678 = vld [vmem:[%s1] sm:$0x1]
      %v680 = vlaneseq
      %v681 = vshrl.u32 %v680, 7
      %v682 = vsub.s32 0, %v681
      %v683 = vrot.slane %v678, %v682
      %v685 = vmul.f32 %v646, %v683
      %v686 = vmul.f32 %v647, %v683
      %v687 = vmul.f32 %v648, %v683
      %v688 = vmul.f32 %v649, %v683
      %v689 = vmul.f32 %v650, %v683
      %v690 = vmul.f32 %v651, %v683
      %v691 = vmul.f32 %v652, %v683
      %v692 = vmul.f32 %v653, %v683
      %v693 = vmul.f32 %v654, %v683
      %v694 = vmul.f32 %v655, %v683
      %v695 = vmul.f32 %v656, %v683
      %v696 = vmul.f32 %v657, %v683
      %v697 = vmul.f32 %v658, %v683
      %v698 = vmul.f32 %v659, %v683
      %v699 = vmul.f32 %v660, %v683
      %v700 = vmul.f32 %v661, %v683
      %v701 = vmul.f32 %v662, %v683
      %v702 = vmul.f32 %v663, %v683
      %v703 = vmul.f32 %v664, %v683
      %v704 = vmul.f32 %v665, %v683
      %v705 = vmul.f32 %v666, %v683
      %v706 = vmul.f32 %v667, %v683
      %v707 = vmul.f32 %v668, %v683
      %v708 = vmul.f32 %v669, %v683
      %v709 = vmul.f32 %v670, %v683
      %v710 = vmul.f32 %v671, %v683
      %v711 = vmul.f32 %v672, %v683
      %v712 = vmul.f32 %v673, %v683
      %v713 = vmul.f32 %v674, %v683
      %v714 = vmul.f32 %v675, %v683
      %v715 = vmul.f32 %v676, %v683
      %v716 = vmul.f32 %v677, %v683
      %v717 = vld [vmem:[%s2] sm:$0x1]
      %v719 = vlaneseq
      %v720 = vshrl.u32 %v719, 7
      %v721 = vsub.s32 0, %v720
      %v722 = vrot.slane %v717, %v721
      %v724 = vadd.f32 %v685, %v722
      %v725 = vadd.f32 %v686, %v722
      %v726 = vadd.f32 %v687, %v722
      %v727 = vadd.f32 %v688, %v722
      %v728 = vadd.f32 %v689, %v722
      %v729 = vadd.f32 %v690, %v722
      %v730 = vadd.f32 %v691, %v722
      %v731 = vadd.f32 %v692, %v722
      %v732 = vadd.f32 %v693, %v722
      %v733 = vadd.f32 %v694, %v722
      %v734 = vadd.f32 %v695, %v722
      %v735 = vadd.f32 %v696, %v722
      %v736 = vadd.f32 %v697, %v722
      %v737 = vadd.f32 %v698, %v722
      %v738 = vadd.f32 %v699, %v722
      %v739 = vadd.f32 %v700, %v722
      %v740 = vadd.f32 %v701, %v722
      %v741 = vadd.f32 %v702, %v722
      %v742 = vadd.f32 %v703, %v722
      %v743 = vadd.f32 %v704, %v722
      %v744 = vadd.f32 %v705, %v722
      %v745 = vadd.f32 %v706, %v722
      %v746 = vadd.f32 %v707, %v722
      %v747 = vadd.f32 %v708, %v722
      %v748 = vadd.f32 %v709, %v722
      %v749 = vadd.f32 %v710, %v722
      %v750 = vadd.f32 %v711, %v722
      %v751 = vadd.f32 %v712, %v722
      %v752 = vadd.f32 %v713, %v722
      %v753 = vadd.f32 %v714, %v722
      %v754 = vadd.f32 %v715, %v722
      %v755 = vadd.f32 %v716, %v722
      %v756 = vld [vmem:[%s3] sm:$0xff]
      %v757 = vld [vmem:[%s3 + $0x8] sm:$0xff]
      %v758 = vld [vmem:[%s3 + $0x10] sm:$0xff]
      %v759 = vld [vmem:[%s3 + $0x18] sm:$0xff]
      %v760 = vld [vmem:[%s4] sm:$0x1]
      %v762 = vlaneseq
      %v763 = vshrl.u32 %v762, 7
      %v764 = vsub.s32 0, %v763
      %v765 = vrot.slane %v760, %v764
      %v768 = vsel %vm260, %v724, 0
      %v771 = vsel %vm260, %v725, 0
      %v774 = vsel %vm260, %v726, 0
      %v777 = vsel %vm260, %v727, 0
      %v780 = vsel %vm260, %v728, 0
      %v783 = vsel %vm260, %v729, 0
      %v786 = vsel %vm260, %v730, 0
      %v789 = vsel %vm260, %v731, 0
      %v792 = vsel %vm260, %v732, 0
      %v795 = vsel %vm260, %v733, 0
      %v798 = vsel %vm260, %v734, 0
      %v801 = vsel %vm260, %v735, 0
      %v804 = vsel %vm260, %v736, 0
      %v807 = vsel %vm260, %v737, 0
      %v810 = vsel %vm260, %v738, 0
      %v813 = vsel %vm260, %v739, 0
      %v816 = vsel %vm260, %v740, 0
      %v819 = vsel %vm260, %v741, 0
      %v822 = vsel %vm260, %v742, 0
      %v825 = vsel %vm260, %v743, 0
      %v828 = vsel %vm260, %v744, 0
      %v831 = vsel %vm260, %v745, 0
      %v834 = vsel %vm260, %v746, 0
      %v837 = vsel %vm260, %v747, 0
      %v840 = vsel %vm260, %v748, 0
      %v843 = vsel %vm260, %v749, 0
      %v846 = vsel %vm260, %v750, 0
      %v849 = vsel %vm260, %v751, 0
      %v852 = vsel %vm260, %v752, 0
      %v855 = vsel %vm260, %v753, 0
      %v858 = vsel %vm260, %v754, 0
      %v861 = vsel %vm260, %v755, 0
      %863 = vmatprep.subr.mxu0 0.0
      %864 = vmatpush1.msra.mxu0 %v756
      %865 = vmatprep.subr.mxu0 0.0
      %866 = vmatpush1.msra.mxu0 %v757
      %867 = vmatprep.subr.mxu0 0.0
      %868 = vmatpush1.msra.mxu0 %v758
      %869 = vmatprep.subr.mxu0 0.0
      %870 = vmatpush1.msra.mxu0 %v759
      %871 = vmatprep.subr.mxu0 0.0
      %872 = vmatpush1.msra.mxu0 0.0
      %873 = vmatprep.subr.mxu0 0.0
      %874 = vmatpush1.msra.mxu0 0.0
      %875 = vmatprep.subr.mxu0 0.0
      %876 = vmatpush1.msra.mxu0 0.0
      %877 = vmatprep.subr.mxu0 0.0
      %878 = vmatpush1.msra.mxu0 0.0
      %879 = vmatprep.subr.mxu0 0.0
      %880 = vmatpush1.msra.mxu0 0.0
      %881 = vmatprep.subr.mxu0 0.0
      %882 = vmatpush1.msra.mxu0 0.0
      %883 = vmatprep.subr.mxu0 0.0
      %884 = vmatpush1.msra.mxu0 0.0
      %885 = vmatprep.subr.mxu0 0.0
      %886 = vmatpush1.msra.mxu0 0.0
      %887 = vmatprep.subr.mxu0 0.0
      %888 = vmatpush1.msra.mxu0 0.0
      %889 = vmatprep.subr.mxu0 0.0
      %890 = vmatpush1.msra.mxu0 0.0
      %891 = vmatprep.subr.mxu0 0.0
      %892 = vmatpush1.msra.mxu0 0.0
      %893 = vmatprep.subr.mxu0 0.0
      %894 = vmatpush1.msra.mxu0 0.0
      %895 = vmatprep.subr.mxu0 0.0
      %896 = vmatpush1.msra.mxu0 0.0
      %897 = vmatprep.subr.mxu0 0.0
      %898 = vmatpush1.msra.mxu0 0.0
      %899 = vmatprep.subr.mxu0 0.0
      %900 = vmatpush1.msra.mxu0 0.0
      %901 = vmatprep.subr.mxu0 0.0
      %902 = vmatpush1.msra.mxu0 0.0
      %903 = vmatprep.subr.mxu0 0.0
      %904 = vmatpush1.msra.mxu0 0.0
      %905 = vmatprep.subr.mxu0 0.0
      %906 = vmatpush1.msra.mxu0 0.0
      %907 = vmatprep.subr.mxu0 0.0
      %908 = vmatpush1.msra.mxu0 0.0
      %909 = vmatprep.subr.mxu0 0.0
      %910 = vmatpush1.msra.mxu0 0.0
      %911 = vmatprep.subr.mxu0 0.0
      %912 = vmatpush1.msra.mxu0 0.0
      %913 = vmatprep.subr.mxu0 0.0
      %914 = vmatpush1.msra.mxu0 0.0
      %915 = vmatprep.subr.mxu0 0.0
      %916 = vmatpush1.msra.mxu0 0.0
      %917 = vmatprep.subr.mxu0 0.0
      %918 = vmatpush1.msra.mxu0 0.0
      %919 = vmatprep.subr.mxu0 0.0
      %920 = vmatpush1.msra.mxu0 0.0
      %921 = vmatprep.subr.mxu0 0.0
      %922 = vmatpush1.msra.mxu0 0.0
      %923 = vmatprep.subr.mxu0 0.0
      %924 = vmatpush1.msra.mxu0 0.0
      %925 = vmatprep.subr.mxu0 0.0
      %926 = vmatpush1.msra.mxu0 0.0
      %927 = vmatprep.mubr.f32.mxu0 0.0
      %928 = vmatmul.mubr.f32.gmra.mrb[0].mxu0 %v768
      %v929 = vpop.f32.mrb[0].mxu0
      %v930 = vadd.f32 %v765, %v929
      %v931 = vpop.f32.mrb[0].mxu0
      %932 = vmatprep.mubr.f32.mxu0 0.0
      %933 = vmatmul.mubr.f32.gmra.mrb[0].mxu0 %v771
      %v934 = vpop.f32.mrb[0].mxu0
      %v935 = vadd.f32 %v765, %v934
      %v936 = vpop.f32.mrb[0].mxu0
      %937 = vmatprep.mubr.f32.mxu0 0.0
      %938 = vmatmul.mubr.f32.gmra.mrb[0].mxu0 %v774
      %v939 = vpop.f32.mrb[0].mxu0
      %v940 = vadd.f32 %v765, %v939
      %v941 = vpop.f32.mrb[0].mxu0
      %942 = vmatprep.mubr.f32.mxu0 0.0
      %943 = vmatmul.mubr.f32.gmra.mrb[0].mxu0 %v777
      %v944 = vpop.f32.mrb[0].mxu0
      %v945 = vadd.f32 %v765, %v944
      %v946 = vpop.f32.mrb[0].mxu0
      %947 = vmatprep.mubr.f32.mxu0 0.0
      %948 = vmatmul.mubr.f32.gmra.mrb[0].mxu0 %v780
      %v949 = vpop.f32.mrb[0].mxu0
      %v950 = vadd.f32 %v765, %v949
      %v951 = vpop.f32.mrb[0].mxu0
      %952 = vmatprep.mubr.f32.mxu0 0.0
      %953 = vmatmul.mubr.f32.gmra.mrb[0].mxu0 %v783
      %v954 = vpop.f32.mrb[0].mxu0
      %v955 = vadd.f32 %v765, %v954
      %v956 = vpop.f32.mrb[0].mxu0
      %957 = vmatprep.mubr.f32.mxu0 0.0
      %958 = vmatmul.mubr.f32.gmra.mrb[0].mxu0 %v786
      %v959 = vpop.f32.mrb[0].mxu0
      %v960 = vadd.f32 %v765, %v959
      %v961 = vpop.f32.mrb[0].mxu0
      %962 = vmatprep.mubr.f32.mxu0 0.0
      %963 = vmatmul.mubr.f32.gmra.mrb[0].mxu0 %v789
      %v964 = vpop.f32.mrb[0].mxu0
      %v965 = vadd.f32 %v765, %v964
      %v966 = vpop.f32.mrb[0].mxu0
      %967 = vmatprep.mubr.f32.mxu0 0.0
      %968 = vmatmul.mubr.f32.gmra.mrb[0].mxu0 %v792
      %v969 = vpop.f32.mrb[0].mxu0
      %v970 = vadd.f32 %v765, %v969
      %v971 = vpop.f32.mrb[0].mxu0
      %972 = vmatprep.mubr.f32.mxu0 0.0
      %973 = vmatmul.mubr.f32.gmra.mrb[0].mxu0 %v795
      %v974 = vpop.f32.mrb[0].mxu0
      %v975 = vadd.f32 %v765, %v974
      %v976 = vpop.f32.mrb[0].mxu0
      %977 = vmatprep.mubr.f32.mxu0 0.0
      %978 = vmatmul.mubr.f32.gmra.mrb[0].mxu0 %v798
      %v979 = vpop.f32.mrb[0].mxu0
      %v980 = vadd.f32 %v765, %v979
      %v981 = vpop.f32.mrb[0].mxu0
      %982 = vmatprep.mubr.f32.mxu0 0.0
      %983 = vmatmul.mubr.f32.gmra.mrb[0].mxu0 %v801
      %v984 = vpop.f32.mrb[0].mxu0
      %v985 = vadd.f32 %v765, %v984
      %v986 = vpop.f32.mrb[0].mxu0
      %987 = vmatprep.mubr.f32.mxu0 0.0
      %988 = vmatmul.mubr.f32.gmra.mrb[0].mxu0 %v804
      %v989 = vpop.f32.mrb[0].mxu0
      %v990 = vadd.f32 %v765, %v989
      %v991 = vpop.f32.mrb[0].mxu0
      %992 = vmatprep.mubr.f32.mxu0 0.0
      %993 = vmatmul.mubr.f32.gmra.mrb[0].mxu0 %v807
      %v994 = vpop.f32.mrb[0].mxu0
      %v995 = vadd.f32 %v765, %v994
      %v996 = vpop.f32.mrb[0].mxu0
      %997 = vmatprep.mubr.f32.mxu0 0.0
      %998 = vmatmul.mubr.f32.gmra.mrb[0].mxu0 %v810
      %v999 = vpop.f32.mrb[0].mxu0
      %v1000 = vadd.f32 %v765, %v999
      %v1001 = vpop.f32.mrb[0].mxu0
      %1002 = vmatprep.mubr.f32.mxu0 0.0
      %1003 = vmatmul.mubr.f32.gmra.mrb[0].mxu0 %v813
      %v1004 = vpop.f32.mrb[0].mxu0
      %v1005 = vadd.f32 %v765, %v1004
      %v1006 = vpop.f32.mrb[0].mxu0
      %1007 = vmatprep.mubr.f32.mxu0 0.0
      %1008 = vmatmul.mubr.f32.gmra.mrb[0].mxu0 %v816
      %v1009 = vpop.f32.mrb[0].mxu0
      %v1010 = vadd.f32 %v765, %v1009
      %v1011 = vpop.f32.mrb[0].mxu0
      %1012 = vmatprep.mubr.f32.mxu0 0.0
      %1013 = vmatmul.mubr.f32.gmra.mrb[0].mxu0 %v819
      %v1014 = vpop.f32.mrb[0].mxu0
      %v1015 = vadd.f32 %v765, %v1014
      %v1016 = vpop.f32.mrb[0].mxu0
      %1017 = vmatprep.mubr.f32.mxu0 0.0
      %1018 = vmatmul.mubr.f32.gmra.mrb[0].mxu0 %v822
      %v1019 = vpop.f32.mrb[0].mxu0
      %v1020 = vadd.f32 %v765, %v1019
      %v1021 = vpop.f32.mrb[0].mxu0
      %1022 = vmatprep.mubr.f32.mxu0 0.0
      %1023 = vmatmul.mubr.f32.gmra.mrb[0].mxu0 %v825
      %v1024 = vpop.f32.mrb[0].mxu0
      %v1025 = vadd.f32 %v765, %v1024
      %v1026 = vpop.f32.mrb[0].mxu0
      %1027 = vmatprep.mubr.f32.mxu0 0.0
      %1028 = vmatmul.mubr.f32.gmra.mrb[0].mxu0 %v828
      %v1029 = vpop.f32.mrb[0].mxu0
      %v1030 = vadd.f32 %v765, %v1029
      %v1031 = vpop.f32.mrb[0].mxu0
      %1032 = vmatprep.mubr.f32.mxu0 0.0
      %1033 = vmatmul.mubr.f32.gmra.mrb[0].mxu0 %v831
      %v1034 = vpop.f32.mrb[0].mxu0
      %v1035 = vadd.f32 %v765, %v1034
      %v1036 = vpop.f32.mrb[0].mxu0
      %1037 = vmatprep.mubr.f32.mxu0 0.0
      %1038 = vmatmul.mubr.f32.gmra.mrb[0].mxu0 %v834
      %v1039 = vpop.f32.mrb[0].mxu0
      %v1040 = vadd.f32 %v765, %v1039
      %v1041 = vpop.f32.mrb[0].mxu0
      %1042 = vmatprep.mubr.f32.mxu0 0.0
      %1043 = vmatmul.mubr.f32.gmra.mrb[0].mxu0 %v837
      %v1044 = vpop.f32.mrb[0].mxu0
      %v1045 = vadd.f32 %v765, %v1044
      %v1046 = vpop.f32.mrb[0].mxu0
      %1047 = vmatprep.mubr.f32.mxu0 0.0
      %1048 = vmatmul.mubr.f32.gmra.mrb[0].mxu0 %v840
      %v1049 = vpop.f32.mrb[0].mxu0
      %v1050 = vadd.f32 %v765, %v1049
      %v1051 = vpop.f32.mrb[0].mxu0
      %1052 = vmatprep.mubr.f32.mxu0 0.0
      %1053 = vmatmul.mubr.f32.gmra.mrb[0].mxu0 %v843
      %v1054 = vpop.f32.mrb[0].mxu0
      %v1055 = vadd.f32 %v765, %v1054
      %v1056 = vpop.f32.mrb[0].mxu0
      %1057 = vmatprep.mubr.f32.mxu0 0.0
      %1058 = vmatmul.mubr.f32.gmra.mrb[0].mxu0 %v846
      %v1059 = vpop.f32.mrb[0].mxu0
      %v1060 = vadd.f32 %v765, %v1059
      %v1061 = vpop.f32.mrb[0].mxu0
      %1062 = vmatprep.mubr.f32.mxu0 0.0
      %1063 = vmatmul.mubr.f32.gmra.mrb[0].mxu0 %v849
      %v1064 = vpop.f32.mrb[0].mxu0
      %v1065 = vadd.f32 %v765, %v1064
      %v1066 = vpop.f32.mrb[0].mxu0
      %1067 = vmatprep.mubr.f32.mxu0 0.0
      %1068 = vmatmul.mubr.f32.gmra.mrb[0].mxu0 %v852
      %v1069 = vpop.f32.mrb[0].mxu0
      %v1070 = vadd.f32 %v765, %v1069
      %v1071 = vpop.f32.mrb[0].mxu0
      %1072 = vmatprep.mubr.f32.mxu0 0.0
      %1073 = vmatmul.mubr.f32.gmra.mrb[0].mxu0 %v855
      %v1074 = vpop.f32.mrb[0].mxu0
      %v1075 = vadd.f32 %v765, %v1074
      %v1076 = vpop.f32.mrb[0].mxu0
      %1077 = vmatprep.mubr.f32.mxu0 0.0
      %1078 = vmatmul.mubr.f32.gmra.mrb[0].mxu0 %v858
      %v1079 = vpop.f32.mrb[0].mxu0
      %v1080 = vadd.f32 %v765, %v1079
      %v1081 = vpop.f32.mrb[0].mxu0
      %1082 = vmatprep.mubr.f32.mxu0 0.0
      %1083 = vmatmul.mubr.f32.gmra.mrb[0].mxu0 %v861
      %v1084 = vpop.f32.mrb[0].mxu0
      %v1085 = vadd.f32 %v765, %v1084
      %v1086 = vpop.f32.mrb[0].mxu0
      %1087 = vdwg.mxu0
      %1088 = vst [vmem:[%s226] sm:$0xff] %v930
      %1089 = vst [vmem:[%s226 + $0x8] sm:$0xff] %v935
      %1090 = vst [vmem:[%s226 + $0x10] sm:$0xff] %v940
      %1091 = vst [vmem:[%s226 + $0x18] sm:$0xff] %v945
      %1092 = vst [vmem:[%s226 + $0x20] sm:$0xff] %v950
      %1093 = vst [vmem:[%s226 + $0x28] sm:$0xff] %v955
      %1094 = vst [vmem:[%s226 + $0x30] sm:$0xff] %v960
      %1095 = vst [vmem:[%s226 + $0x38] sm:$0xff] %v965
      %1096 = vst [vmem:[%s226 + $0x40] sm:$0xff] %v970
      %1097 = vst [vmem:[%s226 + $0x48] sm:$0xff] %v975
      %1098 = vst [vmem:[%s226 + $0x50] sm:$0xff] %v980
      %1099 = vst [vmem:[%s226 + $0x58] sm:$0xff] %v985
      %1100 = vst [vmem:[%s226 + $0x60] sm:$0xff] %v990
      %1101 = vst [vmem:[%s226 + $0x68] sm:$0xff] %v995
      %1102 = vst [vmem:[%s226 + $0x70] sm:$0xff] %v1000
      %1103 = vst [vmem:[%s226 + $0x78] sm:$0xff] %v1005
      %1104 = vst [vmem:[%s226 + $0x80] sm:$0xff] %v1010
      %1105 = vst [vmem:[%s226 + $0x88] sm:$0xff] %v1015
      %1106 = vst [vmem:[%s226 + $0x90] sm:$0xff] %v1020
      %1107 = vst [vmem:[%s226 + $0x98] sm:$0xff] %v1025
      %1108 = vst [vmem:[%s226 + $0xa0] sm:$0xff] %v1030
      %1109 = vst [vmem:[%s226 + $0xa8] sm:$0xff] %v1035
      %1110 = vst [vmem:[%s226 + $0xb0] sm:$0xff] %v1040
      %1111 = vst [vmem:[%s226 + $0xb8] sm:$0xff] %v1045
      %1112 = vst [vmem:[%s226 + $0xc0] sm:$0xff] %v1050
      %1113 = vst [vmem:[%s226 + $0xc8] sm:$0xff] %v1055
      %1114 = vst [vmem:[%s226 + $0xd0] sm:$0xff] %v1060
      %1115 = vst [vmem:[%s226 + $0xd8] sm:$0xff] %v1065
      %1116 = vst [vmem:[%s226 + $0xe0] sm:$0xff] %v1070
      %1117 = vst [vmem:[%s226 + $0xe8] sm:$0xff] %v1075
      %1118 = vst [vmem:[%s226 + $0xf0] sm:$0xff] %v1080
      %1119 = vst [vmem:[%s226 + $0xf8] sm:$0xff] %v1085
      %s1120 = smul.u32 32, %s16
      %p1121 = scmp.lt.s32.totalorder %s1120, 63
      %s1122 = scalar_select %p1121, %s1120, 63
      %s1123 = smul.addr %s1122, 8
      %s1124 = scalar_lea.vmem %s5, %s1123
      // Predicated region
      $region41: #{transformer_block_forward.11} parent=39 // pred_check
        %p1125 = pneg %p144
      $region42: #{transformer_block_forward.11} parent=39 // pred_check_branch
        %1127 = sbr.rel (%p1125) target = $region44
      $region43: #{transformer_block_forward.11} parent=39 // pred_region
        %s1128 = smul.u32 32, %s16
      $region44: #{transformer_block_forward.11} parent=39 // pred_fallthru
        _
    $region40: #{transformer_block_forward.11} parent=5 // pred_fallthru
      _
    %p1129 = scmp.le.s32.totalorder 2, %s11
    // Predicated region
    $region45: #{transformer_block_forward.11} parent=5 // pred_check
      %p1130 = pneg %p1129
    $region46: #{transformer_block_forward.11} parent=5 // pred_check_branch
      %1132 = sbr.rel (%p1130) target = $region48
    $region47: #{transformer_block_forward.11} parent=5 // pred_region
      %s1133 = ssub.s32 %s11, 2
      // Predicated region
      $region49: #{transformer_block_forward.11} parent=47 // pred_check
        %p1134 = pneg %p150
      $region50: #{transformer_block_forward.11} parent=47 // pred_check_branch
        %1136 = sbr.rel (%p1134) target = $region52
      $region51: #{transformer_block_forward.11} parent=47 // pred_region
        %s1137 = smul.u32 32, %s17
        %p1138 = scmp.lt.s32.totalorder %s1137, 63
        %s1139 = scalar_select %p1138, %s1137, 63
        %s1140 = smul.addr %s1139, 8
        %s1141 = scalar_lea.vmem %s5, %s1140
      $region52: #{transformer_block_forward.11} parent=47 // pred_fallthru
        _
    $region48: #{transformer_block_forward.11} parent=5 // pred_fallthru
      _
  $region6: #{transformer_block_forward.11} parent=0 // loop_footer
    %s15 = sadd.s32 1, %s11
  $region7: #{transformer_block_forward.11} parent=0 // loop_footer_branch
    %10 = sbr.rel target = $region3
  $region8: #{transformer_block_forward.11} parent=0 // loop_exit
    _

// kernel: transformer_block_forward.13
$region0: #{transformer_block_forward.13}
  #allocation0 [shape = 'u32[]', space=smem, size = 0x4, offset = 0x4, fixed_abs, tag = 'smem constant byte address 0x4 - core index']
  #allocation1 [shape = 'u32[144,128]{1,0:T(1,128)}', space=vmem, size = 0x12000, scoped, tag = 'internal scratch']
  %s0 = inlined_call_operand.vmem [shape: f32[512,128], index: 0, kind: input, shape index: {}]
  %s1 = inlined_call_operand.vmem [shape: f32[64,32], index: 1, kind: input, shape index: {}]
  %s2 = inlined_call_operand.vmem [shape: f32[1,32], index: 2, kind: input, shape index: {}]
  %s3 = inlined_call_operand.vmem [shape: f32[512,32], index: 3, kind: input, shape index: {}]
  %s4 = inlined_call_operand.hbm [shape: f32[512,32], index: 4, kind: output, shape index: {}]
  %s5 = sld [smem:[#allocation0]]
  $region49: #{transformer_block_forward.13} parent=0
    _
  %s7 = ssub.s32 1, %s5
  %s8 = scalar_select 0, %s7, %s5
  $region1: #{transformer_block_forward.13} parent=0
    #allocation2 [shape = 'u8[262144]{0}', space=vmem, size = 0x40000, scoped, tag = 'output window, operand 0']
    #allocation3 [shape = 's32[2]{0}', space=sflag, size = 0x8, scoped, tag = 'scoped memory for transformer_block_forward.13']
    %9 = vsyncpa [#allocation3], 0
    %s10 = scalar_lea.sflag [#allocation3], 1
    %11 = vsyncpa %s10, 0
    loop: start=0, step=1, limit=4
    $region2: #{transformer_block_forward.13} parent=1 // loop_pre_header
      _
    $region3: #{transformer_block_forward.13} parent=1 // loop_header
      %s13 = sphi 0, %s17
      %p14 = scmp.ge.s32.totalorder %s13, 4
      %s23 = sphi 0, %s25
      %s26 = sphi 0, %s23
      %s27 = sphi 0, %s26
      %s43 = sphi 0, %s27
      %s47 = sphi 0, %s47
      %s49 = sphi 0, %s47
      %s50 = sphi 0, %s49
      %s64 = sphi 0, %s50
      %s68 = sphi 0, %s68
      %s70 = sphi 0, %s68
      %s71 = sphi 0, %s70
      %s85 = sphi 0, %s71
      %s91 = sphi 0, %s93
      %s94 = sphi 0, %s91
      %s95 = sphi 0, %s94
      %s111 = sphi 0, %s95
      %s117 = sphi 0, %s119
      %s120 = sphi 0, %s117
      %s121 = sphi 0, %s120
      %s137 = sphi 0, %s121
    $region4: #{transformer_block_forward.13} parent=1 // loop_header_branch
      %16 = sbr.rel (%p14) target = $region8
    $region5: #{transformer_block_forward.13} parent=1 // loop_body
      %s18 = ssub.s32 %s13, 1
      %s19 = ssub.s32 %s13, 2
      %s20 = sadd.s32 %s13, 1
      %s21 = ssub.s32 %s13, %s20
      %p22 = scmp.eq.s32.totalorder %s21, 0
      %s24 = sadd.s32 %s23, 1
      %s25 = scalar_select %p22, %s23, %s24
      %p28 = pneg %p22
      %p29 = scmp.eq.s32.totalorder %s13, 1
      %p30 = por %p28, %p29
      %p31 = scmp.ne.s32.totalorder %s23, %s26
      %p32 = scmp.eq.s32.totalorder %s13, 0
      %p33 = por %p31, %p32
      %p34 = scmp.ne.s32.totalorder %s23, %s26
      %p35 = scmp.eq.s32.totalorder %s18, 1
      %p36 = por %p34, %p35
      %p37 = scmp.ne.s32.totalorder %s26, %s27
      %p38 = scmp.eq.s32.totalorder %s18, 0
      %p39 = por %p37, %p38
      %p40 = scmp.ne.s32.totalorder %s26, %s27
      %p41 = scmp.eq.s32.totalorder %s19, 1
      %p42 = por %p40, %p41
      %p44 = scmp.ne.s32.totalorder %s27, %s43
      %p45 = scmp.eq.s32.totalorder %s19, 0
      %p46 = por %p44, %p45
      %s48 = sadd.s32 %s47, 1
      %p51 = scmp.eq.s32.totalorder %s13, 1
      %p52 = scmp.ne.s32.totalorder %s47, %s49
      %p53 = scmp.eq.s32.totalorder %s13, 0
      %p54 = por %p52, %p53
      %p55 = scmp.ne.s32.totalorder %s47, %s49
      %p56 = scmp.eq.s32.totalorder %s18, 1
      %p57 = por %p55, %p56
      %p58 = scmp.ne.s32.totalorder %s49, %s50
      %p59 = scmp.eq.s32.totalorder %s18, 0
      %p60 = por %p58, %p59
      %p61 = scmp.ne.s32.totalorder %s49, %s50
      %p62 = scmp.eq.s32.totalorder %s19, 1
      %p63 = por %p61, %p62
      %p65 = scmp.ne.s32.totalorder %s50, %s64
      %p66 = scmp.eq.s32.totalorder %s19, 0
      %p67 = por %p65, %p66
      %s69 = sadd.s32 %s68, 1
      %p72 = scmp.eq.s32.totalorder %s13, 1
      %p73 = scmp.ne.s32.totalorder %s68, %s70
      %p74 = scmp.eq.s32.totalorder %s13, 0
      %p75 = por %p73, %p74
      %p76 = scmp.ne.s32.totalorder %s68, %s70
      %p77 = scmp.eq.s32.totalorder %s18, 1
      %p78 = por %p76, %p77
      %p79 = scmp.ne.s32.totalorder %s70, %s71
      %p80 = scmp.eq.s32.totalorder %s18, 0
      %p81 = por %p79, %p80
      %p82 = scmp.ne.s32.totalorder %s70, %s71
      %p83 = scmp.eq.s32.totalorder %s19, 1
      %p84 = por %p82, %p83
      %p86 = scmp.ne.s32.totalorder %s71, %s85
      %p87 = scmp.eq.s32.totalorder %s19, 0
      %p88 = por %p86, %p87
      %s89 = ssub.s32 %s13, %s20
      %p90 = scmp.eq.s32.totalorder %s89, 0
      %s92 = sadd.s32 %s91, 1
      %s93 = scalar_select %p90, %s91, %s92
      %p96 = pneg %p90
      %p97 = scmp.eq.s32.totalorder %s13, 1
      %p98 = por %p96, %p97
      %p99 = scmp.ne.s32.totalorder %s91, %s94
      %p100 = scmp.eq.s32.totalorder %s13, 0
      %p101 = por %p99, %p100
      %p102 = scmp.ne.s32.totalorder %s91, %s94
      %p103 = scmp.eq.s32.totalorder %s18, 1
      %p104 = por %p102, %p103
      %p105 = scmp.ne.s32.totalorder %s94, %s95
      %p106 = scmp.eq.s32.totalorder %s18, 0
      %p107 = por %p105, %p106
      %p108 = scmp.ne.s32.totalorder %s94, %s95
      %p109 = scmp.eq.s32.totalorder %s19, 1
      %p110 = por %p108, %p109
      %p112 = scmp.ne.s32.totalorder %s95, %s111
      %p113 = scmp.eq.s32.totalorder %s19, 0
      %p114 = por %p112, %p113
      %s115 = ssub.s32 %s13, %s20
      %p116 = scmp.eq.s32.totalorder %s115, 0
      %s118 = sadd.s32 %s117, 1
      %s119 = scalar_select %p116, %s117, %s118
      %p122 = pneg %p116
      %p123 = scmp.eq.s32.totalorder %s13, 1
      %p124 = por %p122, %p123
      %p125 = scmp.ne.s32.totalorder %s117, %s120
      %p126 = scmp.eq.s32.totalorder %s13, 0
      %p127 = por %p125, %p126
      %p128 = scmp.ne.s32.totalorder %s117, %s120
      %p129 = scmp.eq.s32.totalorder %s18, 1
      %p130 = por %p128, %p129
      %p131 = scmp.ne.s32.totalorder %s120, %s121
      %p132 = scmp.eq.s32.totalorder %s18, 0
      %p133 = por %p131, %p132
      %p134 = scmp.ne.s32.totalorder %s120, %s121
      %p135 = scmp.eq.s32.totalorder %s19, 1
      %p136 = por %p134, %p135
      %p138 = scmp.ne.s32.totalorder %s121, %s137
      %p139 = scmp.eq.s32.totalorder %s19, 0
      %p140 = por %p138, %p139
      %p141 = scmp.le.s32.totalorder 1, %s13
      %p142 = scmp.lt.s32.totalorder %s13, 3
      %p143 = pnand %p141, %p142
      %p144 = pneg %p143
      // Predicated region
      $region9: #{transformer_block_forward.13} parent=5 // pred_check
        _
      $region10: #{transformer_block_forward.13} parent=5 // pred_check_branch
        %146 = sbr.rel (%p143) target = $region12
      $region11: #{transformer_block_forward.13} parent=5 // pred_region
        %s147 = ssub.s32 %s13, 1
        // Predicated region
        $region13: #{transformer_block_forward.13} parent=11 // pred_check
          %p148 = pneg %p60
        $region14: #{transformer_block_forward.13} parent=11 // pred_check_branch
          %150 = sbr.rel (%p148) target = $region16
        $region15: #{transformer_block_forward.13} parent=11 // pred_region
          _
        $region16: #{transformer_block_forward.13} parent=11 // pred_fallthru
          _
        // Predicated region
        $region17: #{transformer_block_forward.13} parent=11 // pred_check
          %p151 = pneg %p81
        $region18: #{transformer_block_forward.13} parent=11 // pred_check_branch
          %153 = sbr.rel (%p151) target = $region20
        $region19: #{transformer_block_forward.13} parent=11 // pred_region
          _
        $region20: #{transformer_block_forward.13} parent=11 // pred_fallthru
          _
      $region12: #{transformer_block_forward.13} parent=5 // pred_fallthru
        _
      %p154 = scmp.lt.s32.totalorder %s13, 2
      // Predicated region
      $region21: #{transformer_block_forward.13} parent=5 // pred_check
        %p155 = pneg %p154
      $region22: #{transformer_block_forward.13} parent=5 // pred_check_branch
        %157 = sbr.rel (%p155) target = $region24
      $region23: #{transformer_block_forward.13} parent=5 // pred_region
        // Predicated region
        $region25: #{transformer_block_forward.13} parent=23 // pred_check
          %p158 = pneg %p33
        $region26: #{transformer_block_forward.13} parent=23 // pred_check_branch
          %160 = sbr.rel (%p158) target = $region28
        $region27: #{transformer_block_forward.13} parent=23 // pred_region
          %s161 = smul.u32 32, %s13
          %p162 = scmp.lt.s32.totalorder %s161, 63
          %s163 = scalar_select %p162, %s161, 63
          %s164 = smul.addr %s163, 8
          %s165 = scalar_lea.vmem %s0, %s164
          %s166 = smul.u32 32, %s13
        $region28: #{transformer_block_forward.13} parent=23 // pred_fallthru
          _
        // Predicated region
        $region29: #{transformer_block_forward.13} parent=23 // pred_check
          %p167 = pneg %p101
        $region30: #{transformer_block_forward.13} parent=23 // pred_check_branch
          %169 = sbr.rel (%p167) target = $region32
        $region31: #{transformer_block_forward.13} parent=23 // pred_region
          %s170 = smul.u32 32, %s13
          %p171 = scmp.lt.s32.totalorder %s170, 63
          %s172 = scalar_select %p171, %s170, 63
          %s173 = smul.addr %s172, 8
          %s174 = scalar_lea.vmem %s3, %s173
          %s175 = smul.u32 32, %s13
        $region32: #{transformer_block_forward.13} parent=23 // pred_fallthru
          _
      $region24: #{transformer_block_forward.13} parent=5 // pred_fallthru
        _
      %p176 = scmp.le.s32.totalorder 1, %s13
      %p177 = scmp.lt.s32.totalorder %s13, 3
      %p178 = pnand %p176, %p177
      %p179 = pneg %p178
      // Predicated region
      $region33: #{transformer_block_forward.13} parent=5 // pred_check
        _
      $region34: #{transformer_block_forward.13} parent=5 // pred_check_branch
        %181 = sbr.rel (%p178) target = $region36
      $region35: #{transformer_block_forward.13} parent=5 // pred_region
        %s182 = ssub.s32 %s13, 1
        %s183 = smul.u32 32, %s18
        %p184 = scmp.lt.s32.totalorder %s183, 63
        %s185 = scalar_select %p184, %s183, 63
        %s186 = smul.addr %s185, 8
        %s187 = scalar_lea.vmem %s0, %s186
        %p188 = pneg %p39
        %p189 = pneg %p36
        %p190 = pneg %p60
        %p191 = pneg %p57
        %p192 = pneg %p81
        %p193 = pneg %p78
        %s194 = smul.u32 32, %s18
        %p195 = scmp.lt.s32.totalorder %s194, 63
        %s196 = scalar_select %p195, %s194, 63
        %s197 = smul.addr %s196, 8
        %s198 = scalar_lea.vmem %s3, %s197
        %p199 = pneg %p107
        %p200 = pneg %p104
        %p201 = pneg %p133
        %p202 = pneg %p130
        %s203 = sand.u32 %s120, 1
        %s204 = scalar_lea.sflag [#allocation3], %s203
        %s205 = sand.u32 %s120, 1
        %s206 = smul.addr %s205, 256
        %s207 = scalar_lea.vmem [#allocation2], %s206
        %s208 = smul.u32 32, %s18
        %p209 = scmp.lt.s32.totalorder %s208, 63
        %s210 = scalar_select %p209, %s208, 63
        %s211 = smul.addr %s210, 8
        %s212 = scalar_lea.vmem %s0, %s211
        %s213 = smul.u32 32, %s18
        %s214 = smul.u32 32, %s18
        %p215 = scmp.lt.s32.totalorder %s214, 63
        %s216 = scalar_select %p215, %s214, 63
        %s217 = smul.addr %s216, 8
        %s218 = scalar_lea.vmem %s3, %s217
        %s219 = smul.u32 32, %s18
        %s220 = smul.u32 32, %s18
        %v221 = vld [vmem:[%s212] sm:$0xff]
        %v222 = vld [vmem:[%s212 + $0x8] sm:$0xff]
        %v223 = vld [vmem:[%s212 + $0x10] sm:$0xff]
        %v224 = vld [vmem:[%s212 + $0x18] sm:$0xff]
        %v225 = vld [vmem:[%s212 + $0x20] sm:$0xff]
        %v226 = vld [vmem:[%s212 + $0x28] sm:$0xff]
        %v227 = vld [vmem:[%s212 + $0x30] sm:$0xff]
        %v228 = vld [vmem:[%s212 + $0x38] sm:$0xff]
        %v229 = vld [vmem:[%s212 + $0x40] sm:$0xff]
        %v230 = vld [vmem:[%s212 + $0x48] sm:$0xff]
        %v231 = vld [vmem:[%s212 + $0x50] sm:$0xff]
        %v232 = vld [vmem:[%s212 + $0x58] sm:$0xff]
        %v233 = vld [vmem:[%s212 + $0x60] sm:$0xff]
        %v234 = vld [vmem:[%s212 + $0x68] sm:$0xff]
        %v235 = vld [vmem:[%s212 + $0x70] sm:$0xff]
        %v236 = vld [vmem:[%s212 + $0x78] sm:$0xff]
        %v237 = vld [vmem:[%s212 + $0x80] sm:$0xff]
        %v238 = vld [vmem:[%s212 + $0x88] sm:$0xff]
        %v239 = vld [vmem:[%s212 + $0x90] sm:$0xff]
        %v240 = vld [vmem:[%s212 + $0x98] sm:$0xff]
        %v241 = vld [vmem:[%s212 + $0xa0] sm:$0xff]
        %v242 = vld [vmem:[%s212 + $0xa8] sm:$0xff]
        %v243 = vld [vmem:[%s212 + $0xb0] sm:$0xff]
        %v244 = vld [vmem:[%s212 + $0xb8] sm:$0xff]
        %v245 = vld [vmem:[%s212 + $0xc0] sm:$0xff]
        %v246 = vld [vmem:[%s212 + $0xc8] sm:$0xff]
        %v247 = vld [vmem:[%s212 + $0xd0] sm:$0xff]
        %v248 = vld [vmem:[%s212 + $0xd8] sm:$0xff]
        %v249 = vld [vmem:[%s212 + $0xe0] sm:$0xff]
        %v250 = vld [vmem:[%s212 + $0xe8] sm:$0xff]
        %v251 = vld [vmem:[%s212 + $0xf0] sm:$0xff]
        %v252 = vld [vmem:[%s212 + $0xf8] sm:$0xff]
        %v253 = vmul.f32 %v221, 0.5
        %v254 = vmul.f32 %v222, 0.5
        %v255 = vmul.f32 %v223, 0.5
        %v256 = vmul.f32 %v224, 0.5
        %v257 = vmul.f32 %v225, 0.5
        %v258 = vmul.f32 %v226, 0.5
        %v259 = vmul.f32 %v227, 0.5
        %v260 = vmul.f32 %v228, 0.5
        %v261 = vmul.f32 %v229, 0.5
        %v262 = vmul.f32 %v230, 0.5
        %v263 = vmul.f32 %v231, 0.5
        %v264 = vmul.f32 %v232, 0.5
        %v265 = vmul.f32 %v233, 0.5
        %v266 = vmul.f32 %v234, 0.5
        %v267 = vmul.f32 %v235, 0.5
        %v268 = vmul.f32 %v236, 0.5
        %v269 = vmul.f32 %v237, 0.5
        %v270 = vmul.f32 %v238, 0.5
        %v271 = vmul.f32 %v239, 0.5
        %v272 = vmul.f32 %v240, 0.5
        %v273 = vmul.f32 %v241, 0.5
        %v274 = vmul.f32 %v242, 0.5
        %v275 = vmul.f32 %v243, 0.5
        %v276 = vmul.f32 %v244, 0.5
        %v277 = vmul.f32 %v245, 0.5
        %v278 = vmul.f32 %v246, 0.5
        %v279 = vmul.f32 %v247, 0.5
        %v280 = vmul.f32 %v248, 0.5
        %v281 = vmul.f32 %v249, 0.5
        %v282 = vmul.f32 %v250, 0.5
        %v283 = vmul.f32 %v251, 0.5
        %v284 = vmul.f32 %v252, 0.5
        %v285 = vmul.f32 %v221, 0.044715
        %v286 = vmul.f32 %v222, 0.044715
        %v287 = vmul.f32 %v223, 0.044715
        %v288 = vmul.f32 %v224, 0.044715
        %v289 = vmul.f32 %v225, 0.044715
        %v290 = vmul.f32 %v226, 0.044715
        %v291 = vmul.f32 %v227, 0.044715
        %v292 = vmul.f32 %v228, 0.044715
        %v293 = vmul.f32 %v229, 0.044715
        %v294 = vmul.f32 %v230, 0.044715
        %v295 = vmul.f32 %v231, 0.044715
        %v296 = vmul.f32 %v232, 0.044715
        %v297 = vmul.f32 %v233, 0.044715
        %v298 = vmul.f32 %v234, 0.044715
        %v299 = vmul.f32 %v235, 0.044715
        %v300 = vmul.f32 %v236, 0.044715
        %v301 = vmul.f32 %v237, 0.044715
        %v302 = vmul.f32 %v238, 0.044715
        %v303 = vmul.f32 %v239, 0.044715
        %v304 = vmul.f32 %v240, 0.044715
        %v305 = vmul.f32 %v241, 0.044715
        %v306 = vmul.f32 %v242, 0.044715
        %v307 = vmul.f32 %v243, 0.044715
        %v308 = vmul.f32 %v244, 0.044715
        %v309 = vmul.f32 %v245, 0.044715
        %v310 = vmul.f32 %v246, 0.044715
        %v311 = vmul.f32 %v247, 0.044715
        %v312 = vmul.f32 %v248, 0.044715
        %v313 = vmul.f32 %v249, 0.044715
        %v314 = vmul.f32 %v250, 0.044715
        %v315 = vmul.f32 %v251, 0.044715
        %v316 = vmul.f32 %v252, 0.044715
        %v317 = vmul.f32 %v285, %v221
        %v318 = vmul.f32 %v286, %v222
        %v319 = vmul.f32 %v287, %v223
        %v320 = vmul.f32 %v288, %v224
        %v321 = vmul.f32 %v289, %v225
        %v322 = vmul.f32 %v290, %v226
        %v323 = vmul.f32 %v291, %v227
        %v324 = vmul.f32 %v292, %v228
        %v325 = vmul.f32 %v293, %v229
        %v326 = vmul.f32 %v294, %v230
        %v327 = vmul.f32 %v295, %v231
        %v328 = vmul.f32 %v296, %v232
        %v329 = vmul.f32 %v297, %v233
        %v330 = vmul.f32 %v298, %v234
        %v331 = vmul.f32 %v299, %v235
        %v332 = vmul.f32 %v300, %v236
        %v333 = vmul.f32 %v301, %v237
        %v334 = vmul.f32 %v302, %v238
        %v335 = vmul.f32 %v303, %v239
        %v336 = vmul.f32 %v304, %v240
        %v337 = vmul.f32 %v305, %v241
        %v338 = vmul.f32 %v306, %v242
        %v339 = vmul.f32 %v307, %v243
        %v340 = vmul.f32 %v308, %v244
        %v341 = vmul.f32 %v309, %v245
        %v342 = vmul.f32 %v310, %v246
        %v343 = vmul.f32 %v311, %v247
        %v344 = vmul.f32 %v312, %v248
        %v345 = vmul.f32 %v313, %v249
        %v346 = vmul.f32 %v314, %v250
        %v347 = vmul.f32 %v315, %v251
        %v348 = vmul.f32 %v316, %v252
        %v349 = vmul.f32 %v317, %v221
        %v350 = vmul.f32 %v318, %v222
        %v351 = vmul.f32 %v319, %v223
        %v352 = vmul.f32 %v320, %v224
        %v353 = vmul.f32 %v321, %v225
        %v354 = vmul.f32 %v322, %v226
        %v355 = vmul.f32 %v323, %v227
        %v356 = vmul.f32 %v324, %v228
        %v357 = vmul.f32 %v325, %v229
        %v358 = vmul.f32 %v326, %v230
        %v359 = vmul.f32 %v327, %v231
        %v360 = vmul.f32 %v328, %v232
        %v361 = vmul.f32 %v329, %v233
        %v362 = vmul.f32 %v330, %v234
        %v363 = vmul.f32 %v331, %v235
        %v364 = vmul.f32 %v332, %v236
        %v365 = vmul.f32 %v333, %v237
        %v366 = vmul.f32 %v334, %v238
        %v367 = vmul.f32 %v335, %v239
        %v368 = vmul.f32 %v336, %v240
        %v369 = vmul.f32 %v337, %v241
        %v370 = vmul.f32 %v338, %v242
        %v371 = vmul.f32 %v339, %v243
        %v372 = vmul.f32 %v340, %v244
        %v373 = vmul.f32 %v341, %v245
        %v374 = vmul.f32 %v342, %v246
        %v375 = vmul.f32 %v343, %v247
        %v376 = vmul.f32 %v344, %v248
        %v377 = vmul.f32 %v345, %v249
        %v378 = vmul.f32 %v346, %v250
        %v379 = vmul.f32 %v347, %v251
        %v380 = vmul.f32 %v348, %v252
        %v381 = vadd.f32 %v221, %v349
        %v382 = vadd.f32 %v222, %v350
        %v383 = vadd.f32 %v223, %v351
        %v384 = vadd.f32 %v224, %v352
        %v385 = vadd.f32 %v225, %v353
        %v386 = vadd.f32 %v226, %v354
        %v387 = vadd.f32 %v227, %v355
        %v388 = vadd.f32 %v228, %v356
        %v389 = vadd.f32 %v229, %v357
        %v390 = vadd.f32 %v230, %v358
        %v391 = vadd.f32 %v231, %v359
        %v392 = vadd.f32 %v232, %v360
        %v393 = vadd.f32 %v233, %v361
        %v394 = vadd.f32 %v234, %v362
        %v395 = vadd.f32 %v235, %v363
        %v396 = vadd.f32 %v236, %v364
        %v397 = vadd.f32 %v237, %v365
        %v398 = vadd.f32 %v238, %v366
        %v399 = vadd.f32 %v239, %v367
        %v400 = vadd.f32 %v240, %v368
        %v401 = vadd.f32 %v241, %v369
        %v402 = vadd.f32 %v242, %v370
        %v403 = vadd.f32 %v243, %v371
        %v404 = vadd.f32 %v244, %v372
        %v405 = vadd.f32 %v245, %v373
        %v406 = vadd.f32 %v246, %v374
        %v407 = vadd.f32 %v247, %v375
        %v408 = vadd.f32 %v248, %v376
        %v409 = vadd.f32 %v249, %v377
        %v410 = vadd.f32 %v250, %v378
        %v411 = vadd.f32 %v251, %v379
        %v412 = vadd.f32 %v252, %v380
        %v413 = vmul.f32 %v381, 0.7978846
        %v414 = vmul.f32 %v382, 0.7978846
        %v415 = vmul.f32 %v383, 0.7978846
        %v416 = vmul.f32 %v384, 0.7978846
        %v417 = vmul.f32 %v385, 0.7978846
        %v418 = vmul.f32 %v386, 0.7978846
        %v419 = vmul.f32 %v387, 0.7978846
        %v420 = vmul.f32 %v388, 0.7978846
        %v421 = vmul.f32 %v389, 0.7978846
        %v422 = vmul.f32 %v390, 0.7978846
        %v423 = vmul.f32 %v391, 0.7978846
        %v424 = vmul.f32 %v392, 0.7978846
        %v425 = vmul.f32 %v393, 0.7978846
        %v426 = vmul.f32 %v394, 0.7978846
        %v427 = vmul.f32 %v395, 0.7978846
        %v428 = vmul.f32 %v396, 0.7978846
        %v429 = vmul.f32 %v397, 0.7978846
        %v430 = vmul.f32 %v398, 0.7978846
        %v431 = vmul.f32 %v399, 0.7978846
        %v432 = vmul.f32 %v400, 0.7978846
        %v433 = vmul.f32 %v401, 0.7978846
        %v434 = vmul.f32 %v402, 0.7978846
        %v435 = vmul.f32 %v403, 0.7978846
        %v436 = vmul.f32 %v404, 0.7978846
        %v437 = vmul.f32 %v405, 0.7978846
        %v438 = vmul.f32 %v406, 0.7978846
        %v439 = vmul.f32 %v407, 0.7978846
        %v440 = vmul.f32 %v408, 0.7978846
        %v441 = vmul.f32 %v409, 0.7978846
        %v442 = vmul.f32 %v410, 0.7978846
        %v443 = vmul.f32 %v411, 0.7978846
        %v444 = vmul.f32 %v412, 0.7978846
        %v445 = vtanh.pop %v413
        %v446 = vtanh.pop %v414
        %v447 = vtanh.pop %v415
        %v448 = vtanh.pop %v416
        %v449 = vtanh.pop %v417
        %v450 = vtanh.pop %v418
        %v451 = vtanh.pop %v419
        %v452 = vtanh.pop %v420
        %v453 = vtanh.pop %v421
        %v454 = vtanh.pop %v422
        %v455 = vtanh.pop %v423
        %v456 = vtanh.pop %v424
        %v457 = vtanh.pop %v425
        %v458 = vtanh.pop %v426
        %v459 = vtanh.pop %v427
        %v460 = vtanh.pop %v428
        %v461 = vtanh.pop %v429
        %v462 = vtanh.pop %v430
        %v463 = vtanh.pop %v431
        %v464 = vtanh.pop %v432
        %v465 = vtanh.pop %v433
        %v466 = vtanh.pop %v434
        %v467 = vtanh.pop %v435
        %v468 = vtanh.pop %v436
        %v469 = vtanh.pop %v437
        %v470 = vtanh.pop %v438
        %v471 = vtanh.pop %v439
        %v472 = vtanh.pop %v440
        %v473 = vtanh.pop %v441
        %v474 = vtanh.pop %v442
        %v475 = vtanh.pop %v443
        %v476 = vtanh.pop %v444
        %v477 = vadd.f32 %v445, 1.0
        %v478 = vadd.f32 %v446, 1.0
        %v479 = vadd.f32 %v447, 1.0
        %v480 = vadd.f32 %v448, 1.0
        %v481 = vadd.f32 %v449, 1.0
        %v482 = vadd.f32 %v450, 1.0
        %v483 = vadd.f32 %v451, 1.0
        %v484 = vadd.f32 %v452, 1.0
        %v485 = vadd.f32 %v453, 1.0
        %v486 = vadd.f32 %v454, 1.0
        %v487 = vadd.f32 %v455, 1.0
        %v488 = vadd.f32 %v456, 1.0
        %v489 = vadd.f32 %v457, 1.0
        %v490 = vadd.f32 %v458, 1.0
        %v491 = vadd.f32 %v459, 1.0
        %v492 = vadd.f32 %v460, 1.0
        %v493 = vadd.f32 %v461, 1.0
        %v494 = vadd.f32 %v462, 1.0
        %v495 = vadd.f32 %v463, 1.0
        %v496 = vadd.f32 %v464, 1.0
        %v497 = vadd.f32 %v465, 1.0
        %v498 = vadd.f32 %v466, 1.0
        %v499 = vadd.f32 %v467, 1.0
        %v500 = vadd.f32 %v468, 1.0
        %v501 = vadd.f32 %v469, 1.0
        %v502 = vadd.f32 %v470, 1.0
        %v503 = vadd.f32 %v471, 1.0
        %v504 = vadd.f32 %v472, 1.0
        %v505 = vadd.f32 %v473, 1.0
        %v506 = vadd.f32 %v474, 1.0
        %v507 = vadd.f32 %v475, 1.0
        %v508 = vadd.f32 %v476, 1.0
        %v509 = vmul.f32 %v253, %v477
        %v510 = vmul.f32 %v254, %v478
        %v511 = vmul.f32 %v255, %v479
        %v512 = vmul.f32 %v256, %v480
        %v513 = vmul.f32 %v257, %v481
        %v514 = vmul.f32 %v258, %v482
        %v515 = vmul.f32 %v259, %v483
        %v516 = vmul.f32 %v260, %v484
        %v517 = vmul.f32 %v261, %v485
        %v518 = vmul.f32 %v262, %v486
        %v519 = vmul.f32 %v263, %v487
        %v520 = vmul.f32 %v264, %v488
        %v521 = vmul.f32 %v265, %v489
        %v522 = vmul.f32 %v266, %v490
        %v523 = vmul.f32 %v267, %v491
        %v524 = vmul.f32 %v268, %v492
        %v525 = vmul.f32 %v269, %v493
        %v526 = vmul.f32 %v270, %v494
        %v527 = vmul.f32 %v271, %v495
        %v528 = vmul.f32 %v272, %v496
        %v529 = vmul.f32 %v273, %v497
        %v530 = vmul.f32 %v274, %v498
        %v531 = vmul.f32 %v275, %v499
        %v532 = vmul.f32 %v276, %v500
        %v533 = vmul.f32 %v277, %v501
        %v534 = vmul.f32 %v278, %v502
        %v535 = vmul.f32 %v279, %v503
        %v536 = vmul.f32 %v280, %v504
        %v537 = vmul.f32 %v281, %v505
        %v538 = vmul.f32 %v282, %v506
        %v539 = vmul.f32 %v283, %v507
        %v540 = vmul.f32 %v284, %v508
        %573 = vrot.lane.b32.xlu0 %v221, 64
        %v574 = vpop.permute.xlu0 %573
        %575 = vrot.lane.b32.xlu0 %v222, 64
        %v576 = vpop.permute.xlu0 %575
        %577 = vrot.lane.b32.xlu0 %v223, 64
        %v578 = vpop.permute.xlu0 %577
        %579 = vrot.lane.b32.xlu0 %v224, 64
        %v580 = vpop.permute.xlu0 %579
        %581 = vrot.lane.b32.xlu0 %v225, 64
        %v582 = vpop.permute.xlu0 %581
        %583 = vrot.lane.b32.xlu0 %v226, 64
        %v584 = vpop.permute.xlu0 %583
        %585 = vrot.lane.b32.xlu0 %v227, 64
        %v586 = vpop.permute.xlu0 %585
        %587 = vrot.lane.b32.xlu0 %v228, 64
        %v588 = vpop.permute.xlu0 %587
        %589 = vrot.lane.b32.xlu0 %v229, 64
        %v590 = vpop.permute.xlu0 %589
        %591 = vrot.lane.b32.xlu0 %v230, 64
        %v592 = vpop.permute.xlu0 %591
        %593 = vrot.lane.b32.xlu0 %v231, 64
        %v594 = vpop.permute.xlu0 %593
        %595 = vrot.lane.b32.xlu0 %v232, 64
        %v596 = vpop.permute.xlu0 %595
        %597 = vrot.lane.b32.xlu0 %v233, 64
        %v598 = vpop.permute.xlu0 %597
        %599 = vrot.lane.b32.xlu0 %v234, 64
        %v600 = vpop.permute.xlu0 %599
        %601 = vrot.lane.b32.xlu0 %v235, 64
        %v602 = vpop.permute.xlu0 %601
        %603 = vrot.lane.b32.xlu0 %v236, 64
        %v604 = vpop.permute.xlu0 %603
        %605 = vrot.lane.b32.xlu0 %v237, 64
        %v606 = vpop.permute.xlu0 %605
        %607 = vrot.lane.b32.xlu0 %v238, 64
        %v608 = vpop.permute.xlu0 %607
        %609 = vrot.lane.b32.xlu0 %v239, 64
        %v610 = vpop.permute.xlu0 %609
        %611 = vrot.lane.b32.xlu0 %v240, 64
        %v612 = vpop.permute.xlu0 %611
        %613 = vrot.lane.b32.xlu0 %v241, 64
        %v614 = vpop.permute.xlu0 %613
        %615 = vrot.lane.b32.xlu0 %v242, 64
        %v616 = vpop.permute.xlu0 %615
        %617 = vrot.lane.b32.xlu0 %v243, 64
        %v618 = vpop.permute.xlu0 %617
        %619 = vrot.lane.b32.xlu0 %v244, 64
        %v620 = vpop.permute.xlu0 %619
        %621 = vrot.lane.b32.xlu0 %v245, 64
        %v622 = vpop.permute.xlu0 %621
        %623 = vrot.lane.b32.xlu0 %v246, 64
        %v624 = vpop.permute.xlu0 %623
        %625 = vrot.lane.b32.xlu0 %v247, 64
        %v626 = vpop.permute.xlu0 %625
        %627 = vrot.lane.b32.xlu0 %v248, 64
        %v628 = vpop.permute.xlu0 %627
        %629 = vrot.lane.b32.xlu0 %v249, 64
        %v630 = vpop.permute.xlu0 %629
        %631 = vrot.lane.b32.xlu0 %v250, 64
        %v632 = vpop.permute.xlu0 %631
        %633 = vrot.lane.b32.xlu0 %v251, 64
        %v634 = vpop.permute.xlu0 %633
        %635 = vrot.lane.b32.xlu0 %v252, 64
        %v636 = vpop.permute.xlu0 %635
        %v669 = vmul.f32 %v509, %v574
        %v670 = vmul.f32 %v510, %v576
        %v671 = vmul.f32 %v511, %v578
        %v672 = vmul.f32 %v512, %v580
        %v673 = vmul.f32 %v513, %v582
        %v674 = vmul.f32 %v514, %v584
        %v675 = vmul.f32 %v515, %v586
        %v676 = vmul.f32 %v516, %v588
        %v677 = vmul.f32 %v517, %v590
        %v678 = vmul.f32 %v518, %v592
        %v679 = vmul.f32 %v519, %v594
        %v680 = vmul.f32 %v520, %v596
        %v681 = vmul.f32 %v521, %v598
        %v682 = vmul.f32 %v522, %v600
        %v683 = vmul.f32 %v523, %v602
        %v684 = vmul.f32 %v524, %v604
        %v685 = vmul.f32 %v525, %v606
        %v686 = vmul.f32 %v526, %v608
        %v687 = vmul.f32 %v527, %v610
        %v688 = vmul.f32 %v528, %v612
        %v689 = vmul.f32 %v529, %v614
        %v690 = vmul.f32 %v530, %v616
        %v691 = vmul.f32 %v531, %v618
        %v692 = vmul.f32 %v532, %v620
        %v693 = vmul.f32 %v533, %v622
        %v694 = vmul.f32 %v534, %v624
        %v695 = vmul.f32 %v535, %v626
        %v696 = vmul.f32 %v536, %v628
        %v697 = vmul.f32 %v537, %v630
        %v698 = vmul.f32 %v538, %v632
        %v699 = vmul.f32 %v539, %v634
        %v700 = vmul.f32 %v540, %v636
        %v701 = vld [vmem:[%s1] sm:$0xff]
        %v702 = vld [vmem:[%s1 + $0x8] sm:$0xff]
        %v703 = vld [vmem:[%s1 + $0x10] sm:$0xff]
        %v704 = vld [vmem:[%s1 + $0x18] sm:$0xff]
        %v705 = vld [vmem:[%s1 + $0x20] sm:$0xff]
        %v706 = vld [vmem:[%s1 + $0x28] sm:$0xff]
        %v707 = vld [vmem:[%s1 + $0x30] sm:$0xff]
        %v708 = vld [vmem:[%s1 + $0x38] sm:$0xff]
        %v709 = vld [vmem:[%s2] sm:$0x1]
        %v711 = vlaneseq
        %v712 = vshrl.u32 %v711, 7
        %v713 = vsub.s32 0, %v712
        %v714 = vrot.slane %v709, %v713
        %vm716 = vcmask 523264
        %v718 = vsel %vm716, %v669, 0
        %v721 = vsel %vm716, %v670, 0
        %v724 = vsel %vm716, %v671, 0
        %v727 = vsel %vm716, %v672, 0
        %v730 = vsel %vm716, %v673, 0
        %v733 = vsel %vm716, %v674, 0
        %v736 = vsel %vm716, %v675, 0
        %v739 = vsel %vm716, %v676, 0
        %v742 = vsel %vm716, %v677, 0
        %v745 = vsel %vm716, %v678, 0
        %v748 = vsel %vm716, %v679, 0
        %v751 = vsel %vm716, %v680, 0
        %v754 = vsel %vm716, %v681, 0
        %v757 = vsel %vm716, %v682, 0
        %v760 = vsel %vm716, %v683, 0
        %v763 = vsel %vm716, %v684, 0
        %v766 = vsel %vm716, %v685, 0
        %v769 = vsel %vm716, %v686, 0
        %v772 = vsel %vm716, %v687, 0
        %v775 = vsel %vm716, %v688, 0
        %v778 = vsel %vm716, %v689, 0
        %v781 = vsel %vm716, %v690, 0
        %v784 = vsel %vm716, %v691, 0
        %v787 = vsel %vm716, %v692, 0
        %v790 = vsel %vm716, %v693, 0
        %v793 = vsel %vm716, %v694, 0
        %v796 = vsel %vm716, %v695, 0
        %v799 = vsel %vm716, %v696, 0
        %v802 = vsel %vm716, %v697, 0
        %v805 = vsel %vm716, %v698, 0
        %v808 = vsel %vm716, %v699, 0
        %v811 = vsel %vm716, %v700, 0
        %813 = vmatprep.subr.mxu0 0.0
        %814 = vmatpush1.msra.mxu0 %v701
        %815 = vmatprep.subr.mxu0 0.0
        %816 = vmatpush1.msra.mxu0 %v702
        %817 = vmatprep.subr.mxu0 0.0
        %818 = vmatpush1.msra.mxu0 %v703
        %819 = vmatprep.subr.mxu0 0.0
        %820 = vmatpush1.msra.mxu0 %v704
        %821 = vmatprep.subr.mxu0 0.0
        %822 = vmatpush1.msra.mxu0 %v705
        %823 = vmatprep.subr.mxu0 0.0
        %824 = vmatpush1.msra.mxu0 %v706
        %825 = vmatprep.subr.mxu0 0.0
        %826 = vmatpush1.msra.mxu0 %v707
        %827 = vmatprep.subr.mxu0 0.0
        %828 = vmatpush1.msra.mxu0 %v708
        %829 = vmatprep.subr.mxu0 0.0
        %830 = vmatpush1.msra.mxu0 0.0
        %831 = vmatprep.subr.mxu0 0.0
        %832 = vmatpush1.msra.mxu0 0.0
        %833 = vmatprep.subr.mxu0 0.0
        %834 = vmatpush1.msra.mxu0 0.0
        %835 = vmatprep.subr.mxu0 0.0
        %836 = vmatpush1.msra.mxu0 0.0
        %837 = vmatprep.subr.mxu0 0.0
        %838 = vmatpush1.msra.mxu0 0.0
        %839 = vmatprep.subr.mxu0 0.0
        %840 = vmatpush1.msra.mxu0 0.0
        %841 = vmatprep.subr.mxu0 0.0
        %842 = vmatpush1.msra.mxu0 0.0
        %843 = vmatprep.subr.mxu0 0.0
        %844 = vmatpush1.msra.mxu0 0.0
        %845 = vmatprep.subr.mxu0 0.0
        %846 = vmatpush1.msra.mxu0 0.0
        %847 = vmatprep.subr.mxu0 0.0
        %848 = vmatpush1.msra.mxu0 0.0
        %849 = vmatprep.subr.mxu0 0.0
        %850 = vmatpush1.msra.mxu0 0.0
        %851 = vmatprep.subr.mxu0 0.0
        %852 = vmatpush1.msra.mxu0 0.0
        %853 = vmatprep.subr.mxu0 0.0
        %854 = vmatpush1.msra.mxu0 0.0
        %855 = vmatprep.subr.mxu0 0.0
        %856 = vmatpush1.msra.mxu0 0.0
        %857 = vmatprep.subr.mxu0 0.0
        %858 = vmatpush1.msra.mxu0 0.0
        %859 = vmatprep.subr.mxu0 0.0
        %860 = vmatpush1.msra.mxu0 0.0
        %861 = vmatprep.subr.mxu0 0.0
        %862 = vmatpush1.msra.mxu0 0.0
        %863 = vmatprep.subr.mxu0 0.0
        %864 = vmatpush1.msra.mxu0 0.0
        %865 = vmatprep.subr.mxu0 0.0
        %866 = vmatpush1.msra.mxu0 0.0
        %867 = vmatprep.subr.mxu0 0.0
        %868 = vmatpush1.msra.mxu0 0.0
        %869 = vmatprep.subr.mxu0 0.0
        %870 = vmatpush1.msra.mxu0 0.0
        %871 = vmatprep.subr.mxu0 0.0
        %872 = vmatpush1.msra.mxu0 0.0
        %873 = vmatprep.subr.mxu0 0.0
        %874 = vmatpush1.msra.mxu0 0.0
        %875 = vmatprep.subr.mxu0 0.0
        %876 = vmatpush1.msra.mxu0 0.0
        %877 = vmatprep.mubr.f32.mxu0 0.0
        %878 = vmatmul.mubr.f32.gmra.mrb[0].mxu0 %v718
        %v879 = vpop.f32.mrb[0].mxu0
        %v880 = vadd.f32 %v714, %v879
        %v881 = vpop.f32.mrb[0].mxu0
        %882 = vmatprep.mubr.f32.mxu0 0.0
        %883 = vmatmul.mubr.f32.gmra.mrb[0].mxu0 %v721
        %v884 = vpop.f32.mrb[0].mxu0
        %v885 = vadd.f32 %v714, %v884
        %v886 = vpop.f32.mrb[0].mxu0
        %887 = vmatprep.mubr.f32.mxu0 0.0
        %888 = vmatmul.mubr.f32.gmra.mrb[0].mxu0 %v724
        %v889 = vpop.f32.mrb[0].mxu0
        %v890 = vadd.f32 %v714, %v889
        %v891 = vpop.f32.mrb[0].mxu0
        %892 = vmatprep.mubr.f32.mxu0 0.0
        %893 = vmatmul.mubr.f32.gmra.mrb[0].mxu0 %v727
        %v894 = vpop.f32.mrb[0].mxu0
        %v895 = vadd.f32 %v714, %v894
        %v896 = vpop.f32.mrb[0].mxu0
        %897 = vmatprep.mubr.f32.mxu0 0.0
        %898 = vmatmul.mubr.f32.gmra.mrb[0].mxu0 %v730
        %v899 = vpop.f32.mrb[0].mxu0
        %v900 = vadd.f32 %v714, %v899
        %v901 = vpop.f32.mrb[0].mxu0
        %902 = vmatprep.mubr.f32.mxu0 0.0
        %903 = vmatmul.mubr.f32.gmra.mrb[0].mxu0 %v733
        %v904 = vpop.f32.mrb[0].mxu0
        %v905 = vadd.f32 %v714, %v904
        %v906 = vpop.f32.mrb[0].mxu0
        %907 = vmatprep.mubr.f32.mxu0 0.0
        %908 = vmatmul.mubr.f32.gmra.mrb[0].mxu0 %v736
        %v909 = vpop.f32.mrb[0].mxu0
        %v910 = vadd.f32 %v714, %v909
        %v911 = vpop.f32.mrb[0].mxu0
        %912 = vmatprep.mubr.f32.mxu0 0.0
        %913 = vmatmul.mubr.f32.gmra.mrb[0].mxu0 %v739
        %v914 = vpop.f32.mrb[0].mxu0
        %v915 = vadd.f32 %v714, %v914
        %v916 = vpop.f32.mrb[0].mxu0
        %917 = vmatprep.mubr.f32.mxu0 0.0
        %918 = vmatmul.mubr.f32.gmra.mrb[0].mxu0 %v742
        %v919 = vpop.f32.mrb[0].mxu0
        %v920 = vadd.f32 %v714, %v919
        %v921 = vpop.f32.mrb[0].mxu0
        %922 = vmatprep.mubr.f32.mxu0 0.0
        %923 = vmatmul.mubr.f32.gmra.mrb[0].mxu0 %v745
        %v924 = vpop.f32.mrb[0].mxu0
        %v925 = vadd.f32 %v714, %v924
        %v926 = vpop.f32.mrb[0].mxu0
        %927 = vmatprep.mubr.f32.mxu0 0.0
        %928 = vmatmul.mubr.f32.gmra.mrb[0].mxu0 %v748
        %v929 = vpop.f32.mrb[0].mxu0
        %v930 = vadd.f32 %v714, %v929
        %v931 = vpop.f32.mrb[0].mxu0
        %932 = vmatprep.mubr.f32.mxu0 0.0
        %933 = vmatmul.mubr.f32.gmra.mrb[0].mxu0 %v751
        %v934 = vpop.f32.mrb[0].mxu0
        %v935 = vadd.f32 %v714, %v934
        %v936 = vpop.f32.mrb[0].mxu0
        %937 = vmatprep.mubr.f32.mxu0 0.0
        %938 = vmatmul.mubr.f32.gmra.mrb[0].mxu0 %v754
        %v939 = vpop.f32.mrb[0].mxu0
        %v940 = vadd.f32 %v714, %v939
        %v941 = vpop.f32.mrb[0].mxu0
        %942 = vmatprep.mubr.f32.mxu0 0.0
        %943 = vmatmul.mubr.f32.gmra.mrb[0].mxu0 %v757
        %v944 = vpop.f32.mrb[0].mxu0
        %v945 = vadd.f32 %v714, %v944
        %v946 = vpop.f32.mrb[0].mxu0
        %947 = vmatprep.mubr.f32.mxu0 0.0
        %948 = vmatmul.mubr.f32.gmra.mrb[0].mxu0 %v760
        %v949 = vpop.f32.mrb[0].mxu0
        %v950 = vadd.f32 %v714, %v949
        %v951 = vpop.f32.mrb[0].mxu0
        %952 = vmatprep.mubr.f32.mxu0 0.0
        %953 = vmatmul.mubr.f32.gmra.mrb[0].mxu0 %v763
        %v954 = vpop.f32.mrb[0].mxu0
        %v955 = vadd.f32 %v714, %v954
        %v956 = vpop.f32.mrb[0].mxu0
        %957 = vmatprep.mubr.f32.mxu0 0.0
        %958 = vmatmul.mubr.f32.gmra.mrb[0].mxu0 %v766
        %v959 = vpop.f32.mrb[0].mxu0
        %v960 = vadd.f32 %v714, %v959
        %v961 = vpop.f32.mrb[0].mxu0
        %962 = vmatprep.mubr.f32.mxu0 0.0
        %963 = vmatmul.mubr.f32.gmra.mrb[0].mxu0 %v769
        %v964 = vpop.f32.mrb[0].mxu0
        %v965 = vadd.f32 %v714, %v964
        %v966 = vpop.f32.mrb[0].mxu0
        %967 = vmatprep.mubr.f32.mxu0 0.0
        %968 = vmatmul.mubr.f32.gmra.mrb[0].mxu0 %v772
        %v969 = vpop.f32.mrb[0].mxu0
        %v970 = vadd.f32 %v714, %v969
        %v971 = vpop.f32.mrb[0].mxu0
        %972 = vmatprep.mubr.f32.mxu0 0.0
        %973 = vmatmul.mubr.f32.gmra.mrb[0].mxu0 %v775
        %v974 = vpop.f32.mrb[0].mxu0
        %v975 = vadd.f32 %v714, %v974
        %v976 = vpop.f32.mrb[0].mxu0
        %977 = vmatprep.mubr.f32.mxu0 0.0
        %978 = vmatmul.mubr.f32.gmra.mrb[0].mxu0 %v778
        %v979 = vpop.f32.mrb[0].mxu0
        %v980 = vadd.f32 %v714, %v979
        %v981 = vpop.f32.mrb[0].mxu0
        %982 = vmatprep.mubr.f32.mxu0 0.0
        %983 = vmatmul.mubr.f32.gmra.mrb[0].mxu0 %v781
        %v984 = vpop.f32.mrb[0].mxu0
        %v985 = vadd.f32 %v714, %v984
        %v986 = vpop.f32.mrb[0].mxu0
        %987 = vmatprep.mubr.f32.mxu0 0.0
        %988 = vmatmul.mubr.f32.gmra.mrb[0].mxu0 %v784
        %v989 = vpop.f32.mrb[0].mxu0
        %v990 = vadd.f32 %v714, %v989
        %v991 = vpop.f32.mrb[0].mxu0
        %992 = vmatprep.mubr.f32.mxu0 0.0
        %993 = vmatmul.mubr.f32.gmra.mrb[0].mxu0 %v787
        %v994 = vpop.f32.mrb[0].mxu0
        %v995 = vadd.f32 %v714, %v994
        %v996 = vpop.f32.mrb[0].mxu0
        %997 = vmatprep.mubr.f32.mxu0 0.0
        %998 = vmatmul.mubr.f32.gmra.mrb[0].mxu0 %v790
        %v999 = vpop.f32.mrb[0].mxu0
        %v1000 = vadd.f32 %v714, %v999
        %v1001 = vpop.f32.mrb[0].mxu0
        %1002 = vmatprep.mubr.f32.mxu0 0.0
        %1003 = vmatmul.mubr.f32.gmra.mrb[0].mxu0 %v793
        %v1004 = vpop.f32.mrb[0].mxu0
        %v1005 = vadd.f32 %v714, %v1004
        %v1006 = vpop.f32.mrb[0].mxu0
        %1007 = vmatprep.mubr.f32.mxu0 0.0
        %1008 = vmatmul.mubr.f32.gmra.mrb[0].mxu0 %v796
        %v1009 = vpop.f32.mrb[0].mxu0
        %v1010 = vadd.f32 %v714, %v1009
        %v1011 = vpop.f32.mrb[0].mxu0
        %1012 = vmatprep.mubr.f32.mxu0 0.0
        %1013 = vmatmul.mubr.f32.gmra.mrb[0].mxu0 %v799
        %v1014 = vpop.f32.mrb[0].mxu0
        %v1015 = vadd.f32 %v714, %v1014
        %v1016 = vpop.f32.mrb[0].mxu0
        %1017 = vmatprep.mubr.f32.mxu0 0.0
        %1018 = vmatmul.mubr.f32.gmra.mrb[0].mxu0 %v802
        %v1019 = vpop.f32.mrb[0].mxu0
        %v1020 = vadd.f32 %v714, %v1019
        %v1021 = vpop.f32.mrb[0].mxu0
        %1022 = vmatprep.mubr.f32.mxu0 0.0
        %1023 = vmatmul.mubr.f32.gmra.mrb[0].mxu0 %v805
        %v1024 = vpop.f32.mrb[0].mxu0
        %v1025 = vadd.f32 %v714, %v1024
        %v1026 = vpop.f32.mrb[0].mxu0
        %1027 = vmatprep.mubr.f32.mxu0 0.0
        %1028 = vmatmul.mubr.f32.gmra.mrb[0].mxu0 %v808
        %v1029 = vpop.f32.mrb[0].mxu0
        %v1030 = vadd.f32 %v714, %v1029
        %v1031 = vpop.f32.mrb[0].mxu0
        %1032 = vmatprep.mubr.f32.mxu0 0.0
        %1033 = vmatmul.mubr.f32.gmra.mrb[0].mxu0 %v811
        %v1034 = vpop.f32.mrb[0].mxu0
        %v1035 = vadd.f32 %v714, %v1034
        %v1036 = vpop.f32.mrb[0].mxu0
        %1037 = vdwg.mxu0
        %v1038 = vld [vmem:[%s218] sm:$0xff]
        %v1039 = vld [vmem:[%s218 + $0x8] sm:$0xff]
        %v1040 = vld [vmem:[%s218 + $0x10] sm:$0xff]
        %v1041 = vld [vmem:[%s218 + $0x18] sm:$0xff]
        %v1042 = vld [vmem:[%s218 + $0x20] sm:$0xff]
        %v1043 = vld [vmem:[%s218 + $0x28] sm:$0xff]
        %v1044 = vld [vmem:[%s218 + $0x30] sm:$0xff]
        %v1045 = vld [vmem:[%s218 + $0x38] sm:$0xff]
        %v1046 = vld [vmem:[%s218 + $0x40] sm:$0xff]
        %v1047 = vld [vmem:[%s218 + $0x48] sm:$0xff]
        %v1048 = vld [vmem:[%s218 + $0x50] sm:$0xff]
        %v1049 = vld [vmem:[%s218 + $0x58] sm:$0xff]
        %v1050 = vld [vmem:[%s218 + $0x60] sm:$0xff]
        %v1051 = vld [vmem:[%s218 + $0x68] sm:$0xff]
        %v1052 = vld [vmem:[%s218 + $0x70] sm:$0xff]
        %v1053 = vld [vmem:[%s218 + $0x78] sm:$0xff]
        %v1054 = vld [vmem:[%s218 + $0x80] sm:$0xff]
        %v1055 = vld [vmem:[%s218 + $0x88] sm:$0xff]
        %v1056 = vld [vmem:[%s218 + $0x90] sm:$0xff]
        %v1057 = vld [vmem:[%s218 + $0x98] sm:$0xff]
        %v1058 = vld [vmem:[%s218 + $0xa0] sm:$0xff]
        %v1059 = vld [vmem:[%s218 + $0xa8] sm:$0xff]
        %v1060 = vld [vmem:[%s218 + $0xb0] sm:$0xff]
        %v1061 = vld [vmem:[%s218 + $0xb8] sm:$0xff]
        %v1062 = vld [vmem:[%s218 + $0xc0] sm:$0xff]
        %v1063 = vld [vmem:[%s218 + $0xc8] sm:$0xff]
        %v1064 = vld [vmem:[%s218 + $0xd0] sm:$0xff]
        %v1065 = vld [vmem:[%s218 + $0xd8] sm:$0xff]
        %v1066 = vld [vmem:[%s218 + $0xe0] sm:$0xff]
        %v1067 = vld [vmem:[%s218 + $0xe8] sm:$0xff]
        %v1068 = vld [vmem:[%s218 + $0xf0] sm:$0xff]
        %v1069 = vld [vmem:[%s218 + $0xf8] sm:$0xff]
        %v1070 = vadd.f32 %v880, %v1038
        %v1071 = vadd.f32 %v885, %v1039
        %v1072 = vadd.f32 %v890, %v1040
        %v1073 = vadd.f32 %v895, %v1041
        %v1074 = vadd.f32 %v900, %v1042
        %v1075 = vadd.f32 %v905, %v1043
        %v1076 = vadd.f32 %v910, %v1044
        %v1077 = vadd.f32 %v915, %v1045
        %v1078 = vadd.f32 %v920, %v1046
        %v1079 = vadd.f32 %v925, %v1047
        %v1080 = vadd.f32 %v930, %v1048
        %v1081 = vadd.f32 %v935, %v1049
        %v1082 = vadd.f32 %v940, %v1050
        %v1083 = vadd.f32 %v945, %v1051
        %v1084 = vadd.f32 %v950, %v1052
        %v1085 = vadd.f32 %v955, %v1053
        %v1086 = vadd.f32 %v960, %v1054
        %v1087 = vadd.f32 %v965, %v1055
        %v1088 = vadd.f32 %v970, %v1056
        %v1089 = vadd.f32 %v975, %v1057
        %v1090 = vadd.f32 %v980, %v1058
        %v1091 = vadd.f32 %v985, %v1059
        %v1092 = vadd.f32 %v990, %v1060
        %v1093 = vadd.f32 %v995, %v1061
        %v1094 = vadd.f32 %v1000, %v1062
        %v1095 = vadd.f32 %v1005, %v1063
        %v1096 = vadd.f32 %v1010, %v1064
        %v1097 = vadd.f32 %v1015, %v1065
        %v1098 = vadd.f32 %v1020, %v1066
        %v1099 = vadd.f32 %v1025, %v1067
        %v1100 = vadd.f32 %v1030, %v1068
        %v1101 = vadd.f32 %v1035, %v1069
        %vm1102 = vcmask 261120
        %1103 = vst.msk [vmem:[%s207] sm:$0xff] %vm1102, %v1070
        %1104 = vst.msk [vmem:[%s207 + $0x8] sm:$0xff] %vm1102, %v1071
        %1105 = vst.msk [vmem:[%s207 + $0x10] sm:$0xff] %vm1102, %v1072
        %1106 = vst.msk [vmem:[%s207 + $0x18] sm:$0xff] %vm1102, %v1073
        %1107 = vst.msk [vmem:[%s207 + $0x20] sm:$0xff] %vm1102, %v1074
        %1108 = vst.msk [vmem:[%s207 + $0x28] sm:$0xff] %vm1102, %v1075
        %1109 = vst.msk [vmem:[%s207 + $0x30] sm:$0xff] %vm1102, %v1076
        %1110 = vst.msk [vmem:[%s207 + $0x38] sm:$0xff] %vm1102, %v1077
        %1111 = vst.msk [vmem:[%s207 + $0x40] sm:$0xff] %vm1102, %v1078
        %1112 = vst.msk [vmem:[%s207 + $0x48] sm:$0xff] %vm1102, %v1079
        %1113 = vst.msk [vmem:[%s207 + $0x50] sm:$0xff] %vm1102, %v1080
        %1114 = vst.msk [vmem:[%s207 + $0x58] sm:$0xff] %vm1102, %v1081
        %1115 = vst.msk [vmem:[%s207 + $0x60] sm:$0xff] %vm1102, %v1082
        %1116 = vst.msk [vmem:[%s207 + $0x68] sm:$0xff] %vm1102, %v1083
        %1117 = vst.msk [vmem:[%s207 + $0x70] sm:$0xff] %vm1102, %v1084
        %1118 = vst.msk [vmem:[%s207 + $0x78] sm:$0xff] %vm1102, %v1085
        %1119 = vst.msk [vmem:[%s207 + $0x80] sm:$0xff] %vm1102, %v1086
        %1120 = vst.msk [vmem:[%s207 + $0x88] sm:$0xff] %vm1102, %v1087
        %1121 = vst.msk [vmem:[%s207 + $0x90] sm:$0xff] %vm1102, %v1088
        %1122 = vst.msk [vmem:[%s207 + $0x98] sm:$0xff] %vm1102, %v1089
        %1123 = vst.msk [vmem:[%s207 + $0xa0] sm:$0xff] %vm1102, %v1090
        %1124 = vst.msk [vmem:[%s207 + $0xa8] sm:$0xff] %vm1102, %v1091
        %1125 = vst.msk [vmem:[%s207 + $0xb0] sm:$0xff] %vm1102, %v1092
        %1126 = vst.msk [vmem:[%s207 + $0xb8] sm:$0xff] %vm1102, %v1093
        %1127 = vst.msk [vmem:[%s207 + $0xc0] sm:$0xff] %vm1102, %v1094
        %1128 = vst.msk [vmem:[%s207 + $0xc8] sm:$0xff] %vm1102, %v1095
        %1129 = vst.msk [vmem:[%s207 + $0xd0] sm:$0xff] %vm1102, %v1096
        %1130 = vst.msk [vmem:[%s207 + $0xd8] sm:$0xff] %vm1102, %v1097
        %1131 = vst.msk [vmem:[%s207 + $0xe0] sm:$0xff] %vm1102, %v1098
        %1132 = vst.msk [vmem:[%s207 + $0xe8] sm:$0xff] %vm1102, %v1099
        %1133 = vst.msk [vmem:[%s207 + $0xf0] sm:$0xff] %vm1102, %v1100
        %1134 = vst.msk [vmem:[%s207 + $0xf8] sm:$0xff] %vm1102, %v1101
        %s1135 = sand.u32 %s120, 1
        %s1136 = scalar_lea.sflag [#allocation3], %s1135
        %s1137 = sand.u32 %s120, 1
        %s1138 = smul.addr %s1137, 256
        %s1139 = scalar_lea.vmem [#allocation2], %s1138
        // Predicated region
        $region37: #{transformer_block_forward.13} parent=35 // pred_check
          %p1140 = pneg %p130
        $region38: #{transformer_block_forward.13} parent=35 // pred_check_branch
          %1142 = sbr.rel (%p1140) target = $region40
        $region39: #{transformer_block_forward.13} parent=35 // pred_region
          %s1143 = smul.u32 32, %s18
          %s1145 = ssub.s32 4096, 4096
          %1146 = vsyncadd %s1136, %s1145
          %s1147 = smul.addr %s1143, 128
          %s1148 = scalar_lea.hbm %s4, %s1147
          %s1149 = sshll.u32 %s1139, 4
          %s1150 = int_to_ptr.vmem [resolvable:$true] %s1149
          %1155 = dma.vmem_to_hbm [thread:$0]  %s1150, 4096, %s1148, %s1136, 128, 128, 8
        $region40: #{transformer_block_forward.13} parent=35 // pred_fallthru
          _
      $region36: #{transformer_block_forward.13} parent=5 // pred_fallthru
        _
      %p1156 = scmp.le.s32.totalorder 2, %s13
      // Predicated region
      $region41: #{transformer_block_forward.13} parent=5 // pred_check
        %p1157 = pneg %p1156
      $region42: #{transformer_block_forward.13} parent=5 // pred_check_branch
        %1159 = sbr.rel (%p1157) target = $region44
      $region43: #{transformer_block_forward.13} parent=5 // pred_region
        %s1160 = ssub.s32 %s13, 2
        // Predicated region
        $region45: #{transformer_block_forward.13} parent=43 // pred_check
          %p1161 = pneg %p136
        $region46: #{transformer_block_forward.13} parent=43 // pred_check_branch
          %1163 = sbr.rel (%p1161) target = $region48
        $region47: #{transformer_block_forward.13} parent=43 // pred_region
          %s1164 = sand.u32 %s121, 1
          %s1165 = scalar_lea.sflag [#allocation3], %s1164
          %s1166 = sand.u32 %s121, 1
          %s1167 = smul.addr %s1166, 256
          %s1168 = scalar_lea.vmem [#allocation2], %s1167
          %1169 = dma.done %s1165, 4096
        $region48: #{transformer_block_forward.13} parent=43 // pred_fallthru
          _
      $region44: #{transformer_block_forward.13} parent=5 // pred_fallthru
        _
    $region6: #{transformer_block_forward.13} parent=1 // loop_footer
      %s17 = sadd.s32 1, %s13
    $region7: #{transformer_block_forward.13} parent=1 // loop_footer_branch
      %12 = sbr.rel target = $region3
    $region8: #{transformer_block_forward.13} parent=1 // loop_exit
      _
    %1170 = vsyncpa [#allocation3], 1
    %s1171 = scalar_lea.sflag [#allocation3], 1
    %1172 = vsyncpa %s1171, 1

// kernel: transformer_block_forward.12
$region0: #{transformer_block_forward.12}
  #allocation0 [shape = 'u32[]', space=smem, size = 0x4, offset = 0x4, fixed_abs, tag = 'smem constant byte address 0x4 - core index']
  #allocation1 [shape = 'u32[144,128]{1,0:T(1,128)}', space=vmem, size = 0x12000, scoped, tag = 'internal scratch']
  %s0 = inlined_call_operand.vmem [shape: f32[2,18,18,128], index: 0, kind: input, shape index: {}]
  %s1 = inlined_call_operand.vmem [shape: f32[9,128], index: 1, kind: input, shape index: {}]
  %s2 = inlined_call_operand.vmem [shape: f32[1,128], index: 2, kind: input, shape index: {}]
  %s3 = inlined_call_operand.vmem [shape: f32[2,16,16,128], index: 3, kind: output, shape index: {}]
  %s4 = sld [smem:[#allocation0]]
  $region45: #{transformer_block_forward.12} parent=0
    _
  %s6 = ssub.s32 1, %s4
  %s7 = scalar_select 0, %s6, %s4
  loop: start=0, step=1, limit=4
  $region2: #{transformer_block_forward.12} parent=0 // loop_pre_header
    _
  $region3: #{transformer_block_forward.12} parent=0 // loop_header
    %s9 = sphi 0, %s13
    %p10 = scmp.ge.s32.totalorder %s9, 4
    %s19 = sphi 0, %s21
    %s22 = sphi 0, %s19
    %s23 = sphi 0, %s22
    %s39 = sphi 0, %s23
    %s43 = sphi 0, %s43
    %s45 = sphi 0, %s43
    %s46 = sphi 0, %s45
    %s60 = sphi 0, %s46
    %s64 = sphi 0, %s64
    %s66 = sphi 0, %s64
    %s67 = sphi 0, %s66
    %s81 = sphi 0, %s67
    %s87 = sphi 0, %s89
    %s90 = sphi 0, %s87
    %s91 = sphi 0, %s90
    %s107 = sphi 0, %s91
  $region4: #{transformer_block_forward.12} parent=0 // loop_header_branch
    %12 = sbr.rel (%p10) target = $region8
  $region5: #{transformer_block_forward.12} parent=0 // loop_body
    %s14 = ssub.s32 %s9, 1
    %s15 = ssub.s32 %s9, 2
    %s16 = sadd.s32 %s9, 1
    %s17 = ssub.s32 %s9, %s16
    %p18 = scmp.eq.s32.totalorder %s17, 0
    %s20 = sadd.s32 %s19, 1
    %s21 = scalar_select %p18, %s19, %s20
    %p24 = pneg %p18
    %p25 = scmp.eq.s32.totalorder %s9, 1
    %p26 = por %p24, %p25
    %p27 = scmp.ne.s32.totalorder %s19, %s22
    %p28 = scmp.eq.s32.totalorder %s9, 0
    %p29 = por %p27, %p28
    %p30 = scmp.ne.s32.totalorder %s19, %s22
    %p31 = scmp.eq.s32.totalorder %s14, 1
    %p32 = por %p30, %p31
    %p33 = scmp.ne.s32.totalorder %s22, %s23
    %p34 = scmp.eq.s32.totalorder %s14, 0
    %p35 = por %p33, %p34
    %p36 = scmp.ne.s32.totalorder %s22, %s23
    %p37 = scmp.eq.s32.totalorder %s15, 1
    %p38 = por %p36, %p37
    %p40 = scmp.ne.s32.totalorder %s23, %s39
    %p41 = scmp.eq.s32.totalorder %s15, 0
    %p42 = por %p40, %p41
    %s44 = sadd.s32 %s43, 1
    %p47 = scmp.eq.s32.totalorder %s9, 1
    %p48 = scmp.ne.s32.totalorder %s43, %s45
    %p49 = scmp.eq.s32.totalorder %s9, 0
    %p50 = por %p48, %p49
    %p51 = scmp.ne.s32.totalorder %s43, %s45
    %p52 = scmp.eq.s32.totalorder %s14, 1
    %p53 = por %p51, %p52
    %p54 = scmp.ne.s32.totalorder %s45, %s46
    %p55 = scmp.eq.s32.totalorder %s14, 0
    %p56 = por %p54, %p55
    %p57 = scmp.ne.s32.totalorder %s45, %s46
    %p58 = scmp.eq.s32.totalorder %s15, 1
    %p59 = por %p57, %p58
    %p61 = scmp.ne.s32.totalorder %s46, %s60
    %p62 = scmp.eq.s32.totalorder %s15, 0
    %p63 = por %p61, %p62
    %s65 = sadd.s32 %s64, 1
    %p68 = scmp.eq.s32.totalorder %s9, 1
    %p69 = scmp.ne.s32.totalorder %s64, %s66
    %p70 = scmp.eq.s32.totalorder %s9, 0
    %p71 = por %p69, %p70
    %p72 = scmp.ne.s32.totalorder %s64, %s66
    %p73 = scmp.eq.s32.totalorder %s14, 1
    %p74 = por %p72, %p73
    %p75 = scmp.ne.s32.totalorder %s66, %s67
    %p76 = scmp.eq.s32.totalorder %s14, 0
    %p77 = por %p75, %p76
    %p78 = scmp.ne.s32.totalorder %s66, %s67
    %p79 = scmp.eq.s32.totalorder %s15, 1
    %p80 = por %p78, %p79
    %p82 = scmp.ne.s32.totalorder %s67, %s81
    %p83 = scmp.eq.s32.totalorder %s15, 0
    %p84 = por %p82, %p83
    %s85 = ssub.s32 %s9, %s16
    %p86 = scmp.eq.s32.totalorder %s85, 0
    %s88 = sadd.s32 %s87, 1
    %s89 = scalar_select %p86, %s87, %s88
    %p92 = pneg %p86
    %p93 = scmp.eq.s32.totalorder %s9, 1
    %p94 = por %p92, %p93
    %p95 = scmp.ne.s32.totalorder %s87, %s90
    %p96 = scmp.eq.s32.totalorder %s9, 0
    %p97 = por %p95, %p96
    %p98 = scmp.ne.s32.totalorder %s87, %s90
    %p99 = scmp.eq.s32.totalorder %s14, 1
    %p100 = por %p98, %p99
    %p101 = scmp.ne.s32.totalorder %s90, %s91
    %p102 = scmp.eq.s32.totalorder %s14, 0
    %p103 = por %p101, %p102
    %p104 = scmp.ne.s32.totalorder %s90, %s91
    %p105 = scmp.eq.s32.totalorder %s15, 1
    %p106 = por %p104, %p105
    %p108 = scmp.ne.s32.totalorder %s91, %s107
    %p109 = scmp.eq.s32.totalorder %s15, 0
    %p110 = por %p108, %p109
    %p111 = scmp.le.s32.totalorder 1, %s9
    %p112 = scmp.lt.s32.totalorder %s9, 3
    %p113 = pnand %p111, %p112
    %p114 = pneg %p113
    // Predicated region
    $region9: #{transformer_block_forward.12} parent=5 // pred_check
      _
    $region10: #{transformer_block_forward.12} parent=5 // pred_check_branch
      %116 = sbr.rel (%p113) target = $region12
    $region11: #{transformer_block_forward.12} parent=5 // pred_region
      %s117 = ssub.s32 %s9, 1
      // Predicated region
      $region13: #{transformer_block_forward.12} parent=11 // pred_check
        %p118 = pneg %p56
      $region14: #{transformer_block_forward.12} parent=11 // pred_check_branch
        %120 = sbr.rel (%p118) target = $region16
      $region15: #{transformer_block_forward.12} parent=11 // pred_region
        _
      $region16: #{transformer_block_forward.12} parent=11 // pred_fallthru
        _
      // Predicated region
      $region17: #{transformer_block_forward.12} parent=11 // pred_check
        %p121 = pneg %p77
      $region18: #{transformer_block_forward.12} parent=11 // pred_check_branch
        %123 = sbr.rel (%p121) target = $region20
      $region19: #{transformer_block_forward.12} parent=11 // pred_region
        _
      $region20: #{transformer_block_forward.12} parent=11 // pred_fallthru
        _
    $region12: #{transformer_block_forward.12} parent=5 // pred_fallthru
      _
    %p124 = scmp.lt.s32.totalorder %s9, 2
    // Predicated region
    $region21: #{transformer_block_forward.12} parent=5 // pred_check
      %p125 = pneg %p124
    $region22: #{transformer_block_forward.12} parent=5 // pred_check_branch
      %127 = sbr.rel (%p125) target = $region24
    $region23: #{transformer_block_forward.12} parent=5 // pred_region
      // Predicated region
      $region25: #{transformer_block_forward.12} parent=23 // pred_check
        %p128 = pneg %p29
      $region26: #{transformer_block_forward.12} parent=23 // pred_check_branch
        %130 = sbr.rel (%p128) target = $region28
      $region27: #{transformer_block_forward.12} parent=23 // pred_region
        %p131 = scmp.lt.s32.totalorder %s9, 1
        %s132 = scalar_select %p131, %s9, 1
        %s133 = smul.addr %s132, 54
        %s134 = smul.addr %s133, 8
        %s135 = scalar_lea.vmem %s0, %s134
      $region28: #{transformer_block_forward.12} parent=23 // pred_fallthru
        _
    $region24: #{transformer_block_forward.12} parent=5 // pred_fallthru
      _
    %p136 = scmp.le.s32.totalorder 1, %s9
    %p137 = scmp.lt.s32.totalorder %s9, 3
    %p138 = pnand %p136, %p137
    %p139 = pneg %p138
    // Predicated region
    $region29: #{transformer_block_forward.12} parent=5 // pred_check
      _
    $region30: #{transformer_block_forward.12} parent=5 // pred_check_branch
      %141 = sbr.rel (%p138) target = $region32
    $region31: #{transformer_block_forward.12} parent=5 // pred_region
      %s142 = ssub.s32 %s9, 1
      %p143 = scmp.lt.s32.totalorder %s14, 1
      %s144 = scalar_select %p143, %s14, 1
      %s145 = smul.addr %s144, 54
      %s146 = smul.addr %s145, 8
      %s147 = scalar_lea.vmem %s0, %s146
      %p148 = pneg %p35
      %p149 = pneg %p32
      %p150 = pneg %p56
      %p151 = pneg %p53
      %p152 = pneg %p77
      %p153 = pneg %p74
      %p154 = pneg %p103
      %p155 = pneg %p100
      %p156 = scmp.lt.s32.totalorder %s14, 1
      %s157 = scalar_select %p156, %s14, 1
      %s158 = smul.addr %s157, 32
      %s159 = smul.addr %s158, 8
      %s160 = scalar_lea.vmem %s3, %s159
      %p161 = scmp.lt.s32.totalorder %s14, 1
      %s162 = scalar_select %p161, %s14, 1
      %s163 = smul.addr %s162, 54
      %s164 = smul.addr %s163, 8
      %s165 = scalar_lea.vmem %s0, %s164
      %p166 = scmp.lt.s32.totalorder %s14, 1
      %s167 = scalar_select %p166, %s14, 1
      %s168 = smul.addr %s167, 32
      %s169 = smul.addr %s168, 8
      %s170 = scalar_lea.vmem %s3, %s169
      %v171 = vld [vmem:[%s165] sm:$0xff]
      %v172 = vld [vmem:[%s165 + $0x8] sm:$0xff]
      %v173 = vld [vmem:[%s165 + $0x10] sm:$0x3]
      %v174 = vld [vmem:[%s165 + $0x18] sm:$0xff]
      %v175 = vld [vmem:[%s165 + $0x20] sm:$0xff]
      %v176 = vld [vmem:[%s165 + $0x28] sm:$0x3]
      %v177 = vld [vmem:[%s165 + $0x30] sm:$0xff]
      %v178 = vld [vmem:[%s165 + $0x38] sm:$0xff]
      %v179 = vld [vmem:[%s165 + $0x40] sm:$0x3]
      %v180 = vld [vmem:[%s165 + $0x48] sm:$0xff]
      %v181 = vld [vmem:[%s165 + $0x50] sm:$0xff]
      %v182 = vld [vmem:[%s165 + $0x58] sm:$0x3]
      %v183 = vld [vmem:[%s165 + $0x60] sm:$0xff]
      %v184 = vld [vmem:[%s165 + $0x68] sm:$0xff]
      %v185 = vld [vmem:[%s165 + $0x70] sm:$0x3]
      %v186 = vld [vmem:[%s165 + $0x78] sm:$0xff]
      %v187 = vld [vmem:[%s165 + $0x80] sm:$0xff]
      %v188 = vld [vmem:[%s165 + $0x88] sm:$0x3]
      %v189 = vld [vmem:[%s165 + $0x90] sm:$0xff]
      %v190 = vld [vmem:[%s165 + $0x98] sm:$0xff]
      %v191 = vld [vmem:[%s165 + $0xa0] sm:$0x3]
      %v192 = vld [vmem:[%s165 + $0xa8] sm:$0xff]
      %v193 = vld [vmem:[%s165 + $0xb0] sm:$0xff]
      %v194 = vld [vmem:[%s165 + $0xb8] sm:$0x3]
      %v195 = vld [vmem:[%s165 + $0xc0] sm:$0xff]
      %v196 = vld [vmem:[%s165 + $0xc8] sm:$0xff]
      %v197 = vld [vmem:[%s165 + $0xd0] sm:$0x3]
      %v198 = vld [vmem:[%s165 + $0xd8] sm:$0xff]
      %v199 = vld [vmem:[%s165 + $0xe0] sm:$0xff]
      %v200 = vld [vmem:[%s165 + $0xe8] sm:$0x3]
      %v201 = vld [vmem:[%s165 + $0xf0] sm:$0xff]
      %v202 = vld [vmem:[%s165 + $0xf8] sm:$0xff]
      %v203 = vld [vmem:[%s165 + $0x100] sm:$0x3]
      %v204 = vld [vmem:[%s165 + $0x108] sm:$0xff]
      %v205 = vld [vmem:[%s165 + $0x110] sm:$0xff]
      %v206 = vld [vmem:[%s165 + $0x118] sm:$0x3]
      %v207 = vld [vmem:[%s165 + $0x120] sm:$0xff]
      %v208 = vld [vmem:[%s165 + $0x128] sm:$0xff]
      %v209 = vld [vmem:[%s165 + $0x130] sm:$0x3]
      %v210 = vld [vmem:[%s165 + $0x138] sm:$0xff]
      %v211 = vld [vmem:[%s165 + $0x140] sm:$0xff]
      %v212 = vld [vmem:[%s165 + $0x148] sm:$0x3]
      %v213 = vld [vmem:[%s165 + $0x150] sm:$0xff]
      %v214 = vld [vmem:[%s165 + $0x158] sm:$0xff]
      %v215 = vld [vmem:[%s165 + $0x160] sm:$0x3]
      %v216 = vld [vmem:[%s165 + $0x168] sm:$0xff]
      %v217 = vld [vmem:[%s165 + $0x170] sm:$0xff]
      %v218 = vld [vmem:[%s165 + $0x178] sm:$0x3]
      %v219 = vld [vmem:[%s165 + $0x180] sm:$0xff]
      %v220 = vld [vmem:[%s165 + $0x188] sm:$0xff]
      %v221 = vld [vmem:[%s165 + $0x190] sm:$0x3]
      %v222 = vld [vmem:[%s165 + $0x198] sm:$0xff]
      %v223 = vld [vmem:[%s165 + $0x1a0] sm:$0xff]
      %v224 = vld [vmem:[%s165 + $0x1a8] sm:$0x3]
      %v225 = vld [vmem:[%s1] sm:$0xff]
      %v226 = vld [vmem:[%s1 + $0x8] sm:$0x1]
      %v227 = vlaneseq
      %v228 = vshrl.u32 %v227, 7
      %v229 = vsub.s32 0, %v228
      %v230 = vrot.slane %v225, %v229
      %v231 = vmul.f32 %v171, %v230
      %v232 = vmul.f32 %v172, %v230
      %v233 = vmul.f32 %v174, %v230
      %v234 = vmul.f32 %v175, %v230
      %v235 = vmul.f32 %v177, %v230
      %v236 = vmul.f32 %v178, %v230
      %v237 = vmul.f32 %v180, %v230
      %v238 = vmul.f32 %v181, %v230
      %v239 = vmul.f32 %v183, %v230
      %v240 = vmul.f32 %v184, %v230
      %v241 = vmul.f32 %v186, %v230
      %v242 = vmul.f32 %v187, %v230
      %v243 = vmul.f32 %v189, %v230
      %v244 = vmul.f32 %v190, %v230
      %v245 = vmul.f32 %v192, %v230
      %v246 = vmul.f32 %v193, %v230
      %v247 = vmul.f32 %v195, %v230
      %v248 = vmul.f32 %v196, %v230
      %v249 = vmul.f32 %v198, %v230
      %v250 = vmul.f32 %v199, %v230
      %v251 = vmul.f32 %v201, %v230
      %v252 = vmul.f32 %v202, %v230
      %v253 = vmul.f32 %v204, %v230
      %v254 = vmul.f32 %v205, %v230
      %v255 = vmul.f32 %v207, %v230
      %v256 = vmul.f32 %v208, %v230
      %v257 = vmul.f32 %v210, %v230
      %v258 = vmul.f32 %v211, %v230
      %v259 = vmul.f32 %v213, %v230
      %v260 = vmul.f32 %v214, %v230
      %v261 = vmul.f32 %v216, %v230
      %v262 = vmul.f32 %v217, %v230
      %v263 = vadd.f32 %v231, 0.0
      %v264 = vadd.f32 %v232, 0.0
      %v265 = vadd.f32 %v233, 0.0
      %v266 = vadd.f32 %v234, 0.0
      %v267 = vadd.f32 %v235, 0.0
      %v268 = vadd.f32 %v236, 0.0
      %v269 = vadd.f32 %v237, 0.0
      %v270 = vadd.f32 %v238, 0.0
      %v271 = vadd.f32 %v239, 0.0
      %v272 = vadd.f32 %v240, 0.0
      %v273 = vadd.f32 %v241, 0.0
      %v274 = vadd.f32 %v242, 0.0
      %v275 = vadd.f32 %v243, 0.0
      %v276 = vadd.f32 %v244, 0.0
      %v277 = vadd.f32 %v245, 0.0
      %v278 = vadd.f32 %v246, 0.0
      %v279 = vadd.f32 %v247, 0.0
      %v280 = vadd.f32 %v248, 0.0
      %v281 = vadd.f32 %v249, 0.0
      %v282 = vadd.f32 %v250, 0.0
      %v283 = vadd.f32 %v251, 0.0
      %v284 = vadd.f32 %v252, 0.0
      %v285 = vadd.f32 %v253, 0.0
      %v286 = vadd.f32 %v254, 0.0
      %v287 = vadd.f32 %v255, 0.0
      %v288 = vadd.f32 %v256, 0.0
      %v289 = vadd.f32 %v257, 0.0
      %v290 = vadd.f32 %v258, 0.0
      %v291 = vadd.f32 %v259, 0.0
      %v292 = vadd.f32 %v260, 0.0
      %v293 = vadd.f32 %v261, 0.0
      %v294 = vadd.f32 %v262, 0.0
      %v295 = vlaneseq
      %v296 = vshrl.u32 %v295, 7
      %v297 = vsub.s32 1, %v296
      %v298 = vrot.slane %v225, %v297
      %v299 = vmul.f32 %v171, %v298
      %v300 = vmul.f32 %v172, %v298
      %v301 = vmul.f32 %v173, %v298
      %v302 = vmul.f32 %v174, %v298
      %v303 = vmul.f32 %v175, %v298
      %v304 = vmul.f32 %v176, %v298
      %v305 = vmul.f32 %v177, %v298
      %v306 = vmul.f32 %v178, %v298
      %v307 = vmul.f32 %v179, %v298
      %v308 = vmul.f32 %v180, %v298
      %v309 = vmul.f32 %v181, %v298
      %v310 = vmul.f32 %v182, %v298
      %v311 = vmul.f32 %v183, %v298
      %v312 = vmul.f32 %v184, %v298
      %v313 = vmul.f32 %v185, %v298
      %v314 = vmul.f32 %v186, %v298
      %v315 = vmul.f32 %v187, %v298
      %v316 = vmul.f32 %v188, %v298
      %v317 = vmul.f32 %v189, %v298
      %v318 = vmul.f32 %v190, %v298
      %v319 = vmul.f32 %v191, %v298
      %v320 = vmul.f32 %v192, %v298
      %v321 = vmul.f32 %v193, %v298
      %v322 = vmul.f32 %v194, %v298
      %v323 = vmul.f32 %v195, %v298
      %v324 = vmul.f32 %v196, %v298
      %v325 = vmul.f32 %v197, %v298
      %v326 = vmul.f32 %v198, %v298
      %v327 = vmul.f32 %v199, %v298
      %v328 = vmul.f32 %v200, %v298
      %v329 = vmul.f32 %v201, %v298
      %v330 = vmul.f32 %v202, %v298
      %v331 = vmul.f32 %v203, %v298
      %v332 = vmul.f32 %v204, %v298
      %v333 = vmul.f32 %v205, %v298
      %v334 = vmul.f32 %v206, %v298
      %v335 = vmul.f32 %v207, %v298
      %v336 = vmul.f32 %v208, %v298
      %v337 = vmul.f32 %v209, %v298
      %v338 = vmul.f32 %v210, %v298
      %v339 = vmul.f32 %v211, %v298
      %v340 = vmul.f32 %v212, %v298
      %v341 = vmul.f32 %v213, %v298
      %v342 = vmul.f32 %v214, %v298
      %v343 = vmul.f32 %v215, %v298
      %v344 = vmul.f32 %v216, %v298
      %v345 = vmul.f32 %v217, %v298
      %v346 = vmul.f32 %v218, %v298
      %vm395 = vcmask 1046528
      %v396 = vrot.slane %v299, 1
      %v397 = vrot.slane %v300, 1
      %v398 = vsel %vm395, %v396, %v397
      %v399 = vrot.slane %v301, 1
      %v400 = vsel %vm395, %v397, %v399
      %v401 = vrot.slane %v302, 1
      %v402 = vrot.slane %v303, 1
      %v403 = vsel %vm395, %v401, %v402
      %v404 = vrot.slane %v304, 1
      %v405 = vsel %vm395, %v402, %v404
      %v406 = vrot.slane %v305, 1
      %v407 = vrot.slane %v306, 1
      %v408 = vsel %vm395, %v406, %v407
      %v409 = vrot.slane %v307, 1
      %v410 = vsel %vm395, %v407, %v409
      %v411 = vrot.slane %v308, 1
      %v412 = vrot.slane %v309, 1
      %v413 = vsel %vm395, %v411, %v412
      %v414 = vrot.slane %v310, 1
      %v415 = vsel %vm395, %v412, %v414
      %v416 = vrot.slane %v311, 1
      %v417 = vrot.slane %v312, 1
      %v418 = vsel %vm395, %v416, %v417
      %v419 = vrot.slane %v313, 1
      %v420 = vsel %vm395, %v417, %v419
      %v421 = vrot.slane %v314, 1
      %v422 = vrot.slane %v315, 1
      %v423 = vsel %vm395, %v421, %v422
      %v424 = vrot.slane %v316, 1
      %v425 = vsel %vm395, %v422, %v424
      %v426 = vrot.slane %v317, 1
      %v427 = vrot.slane %v318, 1
      %v428 = vsel %vm395, %v426, %v427
      %v429 = vrot.slane %v319, 1
      %v430 = vsel %vm395, %v427, %v429
      %v431 = vrot.slane %v320, 1
      %v432 = vrot.slane %v321, 1
      %v433 = vsel %vm395, %v431, %v432
      %v434 = vrot.slane %v322, 1
      %v435 = vsel %vm395, %v432, %v434
      %v436 = vrot.slane %v323, 1
      %v437 = vrot.slane %v324, 1
      %v438 = vsel %vm395, %v436, %v437
      %v439 = vrot.slane %v325, 1
      %v440 = vsel %vm395, %v437, %v439
      %v441 = vrot.slane %v326, 1
      %v442 = vrot.slane %v327, 1
      %v443 = vsel %vm395, %v441, %v442
      %v444 = vrot.slane %v328, 1
      %v445 = vsel %vm395, %v442, %v444
      %v446 = vrot.slane %v329, 1
      %v447 = vrot.slane %v330, 1
      %v448 = vsel %vm395, %v446, %v447
      %v449 = vrot.slane %v331, 1
      %v450 = vsel %vm395, %v447, %v449
      %v451 = vrot.slane %v332, 1
      %v452 = vrot.slane %v333, 1
      %v453 = vsel %vm395, %v451, %v452
      %v454 = vrot.slane %v334, 1
      %v455 = vsel %vm395, %v452, %v454
      %v456 = vrot.slane %v335, 1
      %v457 = vrot.slane %v336, 1
      %v458 = vsel %vm395, %v456, %v457
      %v459 = vrot.slane %v337, 1
      %v460 = vsel %vm395, %v457, %v459
      %v461 = vrot.slane %v338, 1
      %v462 = vrot.slane %v339, 1
      %v463 = vsel %vm395, %v461, %v462
      %v464 = vrot.slane %v340, 1
      %v465 = vsel %vm395, %v462, %v464
      %v466 = vrot.slane %v341, 1
      %v467 = vrot.slane %v342, 1
      %v468 = vsel %vm395, %v466, %v467
      %v469 = vrot.slane %v343, 1
      %v470 = vsel %vm395, %v467, %v469
      %v471 = vrot.slane %v344, 1
      %v472 = vrot.slane %v345, 1
      %v473 = vsel %vm395, %v471, %v472
      %v474 = vrot.slane %v346, 1
      %v475 = vsel %vm395, %v472, %v474
      %v508 = vadd.f32 %v263, %v398
      %v509 = vadd.f32 %v264, %v400
      %v510 = vadd.f32 %v265, %v403
      %v511 = vadd.f32 %v266, %v405
      %v512 = vadd.f32 %v267, %v408
      %v513 = vadd.f32 %v268, %v410
      %v514 = vadd.f32 %v269, %v413
      %v515 = vadd.f32 %v270, %v415
      %v516 = vadd.f32 %v271, %v418
      %v517 = vadd.f32 %v272, %v420
      %v518 = vadd.f32 %v273, %v423
      %v519 = vadd.f32 %v274, %v425
      %v520 = vadd.f32 %v275, %v428
      %v521 = vadd.f32 %v276, %v430
      %v522 = vadd.f32 %v277, %v433
      %v523 = vadd.f32 %v278, %v435
      %v524 = vadd.f32 %v279, %v438
      %v525 = vadd.f32 %v280, %v440
      %v526 = vadd.f32 %v281, %v443
      %v527 = vadd.f32 %v282, %v445
      %v528 = vadd.f32 %v283, %v448
      %v529 = vadd.f32 %v284, %v450
      %v530 = vadd.f32 %v285, %v453
      %v531 = vadd.f32 %v286, %v455
      %v532 = vadd.f32 %v287, %v458
      %v533 = vadd.f32 %v288, %v460
      %v534 = vadd.f32 %v289, %v463
      %v535 = vadd.f32 %v290, %v465
      %v536 = vadd.f32 %v291, %v468
      %v537 = vadd.f32 %v292, %v470
      %v538 = vadd.f32 %v293, %v473
      %v539 = vadd.f32 %v294, %v475
      %v540 = vlaneseq
      %v541 = vshrl.u32 %v540, 7
      %v542 = vsub.s32 2, %v541
      %v543 = vrot.slane %v225, %v542
      %v544 = vmul.f32 %v171, %v543
      %v545 = vmul.f32 %v172, %v543
      %v546 = vmul.f32 %v173, %v543
      %v547 = vmul.f32 %v174, %v543
      %v548 = vmul.f32 %v175, %v543
      %v549 = vmul.f32 %v176, %v543
      %v550 = vmul.f32 %v177, %v543
      %v551 = vmul.f32 %v178, %v543
      %v552 = vmul.f32 %v179, %v543
      %v553 = vmul.f32 %v180, %v543
      %v554 = vmul.f32 %v181, %v543
      %v555 = vmul.f32 %v182, %v543
      %v556 = vmul.f32 %v183, %v543
      %v557 = vmul.f32 %v184, %v543
      %v558 = vmul.f32 %v185, %v543
      %v559 = vmul.f32 %v186, %v543
      %v560 = vmul.f32 %v187, %v543
      %v561 = vmul.f32 %v188, %v543
      %v562 = vmul.f32 %v189, %v543
      %v563 = vmul.f32 %v190, %v543
      %v564 = vmul.f32 %v191, %v543
      %v565 = vmul.f32 %v192, %v543
      %v566 = vmul.f32 %v193, %v543
      %v567 = vmul.f32 %v194, %v543
      %v568 = vmul.f32 %v195, %v543
      %v569 = vmul.f32 %v196, %v543
      %v570 = vmul.f32 %v197, %v543
      %v571 = vmul.f32 %v198, %v543
      %v572 = vmul.f32 %v199, %v543
      %v573 = vmul.f32 %v200, %v543
      %v574 = vmul.f32 %v201, %v543
      %v575 = vmul.f32 %v202, %v543
      %v576 = vmul.f32 %v203, %v543
      %v577 = vmul.f32 %v204, %v543
      %v578 = vmul.f32 %v205, %v543
      %v579 = vmul.f32 %v206, %v543
      %v580 = vmul.f32 %v207, %v543
      %v581 = vmul.f32 %v208, %v543
      %v582 = vmul.f32 %v209, %v543
      %v583 = vmul.f32 %v210, %v543
      %v584 = vmul.f32 %v211, %v543
      %v585 = vmul.f32 %v212, %v543
      %v586 = vmul.f32 %v213, %v543
      %v587 = vmul.f32 %v214, %v543
      %v588 = vmul.f32 %v215, %v543
      %v589 = vmul.f32 %v216, %v543
      %v590 = vmul.f32 %v217, %v543
      %v591 = vmul.f32 %v218, %v543
      %vm640 = vcmask 1045504
      %v641 = vrot.slane %v544, 2
      %v642 = vrot.slane %v545, 2
      %v643 = vsel %vm640, %v641, %v642
      %v644 = vrot.slane %v546, 2
      %v645 = vsel %vm640, %v642, %v644
      %v646 = vrot.slane %v547, 2
      %v647 = vrot.slane %v548, 2
      %v648 = vsel %vm640, %v646, %v647
      %v649 = vrot.slane %v549, 2
      %v650 = vsel %vm640, %v647, %v649
      %v651 = vrot.slane %v550, 2
      %v652 = vrot.slane %v551, 2
      %v653 = vsel %vm640, %v651, %v652
      %v654 = vrot.slane %v552, 2
      %v655 = vsel %vm640, %v652, %v654
      %v656 = vrot.slane %v553, 2
      %v657 = vrot.slane %v554, 2
      %v658 = vsel %vm640, %v656, %v657
      %v659 = vrot.slane %v555, 2
      %v660 = vsel %vm640, %v657, %v659
      %v661 = vrot.slane %v556, 2
      %v662 = vrot.slane %v557, 2
      %v663 = vsel %vm640, %v661, %v662
      %v664 = vrot.slane %v558, 2
      %v665 = vsel %vm640, %v662, %v664
      %v666 = vrot.slane %v559, 2
      %v667 = vrot.slane %v560, 2
      %v668 = vsel %vm640, %v666, %v667
      %v669 = vrot.slane %v561, 2
      %v670 = vsel %vm640, %v667, %v669
      %v671 = vrot.slane %v562, 2
      %v672 = vrot.slane %v563, 2
      %v673 = vsel %vm640, %v671, %v672
      %v674 = vrot.slane %v564, 2
      %v675 = vsel %vm640, %v672, %v674
      %v676 = vrot.slane %v565, 2
      %v677 = vrot.slane %v566, 2
      %v678 = vsel %vm640, %v676, %v677
      %v679 = vrot.slane %v567, 2
      %v680 = vsel %vm640, %v677, %v679
      %v681 = vrot.slane %v568, 2
      %v682 = vrot.slane %v569, 2
      %v683 = vsel %vm640, %v681, %v682
      %v684 = vrot.slane %v570, 2
      %v685 = vsel %vm640, %v682, %v684
      %v686 = vrot.slane %v571, 2
      %v687 = vrot.slane %v572, 2
      %v688 = vsel %vm640, %v686, %v687
      %v689 = vrot.slane %v573, 2
      %v690 = vsel %vm640, %v687, %v689
      %v691 = vrot.slane %v574, 2
      %v692 = vrot.slane %v575, 2
      %v693 = vsel %vm640, %v691, %v692
      %v694 = vrot.slane %v576, 2
      %v695 = vsel %vm640, %v692, %v694
      %v696 = vrot.slane %v577, 2
      %v697 = vrot.slane %v578, 2
      %v698 = vsel %vm640, %v696, %v697
      %v699 = vrot.slane %v579, 2
      %v700 = vsel %vm640, %v697, %v699
      %v701 = vrot.slane %v580, 2
      %v702 = vrot.slane %v581, 2
      %v703 = vsel %vm640, %v701, %v702
      %v704 = vrot.slane %v582, 2
      %v705 = vsel %vm640, %v702, %v704
      %v706 = vrot.slane %v583, 2
      %v707 = vrot.slane %v584, 2
      %v708 = vsel %vm640, %v706, %v707
      %v709 = vrot.slane %v585, 2
      %v710 = vsel %vm640, %v707, %v709
      %v711 = vrot.slane %v586, 2
      %v712 = vrot.slane %v587, 2
      %v713 = vsel %vm640, %v711, %v712
      %v714 = vrot.slane %v588, 2
      %v715 = vsel %vm640, %v712, %v714
      %v716 = vrot.slane %v589, 2
      %v717 = vrot.slane %v590, 2
      %v718 = vsel %vm640, %v716, %v717
      %v719 = vrot.slane %v591, 2
      %v720 = vsel %vm640, %v717, %v719
      %v753 = vadd.f32 %v508, %v643
      %v754 = vadd.f32 %v509, %v645
      %v755 = vadd.f32 %v510, %v648
      %v756 = vadd.f32 %v511, %v650
      %v757 = vadd.f32 %v512, %v653
      %v758 = vadd.f32 %v513, %v655
      %v759 = vadd.f32 %v514, %v658
      %v760 = vadd.f32 %v515, %v660
      %v761 = vadd.f32 %v516, %v663
      %v762 = vadd.f32 %v517, %v665
      %v763 = vadd.f32 %v518, %v668
      %v764 = vadd.f32 %v519, %v670
      %v765 = vadd.f32 %v520, %v673
      %v766 = vadd.f32 %v521, %v675
      %v767 = vadd.f32 %v522, %v678
      %v768 = vadd.f32 %v523, %v680
      %v769 = vadd.f32 %v524, %v683
      %v770 = vadd.f32 %v525, %v685
      %v771 = vadd.f32 %v526, %v688
      %v772 = vadd.f32 %v527, %v690
      %v773 = vadd.f32 %v528, %v693
      %v774 = vadd.f32 %v529, %v695
      %v775 = vadd.f32 %v530, %v698
      %v776 = vadd.f32 %v531, %v700
      %v777 = vadd.f32 %v532, %v703
      %v778 = vadd.f32 %v533, %v705
      %v779 = vadd.f32 %v534, %v708
      %v780 = vadd.f32 %v535, %v710
      %v781 = vadd.f32 %v536, %v713
      %v782 = vadd.f32 %v537, %v715
      %v783 = vadd.f32 %v538, %v718
      %v784 = vadd.f32 %v539, %v720
      %v785 = vlaneseq
      %v786 = vshrl.u32 %v785, 7
      %v787 = vsub.s32 3, %v786
      %v788 = vrot.slane %v225, %v787
      %v789 = vmul.f32 %v174, %v788
      %v790 = vmul.f32 %v175, %v788
      %v791 = vmul.f32 %v177, %v788
      %v792 = vmul.f32 %v178, %v788
      %v793 = vmul.f32 %v180, %v788
      %v794 = vmul.f32 %v181, %v788
      %v795 = vmul.f32 %v183, %v788
      %v796 = vmul.f32 %v184, %v788
      %v797 = vmul.f32 %v186, %v788
      %v798 = vmul.f32 %v187, %v788
      %v799 = vmul.f32 %v189, %v788
      %v800 = vmul.f32 %v190, %v788
      %v801 = vmul.f32 %v192, %v788
      %v802 = vmul.f32 %v193, %v788
      %v803 = vmul.f32 %v195, %v788
      %v804 = vmul.f32 %v196, %v788
      %v805 = vmul.f32 %v198, %v788
      %v806 = vmul.f32 %v199, %v788
      %v807 = vmul.f32 %v201, %v788
      %v808 = vmul.f32 %v202, %v788
      %v809 = vmul.f32 %v204, %v788
      %v810 = vmul.f32 %v205, %v788
      %v811 = vmul.f32 %v207, %v788
      %v812 = vmul.f32 %v208, %v788
      %v813 = vmul.f32 %v210, %v788
      %v814 = vmul.f32 %v211, %v788
      %v815 = vmul.f32 %v213, %v788
      %v816 = vmul.f32 %v214, %v788
      %v817 = vmul.f32 %v216, %v788
      %v818 = vmul.f32 %v217, %v788
      %v819 = vmul.f32 %v219, %v788
      %v820 = vmul.f32 %v220, %v788
      %v821 = vadd.f32 %v753, %v789
      %v822 = vadd.f32 %v754, %v790
      %v823 = vadd.f32 %v755, %v791
      %v824 = vadd.f32 %v756, %v792
      %v825 = vadd.f32 %v757, %v793
      %v826 = vadd.f32 %v758, %v794
      %v827 = vadd.f32 %v759, %v795
      %v828 = vadd.f32 %v760, %v796
      %v829 = vadd.f32 %v761, %v797
      %v830 = vadd.f32 %v762, %v798
      %v831 = vadd.f32 %v763, %v799
      %v832 = vadd.f32 %v764, %v800
      %v833 = vadd.f32 %v765, %v801
      %v834 = vadd.f32 %v766, %v802
      %v835 = vadd.f32 %v767, %v803
      %v836 = vadd.f32 %v768, %v804
      %v837 = vadd.f32 %v769, %v805
      %v838 = vadd.f32 %v770, %v806
      %v839 = vadd.f32 %v771, %v807
      %v840 = vadd.f32 %v772, %v808
      %v841 = vadd.f32 %v773, %v809
      %v842 = vadd.f32 %v774, %v810
      %v843 = vadd.f32 %v775, %v811
      %v844 = vadd.f32 %v776, %v812
      %v845 = vadd.f32 %v777, %v813
      %v846 = vadd.f32 %v778, %v814
      %v847 = vadd.f32 %v779, %v815
      %v848 = vadd.f32 %v780, %v816
      %v849 = vadd.f32 %v781, %v817
      %v850 = vadd.f32 %v782, %v818
      %v851 = vadd.f32 %v783, %v819
      %v852 = vadd.f32 %v784, %v820
      %v853 = vlaneseq
      %v854 = vshrl.u32 %v853, 7
      %v855 = vsub.s32 4, %v854
      %v856 = vrot.slane %v225, %v855
      %v857 = vmul.f32 %v174, %v856
      %v858 = vmul.f32 %v175, %v856
      %v859 = vmul.f32 %v176, %v856
      %v860 = vmul.f32 %v177, %v856
      %v861 = vmul.f32 %v178, %v856
      %v862 = vmul.f32 %v179, %v856
      %v863 = vmul.f32 %v180, %v856
      %v864 = vmul.f32 %v181, %v856
      %v865 = vmul.f32 %v182, %v856
      %v866 = vmul.f32 %v183, %v856
      %v867 = vmul.f32 %v184, %v856
      %v868 = vmul.f32 %v185, %v856
      %v869 = vmul.f32 %v186, %v856
      %v870 = vmul.f32 %v187, %v856
      %v871 = vmul.f32 %v188, %v856
      %v872 = vmul.f32 %v189, %v856
      %v873 = vmul.f32 %v190, %v856
      %v874 = vmul.f32 %v191, %v856
      %v875 = vmul.f32 %v192, %v856
      %v876 = vmul.f32 %v193, %v856
      %v877 = vmul.f32 %v194, %v856
      %v878 = vmul.f32 %v195, %v856
      %v879 = vmul.f32 %v196, %v856
      %v880 = vmul.f32 %v197, %v856
      %v881 = vmul.f32 %v198, %v856
      %v882 = vmul.f32 %v199, %v856
      %v883 = vmul.f32 %v200, %v856
      %v884 = vmul.f32 %v201, %v856
      %v885 = vmul.f32 %v202, %v856
      %v886 = vmul.f32 %v203, %v856
      %v887 = vmul.f32 %v204, %v856
      %v888 = vmul.f32 %v205, %v856
      %v889 = vmul.f32 %v206, %v856
      %v890 = vmul.f32 %v207, %v856
      %v891 = vmul.f32 %v208, %v856
      %v892 = vmul.f32 %v209, %v856
      %v893 = vmul.f32 %v210, %v856
      %v894 = vmul.f32 %v211, %v856
      %v895 = vmul.f32 %v212, %v856
      %v896 = vmul.f32 %v213, %v856
      %v897 = vmul.f32 %v214, %v856
      %v898 = vmul.f32 %v215, %v856
      %v899 = vmul.f32 %v216, %v856
      %v900 = vmul.f32 %v217, %v856
      %v901 = vmul.f32 %v218, %v856
      %v902 = vmul.f32 %v219, %v856
      %v903 = vmul.f32 %v220, %v856
      %v904 = vmul.f32 %v221, %v856
      %v953 = vrot.slane %v857, 1
      %v954 = vrot.slane %v858, 1
      %v955 = vsel %vm395, %v953, %v954
      %v956 = vrot.slane %v859, 1
      %v957 = vsel %vm395, %v954, %v956
      %v958 = vrot.slane %v860, 1
      %v959 = vrot.slane %v861, 1
      %v960 = vsel %vm395, %v958, %v959
      %v961 = vrot.slane %v862, 1
      %v962 = vsel %vm395, %v959, %v961
      %v963 = vrot.slane %v863, 1
      %v964 = vrot.slane %v864, 1
      %v965 = vsel %vm395, %v963, %v964
      %v966 = vrot.slane %v865, 1
      %v967 = vsel %vm395, %v964, %v966
      %v968 = vrot.slane %v866, 1
      %v969 = vrot.slane %v867, 1
      %v970 = vsel %vm395, %v968, %v969
      %v971 = vrot.slane %v868, 1
      %v972 = vsel %vm395, %v969, %v971
      %v973 = vrot.slane %v869, 1
      %v974 = vrot.slane %v870, 1
      %v975 = vsel %vm395, %v973, %v974
      %v976 = vrot.slane %v871, 1
      %v977 = vsel %vm395, %v974, %v976
      %v978 = vrot.slane %v872, 1
      %v979 = vrot.slane %v873, 1
      %v980 = vsel %vm395, %v978, %v979
      %v981 = vrot.slane %v874, 1
      %v982 = vsel %vm395, %v979, %v981
      %v983 = vrot.slane %v875, 1
      %v984 = vrot.slane %v876, 1
      %v985 = vsel %vm395, %v983, %v984
      %v986 = vrot.slane %v877, 1
      %v987 = vsel %vm395, %v984, %v986
      %v988 = vrot.slane %v878, 1
      %v989 = vrot.slane %v879, 1
      %v990 = vsel %vm395, %v988, %v989
      %v991 = vrot.slane %v880, 1
      %v992 = vsel %vm395, %v989, %v991
      %v993 = vrot.slane %v881, 1
      %v994 = vrot.slane %v882, 1
      %v995 = vsel %vm395, %v993, %v994
      %v996 = vrot.slane %v883, 1
      %v997 = vsel %vm395, %v994, %v996
      %v998 = vrot.slane %v884, 1
      %v999 = vrot.slane %v885, 1
      %v1000 = vsel %vm395, %v998, %v999
      %v1001 = vrot.slane %v886, 1
      %v1002 = vsel %vm395, %v999, %v1001
      %v1003 = vrot.slane %v887, 1
      %v1004 = vrot.slane %v888, 1
      %v1005 = vsel %vm395, %v1003, %v1004
      %v1006 = vrot.slane %v889, 1
      %v1007 = vsel %vm395, %v1004, %v1006
      %v1008 = vrot.slane %v890, 1
      %v1009 = vrot.slane %v891, 1
      %v1010 = vsel %vm395, %v1008, %v1009
      %v1011 = vrot.slane %v892, 1
      %v1012 = vsel %vm395, %v1009, %v1011
      %v1013 = vrot.slane %v893, 1
      %v1014 = vrot.slane %v894, 1
      %v1015 = vsel %vm395, %v1013, %v1014
      %v1016 = vrot.slane %v895, 1
      %v1017 = vsel %vm395, %v1014, %v1016
      %v1018 = vrot.slane %v896, 1
      %v1019 = vrot.slane %v897, 1
      %v1020 = vsel %vm395, %v1018, %v1019
      %v1021 = vrot.slane %v898, 1
      %v1022 = vsel %vm395, %v1019, %v1021
      %v1023 = vrot.slane %v899, 1
      %v1024 = vrot.slane %v900, 1
      %v1025 = vsel %vm395, %v1023, %v1024
      %v1026 = vrot.slane %v901, 1
      %v1027 = vsel %vm395, %v1024, %v1026
      %v1028 = vrot.slane %v902, 1
      %v1029 = vrot.slane %v903, 1
      %v1030 = vsel %vm395, %v1028, %v1029
      %v1031 = vrot.slane %v904, 1
      %v1032 = vsel %vm395, %v1029, %v1031
      %v1065 = vadd.f32 %v821, %v955
      %v1066 = vadd.f32 %v822, %v957
      %v1067 = vadd.f32 %v823, %v960
      %v1068 = vadd.f32 %v824, %v962
      %v1069 = vadd.f32 %v825, %v965
      %v1070 = vadd.f32 %v826, %v967
      %v1071 = vadd.f32 %v827, %v970
      %v1072 = vadd.f32 %v828, %v972
      %v1073 = vadd.f32 %v829, %v975
      %v1074 = vadd.f32 %v830, %v977
      %v1075 = vadd.f32 %v831, %v980
      %v1076 = vadd.f32 %v832, %v982
      %v1077 = vadd.f32 %v833, %v985
      %v1078 = vadd.f32 %v834, %v987
      %v1079 = vadd.f32 %v835, %v990
      %v1080 = vadd.f32 %v836, %v992
      %v1081 = vadd.f32 %v837, %v995
      %v1082 = vadd.f32 %v838, %v997
      %v1083 = vadd.f32 %v839, %v1000
      %v1084 = vadd.f32 %v840, %v1002
      %v1085 = vadd.f32 %v841, %v1005
      %v1086 = vadd.f32 %v842, %v1007
      %v1087 = vadd.f32 %v843, %v1010
      %v1088 = vadd.f32 %v844, %v1012
      %v1089 = vadd.f32 %v845, %v1015
      %v1090 = vadd.f32 %v846, %v1017
      %v1091 = vadd.f32 %v847, %v1020
      %v1092 = vadd.f32 %v848, %v1022
      %v1093 = vadd.f32 %v849, %v1025
      %v1094 = vadd.f32 %v850, %v1027
      %v1095 = vadd.f32 %v851, %v1030
      %v1096 = vadd.f32 %v852, %v1032
      %v1097 = vlaneseq
      %v1098 = vshrl.u32 %v1097, 7
      %v1099 = vsub.s32 5, %v1098
      %v1100 = vrot.slane %v225, %v1099
      %v1101 = vmul.f32 %v174, %v1100
      %v1102 = vmul.f32 %v175, %v1100
      %v1103 = vmul.f32 %v176, %v1100
      %v1104 = vmul.f32 %v177, %v1100
      %v1105 = vmul.f32 %v178, %v1100
      %v1106 = vmul.f32 %v179, %v1100
      %v1107 = vmul.f32 %v180, %v1100
      %v1108 = vmul.f32 %v181, %v1100
      %v1109 = vmul.f32 %v182, %v1100
      %v1110 = vmul.f32 %v183, %v1100
      %v1111 = vmul.f32 %v184, %v1100
      %v1112 = vmul.f32 %v185, %v1100
      %v1113 = vmul.f32 %v186, %v1100
      %v1114 = vmul.f32 %v187, %v1100
      %v1115 = vmul.f32 %v188, %v1100
      %v1116 = vmul.f32 %v189, %v1100
      %v1117 = vmul.f32 %v190, %v1100
      %v1118 = vmul.f32 %v191, %v1100
      %v1119 = vmul.f32 %v192, %v1100
      %v1120 = vmul.f32 %v193, %v1100
      %v1121 = vmul.f32 %v194, %v1100
      %v1122 = vmul.f32 %v195, %v1100
      %v1123 = vmul.f32 %v196, %v1100
      %v1124 = vmul.f32 %v197, %v1100
      %v1125 = vmul.f32 %v198, %v1100
      %v1126 = vmul.f32 %v199, %v1100
      %v1127 = vmul.f32 %v200, %v1100
      %v1128 = vmul.f32 %v201, %v1100
      %v1129 = vmul.f32 %v202, %v1100
      %v1130 = vmul.f32 %v203, %v1100
      %v1131 = vmul.f32 %v204, %v1100
      %v1132 = vmul.f32 %v205, %v1100
      %v1133 = vmul.f32 %v206, %v1100
      %v1134 = vmul.f32 %v207, %v1100
      %v1135 = vmul.f32 %v208, %v1100
      %v1136 = vmul.f32 %v209, %v1100
      %v1137 = vmul.f32 %v210, %v1100
      %v1138 = vmul.f32 %v211, %v1100
      %v1139 = vmul.f32 %v212, %v1100
      %v1140 = vmul.f32 %v213, %v1100
      %v1141 = vmul.f32 %v214, %v1100
      %v1142 = vmul.f32 %v215, %v1100
      %v1143 = vmul.f32 %v216, %v1100
      %v1144 = vmul.f32 %v217, %v1100
      %v1145 = vmul.f32 %v218, %v1100
      %v1146 = vmul.f32 %v219, %v1100
      %v1147 = vmul.f32 %v220, %v1100
      %v1148 = vmul.f32 %v221, %v1100
      %v1197 = vrot.slane %v1101, 2
      %v1198 = vrot.slane %v1102, 2
      %v1199 = vsel %vm640, %v1197, %v1198
      %v1200 = vrot.slane %v1103, 2
      %v1201 = vsel %vm640, %v1198, %v1200
      %v1202 = vrot.slane %v1104, 2
      %v1203 = vrot.slane %v1105, 2
      %v1204 = vsel %vm640, %v1202, %v1203
      %v1205 = vrot.slane %v1106, 2
      %v1206 = vsel %vm640, %v1203, %v1205
      %v1207 = vrot.slane %v1107, 2
      %v1208 = vrot.slane %v1108, 2
      %v1209 = vsel %vm640, %v1207, %v1208
      %v1210 = vrot.slane %v1109, 2
      %v1211 = vsel %vm640, %v1208, %v1210
      %v1212 = vrot.slane %v1110, 2
      %v1213 = vrot.slane %v1111, 2
      %v1214 = vsel %vm640, %v1212, %v1213
      %v1215 = vrot.slane %v1112, 2
      %v1216 = vsel %vm640, %v1213, %v1215
      %v1217 = vrot.slane %v1113, 2
      %v1218 = vrot.slane %v1114, 2
      %v1219 = vsel %vm640, %v1217, %v1218
      %v1220 = vrot.slane %v1115, 2
      %v1221 = vsel %vm640, %v1218, %v1220
      %v1222 = vrot.slane %v1116, 2
      %v1223 = vrot.slane %v1117, 2
      %v1224 = vsel %vm640, %v1222, %v1223
      %v1225 = vrot.slane %v1118, 2
      %v1226 = vsel %vm640, %v1223, %v1225
      %v1227 = vrot.slane %v1119, 2
      %v1228 = vrot.slane %v1120, 2
      %v1229 = vsel %vm640, %v1227, %v1228
      %v1230 = vrot.slane %v1121, 2
      %v1231 = vsel %vm640, %v1228, %v1230
      %v1232 = vrot.slane %v1122, 2
      %v1233 = vrot.slane %v1123, 2
      %v1234 = vsel %vm640, %v1232, %v1233
      %v1235 = vrot.slane %v1124, 2
      %v1236 = vsel %vm640, %v1233, %v1235
      %v1237 = vrot.slane %v1125, 2
      %v1238 = vrot.slane %v1126, 2
      %v1239 = vsel %vm640, %v1237, %v1238
      %v1240 = vrot.slane %v1127, 2
      %v1241 = vsel %vm640, %v1238, %v1240
      %v1242 = vrot.slane %v1128, 2
      %v1243 = vrot.slane %v1129, 2
      %v1244 = vsel %vm640, %v1242, %v1243
      %v1245 = vrot.slane %v1130, 2
      %v1246 = vsel %vm640, %v1243, %v1245
      %v1247 = vrot.slane %v1131, 2
      %v1248 = vrot.slane %v1132, 2
      %v1249 = vsel %vm640, %v1247, %v1248
      %v1250 = vrot.slane %v1133, 2
      %v1251 = vsel %vm640, %v1248, %v1250
      %v1252 = vrot.slane %v1134, 2
      %v1253 = vrot.slane %v1135, 2
      %v1254 = vsel %vm640, %v1252, %v1253
      %v1255 = vrot.slane %v1136, 2
      %v1256 = vsel %vm640, %v1253, %v1255
      %v1257 = vrot.slane %v1137, 2
      %v1258 = vrot.slane %v1138, 2
      %v1259 = vsel %vm640, %v1257, %v1258
      %v1260 = vrot.slane %v1139, 2
      %v1261 = vsel %vm640, %v1258, %v1260
      %v1262 = vrot.slane %v1140, 2
      %v1263 = vrot.slane %v1141, 2
      %v1264 = vsel %vm640, %v1262, %v1263
      %v1265 = vrot.slane %v1142, 2
      %v1266 = vsel %vm640, %v1263, %v1265
      %v1267 = vrot.slane %v1143, 2
      %v1268 = vrot.slane %v1144, 2
      %v1269 = vsel %vm640, %v1267, %v1268
      %v1270 = vrot.slane %v1145, 2
      %v1271 = vsel %vm640, %v1268, %v1270
      %v1272 = vrot.slane %v1146, 2
      %v1273 = vrot.slane %v1147, 2
      %v1274 = vsel %vm640, %v1272, %v1273
      %v1275 = vrot.slane %v1148, 2
      %v1276 = vsel %vm640, %v1273, %v1275
      %v1309 = vadd.f32 %v1065, %v1199
      %v1310 = vadd.f32 %v1066, %v1201
      %v1311 = vadd.f32 %v1067, %v1204
      %v1312 = vadd.f32 %v1068, %v1206
      %v1313 = vadd.f32 %v1069, %v1209
      %v1314 = vadd.f32 %v1070, %v1211
      %v1315 = vadd.f32 %v1071, %v1214
      %v1316 = vadd.f32 %v1072, %v1216
      %v1317 = vadd.f32 %v1073, %v1219
      %v1318 = vadd.f32 %v1074, %v1221
      %v1319 = vadd.f32 %v1075, %v1224
      %v1320 = vadd.f32 %v1076, %v1226
      %v1321 = vadd.f32 %v1077, %v1229
      %v1322 = vadd.f32 %v1078, %v1231
      %v1323 = vadd.f32 %v1079, %v1234
      %v1324 = vadd.f32 %v1080, %v1236
      %v1325 = vadd.f32 %v1081, %v1239
      %v1326 = vadd.f32 %v1082, %v1241
      %v1327 = vadd.f32 %v1083, %v1244
      %v1328 = vadd.f32 %v1084, %v1246
      %v1329 = vadd.f32 %v1085, %v1249
      %v1330 = vadd.f32 %v1086, %v1251
      %v1331 = vadd.f32 %v1087, %v1254
      %v1332 = vadd.f32 %v1088, %v1256
      %v1333 = vadd.f32 %v1089, %v1259
      %v1334 = vadd.f32 %v1090, %v1261
      %v1335 = vadd.f32 %v1091, %v1264
      %v1336 = vadd.f32 %v1092, %v1266
      %v1337 = vadd.f32 %v1093, %v1269
      %v1338 = vadd.f32 %v1094, %v1271
      %v1339 = vadd.f32 %v1095, %v1274
      %v1340 = vadd.f32 %v1096, %v1276
      %v1341 = vlaneseq
      %v1342 = vshrl.u32 %v1341, 7
      %v1343 = vsub.s32 6, %v1342
      %v1344 = vrot.slane %v225, %v1343
      %v1345 = vmul.f32 %v177, %v1344
      %v1346 = vmul.f32 %v178, %v1344
      %v1347 = vmul.f32 %v180, %v1344
      %v1348 = vmul.f32 %v181, %v1344
      %v1349 = vmul.f32 %v183, %v1344
      %v1350 = vmul.f32 %v184, %v1344
      %v1351 = vmul.f32 %v186, %v1344
      %v1352 = vmul.f32 %v187, %v1344
      %v1353 = vmul.f32 %v189, %v1344
      %v1354 = vmul.f32 %v190, %v1344
      %v1355 = vmul.f32 %v192, %v1344
      %v1356 = vmul.f32 %v193, %v1344
      %v1357 = vmul.f32 %v195, %v1344
      %v1358 = vmul.f32 %v196, %v1344
      %v1359 = vmul.f32 %v198, %v1344
      %v1360 = vmul.f32 %v199, %v1344
      %v1361 = vmul.f32 %v201, %v1344
      %v1362 = vmul.f32 %v202, %v1344
      %v1363 = vmul.f32 %v204, %v1344
      %v1364 = vmul.f32 %v205, %v1344
      %v1365 = vmul.f32 %v207, %v1344
      %v1366 = vmul.f32 %v208, %v1344
      %v1367 = vmul.f32 %v210, %v1344
      %v1368 = vmul.f32 %v211, %v1344
      %v1369 = vmul.f32 %v213, %v1344
      %v1370 = vmul.f32 %v214, %v1344
      %v1371 = vmul.f32 %v216, %v1344
      %v1372 = vmul.f32 %v217, %v1344
      %v1373 = vmul.f32 %v219, %v1344
      %v1374 = vmul.f32 %v220, %v1344
      %v1375 = vmul.f32 %v222, %v1344
      %v1376 = vmul.f32 %v223, %v1344
      %v1377 = vadd.f32 %v1309, %v1345
      %v1378 = vadd.f32 %v1310, %v1346
      %v1379 = vadd.f32 %v1311, %v1347
      %v1380 = vadd.f32 %v1312, %v1348
      %v1381 = vadd.f32 %v1313, %v1349
      %v1382 = vadd.f32 %v1314, %v1350
      %v1383 = vadd.f32 %v1315, %v1351
      %v1384 = vadd.f32 %v1316, %v1352
      %v1385 = vadd.f32 %v1317, %v1353
      %v1386 = vadd.f32 %v1318, %v1354
      %v1387 = vadd.f32 %v1319, %v1355
      %v1388 = vadd.f32 %v1320, %v1356
      %v1389 = vadd.f32 %v1321, %v1357
      %v1390 = vadd.f32 %v1322, %v1358
      %v1391 = vadd.f32 %v1323, %v1359
      %v1392 = vadd.f32 %v1324, %v1360
      %v1393 = vadd.f32 %v1325, %v1361
      %v1394 = vadd.f32 %v1326, %v1362
      %v1395 = vadd.f32 %v1327, %v1363
      %v1396 = vadd.f32 %v1328, %v1364
      %v1397 = vadd.f32 %v1329, %v1365
      %v1398 = vadd.f32 %v1330, %v1366
      %v1399 = vadd.f32 %v1331, %v1367
      %v1400 = vadd.f32 %v1332, %v1368
      %v1401 = vadd.f32 %v1333, %v1369
      %v1402 = vadd.f32 %v1334, %v1370
      %v1403 = vadd.f32 %v1335, %v1371
      %v1404 = vadd.f32 %v1336, %v1372
      %v1405 = vadd.f32 %v1337, %v1373
      %v1406 = vadd.f32 %v1338, %v1374
      %v1407 = vadd.f32 %v1339, %v1375
      %v1408 = vadd.f32 %v1340, %v1376
      %v1409 = vlaneseq
      %v1410 = vshrl.u32 %v1409, 7
      %v1411 = vsub.s32 7, %v1410
      %v1412 = vrot.slane %v225, %v1411
      %v1413 = vmul.f32 %v177, %v1412
      %v1414 = vmul.f32 %v178, %v1412
      %v1415 = vmul.f32 %v179, %v1412
      %v1416 = vmul.f32 %v180, %v1412
      %v1417 = vmul.f32 %v181, %v1412
      %v1418 = vmul.f32 %v182, %v1412
      %v1419 = vmul.f32 %v183, %v1412
      %v1420 = vmul.f32 %v184, %v1412
      %v1421 = vmul.f32 %v185, %v1412
      %v1422 = vmul.f32 %v186, %v1412
      %v1423 = vmul.f32 %v187, %v1412
      %v1424 = vmul.f32 %v188, %v1412
      %v1425 = vmul.f32 %v189, %v1412
      %v1426 = vmul.f32 %v190, %v1412
      %v1427 = vmul.f32 %v191, %v1412
      %v1428 = vmul.f32 %v192, %v1412
      %v1429 = vmul.f32 %v193, %v1412
      %v1430 = vmul.f32 %v194, %v1412
      %v1431 = vmul.f32 %v195, %v1412
      %v1432 = vmul.f32 %v196, %v1412
      %v1433 = vmul.f32 %v197, %v1412
      %v1434 = vmul.f32 %v198, %v1412
      %v1435 = vmul.f32 %v199, %v1412
      %v1436 = vmul.f32 %v200, %v1412
      %v1437 = vmul.f32 %v201, %v1412
      %v1438 = vmul.f32 %v202, %v1412
      %v1439 = vmul.f32 %v203, %v1412
      %v1440 = vmul.f32 %v204, %v1412
      %v1441 = vmul.f32 %v205, %v1412
      %v1442 = vmul.f32 %v206, %v1412
      %v1443 = vmul.f32 %v207, %v1412
      %v1444 = vmul.f32 %v208, %v1412
      %v1445 = vmul.f32 %v209, %v1412
      %v1446 = vmul.f32 %v210, %v1412
      %v1447 = vmul.f32 %v211, %v1412
      %v1448 = vmul.f32 %v212, %v1412
      %v1449 = vmul.f32 %v213, %v1412
      %v1450 = vmul.f32 %v214, %v1412
      %v1451 = vmul.f32 %v215, %v1412
      %v1452 = vmul.f32 %v216, %v1412
      %v1453 = vmul.f32 %v217, %v1412
      %v1454 = vmul.f32 %v218, %v1412
      %v1455 = vmul.f32 %v219, %v1412
      %v1456 = vmul.f32 %v220, %v1412
      %v1457 = vmul.f32 %v221, %v1412
      %v1458 = vmul.f32 %v222, %v1412
      %v1459 = vmul.f32 %v223, %v1412
      %v1460 = vmul.f32 %v224, %v1412
      %v1509 = vrot.slane %v1413, 1
      %v1510 = vrot.slane %v1414, 1
      %v1511 = vsel %vm395, %v1509, %v1510
      %v1512 = vrot.slane %v1415, 1
      %v1513 = vsel %vm395, %v1510, %v1512
      %v1514 = vrot.slane %v1416, 1
      %v1515 = vrot.slane %v1417, 1
      %v1516 = vsel %vm395, %v1514, %v1515
      %v1517 = vrot.slane %v1418, 1
      %v1518 = vsel %vm395, %v1515, %v1517
      %v1519 = vrot.slane %v1419, 1
      %v1520 = vrot.slane %v1420, 1
      %v1521 = vsel %vm395, %v1519, %v1520
      %v1522 = vrot.slane %v1421, 1
      %v1523 = vsel %vm395, %v1520, %v1522
      %v1524 = vrot.slane %v1422, 1
      %v1525 = vrot.slane %v1423, 1
      %v1526 = vsel %vm395, %v1524, %v1525
      %v1527 = vrot.slane %v1424, 1
      %v1528 = vsel %vm395, %v1525, %v1527
      %v1529 = vrot.slane %v1425, 1
      %v1530 = vrot.slane %v1426, 1
      %v1531 = vsel %vm395, %v1529, %v1530
      %v1532 = vrot.slane %v1427, 1
      %v1533 = vsel %vm395, %v1530, %v1532
      %v1534 = vrot.slane %v1428, 1
      %v1535 = vrot.slane %v1429, 1
      %v1536 = vsel %vm395, %v1534, %v1535
      %v1537 = vrot.slane %v1430, 1
      %v1538 = vsel %vm395, %v1535, %v1537
      %v1539 = vrot.slane %v1431, 1
      %v1540 = vrot.slane %v1432, 1
      %v1541 = vsel %vm395, %v1539, %v1540
      %v1542 = vrot.slane %v1433, 1
      %v1543 = vsel %vm395, %v1540, %v1542
      %v1544 = vrot.slane %v1434, 1
      %v1545 = vrot.slane %v1435, 1
      %v1546 = vsel %vm395, %v1544, %v1545
      %v1547 = vrot.slane %v1436, 1
      %v1548 = vsel %vm395, %v1545, %v1547
      %v1549 = vrot.slane %v1437, 1
      %v1550 = vrot.slane %v1438, 1
      %v1551 = vsel %vm395, %v1549, %v1550
      %v1552 = vrot.slane %v1439, 1
      %v1553 = vsel %vm395, %v1550, %v1552
      %v1554 = vrot.slane %v1440, 1
      %v1555 = vrot.slane %v1441, 1
      %v1556 = vsel %vm395, %v1554, %v1555
      %v1557 = vrot.slane %v1442, 1
      %v1558 = vsel %vm395, %v1555, %v1557
      %v1559 = vrot.slane %v1443, 1
      %v1560 = vrot.slane %v1444, 1
      %v1561 = vsel %vm395, %v1559, %v1560
      %v1562 = vrot.slane %v1445, 1
      %v1563 = vsel %vm395, %v1560, %v1562
      %v1564 = vrot.slane %v1446, 1
      %v1565 = vrot.slane %v1447, 1
      %v1566 = vsel %vm395, %v1564, %v1565
      %v1567 = vrot.slane %v1448, 1
      %v1568 = vsel %vm395, %v1565, %v1567
      %v1569 = vrot.slane %v1449, 1
      %v1570 = vrot.slane %v1450, 1
      %v1571 = vsel %vm395, %v1569, %v1570
      %v1572 = vrot.slane %v1451, 1
      %v1573 = vsel %vm395, %v1570, %v1572
      %v1574 = vrot.slane %v1452, 1
      %v1575 = vrot.slane %v1453, 1
      %v1576 = vsel %vm395, %v1574, %v1575
      %v1577 = vrot.slane %v1454, 1
      %v1578 = vsel %vm395, %v1575, %v1577
      %v1579 = vrot.slane %v1455, 1
      %v1580 = vrot.slane %v1456, 1
      %v1581 = vsel %vm395, %v1579, %v1580
      %v1582 = vrot.slane %v1457, 1
      %v1583 = vsel %vm395, %v1580, %v1582
      %v1584 = vrot.slane %v1458, 1
      %v1585 = vrot.slane %v1459, 1
      %v1586 = vsel %vm395, %v1584, %v1585
      %v1587 = vrot.slane %v1460, 1
      %v1588 = vsel %vm395, %v1585, %v1587
      %v1621 = vadd.f32 %v1377, %v1511
      %v1622 = vadd.f32 %v1378, %v1513
      %v1623 = vadd.f32 %v1379, %v1516
      %v1624 = vadd.f32 %v1380, %v1518
      %v1625 = vadd.f32 %v1381, %v1521
      %v1626 = vadd.f32 %v1382, %v1523
      %v1627 = vadd.f32 %v1383, %v1526
      %v1628 = vadd.f32 %v1384, %v1528
      %v1629 = vadd.f32 %v1385, %v1531
      %v1630 = vadd.f32 %v1386, %v1533
      %v1631 = vadd.f32 %v1387, %v1536
      %v1632 = vadd.f32 %v1388, %v1538
      %v1633 = vadd.f32 %v1389, %v1541
      %v1634 = vadd.f32 %v1390, %v1543
      %v1635 = vadd.f32 %v1391, %v1546
      %v1636 = vadd.f32 %v1392, %v1548
      %v1637 = vadd.f32 %v1393, %v1551
      %v1638 = vadd.f32 %v1394, %v1553
      %v1639 = vadd.f32 %v1395, %v1556
      %v1640 = vadd.f32 %v1396, %v1558
      %v1641 = vadd.f32 %v1397, %v1561
      %v1642 = vadd.f32 %v1398, %v1563
      %v1643 = vadd.f32 %v1399, %v1566
      %v1644 = vadd.f32 %v1400, %v1568
      %v1645 = vadd.f32 %v1401, %v1571
      %v1646 = vadd.f32 %v1402, %v1573
      %v1647 = vadd.f32 %v1403, %v1576
      %v1648 = vadd.f32 %v1404, %v1578
      %v1649 = vadd.f32 %v1405, %v1581
      %v1650 = vadd.f32 %v1406, %v1583
      %v1651 = vadd.f32 %v1407, %v1586
      %v1652 = vadd.f32 %v1408, %v1588
      %v1653 = vlaneseq
      %v1654 = vshrl.u32 %v1653, 7
      %v1655 = vsub.s32 0, %v1654
      %v1656 = vrot.slane %v226, %v1655
      %v1657 = vmul.f32 %v177, %v1656
      %v1658 = vmul.f32 %v178, %v1656
      %v1659 = vmul.f32 %v179, %v1656
      %v1660 = vmul.f32 %v180, %v1656
      %v1661 = vmul.f32 %v181, %v1656
      %v1662 = vmul.f32 %v182, %v1656
      %v1663 = vmul.f32 %v183, %v1656
      %v1664 = vmul.f32 %v184, %v1656
      %v1665 = vmul.f32 %v185, %v1656
      %v1666 = vmul.f32 %v186, %v1656
      %v1667 = vmul.f32 %v187, %v1656
      %v1668 = vmul.f32 %v188, %v1656
      %v1669 = vmul.f32 %v189, %v1656
      %v1670 = vmul.f32 %v190, %v1656
      %v1671 = vmul.f32 %v191, %v1656
      %v1672 = vmul.f32 %v192, %v1656
      %v1673 = vmul.f32 %v193, %v1656
      %v1674 = vmul.f32 %v194, %v1656
      %v1675 = vmul.f32 %v195, %v1656
      %v1676 = vmul.f32 %v196, %v1656
      %v1677 = vmul.f32 %v197, %v1656
      %v1678 = vmul.f32 %v198, %v1656
      %v1679 = vmul.f32 %v199, %v1656
      %v1680 = vmul.f32 %v200, %v1656
      %v1681 = vmul.f32 %v201, %v1656
      %v1682 = vmul.f32 %v202, %v1656
      %v1683 = vmul.f32 %v203, %v1656
      %v1684 = vmul.f32 %v204, %v1656
      %v1685 = vmul.f32 %v205, %v1656
      %v1686 = vmul.f32 %v206, %v1656
      %v1687 = vmul.f32 %v207, %v1656
      %v1688 = vmul.f32 %v208, %v1656
      %v1689 = vmul.f32 %v209, %v1656
      %v1690 = vmul.f32 %v210, %v1656
      %v1691 = vmul.f32 %v211, %v1656
      %v1692 = vmul.f32 %v212, %v1656
      %v1693 = vmul.f32 %v213, %v1656
      %v1694 = vmul.f32 %v214, %v1656
      %v1695 = vmul.f32 %v215, %v1656
      %v1696 = vmul.f32 %v216, %v1656
      %v1697 = vmul.f32 %v217, %v1656
      %v1698 = vmul.f32 %v218, %v1656
      %v1699 = vmul.f32 %v219, %v1656
      %v1700 = vmul.f32 %v220, %v1656
      %v1701 = vmul.f32 %v221, %v1656
      %v1702 = vmul.f32 %v222, %v1656
      %v1703 = vmul.f32 %v223, %v1656
      %v1704 = vmul.f32 %v224, %v1656
      %v1753 = vrot.slane %v1657, 2
      %v1754 = vrot.slane %v1658, 2
      %v1755 = vsel %vm640, %v1753, %v1754
      %v1756 = vrot.slane %v1659, 2
      %v1757 = vsel %vm640, %v1754, %v1756
      %v1758 = vrot.slane %v1660, 2
      %v1759 = vrot.slane %v1661, 2
      %v1760 = vsel %vm640, %v1758, %v1759
      %v1761 = vrot.slane %v1662, 2
      %v1762 = vsel %vm640, %v1759, %v1761
      %v1763 = vrot.slane %v1663, 2
      %v1764 = vrot.slane %v1664, 2
      %v1765 = vsel %vm640, %v1763, %v1764
      %v1766 = vrot.slane %v1665, 2
      %v1767 = vsel %vm640, %v1764, %v1766
      %v1768 = vrot.slane %v1666, 2
      %v1769 = vrot.slane %v1667, 2
      %v1770 = vsel %vm640, %v1768, %v1769
      %v1771 = vrot.slane %v1668, 2
      %v1772 = vsel %vm640, %v1769, %v1771
      %v1773 = vrot.slane %v1669, 2
      %v1774 = vrot.slane %v1670, 2
      %v1775 = vsel %vm640, %v1773, %v1774
      %v1776 = vrot.slane %v1671, 2
      %v1777 = vsel %vm640, %v1774, %v1776
      %v1778 = vrot.slane %v1672, 2
      %v1779 = vrot.slane %v1673, 2
      %v1780 = vsel %vm640, %v1778, %v1779
      %v1781 = vrot.slane %v1674, 2
      %v1782 = vsel %vm640, %v1779, %v1781
      %v1783 = vrot.slane %v1675, 2
      %v1784 = vrot.slane %v1676, 2
      %v1785 = vsel %vm640, %v1783, %v1784
      %v1786 = vrot.slane %v1677, 2
      %v1787 = vsel %vm640, %v1784, %v1786
      %v1788 = vrot.slane %v1678, 2
      %v1789 = vrot.slane %v1679, 2
      %v1790 = vsel %vm640, %v1788, %v1789
      %v1791 = vrot.slane %v1680, 2
      %v1792 = vsel %vm640, %v1789, %v1791
      %v1793 = vrot.slane %v1681, 2
      %v1794 = vrot.slane %v1682, 2
      %v1795 = vsel %vm640, %v1793, %v1794
      %v1796 = vrot.slane %v1683, 2
      %v1797 = vsel %vm640, %v1794, %v1796
      %v1798 = vrot.slane %v1684, 2
      %v1799 = vrot.slane %v1685, 2
      %v1800 = vsel %vm640, %v1798, %v1799
      %v1801 = vrot.slane %v1686, 2
      %v1802 = vsel %vm640, %v1799, %v1801
      %v1803 = vrot.slane %v1687, 2
      %v1804 = vrot.slane %v1688, 2
      %v1805 = vsel %vm640, %v1803, %v1804
      %v1806 = vrot.slane %v1689, 2
      %v1807 = vsel %vm640, %v1804, %v1806
      %v1808 = vrot.slane %v1690, 2
      %v1809 = vrot.slane %v1691, 2
      %v1810 = vsel %vm640, %v1808, %v1809
      %v1811 = vrot.slane %v1692, 2
      %v1812 = vsel %vm640, %v1809, %v1811
      %v1813 = vrot.slane %v1693, 2
      %v1814 = vrot.slane %v1694, 2
      %v1815 = vsel %vm640, %v1813, %v1814
      %v1816 = vrot.slane %v1695, 2
      %v1817 = vsel %vm640, %v1814, %v1816
      %v1818 = vrot.slane %v1696, 2
      %v1819 = vrot.slane %v1697, 2
      %v1820 = vsel %vm640, %v1818, %v1819
      %v1821 = vrot.slane %v1698, 2
      %v1822 = vsel %vm640, %v1819, %v1821
      %v1823 = vrot.slane %v1699, 2
      %v1824 = vrot.slane %v1700, 2
      %v1825 = vsel %vm640, %v1823, %v1824
      %v1826 = vrot.slane %v1701, 2
      %v1827 = vsel %vm640, %v1824, %v1826
      %v1828 = vrot.slane %v1702, 2
      %v1829 = vrot.slane %v1703, 2
      %v1830 = vsel %vm640, %v1828, %v1829
      %v1831 = vrot.slane %v1704, 2
      %v1832 = vsel %vm640, %v1829, %v1831
      %v1865 = vadd.f32 %v1621, %v1755
      %v1866 = vadd.f32 %v1622, %v1757
      %v1867 = vadd.f32 %v1623, %v1760
      %v1868 = vadd.f32 %v1624, %v1762
      %v1869 = vadd.f32 %v1625, %v1765
      %v1870 = vadd.f32 %v1626, %v1767
      %v1871 = vadd.f32 %v1627, %v1770
      %v1872 = vadd.f32 %v1628, %v1772
      %v1873 = vadd.f32 %v1629, %v1775
      %v1874 = vadd.f32 %v1630, %v1777
      %v1875 = vadd.f32 %v1631, %v1780
      %v1876 = vadd.f32 %v1632, %v1782
      %v1877 = vadd.f32 %v1633, %v1785
      %v1878 = vadd.f32 %v1634, %v1787
      %v1879 = vadd.f32 %v1635, %v1790
      %v1880 = vadd.f32 %v1636, %v1792
      %v1881 = vadd.f32 %v1637, %v1795
      %v1882 = vadd.f32 %v1638, %v1797
      %v1883 = vadd.f32 %v1639, %v1800
      %v1884 = vadd.f32 %v1640, %v1802
      %v1885 = vadd.f32 %v1641, %v1805
      %v1886 = vadd.f32 %v1642, %v1807
      %v1887 = vadd.f32 %v1643, %v1810
      %v1888 = vadd.f32 %v1644, %v1812
      %v1889 = vadd.f32 %v1645, %v1815
      %v1890 = vadd.f32 %v1646, %v1817
      %v1891 = vadd.f32 %v1647, %v1820
      %v1892 = vadd.f32 %v1648, %v1822
      %v1893 = vadd.f32 %v1649, %v1825
      %v1894 = vadd.f32 %v1650, %v1827
      %v1895 = vadd.f32 %v1651, %v1830
      %v1896 = vadd.f32 %v1652, %v1832
      %v1897 = vld [vmem:[%s2] sm:$0x1]
      %v1899 = vlaneseq
      %v1900 = vshrl.u32 %v1899, 7
      %v1901 = vsub.s32 0, %v1900
      %v1902 = vrot.slane %v1897, %v1901
      %v1904 = vadd.f32 %v1865, %v1902
      %v1905 = vadd.f32 %v1866, %v1902
      %v1906 = vadd.f32 %v1867, %v1902
      %v1907 = vadd.f32 %v1868, %v1902
      %v1908 = vadd.f32 %v1869, %v1902
      %v1909 = vadd.f32 %v1870, %v1902
      %v1910 = vadd.f32 %v1871, %v1902
      %v1911 = vadd.f32 %v1872, %v1902
      %v1912 = vadd.f32 %v1873, %v1902
      %v1913 = vadd.f32 %v1874, %v1902
      %v1914 = vadd.f32 %v1875, %v1902
      %v1915 = vadd.f32 %v1876, %v1902
      %v1916 = vadd.f32 %v1877, %v1902
      %v1917 = vadd.f32 %v1878, %v1902
      %v1918 = vadd.f32 %v1879, %v1902
      %v1919 = vadd.f32 %v1880, %v1902
      %v1920 = vadd.f32 %v1881, %v1902
      %v1921 = vadd.f32 %v1882, %v1902
      %v1922 = vadd.f32 %v1883, %v1902
      %v1923 = vadd.f32 %v1884, %v1902
      %v1924 = vadd.f32 %v1885, %v1902
      %v1925 = vadd.f32 %v1886, %v1902
      %v1926 = vadd.f32 %v1887, %v1902
      %v1927 = vadd.f32 %v1888, %v1902
      %v1928 = vadd.f32 %v1889, %v1902
      %v1929 = vadd.f32 %v1890, %v1902
      %v1930 = vadd.f32 %v1891, %v1902
      %v1931 = vadd.f32 %v1892, %v1902
      %v1932 = vadd.f32 %v1893, %v1902
      %v1933 = vadd.f32 %v1894, %v1902
      %v1934 = vadd.f32 %v1895, %v1902
      %v1935 = vadd.f32 %v1896, %v1902
      %1936 = vst [vmem:[%s170] sm:$0xff] %v1904
      %1937 = vst [vmem:[%s170 + $0x8] sm:$0xff] %v1905
      %1938 = vst [vmem:[%s170 + $0x10] sm:$0xff] %v1906
      %1939 = vst [vmem:[%s170 + $0x18] sm:$0xff] %v1907
      %1940 = vst [vmem:[%s170 + $0x20] sm:$0xff] %v1908
      %1941 = vst [vmem:[%s170 + $0x28] sm:$0xff] %v1909
      %1942 = vst [vmem:[%s170 + $0x30] sm:$0xff] %v1910
      %1943 = vst [vmem:[%s170 + $0x38] sm:$0xff] %v1911
      %1944 = vst [vmem:[%s170 + $0x40] sm:$0xff] %v1912
      %1945 = vst [vmem:[%s170 + $0x48] sm:$0xff] %v1913
      %1946 = vst [vmem:[%s170 + $0x50] sm:$0xff] %v1914
      %1947 = vst [vmem:[%s170 + $0x58] sm:$0xff] %v1915
      %1948 = vst [vmem:[%s170 + $0x60] sm:$0xff] %v1916
      %1949 = vst [vmem:[%s170 + $0x68] sm:$0xff] %v1917
      %1950 = vst [vmem:[%s170 + $0x70] sm:$0xff] %v1918
      %1951 = vst [vmem:[%s170 + $0x78] sm:$0xff] %v1919
      %1952 = vst [vmem:[%s170 + $0x80] sm:$0xff] %v1920
      %1953 = vst [vmem:[%s170 + $0x88] sm:$0xff] %v1921
      %1954 = vst [vmem:[%s170 + $0x90] sm:$0xff] %v1922
      %1955 = vst [vmem:[%s170 + $0x98] sm:$0xff] %v1923
      %1956 = vst [vmem:[%s170 + $0xa0] sm:$0xff] %v1924
      %1957 = vst [vmem:[%s170 + $0xa8] sm:$0xff] %v1925
      %1958 = vst [vmem:[%s170 + $0xb0] sm:$0xff] %v1926
      %1959 = vst [vmem:[%s170 + $0xb8] sm:$0xff] %v1927
      %1960 = vst [vmem:[%s170 + $0xc0] sm:$0xff] %v1928
      %1961 = vst [vmem:[%s170 + $0xc8] sm:$0xff] %v1929
      %1962 = vst [vmem:[%s170 + $0xd0] sm:$0xff] %v1930
      %1963 = vst [vmem:[%s170 + $0xd8] sm:$0xff] %v1931
      %1964 = vst [vmem:[%s170 + $0xe0] sm:$0xff] %v1932
      %1965 = vst [vmem:[%s170 + $0xe8] sm:$0xff] %v1933
      %1966 = vst [vmem:[%s170 + $0xf0] sm:$0xff] %v1934
      %1967 = vst [vmem:[%s170 + $0xf8] sm:$0xff] %v1935
      %p1968 = scmp.lt.s32.totalorder %s14, 1
      %s1969 = scalar_select %p1968, %s14, 1
      %s1970 = smul.addr %s1969, 32
      %s1971 = smul.addr %s1970, 8
      %s1972 = scalar_lea.vmem %s3, %s1971
      // Predicated region
      $region33: #{transformer_block_forward.12} parent=31 // pred_check
        %p1973 = pneg %p100
      $region34: #{transformer_block_forward.12} parent=31 // pred_check_branch
        %1975 = sbr.rel (%p1973) target = $region36
      $region35: #{transformer_block_forward.12} parent=31 // pred_region
        _
      $region36: #{transformer_block_forward.12} parent=31 // pred_fallthru
        _
    $region32: #{transformer_block_forward.12} parent=5 // pred_fallthru
      _
    %p1976 = scmp.le.s32.totalorder 2, %s9
    // Predicated region
    $region37: #{transformer_block_forward.12} parent=5 // pred_check
      %p1977 = pneg %p1976
    $region38: #{transformer_block_forward.12} parent=5 // pred_check_branch
      %1979 = sbr.rel (%p1977) target = $region40
    $region39: #{transformer_block_forward.12} parent=5 // pred_region
      %s1980 = ssub.s32 %s9, 2
      // Predicated region
      $region41: #{transformer_block_forward.12} parent=39 // pred_check
        %p1981 = pneg %p106
      $region42: #{transformer_block_forward.12} parent=39 // pred_check_branch
        %1983 = sbr.rel (%p1981) target = $region44
      $region43: #{transformer_block_forward.12} parent=39 // pred_region
        %p1984 = scmp.lt.s32.totalorder %s15, 1
        %s1985 = scalar_select %p1984, %s15, 1
        %s1986 = smul.addr %s1985, 32
        %s1987 = smul.addr %s1986, 8
        %s1988 = scalar_lea.vmem %s3, %s1987
      $region44: #{transformer_block_forward.12} parent=39 // pred_fallthru
        _
    $region40: #{transformer_block_forward.12} parent=5 // pred_fallthru
      _
  $region6: #{transformer_block_forward.12} parent=0 // loop_footer
    %s13 = sadd.s32 1, %s9
  $region7: #{transformer_block_forward.12} parent=0 // loop_footer_branch
    %8 = sbr.rel target = $region3
  $region8: #{transformer_block_forward.12} parent=0 // loop_exit
    _

</llo_original>
